<compile_context>
chip_gen: v6e
topology: v6e:2x2x1
jax: 0.10.0
libtpu: 0.0.40
codegen_flags: <defaults>
</compile_context>

<pallas_src>
import functools

import jax
import jax.numpy as jnp
from jax import lax
from jax.experimental import pallas as pl
from jax.experimental.pallas import tpu as pltpu

NGF = 64


# ----------------------------- activations -----------------------------
def _elu(x):
    # ELU(alpha=1): x if x > 0 else exp(x) - 1 (clamp exp arg on the dead branch)
    return jnp.where(x > 0, x, jnp.exp(jnp.minimum(x, 0.0)) - 1.0)


def _relu(x):
    return jnp.maximum(x, 0.0)


# ----------------------------- in-kernel helpers (operate on VMEM-resident values) -----------------------------
def _pool2_flat(h, ho, wo):
    """2x2 / stride-2 max pool.
    h: (ho*wo, C) with rows in row-major (ho, wo) order  ->  (ho//2, wo//2, C).
    Uses only lane-preserving reshapes (the flattened row order never changes)."""
    c = h.shape[-1]
    y = h.reshape(ho * wo // 2, 2, c)                    # pair adjacent W positions
    wmax = jnp.maximum(y[:, 0, :], y[:, 1, :])           # (ho * wo//2, C)
    z = wmax.reshape(ho // 2, 2, wo // 2, c)             # pair adjacent H rows
    return jnp.maximum(z[:, 0, :, :], z[:, 1, :, :])     # (ho//2, wo//2, C)


def _im2col(h, k):
    """h: (H, W, C) -> (Ho*Wo, k*k*C); column order (kh, kw, c) matches HWIO weight reshape."""
    H, W, C = h.shape
    ho, wo = H - k + 1, W - k + 1
    cols = [h[i:i + ho, j:j + wo, :].reshape(ho * wo, C)
            for i in range(k) for j in range(k)]
    return jnp.concatenate(cols, axis=-1)


# ----------------------------- fused forward kernel (one image per grid step) -----------------------------
def _dnet_fused_kernel(x_ref, w1_ref, b1_ref, w2_ref, b2_ref, w3_ref, b3_ref,
                       f1w_ref, f1b_ref, f2w_ref, f2b_ref, o_ref,
                       *, ho1, wo1, k2, k3):
    f32 = jnp.float32

    # ---- conv1 (input pre-im2col'd in wrapper) + ELU + 2x2 maxpool ----
    h = jnp.dot(x_ref[...], w1_ref[...], preferred_element_type=f32) + b1_ref[...]
    h = _pool2_flat(_elu(h), ho1, wo1)                       # (ho1//2, wo1//2, ngf)

    # ---- conv2 + ReLU + 2x2 maxpool ----
    ho2, wo2 = ho1 // 2 - (k2 - 1), wo1 // 2 - (k2 - 1)
    h = jnp.dot(_im2col(h, k2), w2_ref[...], preferred_element_type=f32) + b2_ref[...]
    h = _pool2_flat(_relu(h), ho2, wo2)                      # (ho2//2, wo2//2, 2*ngf)

    # ---- conv3 + ReLU + 2x2 maxpool ----
    ho3, wo3 = ho2 // 2 - (k3 - 1), wo2 // 2 - (k3 - 1)
    h = jnp.dot(_im2col(h, k3), w3_ref[...], preferred_element_type=f32) + b3_ref[...]
    h = _pool2_flat(_relu(h), ho3, wo3)                      # (1, 1, 4*ngf)

    feat = h.reshape(1, h.shape[-1])                         # == torch .view(-1, ngf*4): spatial is 1x1

    # ---- MLP head: Linear + ELU + Linear + Sigmoid ----
    z = _elu(jnp.dot(feat, f1w_ref[...], preferred_element_type=f32) + f1b_ref[...])
    y = jnp.dot(z, f2w_ref[...], preferred_element_type=f32) + f2b_ref[...]
    o_ref[...] = (1.0 / (1.0 + jnp.exp(-y))).astype(o_ref.dtype)


# ----------------------------- wrapper -----------------------------
def d_net_conv_forward(params, x_nchw):
    ngf = NGF
    x = jnp.transpose(x_nchw, (0, 2, 3, 1)).astype(jnp.float32)   # NCHW -> NHWC (glue)
    B, H, W, Cin = x.shape
    k1, k2, k3 = 5, 5, 3
    ho1, wo1 = H - k1 + 1, W - k1 + 1
    ho2, wo2 = ho1 // 2 - (k2 - 1), wo1 // 2 - (k2 - 1)
    ho3, wo3 = ho2 // 2 - (k3 - 1), wo2 // 2 - (k3 - 1)
    # torch's .view(-1, ngf*4) is layout-free only when the final spatial size is 1x1 (28x28 input)
    assert ho3 // 2 == 1 and wo3 // 2 == 1, "expected MNIST-sized (28x28) input"

    # im2col of the raw input (tiny; done once, XLA-side) so conv1 is a single clean MXU matmul
    cols = [x[:, i:i + ho1, j:j + wo1, :] for i in range(k1) for j in range(k1)]
    x_col = jnp.concatenate(cols, axis=-1).reshape(B, ho1 * wo1, k1 * k1 * Cin)

    # reshape conv weights once, wrapper-side, to im2col layout (row order = (kh, kw, cin))
    w1 = params["w1"].reshape(-1, ngf)          # (25*Cin, 64)
    w2 = params["w2"].reshape(-1, ngf * 2)      # (1600, 128)
    w3 = params["w3"].reshape(-1, ngf * 4)      # (1152, 256)
    args = (x_col, w1, params["b1"], w2, params["b2"], w3, params["b3"],
            params["fc1_w"], params["fc1_b"], params["fc2_w"], params["fc2_b"])

    def _const(a):
        nd = a.ndim
        return pl.BlockSpec(a.shape, lambda b: (0,) * nd)   # whole array, never changes

    kern = functools.partial(_dnet_fused_kernel, ho1=ho1, wo1=wo1, k2=k2, k3=k3)
    out = pl.pallas_call(
        kern,
        out_shape=jax.ShapeDtypeStruct((B, 1, 1), jnp.float32),
        grid=(B,),
        in_specs=[pl.BlockSpec((None, ho1 * wo1, k1 * k1 * Cin), lambda b: (b, 0, 0))]
                + [_const(a) for a in args[1:]],
        out_specs=pl.BlockSpec((None, 1, 1), lambda b: (b, 0, 0)),
        compiler_params=pltpu.CompilerParams(dimension_semantics=("parallel",)),
    )(*args)
    return out.reshape(B, 1)


# ----------------------------- parameters (deterministic, PyTorch-default-style uniform) -----------------------------
def init_params(key, inchannel):
    ngf = NGF
    keys = jax.random.split(key, 10)

    def u(k, shape, fan_in):
        bound = 1.0 / jnp.sqrt(jnp.float32(fan_in))
        return jax.random.uniform(k, shape, jnp.float32, -bound, bound)

    return {
        # conv weights stored HWIO
        "w1": u(keys[0], (5, 5, inchannel, ngf), inchannel * 25),
        "b1": u(keys[1], (1, ngf), inchannel * 25),
        "w2": u(keys[2], (5, 5, ngf, ngf * 2), ngf * 25),
        "b2": u(keys[3], (1, ngf * 2), ngf * 25),
        "w3": u(keys[4], (3, 3, ngf * 2, ngf * 4), ngf * 2 * 9),
        "b3": u(keys[5], (1, ngf * 4), ngf * 2 * 9),
        "fc1_w": u(keys[6], (ngf * 4, ngf), ngf * 4),
        "fc1_b": u(keys[7], (1, ngf), ngf * 4),
        "fc2_w": u(keys[8], (ngf, 1), ngf),
        "fc2_b": u(keys[9], (1, 1), ngf),
    }


# ----------------------------- pure-JAX reference for validation -----------------------------
def reference_forward(params, x_nchw):
    x = x_nchw.astype(jnp.float32)

    def conv(x, w_hwio, b, act):
        y = lax.conv_general_dilated(
            x, w_hwio, window_strides=(1, 1), padding="VALID",
            dimension_numbers=("NCHW", "HWIO", "NCHW"),
            precision=lax.Precision.HIGHEST)
        return act(y + b.reshape(1, -1, 1, 1))

    def pool(x):
        return lax.reduce_window(x, -jnp.inf, lax.max, (1, 1, 2, 2), (1, 1, 2, 2), "VALID")

    h = pool(conv(x, params["w1"], params["b1"], _elu))
    h = pool(conv(h, params["w2"], params["b2"], _relu))
    h = pool(conv(h, params["w3"], params["b3"], _relu))
    feat = h.reshape(-1, NGF * 4)
    h1 = _elu(feat @ params["fc1_w"] + params["fc1_b"])
    return jax.nn.sigmoid(h1 @ params["fc2_w"] + params["fc2_b"])


if __name__ == "__main__":
    key = jax.random.PRNGKey(0)
    pkey, xkey = jax.random.split(key)

    inchannel = 1
    params = init_params(pkey, inchannel)
    x = jax.random.normal(xkey, (2, inchannel, 28, 28), dtype=jnp.float32)  # NCHW like PyTorch

    out = d_net_conv_forward(params, x)
    out = jax.block_until_ready(out)
    assert out.shape == (2, 1), out.shape

    ref = reference_forward(params, x)
    assert bool(jnp.allclose(out, ref, rtol=5e-3, atol=5e-3)), (out, ref)

    print("KERNEL_OK")
</pallas_src>

<mosaic_0001>
module attributes {stable_mosaic.version = 11 : i64} {
  func.func @_dnet_fused_kernel(%arg0: i32, %arg1: memref<1x576x25xf32, #tpu.memory_space<vmem>>, %arg2: memref<25x64xf32, #tpu.memory_space<vmem>>, %arg3: memref<1x64xf32, #tpu.memory_space<vmem>>, %arg4: memref<1600x128xf32, #tpu.memory_space<vmem>>, %arg5: memref<1x128xf32, #tpu.memory_space<vmem>>, %arg6: memref<1152x256xf32, #tpu.memory_space<vmem>>, %arg7: memref<1x256xf32, #tpu.memory_space<vmem>>, %arg8: memref<256x64xf32, #tpu.memory_space<vmem>>, %arg9: memref<1x64xf32, #tpu.memory_space<vmem>>, %arg10: memref<64x1xf32, #tpu.memory_space<vmem>>, %arg11: memref<1x1xf32, #tpu.memory_space<vmem>>, %arg12: memref<1x1x1xf32, #tpu.memory_space<vmem>>) attributes {dimension_semantics = [#tpu.dimension_semantics<parallel>], iteration_bounds = array<i64: 2>, scalar_prefetch = 0 : i64, scratch_operands = 0 : i64, tpu.core_type = #tpu.core_type<tc>, window_params = [{transform_indices = @transform_0, window_bounds = array<i64: 1, 576, 25>}, {pipeline_mode = #tpu.pipeline_mode<synchronous>, transform_indices = @transform_1, window_bounds = array<i64: 25, 64>}, {pipeline_mode = #tpu.pipeline_mode<synchronous>, transform_indices = @transform_2, window_bounds = array<i64: 1, 64>}, {pipeline_mode = #tpu.pipeline_mode<synchronous>, transform_indices = @transform_3, window_bounds = array<i64: 1600, 128>}, {pipeline_mode = #tpu.pipeline_mode<synchronous>, transform_indices = @transform_4, window_bounds = array<i64: 1, 128>}, {pipeline_mode = #tpu.pipeline_mode<synchronous>, transform_indices = @transform_5, window_bounds = array<i64: 1152, 256>}, {pipeline_mode = #tpu.pipeline_mode<synchronous>, transform_indices = @transform_6, window_bounds = array<i64: 1, 256>}, {pipeline_mode = #tpu.pipeline_mode<synchronous>, transform_indices = @transform_7, window_bounds = array<i64: 256, 64>}, {pipeline_mode = #tpu.pipeline_mode<synchronous>, transform_indices = @transform_8, window_bounds = array<i64: 1, 64>}, {pipeline_mode = #tpu.pipeline_mode<synchronous>, transform_indices = @transform_9, window_bounds = array<i64: 64, 1>}, {pipeline_mode = #tpu.pipeline_mode<synchronous>, transform_indices = @transform_10, window_bounds = array<i64: 1, 1>}, {transform_indices = @transform_11, window_bounds = array<i64: 1, 1, 1>}]} {
    %c0 = arith.constant 0 : index
    %c0_0 = arith.constant 0 : index
    %c0_1 = arith.constant 0 : index
    %0 = vector.load %arg1[%c0, %c0_0, %c0_1] : memref<1x576x25xf32, #tpu.memory_space<vmem>>, vector<1x576x25xf32>
    %1 = vector.shape_cast %0 : vector<1x576x25xf32> to vector<576x25xf32>
    %c0_2 = arith.constant 0 : index
    %c0_3 = arith.constant 0 : index
    %2 = vector.load %arg2[%c0_2, %c0_3] : memref<25x64xf32, #tpu.memory_space<vmem>>, vector<25x64xf32>
    %cst = arith.constant dense<0.000000e+00> : vector<576x64xf32>
    %3 = tpu.matmul %1, %2, %cst {dimension_numbers = #tpu.dot_dimension_numbers<[1], [0], [0], [1], [0, 0, 1, 1], [], []>} : vector<576x25xf32>, vector<25x64xf32>, vector<576x64xf32> -> vector<576x64xf32>
    %c0_4 = arith.constant 0 : index
    %c0_5 = arith.constant 0 : index
    %4 = vector.load %arg3[%c0_4, %c0_5] : memref<1x64xf32, #tpu.memory_space<vmem>>, vector<1x64xf32>
    %5 = vector.broadcast %4 : vector<1x64xf32> to vector<576x64xf32>
    %6 = arith.addf %3, %5 : vector<576x64xf32>
    %cst_6 = arith.constant 0.000000e+00 : f32
    %7 = vector.broadcast %cst_6 : f32 to vector<576x64xf32>
    %8 = arith.cmpf ogt, %6, %7 : vector<576x64xf32>
    %cst_7 = arith.constant 0.000000e+00 : f32
    %9 = vector.broadcast %cst_7 : f32 to vector<576x64xf32>
    %10 = arith.minimumf %6, %9 : vector<576x64xf32>
    %11 = math.exp %10 : vector<576x64xf32>
    %cst_8 = arith.constant 1.000000e+00 : f32
    %12 = vector.broadcast %cst_8 : f32 to vector<576x64xf32>
    %13 = arith.subf %11, %12 : vector<576x64xf32>
    %14 = arith.select %8, %6, %13 : vector<576x64xi1>, vector<576x64xf32>
    %15 = vector.shape_cast %14 : vector<576x64xf32> to vector<288x2x64xf32>
    %16 = vector.extract_strided_slice %15 {offsets = [0, 0, 0], sizes = [288, 1, 64], strides = [1, 1, 1]} : vector<288x2x64xf32> to vector<288x1x64xf32>
    %17 = vector.shape_cast %16 : vector<288x1x64xf32> to vector<288x64xf32>
    %18 = vector.extract_strided_slice %15 {offsets = [0, 1, 0], sizes = [288, 1, 64], strides = [1, 1, 1]} : vector<288x2x64xf32> to vector<288x1x64xf32>
    %19 = vector.shape_cast %18 : vector<288x1x64xf32> to vector<288x64xf32>
    %20 = arith.maximumf %17, %19 : vector<288x64xf32>
    %21 = vector.shape_cast %20 : vector<288x64xf32> to vector<12x2x12x64xf32>
    %22 = vector.extract_strided_slice %21 {offsets = [0, 0, 0, 0], sizes = [12, 1, 12, 64], strides = [1, 1, 1, 1]} : vector<12x2x12x64xf32> to vector<12x1x12x64xf32>
    %23 = vector.shape_cast %22 : vector<12x1x12x64xf32> to vector<12x12x64xf32>
    %24 = vector.extract_strided_slice %21 {offsets = [0, 1, 0, 0], sizes = [12, 1, 12, 64], strides = [1, 1, 1, 1]} : vector<12x2x12x64xf32> to vector<12x1x12x64xf32>
    %25 = vector.shape_cast %24 : vector<12x1x12x64xf32> to vector<12x12x64xf32>
    %26 = arith.maximumf %23, %25 : vector<12x12x64xf32>
    %27 = vector.extract_strided_slice %26 {offsets = [0, 0, 0], sizes = [8, 8, 64], strides = [1, 1, 1]} : vector<12x12x64xf32> to vector<8x8x64xf32>
    %28 = vector.shape_cast %27 : vector<8x8x64xf32> to vector<64x64xf32>
    %29 = vector.extract_strided_slice %26 {offsets = [0, 1, 0], sizes = [8, 8, 64], strides = [1, 1, 1]} : vector<12x12x64xf32> to vector<8x8x64xf32>
    %30 = vector.shape_cast %29 : vector<8x8x64xf32> to vector<64x64xf32>
    %31 = vector.extract_strided_slice %26 {offsets = [0, 2, 0], sizes = [8, 8, 64], strides = [1, 1, 1]} : vector<12x12x64xf32> to vector<8x8x64xf32>
    %32 = vector.shape_cast %31 : vector<8x8x64xf32> to vector<64x64xf32>
    %33 = vector.extract_strided_slice %26 {offsets = [0, 3, 0], sizes = [8, 8, 64], strides = [1, 1, 1]} : vector<12x12x64xf32> to vector<8x8x64xf32>
    %34 = vector.shape_cast %33 : vector<8x8x64xf32> to vector<64x64xf32>
    %35 = vector.extract_strided_slice %26 {offsets = [0, 4, 0], sizes = [8, 8, 64], strides = [1, 1, 1]} : vector<12x12x64xf32> to vector<8x8x64xf32>
    %36 = vector.shape_cast %35 : vector<8x8x64xf32> to vector<64x64xf32>
    %37 = vector.extract_strided_slice %26 {offsets = [1, 0, 0], sizes = [8, 8, 64], strides = [1, 1, 1]} : vector<12x12x64xf32> to vector<8x8x64xf32>
    %38 = vector.shape_cast %37 : vector<8x8x64xf32> to vector<64x64xf32>
    %39 = vector.extract_strided_slice %26 {offsets = [1, 1, 0], sizes = [8, 8, 64], strides = [1, 1, 1]} : vector<12x12x64xf32> to vector<8x8x64xf32>
    %40 = vector.shape_cast %39 : vector<8x8x64xf32> to vector<64x64xf32>
    %41 = vector.extract_strided_slice %26 {offsets = [1, 2, 0], sizes = [8, 8, 64], strides = [1, 1, 1]} : vector<12x12x64xf32> to vector<8x8x64xf32>
    %42 = vector.shape_cast %41 : vector<8x8x64xf32> to vector<64x64xf32>
    %43 = vector.extract_strided_slice %26 {offsets = [1, 3, 0], sizes = [8, 8, 64], strides = [1, 1, 1]} : vector<12x12x64xf32> to vector<8x8x64xf32>
    %44 = vector.shape_cast %43 : vector<8x8x64xf32> to vector<64x64xf32>
    %45 = vector.extract_strided_slice %26 {offsets = [1, 4, 0], sizes = [8, 8, 64], strides = [1, 1, 1]} : vector<12x12x64xf32> to vector<8x8x64xf32>
    %46 = vector.shape_cast %45 : vector<8x8x64xf32> to vector<64x64xf32>
    %47 = vector.extract_strided_slice %26 {offsets = [2, 0, 0], sizes = [8, 8, 64], strides = [1, 1, 1]} : vector<12x12x64xf32> to vector<8x8x64xf32>
    %48 = vector.shape_cast %47 : vector<8x8x64xf32> to vector<64x64xf32>
    %49 = vector.extract_strided_slice %26 {offsets = [2, 1, 0], sizes = [8, 8, 64], strides = [1, 1, 1]} : vector<12x12x64xf32> to vector<8x8x64xf32>
    %50 = vector.shape_cast %49 : vector<8x8x64xf32> to vector<64x64xf32>
    %51 = vector.extract_strided_slice %26 {offsets = [2, 2, 0], sizes = [8, 8, 64], strides = [1, 1, 1]} : vector<12x12x64xf32> to vector<8x8x64xf32>
    %52 = vector.shape_cast %51 : vector<8x8x64xf32> to vector<64x64xf32>
    %53 = vector.extract_strided_slice %26 {offsets = [2, 3, 0], sizes = [8, 8, 64], strides = [1, 1, 1]} : vector<12x12x64xf32> to vector<8x8x64xf32>
    %54 = vector.shape_cast %53 : vector<8x8x64xf32> to vector<64x64xf32>
    %55 = vector.extract_strided_slice %26 {offsets = [2, 4, 0], sizes = [8, 8, 64], strides = [1, 1, 1]} : vector<12x12x64xf32> to vector<8x8x64xf32>
    %56 = vector.shape_cast %55 : vector<8x8x64xf32> to vector<64x64xf32>
    %57 = vector.extract_strided_slice %26 {offsets = [3, 0, 0], sizes = [8, 8, 64], strides = [1, 1, 1]} : vector<12x12x64xf32> to vector<8x8x64xf32>
    %58 = vector.shape_cast %57 : vector<8x8x64xf32> to vector<64x64xf32>
    %59 = vector.extract_strided_slice %26 {offsets = [3, 1, 0], sizes = [8, 8, 64], strides = [1, 1, 1]} : vector<12x12x64xf32> to vector<8x8x64xf32>
    %60 = vector.shape_cast %59 : vector<8x8x64xf32> to vector<64x64xf32>
    %61 = vector.extract_strided_slice %26 {offsets = [3, 2, 0], sizes = [8, 8, 64], strides = [1, 1, 1]} : vector<12x12x64xf32> to vector<8x8x64xf32>
    %62 = vector.shape_cast %61 : vector<8x8x64xf32> to vector<64x64xf32>
    %63 = vector.extract_strided_slice %26 {offsets = [3, 3, 0], sizes = [8, 8, 64], strides = [1, 1, 1]} : vector<12x12x64xf32> to vector<8x8x64xf32>
    %64 = vector.shape_cast %63 : vector<8x8x64xf32> to vector<64x64xf32>
    %65 = vector.extract_strided_slice %26 {offsets = [3, 4, 0], sizes = [8, 8, 64], strides = [1, 1, 1]} : vector<12x12x64xf32> to vector<8x8x64xf32>
    %66 = vector.shape_cast %65 : vector<8x8x64xf32> to vector<64x64xf32>
    %67 = vector.extract_strided_slice %26 {offsets = [4, 0, 0], sizes = [8, 8, 64], strides = [1, 1, 1]} : vector<12x12x64xf32> to vector<8x8x64xf32>
    %68 = vector.shape_cast %67 : vector<8x8x64xf32> to vector<64x64xf32>
    %69 = vector.extract_strided_slice %26 {offsets = [4, 1, 0], sizes = [8, 8, 64], strides = [1, 1, 1]} : vector<12x12x64xf32> to vector<8x8x64xf32>
    %70 = vector.shape_cast %69 : vector<8x8x64xf32> to vector<64x64xf32>
    %71 = vector.extract_strided_slice %26 {offsets = [4, 2, 0], sizes = [8, 8, 64], strides = [1, 1, 1]} : vector<12x12x64xf32> to vector<8x8x64xf32>
    %72 = vector.shape_cast %71 : vector<8x8x64xf32> to vector<64x64xf32>
    %73 = vector.extract_strided_slice %26 {offsets = [4, 3, 0], sizes = [8, 8, 64], strides = [1, 1, 1]} : vector<12x12x64xf32> to vector<8x8x64xf32>
    %74 = vector.shape_cast %73 : vector<8x8x64xf32> to vector<64x64xf32>
    %75 = vector.extract_strided_slice %26 {offsets = [4, 4, 0], sizes = [8, 8, 64], strides = [1, 1, 1]} : vector<12x12x64xf32> to vector<8x8x64xf32>
    %76 = vector.shape_cast %75 : vector<8x8x64xf32> to vector<64x64xf32>
    %77 = tpu.concatenate %28, %30, %32, %34, %36, %38, %40, %42, %44, %46, %48, %50, %52, %54, %56, %58 in 1 : vector<64x64xf32>, vector<64x64xf32>, vector<64x64xf32>, vector<64x64xf32>, vector<64x64xf32>, vector<64x64xf32>, vector<64x64xf32>, vector<64x64xf32>, vector<64x64xf32>, vector<64x64xf32>, vector<64x64xf32>, vector<64x64xf32>, vector<64x64xf32>, vector<64x64xf32>, vector<64x64xf32>, vector<64x64xf32> -> vector<64x1024xf32>
    %78 = tpu.concatenate %60, %62, %64, %66, %68, %70, %72, %74, %76 in 1 : vector<64x64xf32>, vector<64x64xf32>, vector<64x64xf32>, vector<64x64xf32>, vector<64x64xf32>, vector<64x64xf32>, vector<64x64xf32>, vector<64x64xf32>, vector<64x64xf32> -> vector<64x576xf32>
    %79 = tpu.concatenate %77, %78 in 1 : vector<64x1024xf32>, vector<64x576xf32> -> vector<64x1600xf32>
    %c0_9 = arith.constant 0 : index
    %c0_10 = arith.constant 0 : index
    %80 = vector.load %arg4[%c0_9, %c0_10] : memref<1600x128xf32, #tpu.memory_space<vmem>>, vector<1600x128xf32>
    %cst_11 = arith.constant dense<0.000000e+00> : vector<64x128xf32>
    %81 = tpu.matmul %79, %80, %cst_11 {dimension_numbers = #tpu.dot_dimension_numbers<[1], [0], [0], [1], [0, 0, 1, 1], [], []>} : vector<64x1600xf32>, vector<1600x128xf32>, vector<64x128xf32> -> vector<64x128xf32>
    %c0_12 = arith.constant 0 : index
    %c0_13 = arith.constant 0 : index
    %82 = vector.load %arg5[%c0_12, %c0_13] : memref<1x128xf32, #tpu.memory_space<vmem>>, vector<1x128xf32>
    %83 = vector.broadcast %82 : vector<1x128xf32> to vector<64x128xf32>
    %84 = arith.addf %81, %83 : vector<64x128xf32>
    %cst_14 = arith.constant 0.000000e+00 : f32
    %85 = vector.broadcast %cst_14 : f32 to vector<64x128xf32>
    %86 = arith.maximumf %84, %85 : vector<64x128xf32>
    %87 = vector.shape_cast %86 : vector<64x128xf32> to vector<32x2x128xf32>
    %88 = vector.extract_strided_slice %87 {offsets = [0, 0, 0], sizes = [32, 1, 128], strides = [1, 1, 1]} : vector<32x2x128xf32> to vector<32x1x128xf32>
    %89 = vector.shape_cast %88 : vector<32x1x128xf32> to vector<32x128xf32>
    %90 = vector.extract_strided_slice %87 {offsets = [0, 1, 0], sizes = [32, 1, 128], strides = [1, 1, 1]} : vector<32x2x128xf32> to vector<32x1x128xf32>
    %91 = vector.shape_cast %90 : vector<32x1x128xf32> to vector<32x128xf32>
    %92 = arith.maximumf %89, %91 : vector<32x128xf32>
    %93 = vector.shape_cast %92 : vector<32x128xf32> to vector<4x2x4x128xf32>
    %94 = vector.extract_strided_slice %93 {offsets = [0, 0, 0, 0], sizes = [4, 1, 4, 128], strides = [1, 1, 1, 1]} : vector<4x2x4x128xf32> to vector<4x1x4x128xf32>
    %95 = vector.shape_cast %94 : vector<4x1x4x128xf32> to vector<4x4x128xf32>
    %96 = vector.extract_strided_slice %93 {offsets = [0, 1, 0, 0], sizes = [4, 1, 4, 128], strides = [1, 1, 1, 1]} : vector<4x2x4x128xf32> to vector<4x1x4x128xf32>
    %97 = vector.shape_cast %96 : vector<4x1x4x128xf32> to vector<4x4x128xf32>
    %98 = arith.maximumf %95, %97 : vector<4x4x128xf32>
    %99 = vector.extract_strided_slice %98 {offsets = [0, 0, 0], sizes = [2, 2, 128], strides = [1, 1, 1]} : vector<4x4x128xf32> to vector<2x2x128xf32>
    %100 = vector.shape_cast %99 : vector<2x2x128xf32> to vector<4x128xf32>
    %101 = vector.extract_strided_slice %98 {offsets = [0, 1, 0], sizes = [2, 2, 128], strides = [1, 1, 1]} : vector<4x4x128xf32> to vector<2x2x128xf32>
    %102 = vector.shape_cast %101 : vector<2x2x128xf32> to vector<4x128xf32>
    %103 = vector.extract_strided_slice %98 {offsets = [0, 2, 0], sizes = [2, 2, 128], strides = [1, 1, 1]} : vector<4x4x128xf32> to vector<2x2x128xf32>
    %104 = vector.shape_cast %103 : vector<2x2x128xf32> to vector<4x128xf32>
    %105 = vector.extract_strided_slice %98 {offsets = [1, 0, 0], sizes = [2, 2, 128], strides = [1, 1, 1]} : vector<4x4x128xf32> to vector<2x2x128xf32>
    %106 = vector.shape_cast %105 : vector<2x2x128xf32> to vector<4x128xf32>
    %107 = vector.extract_strided_slice %98 {offsets = [1, 1, 0], sizes = [2, 2, 128], strides = [1, 1, 1]} : vector<4x4x128xf32> to vector<2x2x128xf32>
    %108 = vector.shape_cast %107 : vector<2x2x128xf32> to vector<4x128xf32>
    %109 = vector.extract_strided_slice %98 {offsets = [1, 2, 0], sizes = [2, 2, 128], strides = [1, 1, 1]} : vector<4x4x128xf32> to vector<2x2x128xf32>
    %110 = vector.shape_cast %109 : vector<2x2x128xf32> to vector<4x128xf32>
    %111 = vector.extract_strided_slice %98 {offsets = [2, 0, 0], sizes = [2, 2, 128], strides = [1, 1, 1]} : vector<4x4x128xf32> to vector<2x2x128xf32>
    %112 = vector.shape_cast %111 : vector<2x2x128xf32> to vector<4x128xf32>
    %113 = vector.extract_strided_slice %98 {offsets = [2, 1, 0], sizes = [2, 2, 128], strides = [1, 1, 1]} : vector<4x4x128xf32> to vector<2x2x128xf32>
    %114 = vector.shape_cast %113 : vector<2x2x128xf32> to vector<4x128xf32>
    %115 = vector.extract_strided_slice %98 {offsets = [2, 2, 0], sizes = [2, 2, 128], strides = [1, 1, 1]} : vector<4x4x128xf32> to vector<2x2x128xf32>
    %116 = vector.shape_cast %115 : vector<2x2x128xf32> to vector<4x128xf32>
    %117 = tpu.concatenate %100, %102, %104, %106, %108, %110, %112, %114, %116 in 1 : vector<4x128xf32>, vector<4x128xf32>, vector<4x128xf32>, vector<4x128xf32>, vector<4x128xf32>, vector<4x128xf32>, vector<4x128xf32>, vector<4x128xf32>, vector<4x128xf32> -> vector<4x1152xf32>
    %c0_15 = arith.constant 0 : index
    %c0_16 = arith.constant 0 : index
    %118 = vector.load %arg6[%c0_15, %c0_16] : memref<1152x256xf32, #tpu.memory_space<vmem>>, vector<1152x256xf32>
    %cst_17 = arith.constant dense<0.000000e+00> : vector<4x256xf32>
    %119 = tpu.matmul %117, %118, %cst_17 {dimension_numbers = #tpu.dot_dimension_numbers<[1], [0], [0], [1], [0, 0, 1, 1], [], []>} : vector<4x1152xf32>, vector<1152x256xf32>, vector<4x256xf32> -> vector<4x256xf32>
    %c0_18 = arith.constant 0 : index
    %c0_19 = arith.constant 0 : index
    %120 = vector.load %arg7[%c0_18, %c0_19] : memref<1x256xf32, #tpu.memory_space<vmem>>, vector<1x256xf32>
    %121 = vector.broadcast %120 : vector<1x256xf32> to vector<4x256xf32>
    %122 = arith.addf %119, %121 : vector<4x256xf32>
    %cst_20 = arith.constant 0.000000e+00 : f32
    %123 = vector.broadcast %cst_20 : f32 to vector<4x256xf32>
    %124 = arith.maximumf %122, %123 : vector<4x256xf32>
    %125 = vector.shape_cast %124 : vector<4x256xf32> to vector<2x2x256xf32>
    %126 = vector.extract_strided_slice %125 {offsets = [0, 0, 0], sizes = [2, 1, 256], strides = [1, 1, 1]} : vector<2x2x256xf32> to vector<2x1x256xf32>
    %127 = vector.shape_cast %126 : vector<2x1x256xf32> to vector<2x256xf32>
    %128 = vector.extract_strided_slice %125 {offsets = [0, 1, 0], sizes = [2, 1, 256], strides = [1, 1, 1]} : vector<2x2x256xf32> to vector<2x1x256xf32>
    %129 = vector.shape_cast %128 : vector<2x1x256xf32> to vector<2x256xf32>
    %130 = arith.maximumf %127, %129 : vector<2x256xf32>
    %131 = vector.shape_cast %130 : vector<2x256xf32> to vector<1x2x1x256xf32>
    %132 = vector.extract_strided_slice %131 {offsets = [0, 0, 0, 0], sizes = [1, 1, 1, 256], strides = [1, 1, 1, 1]} : vector<1x2x1x256xf32> to vector<1x1x1x256xf32>
    %133 = vector.shape_cast %132 : vector<1x1x1x256xf32> to vector<1x1x256xf32>
    %134 = vector.extract_strided_slice %131 {offsets = [0, 1, 0, 0], sizes = [1, 1, 1, 256], strides = [1, 1, 1, 1]} : vector<1x2x1x256xf32> to vector<1x1x1x256xf32>
    %135 = vector.shape_cast %134 : vector<1x1x1x256xf32> to vector<1x1x256xf32>
    %136 = arith.maximumf %133, %135 : vector<1x1x256xf32>
    %137 = vector.shape_cast %136 : vector<1x1x256xf32> to vector<1x256xf32>
    %c0_21 = arith.constant 0 : index
    %c0_22 = arith.constant 0 : index
    %138 = vector.load %arg8[%c0_21, %c0_22] : memref<256x64xf32, #tpu.memory_space<vmem>>, vector<256x64xf32>
    %cst_23 = arith.constant dense<0.000000e+00> : vector<1x64xf32>
    %139 = tpu.matmul %137, %138, %cst_23 {dimension_numbers = #tpu.dot_dimension_numbers<[1], [0], [0], [1], [0, 0, 1, 1], [], []>} : vector<1x256xf32>, vector<256x64xf32>, vector<1x64xf32> -> vector<1x64xf32>
    %c0_24 = arith.constant 0 : index
    %c0_25 = arith.constant 0 : index
    %140 = vector.load %arg9[%c0_24, %c0_25] : memref<1x64xf32, #tpu.memory_space<vmem>>, vector<1x64xf32>
    %141 = arith.addf %139, %140 : vector<1x64xf32>
    %cst_26 = arith.constant 0.000000e+00 : f32
    %142 = vector.broadcast %cst_26 : f32 to vector<1x64xf32>
    %143 = arith.cmpf ogt, %141, %142 : vector<1x64xf32>
    %cst_27 = arith.constant 0.000000e+00 : f32
    %144 = vector.broadcast %cst_27 : f32 to vector<1x64xf32>
    %145 = arith.minimumf %141, %144 : vector<1x64xf32>
    %146 = math.exp %145 : vector<1x64xf32>
    %cst_28 = arith.constant 1.000000e+00 : f32
    %147 = vector.broadcast %cst_28 : f32 to vector<1x64xf32>
    %148 = arith.subf %146, %147 : vector<1x64xf32>
    %149 = arith.select %143, %141, %148 : vector<1x64xi1>, vector<1x64xf32>
    %c0_29 = arith.constant 0 : index
    %c0_30 = arith.constant 0 : index
    %150 = vector.load %arg10[%c0_29, %c0_30] : memref<64x1xf32, #tpu.memory_space<vmem>>, vector<64x1xf32>
    %cst_31 = arith.constant dense<0.000000e+00> : vector<1x1xf32>
    %151 = tpu.matmul %149, %150, %cst_31 {dimension_numbers = #tpu.dot_dimension_numbers<[1], [0], [0], [1], [0, 0, 1, 1], [], []>} : vector<1x64xf32>, vector<64x1xf32>, vector<1x1xf32> -> vector<1x1xf32>
    %c0_32 = arith.constant 0 : index
    %c0_33 = arith.constant 0 : index
    %152 = vector.load %arg11[%c0_32, %c0_33] : memref<1x1xf32, #tpu.memory_space<vmem>>, vector<1x1xf32>
    %153 = arith.addf %151, %152 : vector<1x1xf32>
    %cst_34 = arith.constant 0.000000e+00 : f32
    %154 = vector.broadcast %cst_34 : f32 to vector<1x1xf32>
    %155 = arith.subf %154, %153 : vector<1x1xf32>
    %156 = math.exp %155 : vector<1x1xf32>
    %cst_35 = arith.constant 1.000000e+00 : f32
    %157 = vector.broadcast %cst_35 : f32 to vector<1x1xf32>
    %158 = arith.addf %157, %156 : vector<1x1xf32>
    %cst_36 = arith.constant 1.000000e+00 : f32
    %159 = vector.broadcast %cst_36 : f32 to vector<1x1xf32>
    %160 = arith.divf %159, %158 : vector<1x1xf32>
    %c0_37 = arith.constant 0 : index
    %c0_38 = arith.constant 0 : index
    %c0_39 = arith.constant 0 : index
    %161 = vector.load %arg12[%c0_37, %c0_38, %c0_39] : memref<1x1x1xf32, #tpu.memory_space<vmem>>, vector<1x1x1xf32>
    %162 = vector.shape_cast %161 : vector<1x1x1xf32> to vector<1x1xf32>
    %163 = vector.shape_cast %160 : vector<1x1xf32> to vector<1x1x1xf32>
    tpu.vector_store %arg12[%c0_37, %c0_38, %c0_39], %163 {strides = array<i32>} : memref<1x1x1xf32, #tpu.memory_space<vmem>>, vector<1x1x1xf32>,
    return
  }
  func.func @transform_0(%arg0: i32) -> (i32, i32, i32) {
    %c0_i32 = arith.constant 0 : i32
    %c0_i32_0 = arith.constant 0 : i32
    %c0_i32_1 = arith.constant 0 : i32
    return %arg0, %c0_i32, %c0_i32_0 : i32, i32, i32
  }
  func.func @transform_1(%arg0: i32) -> (i32, i32) {
    %c0_i32 = arith.constant 0 : i32
    %c0_i32_0 = arith.constant 0 : i32
    %c0_i32_1 = arith.constant 0 : i32
    return %c0_i32, %c0_i32_0 : i32, i32
  }
  func.func @transform_2(%arg0: i32) -> (i32, i32) {
    %c0_i32 = arith.constant 0 : i32
    %c0_i32_0 = arith.constant 0 : i32
    %c0_i32_1 = arith.constant 0 : i32
    return %c0_i32, %c0_i32_0 : i32, i32
  }
  func.func @transform_3(%arg0: i32) -> (i32, i32) {
    %c0_i32 = arith.constant 0 : i32
    %c0_i32_0 = arith.constant 0 : i32
    %c0_i32_1 = arith.constant 0 : i32
    return %c0_i32, %c0_i32_0 : i32, i32
  }
  func.func @transform_4(%arg0: i32) -> (i32, i32) {
    %c0_i32 = arith.constant 0 : i32
    %c0_i32_0 = arith.constant 0 : i32
    %c0_i32_1 = arith.constant 0 : i32
    return %c0_i32, %c0_i32_0 : i32, i32
  }
  func.func @transform_5(%arg0: i32) -> (i32, i32) {
    %c0_i32 = arith.constant 0 : i32
    %c0_i32_0 = arith.constant 0 : i32
    %c0_i32_1 = arith.constant 0 : i32
    return %c0_i32, %c0_i32_0 : i32, i32
  }
  func.func @transform_6(%arg0: i32) -> (i32, i32) {
    %c0_i32 = arith.constant 0 : i32
    %c0_i32_0 = arith.constant 0 : i32
    %c0_i32_1 = arith.constant 0 : i32
    return %c0_i32, %c0_i32_0 : i32, i32
  }
  func.func @transform_7(%arg0: i32) -> (i32, i32) {
    %c0_i32 = arith.constant 0 : i32
    %c0_i32_0 = arith.constant 0 : i32
    %c0_i32_1 = arith.constant 0 : i32
    return %c0_i32, %c0_i32_0 : i32, i32
  }
  func.func @transform_8(%arg0: i32) -> (i32, i32) {
    %c0_i32 = arith.constant 0 : i32
    %c0_i32_0 = arith.constant 0 : i32
    %c0_i32_1 = arith.constant 0 : i32
    return %c0_i32, %c0_i32_0 : i32, i32
  }
  func.func @transform_9(%arg0: i32) -> (i32, i32) {
    %c0_i32 = arith.constant 0 : i32
    %c0_i32_0 = arith.constant 0 : i32
    %c0_i32_1 = arith.constant 0 : i32
    return %c0_i32, %c0_i32_0 : i32, i32
  }
  func.func @transform_10(%arg0: i32) -> (i32, i32) {
    %c0_i32 = arith.constant 0 : i32
    %c0_i32_0 = arith.constant 0 : i32
    %c0_i32_1 = arith.constant 0 : i32
    return %c0_i32, %c0_i32_0 : i32, i32
  }
  func.func @transform_11(%arg0: i32) -> (i32, i32, i32) {
    %c0_i32 = arith.constant 0 : i32
    %c0_i32_0 = arith.constant 0 : i32
    %c0_i32_1 = arith.constant 0 : i32
    return %arg0, %c0_i32, %c0_i32_0 : i32, i32, i32
  }
}

</mosaic_0001>

<llo_original>
// kernel: tpu_custom_call.1
$region0: #{tpu_custom_call.1}
  #allocation0 [shape = 'u32[]', space=smem, size = 0x4, offset = 0x4, fixed_abs, tag = 'smem constant byte address 0x4 - core index']
  #allocation1 [shape = 'u32[144,128]{1,0:T(1,128)}', space=vmem, size = 0x12000, scoped, tag = 'internal scratch']
  #allocation2 [shape = 'f32[1,1]{1,0:T(1,128)S(1)}', space=vmem, size = 0x200, scoped, tag = 'scoped memory for tpu_custom_call.1']
  %s0 = inlined_call_operand.vmem [shape: f32[2,576,25], index: 0, kind: input, shape index: {}]
  %s1 = inlined_call_operand.hbm [shape: f32[25,64], index: 1, kind: input, shape index: {}]
  %s2 = inlined_call_operand.hbm [shape: f32[1,64], index: 2, kind: input, shape index: {}]
  %s3 = inlined_call_operand.vmem [shape: f32[1600,128], index: 3, kind: input, shape index: {}]
  %s4 = inlined_call_operand.hbm [shape: f32[1,128], index: 4, kind: input, shape index: {}]
  %s5 = inlined_call_operand.hbm [shape: f32[1152,256], index: 5, kind: input, shape index: {}]
  %s6 = inlined_call_operand.hbm [shape: f32[1,256], index: 6, kind: input, shape index: {}]
  %s7 = inlined_call_operand.vmem [shape: f32[256,64], index: 7, kind: input, shape index: {}]
  %s8 = inlined_call_operand.hbm [shape: f32[1,64], index: 8, kind: input, shape index: {}]
  %s9 = inlined_call_operand.vmem [shape: f32[64,1], index: 9, kind: input, shape index: {}]
  %s10 = inlined_call_operand.<no memory space> [shape: f32[1,1], index: 10, kind: input, shape index: {}]
  %s11 = inlined_call_operand.vmem [shape: f32[2,1,1], index: 11, kind: output, shape index: {}]
  %s12 = sld [smem:[#allocation0]]
  $region101: #{tpu_custom_call.1} parent=0
    _
  %s14 = ssub.s32 1, %s12
  %s15 = scalar_select 0, %s14, %s12
  %v16 = vstv %s10
  %17 = vst [vmem:[#allocation2] sm:$0x1] %v16
  $region1: #{tpu_custom_call.1} parent=0
    #allocation3 [shape = 'u8[16384]{0}', space=vmem, size = 0x4000, scoped, tag = 'input window, operand 1, single buffered']
    #allocation4 [shape = 's32[2]{0}', space=sflag, size = 0x8, scoped, tag = 'scoped memory for tpu_custom_call.1']
    #allocation5 [shape = 'u8[512]{0}', space=vmem, size = 0x400, scoped, tag = 'input window, operand 2, single buffered']
    #allocation6 [shape = 's32[1]{0}', space=sflag, size = 0x4, scoped, tag = 'scoped memory for tpu_custom_call.1']
    #allocation7 [shape = 'u8[512]{0}', space=vmem, size = 0x400, scoped, tag = 'input window, operand 4, single buffered']
    #allocation8 [shape = 'u8[1179648]{0}', space=vmem, size = 0x120000, scoped, tag = 'input window, operand 5, single buffered']
    #allocation9 [shape = 's32[1]{0}', space=sflag, size = 0x4, scoped, tag = 'scoped memory for tpu_custom_call.1']
    #allocation10 [shape = 'u8[1024]{0}', space=vmem, size = 0x400, scoped, tag = 'input window, operand 6, single buffered']
    #allocation11 [shape = 'u8[512]{0}', space=vmem, size = 0x400, scoped, tag = 'input window, operand 8, single buffered']
    #allocation12 [shape = 's32[1]{0}', space=sflag, size = 0x4, scoped, tag = 'scoped memory for tpu_custom_call.1']
    %18 = vsyncpa [#allocation4], 0
    %19 = vsyncpa [#allocation6], 0
    %20 = vsyncpa [#allocation9], 0
    %21 = vsyncpa [#allocation12], 0
    loop: start=0, step=1, limit=4
    $region2: #{tpu_custom_call.1} parent=1 // loop_pre_header
      _
    $region3: #{tpu_custom_call.1} parent=1 // loop_header
      %s23 = sphi 0, %s27
      %p24 = scmp.ge.s32.totalorder %s23, 4
      %s33 = sphi 0, %s35
      %s36 = sphi 0, %s33
      %s37 = sphi 0, %s36
      %s53 = sphi 0, %s37
      %s57 = sphi 0, %s57
      %s59 = sphi 0, %s57
      %s60 = sphi 0, %s59
      %s74 = sphi 0, %s60
      %s78 = sphi 0, %s78
      %s80 = sphi 0, %s78
      %s81 = sphi 0, %s80
      %s95 = sphi 0, %s81
      %s99 = sphi 0, %s99
      %s101 = sphi 0, %s99
      %s102 = sphi 0, %s101
      %s116 = sphi 0, %s102
      %s120 = sphi 0, %s120
      %s122 = sphi 0, %s120
      %s123 = sphi 0, %s122
      %s137 = sphi 0, %s123
      %s141 = sphi 0, %s141
      %s143 = sphi 0, %s141
      %s144 = sphi 0, %s143
      %s158 = sphi 0, %s144
      %s162 = sphi 0, %s162
      %s164 = sphi 0, %s162
      %s165 = sphi 0, %s164
      %s179 = sphi 0, %s165
      %s183 = sphi 0, %s183
      %s185 = sphi 0, %s183
      %s186 = sphi 0, %s185
      %s200 = sphi 0, %s186
      %s204 = sphi 0, %s204
      %s206 = sphi 0, %s204
      %s207 = sphi 0, %s206
      %s221 = sphi 0, %s207
      %s225 = sphi 0, %s225
      %s227 = sphi 0, %s225
      %s228 = sphi 0, %s227
      %s242 = sphi 0, %s228
      %s246 = sphi 0, %s246
      %s248 = sphi 0, %s246
      %s249 = sphi 0, %s248
      %s263 = sphi 0, %s249
      %s269 = sphi 0, %s271
      %s272 = sphi 0, %s269
      %s273 = sphi 0, %s272
      %s289 = sphi 0, %s273
    $region4: #{tpu_custom_call.1} parent=1 // loop_header_branch
      %26 = sbr.rel (%p24) target = $region8
    $region5: #{tpu_custom_call.1} parent=1 // loop_body
      %s28 = ssub.s32 %s23, 1
      %s29 = ssub.s32 %s23, 2
      %s30 = sadd.s32 %s23, 1
      %s31 = ssub.s32 %s23, %s30
      %p32 = scmp.eq.s32.totalorder %s31, 0
      %s34 = sadd.s32 %s33, 1
      %s35 = scalar_select %p32, %s33, %s34
      %p38 = pneg %p32
      %p39 = scmp.eq.s32.totalorder %s23, 1
      %p40 = por %p38, %p39
      %p41 = scmp.ne.s32.totalorder %s33, %s36
      %p42 = scmp.eq.s32.totalorder %s23, 0
      %p43 = por %p41, %p42
      %p44 = scmp.ne.s32.totalorder %s33, %s36
      %p45 = scmp.eq.s32.totalorder %s28, 1
      %p46 = por %p44, %p45
      %p47 = scmp.ne.s32.totalorder %s36, %s37
      %p48 = scmp.eq.s32.totalorder %s28, 0
      %p49 = por %p47, %p48
      %p50 = scmp.ne.s32.totalorder %s36, %s37
      %p51 = scmp.eq.s32.totalorder %s29, 1
      %p52 = por %p50, %p51
      %p54 = scmp.ne.s32.totalorder %s37, %s53
      %p55 = scmp.eq.s32.totalorder %s29, 0
      %p56 = por %p54, %p55
      %s58 = sadd.s32 %s57, 1
      %p61 = scmp.eq.s32.totalorder %s23, 1
      %p62 = scmp.ne.s32.totalorder %s57, %s59
      %p63 = scmp.eq.s32.totalorder %s23, 0
      %p64 = por %p62, %p63
      %p65 = scmp.ne.s32.totalorder %s57, %s59
      %p66 = scmp.eq.s32.totalorder %s28, 1
      %p67 = por %p65, %p66
      %p68 = scmp.ne.s32.totalorder %s59, %s60
      %p69 = scmp.eq.s32.totalorder %s28, 0
      %p70 = por %p68, %p69
      %p71 = scmp.ne.s32.totalorder %s59, %s60
      %p72 = scmp.eq.s32.totalorder %s29, 1
      %p73 = por %p71, %p72
      %p75 = scmp.ne.s32.totalorder %s60, %s74
      %p76 = scmp.eq.s32.totalorder %s29, 0
      %p77 = por %p75, %p76
      %s79 = sadd.s32 %s78, 1
      %p82 = scmp.eq.s32.totalorder %s23, 1
      %p83 = scmp.ne.s32.totalorder %s78, %s80
      %p84 = scmp.eq.s32.totalorder %s23, 0
      %p85 = por %p83, %p84
      %p86 = scmp.ne.s32.totalorder %s78, %s80
      %p87 = scmp.eq.s32.totalorder %s28, 1
      %p88 = por %p86, %p87
      %p89 = scmp.ne.s32.totalorder %s80, %s81
      %p90 = scmp.eq.s32.totalorder %s28, 0
      %p91 = por %p89, %p90
      %p92 = scmp.ne.s32.totalorder %s80, %s81
      %p93 = scmp.eq.s32.totalorder %s29, 1
      %p94 = por %p92, %p93
      %p96 = scmp.ne.s32.totalorder %s81, %s95
      %p97 = scmp.eq.s32.totalorder %s29, 0
      %p98 = por %p96, %p97
      %s100 = sadd.s32 %s99, 1
      %p103 = scmp.eq.s32.totalorder %s23, 1
      %p104 = scmp.ne.s32.totalorder %s99, %s101
      %p105 = scmp.eq.s32.totalorder %s23, 0
      %p106 = por %p104, %p105
      %p107 = scmp.ne.s32.totalorder %s99, %s101
      %p108 = scmp.eq.s32.totalorder %s28, 1
      %p109 = por %p107, %p108
      %p110 = scmp.ne.s32.totalorder %s101, %s102
      %p111 = scmp.eq.s32.totalorder %s28, 0
      %p112 = por %p110, %p111
      %p113 = scmp.ne.s32.totalorder %s101, %s102
      %p114 = scmp.eq.s32.totalorder %s29, 1
      %p115 = por %p113, %p114
      %p117 = scmp.ne.s32.totalorder %s102, %s116
      %p118 = scmp.eq.s32.totalorder %s29, 0
      %p119 = por %p117, %p118
      %s121 = sadd.s32 %s120, 1
      %p124 = scmp.eq.s32.totalorder %s23, 1
      %p125 = scmp.ne.s32.totalorder %s120, %s122
      %p126 = scmp.eq.s32.totalorder %s23, 0
      %p127 = por %p125, %p126
      %p128 = scmp.ne.s32.totalorder %s120, %s122
      %p129 = scmp.eq.s32.totalorder %s28, 1
      %p130 = por %p128, %p129
      %p131 = scmp.ne.s32.totalorder %s122, %s123
      %p132 = scmp.eq.s32.totalorder %s28, 0
      %p133 = por %p131, %p132
      %p134 = scmp.ne.s32.totalorder %s122, %s123
      %p135 = scmp.eq.s32.totalorder %s29, 1
      %p136 = por %p134, %p135
      %p138 = scmp.ne.s32.totalorder %s123, %s137
      %p139 = scmp.eq.s32.totalorder %s29, 0
      %p140 = por %p138, %p139
      %s142 = sadd.s32 %s141, 1
      %p145 = scmp.eq.s32.totalorder %s23, 1
      %p146 = scmp.ne.s32.totalorder %s141, %s143
      %p147 = scmp.eq.s32.totalorder %s23, 0
      %p148 = por %p146, %p147
      %p149 = scmp.ne.s32.totalorder %s141, %s143
      %p150 = scmp.eq.s32.totalorder %s28, 1
      %p151 = por %p149, %p150
      %p152 = scmp.ne.s32.totalorder %s143, %s144
      %p153 = scmp.eq.s32.totalorder %s28, 0
      %p154 = por %p152, %p153
      %p155 = scmp.ne.s32.totalorder %s143, %s144
      %p156 = scmp.eq.s32.totalorder %s29, 1
      %p157 = por %p155, %p156
      %p159 = scmp.ne.s32.totalorder %s144, %s158
      %p160 = scmp.eq.s32.totalorder %s29, 0
      %p161 = por %p159, %p160
      %s163 = sadd.s32 %s162, 1
      %p166 = scmp.eq.s32.totalorder %s23, 1
      %p167 = scmp.ne.s32.totalorder %s162, %s164
      %p168 = scmp.eq.s32.totalorder %s23, 0
      %p169 = por %p167, %p168
      %p170 = scmp.ne.s32.totalorder %s162, %s164
      %p171 = scmp.eq.s32.totalorder %s28, 1
      %p172 = por %p170, %p171
      %p173 = scmp.ne.s32.totalorder %s164, %s165
      %p174 = scmp.eq.s32.totalorder %s28, 0
      %p175 = por %p173, %p174
      %p176 = scmp.ne.s32.totalorder %s164, %s165
      %p177 = scmp.eq.s32.totalorder %s29, 1
      %p178 = por %p176, %p177
      %p180 = scmp.ne.s32.totalorder %s165, %s179
      %p181 = scmp.eq.s32.totalorder %s29, 0
      %p182 = por %p180, %p181
      %s184 = sadd.s32 %s183, 1
      %p187 = scmp.eq.s32.totalorder %s23, 1
      %p188 = scmp.ne.s32.totalorder %s183, %s185
      %p189 = scmp.eq.s32.totalorder %s23, 0
      %p190 = por %p188, %p189
      %p191 = scmp.ne.s32.totalorder %s183, %s185
      %p192 = scmp.eq.s32.totalorder %s28, 1
      %p193 = por %p191, %p192
      %p194 = scmp.ne.s32.totalorder %s185, %s186
      %p195 = scmp.eq.s32.totalorder %s28, 0
      %p196 = por %p194, %p195
      %p197 = scmp.ne.s32.totalorder %s185, %s186
      %p198 = scmp.eq.s32.totalorder %s29, 1
      %p199 = por %p197, %p198
      %p201 = scmp.ne.s32.totalorder %s186, %s200
      %p202 = scmp.eq.s32.totalorder %s29, 0
      %p203 = por %p201, %p202
      %s205 = sadd.s32 %s204, 1
      %p208 = scmp.eq.s32.totalorder %s23, 1
      %p209 = scmp.ne.s32.totalorder %s204, %s206
      %p210 = scmp.eq.s32.totalorder %s23, 0
      %p211 = por %p209, %p210
      %p212 = scmp.ne.s32.totalorder %s204, %s206
      %p213 = scmp.eq.s32.totalorder %s28, 1
      %p214 = por %p212, %p213
      %p215 = scmp.ne.s32.totalorder %s206, %s207
      %p216 = scmp.eq.s32.totalorder %s28, 0
      %p217 = por %p215, %p216
      %p218 = scmp.ne.s32.totalorder %s206, %s207
      %p219 = scmp.eq.s32.totalorder %s29, 1
      %p220 = por %p218, %p219
      %p222 = scmp.ne.s32.totalorder %s207, %s221
      %p223 = scmp.eq.s32.totalorder %s29, 0
      %p224 = por %p222, %p223
      %s226 = sadd.s32 %s225, 1
      %p229 = scmp.eq.s32.totalorder %s23, 1
      %p230 = scmp.ne.s32.totalorder %s225, %s227
      %p231 = scmp.eq.s32.totalorder %s23, 0
      %p232 = por %p230, %p231
      %p233 = scmp.ne.s32.totalorder %s225, %s227
      %p234 = scmp.eq.s32.totalorder %s28, 1
      %p235 = por %p233, %p234
      %p236 = scmp.ne.s32.totalorder %s227, %s228
      %p237 = scmp.eq.s32.totalorder %s28, 0
      %p238 = por %p236, %p237
      %p239 = scmp.ne.s32.totalorder %s227, %s228
      %p240 = scmp.eq.s32.totalorder %s29, 1
      %p241 = por %p239, %p240
      %p243 = scmp.ne.s32.totalorder %s228, %s242
      %p244 = scmp.eq.s32.totalorder %s29, 0
      %p245 = por %p243, %p244
      %s247 = sadd.s32 %s246, 1
      %p250 = scmp.eq.s32.totalorder %s23, 1
      %p251 = scmp.ne.s32.totalorder %s246, %s248
      %p252 = scmp.eq.s32.totalorder %s23, 0
      %p253 = por %p251, %p252
      %p254 = scmp.ne.s32.totalorder %s246, %s248
      %p255 = scmp.eq.s32.totalorder %s28, 1
      %p256 = por %p254, %p255
      %p257 = scmp.ne.s32.totalorder %s248, %s249
      %p258 = scmp.eq.s32.totalorder %s28, 0
      %p259 = por %p257, %p258
      %p260 = scmp.ne.s32.totalorder %s248, %s249
      %p261 = scmp.eq.s32.totalorder %s29, 1
      %p262 = por %p260, %p261
      %p264 = scmp.ne.s32.totalorder %s249, %s263
      %p265 = scmp.eq.s32.totalorder %s29, 0
      %p266 = por %p264, %p265
      %s267 = ssub.s32 %s23, %s30
      %p268 = scmp.eq.s32.totalorder %s267, 0
      %s270 = sadd.s32 %s269, 1
      %s271 = scalar_select %p268, %s269, %s270
      %p274 = pneg %p268
      %p275 = scmp.eq.s32.totalorder %s23, 1
      %p276 = por %p274, %p275
      %p277 = scmp.ne.s32.totalorder %s269, %s272
      %p278 = scmp.eq.s32.totalorder %s23, 0
      %p279 = por %p277, %p278
      %p280 = scmp.ne.s32.totalorder %s269, %s272
      %p281 = scmp.eq.s32.totalorder %s28, 1
      %p282 = por %p280, %p281
      %p283 = scmp.ne.s32.totalorder %s272, %s273
      %p284 = scmp.eq.s32.totalorder %s28, 0
      %p285 = por %p283, %p284
      %p286 = scmp.ne.s32.totalorder %s272, %s273
      %p287 = scmp.eq.s32.totalorder %s29, 1
      %p288 = por %p286, %p287
      %p290 = scmp.ne.s32.totalorder %s273, %s289
      %p291 = scmp.eq.s32.totalorder %s29, 0
      %p292 = por %p290, %p291
      %p293 = scmp.le.s32.totalorder 1, %s23
      %p294 = scmp.lt.s32.totalorder %s23, 3
      %p295 = pnand %p293, %p294
      %p296 = pneg %p295
      // Predicated region
      $region9: #{tpu_custom_call.1} parent=5 // pred_check
        _
      $region10: #{tpu_custom_call.1} parent=5 // pred_check_branch
        %298 = sbr.rel (%p295) target = $region12
      $region11: #{tpu_custom_call.1} parent=5 // pred_region
        %s299 = ssub.s32 %s23, 1
        // Predicated region
        $region13: #{tpu_custom_call.1} parent=11 // pred_check
          %p300 = pneg %p70
        $region14: #{tpu_custom_call.1} parent=11 // pred_check_branch
          %302 = sbr.rel (%p300) target = $region16
        $region15: #{tpu_custom_call.1} parent=11 // pred_region
          %s304 = ssub.s32 512, 512
          %305 = vsyncadd [#allocation4], %s304
          %s306 = sshll.u32 [#allocation3], 4
          %s307 = int_to_ptr.vmem [resolvable:$true] %s306
          %312 = dma.hbm_to_vmem [thread:$0]  %s1, 512, %s307, [#allocation4], 128, 128, 8
        $region16: #{tpu_custom_call.1} parent=11 // pred_fallthru
          _
        // Predicated region
        $region17: #{tpu_custom_call.1} parent=11 // pred_check
          %p313 = pneg %p91
        $region18: #{tpu_custom_call.1} parent=11 // pred_check_branch
          %315 = sbr.rel (%p313) target = $region20
        $region19: #{tpu_custom_call.1} parent=11 // pred_region
          %s317 = ssub.s32 16, 16
          %318 = vsyncadd [#allocation6], %s317
          %s320 = sshll.u32 [#allocation5], 4
          %s321 = int_to_ptr.vmem [resolvable:$true] %s320
          %323 = dma.hbm_to_vmem [thread:$0]  %s2, 16, %s321, [#allocation6]
        $region20: #{tpu_custom_call.1} parent=11 // pred_fallthru
          _
        // Predicated region
        $region21: #{tpu_custom_call.1} parent=11 // pred_check
          %p324 = pneg %p112
        $region22: #{tpu_custom_call.1} parent=11 // pred_check_branch
          %326 = sbr.rel (%p324) target = $region24
        $region23: #{tpu_custom_call.1} parent=11 // pred_region
          _
        $region24: #{tpu_custom_call.1} parent=11 // pred_fallthru
          _
        // Predicated region
        $region25: #{tpu_custom_call.1} parent=11 // pred_check
          %p327 = pneg %p133
        $region26: #{tpu_custom_call.1} parent=11 // pred_check_branch
          %329 = sbr.rel (%p327) target = $region28
        $region27: #{tpu_custom_call.1} parent=11 // pred_region
          %s331 = ssub.s32 16, 16
          %332 = vsyncadd [#allocation6], %s331
          %s334 = sshll.u32 [#allocation7], 4
          %s335 = int_to_ptr.vmem [resolvable:$true] %s334
          %337 = dma.hbm_to_vmem [thread:$0]  %s4, 16, %s335, [#allocation6]
        $region28: #{tpu_custom_call.1} parent=11 // pred_fallthru
          _
        // Predicated region
        $region29: #{tpu_custom_call.1} parent=11 // pred_check
          %p338 = pneg %p154
        $region30: #{tpu_custom_call.1} parent=11 // pred_check_branch
          %340 = sbr.rel (%p338) target = $region32
        $region31: #{tpu_custom_call.1} parent=11 // pred_region
          %s342 = ssub.s32 36864, 36864
          %343 = vsyncadd [#allocation9], %s342
          %s344 = sshll.u32 [#allocation8], 4
          %s345 = int_to_ptr.vmem [resolvable:$true] %s344
          %350 = dma.hbm_to_vmem [thread:$0]  %s5, 36864, %s345, [#allocation9], 256, 256, 16
        $region32: #{tpu_custom_call.1} parent=11 // pred_fallthru
          _
        // Predicated region
        $region33: #{tpu_custom_call.1} parent=11 // pred_check
          %p351 = pneg %p175
        $region34: #{tpu_custom_call.1} parent=11 // pred_check_branch
          %353 = sbr.rel (%p351) target = $region36
        $region35: #{tpu_custom_call.1} parent=11 // pred_region
          %s355 = ssub.s32 32, 32
          %356 = vsyncadd [#allocation9], %s355
          %s358 = sshll.u32 [#allocation10], 4
          %s359 = int_to_ptr.vmem [resolvable:$true] %s358
          %361 = dma.hbm_to_vmem [thread:$0]  %s6, 32, %s359, [#allocation9]
        $region36: #{tpu_custom_call.1} parent=11 // pred_fallthru
          _
        // Predicated region
        $region37: #{tpu_custom_call.1} parent=11 // pred_check
          %p362 = pneg %p196
        $region38: #{tpu_custom_call.1} parent=11 // pred_check_branch
          %364 = sbr.rel (%p362) target = $region40
        $region39: #{tpu_custom_call.1} parent=11 // pred_region
          _
        $region40: #{tpu_custom_call.1} parent=11 // pred_fallthru
          _
        // Predicated region
        $region41: #{tpu_custom_call.1} parent=11 // pred_check
          %p365 = pneg %p217
        $region42: #{tpu_custom_call.1} parent=11 // pred_check_branch
          %367 = sbr.rel (%p365) target = $region44
        $region43: #{tpu_custom_call.1} parent=11 // pred_region
          %s369 = ssub.s32 16, 16
          %370 = vsyncadd [#allocation12], %s369
          %s372 = sshll.u32 [#allocation11], 4
          %s373 = int_to_ptr.vmem [resolvable:$true] %s372
          %375 = dma.hbm_to_vmem [thread:$0]  %s8, 16, %s373, [#allocation12]
        $region44: #{tpu_custom_call.1} parent=11 // pred_fallthru
          _
        // Predicated region
        $region45: #{tpu_custom_call.1} parent=11 // pred_check
          %p376 = pneg %p238
        $region46: #{tpu_custom_call.1} parent=11 // pred_check_branch
          %378 = sbr.rel (%p376) target = $region48
        $region47: #{tpu_custom_call.1} parent=11 // pred_region
          _
        $region48: #{tpu_custom_call.1} parent=11 // pred_fallthru
          _
        // Predicated region
        $region49: #{tpu_custom_call.1} parent=11 // pred_check
          %p379 = pneg %p259
        $region50: #{tpu_custom_call.1} parent=11 // pred_check_branch
          %381 = sbr.rel (%p379) target = $region52
        $region51: #{tpu_custom_call.1} parent=11 // pred_region
          _
        $region52: #{tpu_custom_call.1} parent=11 // pred_fallthru
          _
      $region12: #{tpu_custom_call.1} parent=5 // pred_fallthru
        _
      %p382 = scmp.lt.s32.totalorder %s23, 2
      // Predicated region
      $region53: #{tpu_custom_call.1} parent=5 // pred_check
        %p383 = pneg %p382
      $region54: #{tpu_custom_call.1} parent=5 // pred_check_branch
        %385 = sbr.rel (%p383) target = $region56
      $region55: #{tpu_custom_call.1} parent=5 // pred_region
        // Predicated region
        $region57: #{tpu_custom_call.1} parent=55 // pred_check
          %p386 = pneg %p43
        $region58: #{tpu_custom_call.1} parent=55 // pred_check_branch
          %388 = sbr.rel (%p386) target = $region60
        $region59: #{tpu_custom_call.1} parent=55 // pred_region
          %p389 = scmp.lt.s32.totalorder %s23, 1
          %s390 = scalar_select %p389, %s23, 1
          %s391 = smul.addr %s390, 72
          %s392 = smul.addr %s391, 8
          %s393 = scalar_lea.vmem %s0, %s392
        $region60: #{tpu_custom_call.1} parent=55 // pred_fallthru
          _
      $region56: #{tpu_custom_call.1} parent=5 // pred_fallthru
        _
      %p394 = scmp.le.s32.totalorder 1, %s23
      %p395 = scmp.lt.s32.totalorder %s23, 3
      %p396 = pnand %p394, %p395
      %p397 = pneg %p396
      // Predicated region
      $region61: #{tpu_custom_call.1} parent=5 // pred_check
        _
      $region62: #{tpu_custom_call.1} parent=5 // pred_check_branch
        %399 = sbr.rel (%p396) target = $region64
      $region63: #{tpu_custom_call.1} parent=5 // pred_region
        %s400 = ssub.s32 %s23, 1
        // Predicated region
        $region65: #{tpu_custom_call.1} parent=63 // pred_check
          %p401 = pneg %p70
        $region66: #{tpu_custom_call.1} parent=63 // pred_check_branch
          %403 = sbr.rel (%p401) target = $region68
        $region67: #{tpu_custom_call.1} parent=63 // pred_region
          %404 = dma.done [#allocation4], 512
        $region68: #{tpu_custom_call.1} parent=63 // pred_fallthru
          _
        // Predicated region
        $region69: #{tpu_custom_call.1} parent=63 // pred_check
          %p405 = pneg %p91
        $region70: #{tpu_custom_call.1} parent=63 // pred_check_branch
          %407 = sbr.rel (%p405) target = $region72
        $region71: #{tpu_custom_call.1} parent=63 // pred_region
          %408 = dma.done [#allocation6], 16
        $region72: #{tpu_custom_call.1} parent=63 // pred_fallthru
          _
        // Predicated region
        $region73: #{tpu_custom_call.1} parent=63 // pred_check
          %p409 = pneg %p133
        $region74: #{tpu_custom_call.1} parent=63 // pred_check_branch
          %411 = sbr.rel (%p409) target = $region76
        $region75: #{tpu_custom_call.1} parent=63 // pred_region
          %412 = dma.done [#allocation6], 16
        $region76: #{tpu_custom_call.1} parent=63 // pred_fallthru
          _
        // Predicated region
        $region77: #{tpu_custom_call.1} parent=63 // pred_check
          %p413 = pneg %p154
        $region78: #{tpu_custom_call.1} parent=63 // pred_check_branch
          %415 = sbr.rel (%p413) target = $region80
        $region79: #{tpu_custom_call.1} parent=63 // pred_region
          %416 = dma.done [#allocation9], 36864
        $region80: #{tpu_custom_call.1} parent=63 // pred_fallthru
          _
        // Predicated region
        $region81: #{tpu_custom_call.1} parent=63 // pred_check
          %p417 = pneg %p175
        $region82: #{tpu_custom_call.1} parent=63 // pred_check_branch
          %419 = sbr.rel (%p417) target = $region84
        $region83: #{tpu_custom_call.1} parent=63 // pred_region
          %420 = dma.done [#allocation9], 32
        $region84: #{tpu_custom_call.1} parent=63 // pred_fallthru
          _
        // Predicated region
        $region85: #{tpu_custom_call.1} parent=63 // pred_check
          %p421 = pneg %p217
        $region86: #{tpu_custom_call.1} parent=63 // pred_check_branch
          %423 = sbr.rel (%p421) target = $region88
        $region87: #{tpu_custom_call.1} parent=63 // pred_region
          %424 = dma.done [#allocation12], 16
        $region88: #{tpu_custom_call.1} parent=63 // pred_fallthru
          _
        %p425 = scmp.lt.s32.totalorder %s28, 1
        %s426 = scalar_select %p425, %s28, 1
        %s427 = smul.addr %s426, 72
        %s428 = smul.addr %s427, 8
        %s429 = scalar_lea.vmem %s0, %s428
        %p430 = pneg %p49
        %p431 = pneg %p46
        %p432 = pneg %p70
        %p433 = pneg %p67
        %p434 = pneg %p91
        %p435 = pneg %p88
        %p436 = pneg %p112
        %p437 = pneg %p109
        %p438 = pneg %p133
        %p439 = pneg %p130
        %p440 = pneg %p154
        %p441 = pneg %p151
        %p442 = pneg %p175
        %p443 = pneg %p172
        %p444 = pneg %p196
        %p445 = pneg %p193
        %p446 = pneg %p217
        %p447 = pneg %p214
        %p448 = pneg %p238
        %p449 = pneg %p235
        %p450 = pneg %p259
        %p451 = pneg %p256
        %p452 = pneg %p285
        %p453 = pneg %p282
        %p454 = scmp.lt.s32.totalorder %s28, 1
        %s455 = scalar_select %p454, %s28, 1
        %s456 = scalar_lea.vmem %s11, %s455
        %p457 = scmp.lt.s32.totalorder %s28, 1
        %s458 = scalar_select %p457, %s28, 1
        %s459 = smul.addr %s458, 72
        %s460 = smul.addr %s459, 8
        %s461 = scalar_lea.vmem %s0, %s460
        %p462 = scmp.lt.s32.totalorder %s28, 1
        %s463 = scalar_select %p462, %s28, 1
        %s464 = scalar_lea.vmem %s11, %s463
        %v465 = vld [vmem:[%s461] sm:$0xff]
        %v466 = vld [vmem:[%s461 + $0x8] sm:$0xff]
        %v467 = vld [vmem:[%s461 + $0x10] sm:$0xff]
        %v468 = vld [vmem:[%s461 + $0x18] sm:$0xff]
        %v469 = vld [vmem:[%s461 + $0x20] sm:$0xff]
        %v470 = vld [vmem:[%s461 + $0x28] sm:$0xff]
        %v471 = vld [vmem:[%s461 + $0x30] sm:$0xff]
        %v472 = vld [vmem:[%s461 + $0x38] sm:$0xff]
        %v473 = vld [vmem:[%s461 + $0x40] sm:$0xff]
        %v474 = vld [vmem:[%s461 + $0x48] sm:$0xff]
        %v475 = vld [vmem:[%s461 + $0x50] sm:$0xff]
        %v476 = vld [vmem:[%s461 + $0x58] sm:$0xff]
        %v477 = vld [vmem:[%s461 + $0x60] sm:$0xff]
        %v478 = vld [vmem:[%s461 + $0x68] sm:$0xff]
        %v479 = vld [vmem:[%s461 + $0x70] sm:$0xff]
        %v480 = vld [vmem:[%s461 + $0x78] sm:$0xff]
        %v481 = vld [vmem:[%s461 + $0x80] sm:$0xff]
        %v482 = vld [vmem:[%s461 + $0x88] sm:$0xff]
        %v483 = vld [vmem:[%s461 + $0x90] sm:$0xff]
        %v484 = vld [vmem:[%s461 + $0x98] sm:$0xff]
        %v485 = vld [vmem:[%s461 + $0xa0] sm:$0xff]
        %v486 = vld [vmem:[%s461 + $0xa8] sm:$0xff]
        %v487 = vld [vmem:[%s461 + $0xb0] sm:$0xff]
        %v488 = vld [vmem:[%s461 + $0xb8] sm:$0xff]
        %v489 = vld [vmem:[%s461 + $0xc0] sm:$0xff]
        %v490 = vld [vmem:[%s461 + $0xc8] sm:$0xff]
        %v491 = vld [vmem:[%s461 + $0xd0] sm:$0xff]
        %v492 = vld [vmem:[%s461 + $0xd8] sm:$0xff]
        %v493 = vld [vmem:[%s461 + $0xe0] sm:$0xff]
        %v494 = vld [vmem:[%s461 + $0xe8] sm:$0xff]
        %v495 = vld [vmem:[%s461 + $0xf0] sm:$0xff]
        %v496 = vld [vmem:[%s461 + $0xf8] sm:$0xff]
        %v497 = vld [vmem:[%s461 + $0x100] sm:$0xff]
        %v498 = vld [vmem:[%s461 + $0x108] sm:$0xff]
        %v499 = vld [vmem:[%s461 + $0x110] sm:$0xff]
        %v500 = vld [vmem:[%s461 + $0x118] sm:$0xff]
        %v501 = vld [vmem:[%s461 + $0x120] sm:$0xff]
        %v502 = vld [vmem:[%s461 + $0x128] sm:$0xff]
        %v503 = vld [vmem:[%s461 + $0x130] sm:$0xff]
        %v504 = vld [vmem:[%s461 + $0x138] sm:$0xff]
        %v505 = vld [vmem:[%s461 + $0x140] sm:$0xff]
        %v506 = vld [vmem:[%s461 + $0x148] sm:$0xff]
        %v507 = vld [vmem:[%s461 + $0x150] sm:$0xff]
        %v508 = vld [vmem:[%s461 + $0x158] sm:$0xff]
        %v509 = vld [vmem:[%s461 + $0x160] sm:$0xff]
        %v510 = vld [vmem:[%s461 + $0x168] sm:$0xff]
        %v511 = vld [vmem:[%s461 + $0x170] sm:$0xff]
        %v512 = vld [vmem:[%s461 + $0x178] sm:$0xff]
        %v513 = vld [vmem:[%s461 + $0x180] sm:$0xff]
        %v514 = vld [vmem:[%s461 + $0x188] sm:$0xff]
        %v515 = vld [vmem:[%s461 + $0x190] sm:$0xff]
        %v516 = vld [vmem:[%s461 + $0x198] sm:$0xff]
        %v517 = vld [vmem:[%s461 + $0x1a0] sm:$0xff]
        %v518 = vld [vmem:[%s461 + $0x1a8] sm:$0xff]
        %v519 = vld [vmem:[%s461 + $0x1b0] sm:$0xff]
        %v520 = vld [vmem:[%s461 + $0x1b8] sm:$0xff]
        %v521 = vld [vmem:[%s461 + $0x1c0] sm:$0xff]
        %v522 = vld [vmem:[%s461 + $0x1c8] sm:$0xff]
        %v523 = vld [vmem:[%s461 + $0x1d0] sm:$0xff]
        %v524 = vld [vmem:[%s461 + $0x1d8] sm:$0xff]
        %v525 = vld [vmem:[%s461 + $0x1e0] sm:$0xff]
        %v526 = vld [vmem:[%s461 + $0x1e8] sm:$0xff]
        %v527 = vld [vmem:[%s461 + $0x1f0] sm:$0xff]
        %v528 = vld [vmem:[%s461 + $0x1f8] sm:$0xff]
        %v529 = vld [vmem:[%s461 + $0x200] sm:$0xff]
        %v530 = vld [vmem:[%s461 + $0x208] sm:$0xff]
        %v531 = vld [vmem:[%s461 + $0x210] sm:$0xff]
        %v532 = vld [vmem:[%s461 + $0x218] sm:$0xff]
        %v533 = vld [vmem:[%s461 + $0x220] sm:$0xff]
        %v534 = vld [vmem:[%s461 + $0x228] sm:$0xff]
        %v535 = vld [vmem:[%s461 + $0x230] sm:$0xff]
        %v536 = vld [vmem:[%s461 + $0x238] sm:$0xff]
        %v537 = vld [vmem:[#allocation3] sm:$0xff]
        %v538 = vld [vmem:[#allocation3 + $0x8] sm:$0xff]
        %v539 = vld [vmem:[#allocation3 + $0x10] sm:$0xff]
        %v540 = vld [vmem:[#allocation3 + $0x18] sm:$0x1]
        %v541 = vld [vmem:[#allocation5] sm:$0x1]
        %v543 = vlaneseq
        %v544 = vshrl.u32 %v543, 7
        %v545 = vsub.s32 0, %v544
        %v546 = vrot.slane %v541, %v545
        %vm548 = vcmask 203776
        %v550 = vsel %vm548, %v465, 0
        %v553 = vsel %vm548, %v466, 0
        %v556 = vsel %vm548, %v467, 0
        %v559 = vsel %vm548, %v468, 0
        %v562 = vsel %vm548, %v469, 0
        %v565 = vsel %vm548, %v470, 0
        %v568 = vsel %vm548, %v471, 0
        %v571 = vsel %vm548, %v472, 0
        %v574 = vsel %vm548, %v473, 0
        %v577 = vsel %vm548, %v474, 0
        %v580 = vsel %vm548, %v475, 0
        %v583 = vsel %vm548, %v476, 0
        %v586 = vsel %vm548, %v477, 0
        %v589 = vsel %vm548, %v478, 0
        %v592 = vsel %vm548, %v479, 0
        %v595 = vsel %vm548, %v480, 0
        %v598 = vsel %vm548, %v481, 0
        %v601 = vsel %vm548, %v482, 0
        %v604 = vsel %vm548, %v483, 0
        %v607 = vsel %vm548, %v484, 0
        %v610 = vsel %vm548, %v485, 0
        %v613 = vsel %vm548, %v486, 0
        %v616 = vsel %vm548, %v487, 0
        %v619 = vsel %vm548, %v488, 0
        %v622 = vsel %vm548, %v489, 0
        %v625 = vsel %vm548, %v490, 0
        %v628 = vsel %vm548, %v491, 0
        %v631 = vsel %vm548, %v492, 0
        %v634 = vsel %vm548, %v493, 0
        %v637 = vsel %vm548, %v494, 0
        %v640 = vsel %vm548, %v495, 0
        %v643 = vsel %vm548, %v496, 0
        %v646 = vsel %vm548, %v497, 0
        %v649 = vsel %vm548, %v498, 0
        %v652 = vsel %vm548, %v499, 0
        %v655 = vsel %vm548, %v500, 0
        %v658 = vsel %vm548, %v501, 0
        %v661 = vsel %vm548, %v502, 0
        %v664 = vsel %vm548, %v503, 0
        %v667 = vsel %vm548, %v504, 0
        %v670 = vsel %vm548, %v505, 0
        %v673 = vsel %vm548, %v506, 0
        %v676 = vsel %vm548, %v507, 0
        %v679 = vsel %vm548, %v508, 0
        %v682 = vsel %vm548, %v509, 0
        %v685 = vsel %vm548, %v510, 0
        %v688 = vsel %vm548, %v511, 0
        %v691 = vsel %vm548, %v512, 0
        %v694 = vsel %vm548, %v513, 0
        %v697 = vsel %vm548, %v514, 0
        %v700 = vsel %vm548, %v515, 0
        %v703 = vsel %vm548, %v516, 0
        %v706 = vsel %vm548, %v517, 0
        %v709 = vsel %vm548, %v518, 0
        %v712 = vsel %vm548, %v519, 0
        %v715 = vsel %vm548, %v520, 0
        %v718 = vsel %vm548, %v521, 0
        %v721 = vsel %vm548, %v522, 0
        %v724 = vsel %vm548, %v523, 0
        %v727 = vsel %vm548, %v524, 0
        %v730 = vsel %vm548, %v525, 0
        %v733 = vsel %vm548, %v526, 0
        %v736 = vsel %vm548, %v527, 0
        %v739 = vsel %vm548, %v528, 0
        %v742 = vsel %vm548, %v529, 0
        %v745 = vsel %vm548, %v530, 0
        %v748 = vsel %vm548, %v531, 0
        %v751 = vsel %vm548, %v532, 0
        %v754 = vsel %vm548, %v533, 0
        %v757 = vsel %vm548, %v534, 0
        %v760 = vsel %vm548, %v535, 0
        %v763 = vsel %vm548, %v536, 0
        %vm765 = vcmask 1040384
        %v767 = vsel %vm765, %v540, 0
        %769 = vmatprep.subr.mxu0 0.0
        %770 = vmatpush1.msra.mxu0 0.0
        %771 = vmatprep.subr.mxu0 0.0
        %772 = vmatpush1.msra.mxu0 0.0
        %773 = vmatprep.subr.mxu0 0.0
        %774 = vmatpush1.msra.mxu0 0.0
        %775 = vmatprep.subr.mxu0 0.0
        %776 = vmatpush1.msra.mxu0 0.0
        %777 = vmatprep.subr.mxu0 0.0
        %778 = vmatpush1.msra.mxu0 0.0
        %779 = vmatprep.subr.mxu0 0.0
        %780 = vmatpush1.msra.mxu0 0.0
        %781 = vmatprep.subr.mxu0 0.0
        %782 = vmatpush1.msra.mxu0 0.0
        %783 = vmatprep.subr.mxu0 0.0
        %784 = vmatpush1.msra.mxu0 0.0
        %785 = vmatprep.subr.mxu0 0.0
        %786 = vmatpush1.msra.mxu0 0.0
        %787 = vmatprep.subr.mxu0 0.0
        %788 = vmatpush1.msra.mxu0 0.0
        %789 = vmatprep.subr.mxu0 0.0
        %790 = vmatpush1.msra.mxu0 0.0
        %791 = vmatprep.subr.mxu0 0.0
        %792 = vmatpush1.msra.mxu0 0.0
        %793 = vmatprep.subr.mxu0 0.0
        %794 = vmatpush1.msra.mxu0 %v767
        %795 = vmatprep.subr.mxu0 0.0
        %796 = vmatpush1.msra.mxu0 %v539
        %797 = vmatprep.subr.mxu0 0.0
        %798 = vmatpush1.msra.mxu0 %v538
        %799 = vmatprep.subr.mxu0 0.0
        %800 = vmatpush1.msra.mxu0 %v537
        %801 = vmatprep.subr.mxu0 0.0
        %802 = vmatpush2.msra.mxu0 0.0
        %803 = vmatprep.subr.mxu0 0.0
        %804 = vmatpush2.msra.mxu0 0.0
        %805 = vmatprep.subr.mxu0 0.0
        %806 = vmatpush2.msra.mxu0 0.0
        %807 = vmatprep.subr.mxu0 0.0
        %808 = vmatpush2.msra.mxu0 0.0
        %809 = vmatprep.subr.mxu0 0.0
        %810 = vmatpush2.msra.mxu0 0.0
        %811 = vmatprep.subr.mxu0 0.0
        %812 = vmatpush2.msra.mxu0 0.0
        %813 = vmatprep.subr.mxu0 0.0
        %814 = vmatpush2.msra.mxu0 0.0
        %815 = vmatprep.subr.mxu0 0.0
        %816 = vmatpush2.msra.mxu0 0.0
        %817 = vmatprep.subr.mxu0 0.0
        %818 = vmatpush2.msra.mxu0 0.0
        %819 = vmatprep.subr.mxu0 0.0
        %820 = vmatpush2.msra.mxu0 0.0
        %821 = vmatprep.subr.mxu0 0.0
        %822 = vmatpush2.msra.mxu0 0.0
        %823 = vmatprep.subr.mxu0 0.0
        %824 = vmatpush2.msra.mxu0 0.0
        %825 = vmatprep.subr.mxu0 0.0
        %826 = vmatpush2.msra.mxu0 0.0
        %827 = vmatprep.subr.mxu0 0.0
        %828 = vmatpush2.msra.mxu0 0.0
        %829 = vmatprep.subr.mxu0 0.0
        %830 = vmatpush2.msra.mxu0 0.0
        %831 = vmatprep.subr.mxu0 0.0
        %832 = vmatpush2.msra.mxu0 0.0
        %833 = vmatprep.mubr.f32.mxu0 0.0
        %834 = vmatmul.mubr.f32.gmra.mxu0 %v550
        %v835 = vpop.f32.mrf.mxu0
        %v836 = vadd.f32 %v546, %v835
        %v837 = vpop.f32.mrf.mxu0
        %838 = vmatprep.mubr.f32.mxu0 0.0
        %839 = vmatmul.mubr.f32.gmra.mxu0 %v553
        %v840 = vpop.f32.mrf.mxu0
        %v841 = vadd.f32 %v546, %v840
        %v842 = vpop.f32.mrf.mxu0
        %843 = vmatprep.mubr.f32.mxu0 0.0
        %844 = vmatmul.mubr.f32.gmra.mxu0 %v556
        %v845 = vpop.f32.mrf.mxu0
        %v846 = vadd.f32 %v546, %v845
        %v847 = vpop.f32.mrf.mxu0
        %848 = vmatprep.mubr.f32.mxu0 0.0
        %849 = vmatmul.mubr.f32.gmra.mxu0 %v559
        %v850 = vpop.f32.mrf.mxu0
        %v851 = vadd.f32 %v546, %v850
        %v852 = vpop.f32.mrf.mxu0
        %853 = vmatprep.mubr.f32.mxu0 0.0
        %854 = vmatmul.mubr.f32.gmra.mxu0 %v562
        %v855 = vpop.f32.mrf.mxu0
        %v856 = vadd.f32 %v546, %v855
        %v857 = vpop.f32.mrf.mxu0
        %858 = vmatprep.mubr.f32.mxu0 0.0
        %859 = vmatmul.mubr.f32.gmra.mxu0 %v565
        %v860 = vpop.f32.mrf.mxu0
        %v861 = vadd.f32 %v546, %v860
        %v862 = vpop.f32.mrf.mxu0
        %863 = vmatprep.mubr.f32.mxu0 0.0
        %864 = vmatmul.mubr.f32.gmra.mxu0 %v568
        %v865 = vpop.f32.mrf.mxu0
        %v866 = vadd.f32 %v546, %v865
        %v867 = vpop.f32.mrf.mxu0
        %868 = vmatprep.mubr.f32.mxu0 0.0
        %869 = vmatmul.mubr.f32.gmra.mxu0 %v571
        %v870 = vpop.f32.mrf.mxu0
        %v871 = vadd.f32 %v546, %v870
        %v872 = vpop.f32.mrf.mxu0
        %873 = vmatprep.mubr.f32.mxu0 0.0
        %874 = vmatmul.mubr.f32.gmra.mxu0 %v574
        %v875 = vpop.f32.mrf.mxu0
        %v876 = vadd.f32 %v546, %v875
        %v877 = vpop.f32.mrf.mxu0
        %878 = vmatprep.mubr.f32.mxu0 0.0
        %879 = vmatmul.mubr.f32.gmra.mxu0 %v577
        %v880 = vpop.f32.mrf.mxu0
        %v881 = vadd.f32 %v546, %v880
        %v882 = vpop.f32.mrf.mxu0
        %883 = vmatprep.mubr.f32.mxu0 0.0
        %884 = vmatmul.mubr.f32.gmra.mxu0 %v580
        %v885 = vpop.f32.mrf.mxu0
        %v886 = vadd.f32 %v546, %v885
        %v887 = vpop.f32.mrf.mxu0
        %888 = vmatprep.mubr.f32.mxu0 0.0
        %889 = vmatmul.mubr.f32.gmra.mxu0 %v583
        %v890 = vpop.f32.mrf.mxu0
        %v891 = vadd.f32 %v546, %v890
        %v892 = vpop.f32.mrf.mxu0
        %893 = vmatprep.mubr.f32.mxu0 0.0
        %894 = vmatmul.mubr.f32.gmra.mxu0 %v586
        %v895 = vpop.f32.mrf.mxu0
        %v896 = vadd.f32 %v546, %v895
        %v897 = vpop.f32.mrf.mxu0
        %898 = vmatprep.mubr.f32.mxu0 0.0
        %899 = vmatmul.mubr.f32.gmra.mxu0 %v589
        %v900 = vpop.f32.mrf.mxu0
        %v901 = vadd.f32 %v546, %v900
        %v902 = vpop.f32.mrf.mxu0
        %903 = vmatprep.mubr.f32.mxu0 0.0
        %904 = vmatmul.mubr.f32.gmra.mxu0 %v592
        %v905 = vpop.f32.mrf.mxu0
        %v906 = vadd.f32 %v546, %v905
        %v907 = vpop.f32.mrf.mxu0
        %908 = vmatprep.mubr.f32.mxu0 0.0
        %909 = vmatmul.mubr.f32.gmra.mxu0 %v595
        %v910 = vpop.f32.mrf.mxu0
        %v911 = vadd.f32 %v546, %v910
        %v912 = vpop.f32.mrf.mxu0
        %913 = vmatprep.mubr.f32.mxu0 0.0
        %914 = vmatmul.mubr.f32.gmra.mxu0 %v598
        %v915 = vpop.f32.mrf.mxu0
        %v916 = vadd.f32 %v546, %v915
        %v917 = vpop.f32.mrf.mxu0
        %918 = vmatprep.mubr.f32.mxu0 0.0
        %919 = vmatmul.mubr.f32.gmra.mxu0 %v601
        %v920 = vpop.f32.mrf.mxu0
        %v921 = vadd.f32 %v546, %v920
        %v922 = vpop.f32.mrf.mxu0
        %923 = vmatprep.mubr.f32.mxu0 0.0
        %924 = vmatmul.mubr.f32.gmra.mxu0 %v604
        %v925 = vpop.f32.mrf.mxu0
        %v926 = vadd.f32 %v546, %v925
        %v927 = vpop.f32.mrf.mxu0
        %928 = vmatprep.mubr.f32.mxu0 0.0
        %929 = vmatmul.mubr.f32.gmra.mxu0 %v607
        %v930 = vpop.f32.mrf.mxu0
        %v931 = vadd.f32 %v546, %v930
        %v932 = vpop.f32.mrf.mxu0
        %933 = vmatprep.mubr.f32.mxu0 0.0
        %934 = vmatmul.mubr.f32.gmra.mxu0 %v610
        %v935 = vpop.f32.mrf.mxu0
        %v936 = vadd.f32 %v546, %v935
        %v937 = vpop.f32.mrf.mxu0
        %938 = vmatprep.mubr.f32.mxu0 0.0
        %939 = vmatmul.mubr.f32.gmra.mxu0 %v613
        %v940 = vpop.f32.mrf.mxu0
        %v941 = vadd.f32 %v546, %v940
        %v942 = vpop.f32.mrf.mxu0
        %943 = vmatprep.mubr.f32.mxu0 0.0
        %944 = vmatmul.mubr.f32.gmra.mxu0 %v616
        %v945 = vpop.f32.mrf.mxu0
        %v946 = vadd.f32 %v546, %v945
        %v947 = vpop.f32.mrf.mxu0
        %948 = vmatprep.mubr.f32.mxu0 0.0
        %949 = vmatmul.mubr.f32.gmra.mxu0 %v619
        %v950 = vpop.f32.mrf.mxu0
        %v951 = vadd.f32 %v546, %v950
        %v952 = vpop.f32.mrf.mxu0
        %953 = vmatprep.mubr.f32.mxu0 0.0
        %954 = vmatmul.mubr.f32.gmra.mxu0 %v622
        %v955 = vpop.f32.mrf.mxu0
        %v956 = vadd.f32 %v546, %v955
        %v957 = vpop.f32.mrf.mxu0
        %958 = vmatprep.mubr.f32.mxu0 0.0
        %959 = vmatmul.mubr.f32.gmra.mxu0 %v625
        %v960 = vpop.f32.mrf.mxu0
        %v961 = vadd.f32 %v546, %v960
        %v962 = vpop.f32.mrf.mxu0
        %963 = vmatprep.mubr.f32.mxu0 0.0
        %964 = vmatmul.mubr.f32.gmra.mxu0 %v628
        %v965 = vpop.f32.mrf.mxu0
        %v966 = vadd.f32 %v546, %v965
        %v967 = vpop.f32.mrf.mxu0
        %968 = vmatprep.mubr.f32.mxu0 0.0
        %969 = vmatmul.mubr.f32.gmra.mxu0 %v631
        %v970 = vpop.f32.mrf.mxu0
        %v971 = vadd.f32 %v546, %v970
        %v972 = vpop.f32.mrf.mxu0
        %973 = vmatprep.mubr.f32.mxu0 0.0
        %974 = vmatmul.mubr.f32.gmra.mxu0 %v634
        %v975 = vpop.f32.mrf.mxu0
        %v976 = vadd.f32 %v546, %v975
        %v977 = vpop.f32.mrf.mxu0
        %978 = vmatprep.mubr.f32.mxu0 0.0
        %979 = vmatmul.mubr.f32.gmra.mxu0 %v637
        %v980 = vpop.f32.mrf.mxu0
        %v981 = vadd.f32 %v546, %v980
        %v982 = vpop.f32.mrf.mxu0
        %983 = vmatprep.mubr.f32.mxu0 0.0
        %984 = vmatmul.mubr.f32.gmra.mxu0 %v640
        %v985 = vpop.f32.mrf.mxu0
        %v986 = vadd.f32 %v546, %v985
        %v987 = vpop.f32.mrf.mxu0
        %988 = vmatprep.mubr.f32.mxu0 0.0
        %989 = vmatmul.mubr.f32.gmra.mxu0 %v643
        %v990 = vpop.f32.mrf.mxu0
        %v991 = vadd.f32 %v546, %v990
        %v992 = vpop.f32.mrf.mxu0
        %993 = vmatprep.mubr.f32.mxu0 0.0
        %994 = vmatmul.mubr.f32.gmra.mxu0 %v646
        %v995 = vpop.f32.mrf.mxu0
        %v996 = vadd.f32 %v546, %v995
        %v997 = vpop.f32.mrf.mxu0
        %998 = vmatprep.mubr.f32.mxu0 0.0
        %999 = vmatmul.mubr.f32.gmra.mxu0 %v649
        %v1000 = vpop.f32.mrf.mxu0
        %v1001 = vadd.f32 %v546, %v1000
        %v1002 = vpop.f32.mrf.mxu0
        %1003 = vmatprep.mubr.f32.mxu0 0.0
        %1004 = vmatmul.mubr.f32.gmra.mxu0 %v652
        %v1005 = vpop.f32.mrf.mxu0
        %v1006 = vadd.f32 %v546, %v1005
        %v1007 = vpop.f32.mrf.mxu0
        %1008 = vmatprep.mubr.f32.mxu0 0.0
        %1009 = vmatmul.mubr.f32.gmra.mxu0 %v655
        %v1010 = vpop.f32.mrf.mxu0
        %v1011 = vadd.f32 %v546, %v1010
        %v1012 = vpop.f32.mrf.mxu0
        %1013 = vmatprep.mubr.f32.mxu0 0.0
        %1014 = vmatmul.mubr.f32.gmra.mxu0 %v658
        %v1015 = vpop.f32.mrf.mxu0
        %v1016 = vadd.f32 %v546, %v1015
        %v1017 = vpop.f32.mrf.mxu0
        %1018 = vmatprep.mubr.f32.mxu0 0.0
        %1019 = vmatmul.mubr.f32.gmra.mxu0 %v661
        %v1020 = vpop.f32.mrf.mxu0
        %v1021 = vadd.f32 %v546, %v1020
        %v1022 = vpop.f32.mrf.mxu0
        %1023 = vmatprep.mubr.f32.mxu0 0.0
        %1024 = vmatmul.mubr.f32.gmra.mxu0 %v664
        %v1025 = vpop.f32.mrf.mxu0
        %v1026 = vadd.f32 %v546, %v1025
        %v1027 = vpop.f32.mrf.mxu0
        %1028 = vmatprep.mubr.f32.mxu0 0.0
        %1029 = vmatmul.mubr.f32.gmra.mxu0 %v667
        %v1030 = vpop.f32.mrf.mxu0
        %v1031 = vadd.f32 %v546, %v1030
        %v1032 = vpop.f32.mrf.mxu0
        %1033 = vmatprep.mubr.f32.mxu0 0.0
        %1034 = vmatmul.mubr.f32.gmra.mxu0 %v670
        %v1035 = vpop.f32.mrf.mxu0
        %v1036 = vadd.f32 %v546, %v1035
        %v1037 = vpop.f32.mrf.mxu0
        %1038 = vmatprep.mubr.f32.mxu0 0.0
        %1039 = vmatmul.mubr.f32.gmra.mxu0 %v673
        %v1040 = vpop.f32.mrf.mxu0
        %v1041 = vadd.f32 %v546, %v1040
        %v1042 = vpop.f32.mrf.mxu0
        %1043 = vmatprep.mubr.f32.mxu0 0.0
        %1044 = vmatmul.mubr.f32.gmra.mxu0 %v676
        %v1045 = vpop.f32.mrf.mxu0
        %v1046 = vadd.f32 %v546, %v1045
        %v1047 = vpop.f32.mrf.mxu0
        %1048 = vmatprep.mubr.f32.mxu0 0.0
        %1049 = vmatmul.mubr.f32.gmra.mxu0 %v679
        %v1050 = vpop.f32.mrf.mxu0
        %v1051 = vadd.f32 %v546, %v1050
        %v1052 = vpop.f32.mrf.mxu0
        %1053 = vmatprep.mubr.f32.mxu0 0.0
        %1054 = vmatmul.mubr.f32.gmra.mxu0 %v682
        %v1055 = vpop.f32.mrf.mxu0
        %v1056 = vadd.f32 %v546, %v1055
        %v1057 = vpop.f32.mrf.mxu0
        %1058 = vmatprep.mubr.f32.mxu0 0.0
        %1059 = vmatmul.mubr.f32.gmra.mxu0 %v685
        %v1060 = vpop.f32.mrf.mxu0
        %v1061 = vadd.f32 %v546, %v1060
        %v1062 = vpop.f32.mrf.mxu0
        %1063 = vmatprep.mubr.f32.mxu0 0.0
        %1064 = vmatmul.mubr.f32.gmra.mxu0 %v688
        %v1065 = vpop.f32.mrf.mxu0
        %v1066 = vadd.f32 %v546, %v1065
        %v1067 = vpop.f32.mrf.mxu0
        %1068 = vmatprep.mubr.f32.mxu0 0.0
        %1069 = vmatmul.mubr.f32.gmra.mxu0 %v691
        %v1070 = vpop.f32.mrf.mxu0
        %v1071 = vadd.f32 %v546, %v1070
        %v1072 = vpop.f32.mrf.mxu0
        %1073 = vmatprep.mubr.f32.mxu0 0.0
        %1074 = vmatmul.mubr.f32.gmra.mxu0 %v694
        %v1075 = vpop.f32.mrf.mxu0
        %v1076 = vadd.f32 %v546, %v1075
        %v1077 = vpop.f32.mrf.mxu0
        %1078 = vmatprep.mubr.f32.mxu0 0.0
        %1079 = vmatmul.mubr.f32.gmra.mxu0 %v697
        %v1080 = vpop.f32.mrf.mxu0
        %v1081 = vadd.f32 %v546, %v1080
        %v1082 = vpop.f32.mrf.mxu0
        %1083 = vmatprep.mubr.f32.mxu0 0.0
        %1084 = vmatmul.mubr.f32.gmra.mxu0 %v700
        %v1085 = vpop.f32.mrf.mxu0
        %v1086 = vadd.f32 %v546, %v1085
        %v1087 = vpop.f32.mrf.mxu0
        %1088 = vmatprep.mubr.f32.mxu0 0.0
        %1089 = vmatmul.mubr.f32.gmra.mxu0 %v703
        %v1090 = vpop.f32.mrf.mxu0
        %v1091 = vadd.f32 %v546, %v1090
        %v1092 = vpop.f32.mrf.mxu0
        %1093 = vmatprep.mubr.f32.mxu0 0.0
        %1094 = vmatmul.mubr.f32.gmra.mxu0 %v706
        %v1095 = vpop.f32.mrf.mxu0
        %v1096 = vadd.f32 %v546, %v1095
        %v1097 = vpop.f32.mrf.mxu0
        %1098 = vmatprep.mubr.f32.mxu0 0.0
        %1099 = vmatmul.mubr.f32.gmra.mxu0 %v709
        %v1100 = vpop.f32.mrf.mxu0
        %v1101 = vadd.f32 %v546, %v1100
        %v1102 = vpop.f32.mrf.mxu0
        %1103 = vmatprep.mubr.f32.mxu0 0.0
        %1104 = vmatmul.mubr.f32.gmra.mxu0 %v712
        %v1105 = vpop.f32.mrf.mxu0
        %v1106 = vadd.f32 %v546, %v1105
        %v1107 = vpop.f32.mrf.mxu0
        %1108 = vmatprep.mubr.f32.mxu0 0.0
        %1109 = vmatmul.mubr.f32.gmra.mxu0 %v715
        %v1110 = vpop.f32.mrf.mxu0
        %v1111 = vadd.f32 %v546, %v1110
        %v1112 = vpop.f32.mrf.mxu0
        %1113 = vmatprep.mubr.f32.mxu0 0.0
        %1114 = vmatmul.mubr.f32.gmra.mxu0 %v718
        %v1115 = vpop.f32.mrf.mxu0
        %v1116 = vadd.f32 %v546, %v1115
        %v1117 = vpop.f32.mrf.mxu0
        %1118 = vmatprep.mubr.f32.mxu0 0.0
        %1119 = vmatmul.mubr.f32.gmra.mxu0 %v721
        %v1120 = vpop.f32.mrf.mxu0
        %v1121 = vadd.f32 %v546, %v1120
        %v1122 = vpop.f32.mrf.mxu0
        %1123 = vmatprep.mubr.f32.mxu0 0.0
        %1124 = vmatmul.mubr.f32.gmra.mxu0 %v724
        %v1125 = vpop.f32.mrf.mxu0
        %v1126 = vadd.f32 %v546, %v1125
        %v1127 = vpop.f32.mrf.mxu0
        %1128 = vmatprep.mubr.f32.mxu0 0.0
        %1129 = vmatmul.mubr.f32.gmra.mxu0 %v727
        %v1130 = vpop.f32.mrf.mxu0
        %v1131 = vadd.f32 %v546, %v1130
        %v1132 = vpop.f32.mrf.mxu0
        %1133 = vmatprep.mubr.f32.mxu0 0.0
        %1134 = vmatmul.mubr.f32.gmra.mxu0 %v730
        %v1135 = vpop.f32.mrf.mxu0
        %v1136 = vadd.f32 %v546, %v1135
        %v1137 = vpop.f32.mrf.mxu0
        %1138 = vmatprep.mubr.f32.mxu0 0.0
        %1139 = vmatmul.mubr.f32.gmra.mxu0 %v733
        %v1140 = vpop.f32.mrf.mxu0
        %v1141 = vadd.f32 %v546, %v1140
        %v1142 = vpop.f32.mrf.mxu0
        %1143 = vmatprep.mubr.f32.mxu0 0.0
        %1144 = vmatmul.mubr.f32.gmra.mxu0 %v736
        %v1145 = vpop.f32.mrf.mxu0
        %v1146 = vadd.f32 %v546, %v1145
        %v1147 = vpop.f32.mrf.mxu0
        %1148 = vmatprep.mubr.f32.mxu0 0.0
        %1149 = vmatmul.mubr.f32.gmra.mxu0 %v739
        %v1150 = vpop.f32.mrf.mxu0
        %v1151 = vadd.f32 %v546, %v1150
        %v1152 = vpop.f32.mrf.mxu0
        %1153 = vmatprep.mubr.f32.mxu0 0.0
        %1154 = vmatmul.mubr.f32.gmra.mxu0 %v742
        %v1155 = vpop.f32.mrf.mxu0
        %v1156 = vadd.f32 %v546, %v1155
        %v1157 = vpop.f32.mrf.mxu0
        %1158 = vmatprep.mubr.f32.mxu0 0.0
        %1159 = vmatmul.mubr.f32.gmra.mxu0 %v745
        %v1160 = vpop.f32.mrf.mxu0
        %v1161 = vadd.f32 %v546, %v1160
        %v1162 = vpop.f32.mrf.mxu0
        %1163 = vmatprep.mubr.f32.mxu0 0.0
        %1164 = vmatmul.mubr.f32.gmra.mxu0 %v748
        %v1165 = vpop.f32.mrf.mxu0
        %v1166 = vadd.f32 %v546, %v1165
        %v1167 = vpop.f32.mrf.mxu0
        %1168 = vmatprep.mubr.f32.mxu0 0.0
        %1169 = vmatmul.mubr.f32.gmra.mxu0 %v751
        %v1170 = vpop.f32.mrf.mxu0
        %v1171 = vadd.f32 %v546, %v1170
        %v1172 = vpop.f32.mrf.mxu0
        %1173 = vmatprep.mubr.f32.mxu0 0.0
        %1174 = vmatmul.mubr.f32.gmra.mxu0 %v754
        %v1175 = vpop.f32.mrf.mxu0
        %v1176 = vadd.f32 %v546, %v1175
        %v1177 = vpop.f32.mrf.mxu0
        %1178 = vmatprep.mubr.f32.mxu0 0.0
        %1179 = vmatmul.mubr.f32.gmra.mxu0 %v757
        %v1180 = vpop.f32.mrf.mxu0
        %v1181 = vadd.f32 %v546, %v1180
        %v1182 = vpop.f32.mrf.mxu0
        %1183 = vmatprep.mubr.f32.mxu0 0.0
        %1184 = vmatmul.mubr.f32.gmra.mxu0 %v760
        %v1185 = vpop.f32.mrf.mxu0
        %v1186 = vadd.f32 %v546, %v1185
        %v1187 = vpop.f32.mrf.mxu0
        %1188 = vmatprep.mubr.f32.mxu0 0.0
        %1189 = vmatmul.mubr.f32.gmra.mxu0 %v763
        %v1190 = vpop.f32.mrf.mxu0
        %v1191 = vadd.f32 %v546, %v1190
        %v1192 = vpop.f32.mrf.mxu0
        %1193 = vdwg.mxu0
        %vm1194 = vcmp.gt.f32.partialorder %v836, 0.0
        %vm1195 = vcmp.gt.f32.partialorder %v841, 0.0
        %vm1196 = vcmp.gt.f32.partialorder %v846, 0.0
        %vm1197 = vcmp.gt.f32.partialorder %v851, 0.0
        %vm1198 = vcmp.gt.f32.partialorder %v856, 0.0
        %vm1199 = vcmp.gt.f32.partialorder %v861, 0.0
        %vm1200 = vcmp.gt.f32.partialorder %v866, 0.0
        %vm1201 = vcmp.gt.f32.partialorder %v871, 0.0
        %vm1202 = vcmp.gt.f32.partialorder %v876, 0.0
        %vm1203 = vcmp.gt.f32.partialorder %v881, 0.0
        %vm1204 = vcmp.gt.f32.partialorder %v886, 0.0
        %vm1205 = vcmp.gt.f32.partialorder %v891, 0.0
        %vm1206 = vcmp.gt.f32.partialorder %v896, 0.0
        %vm1207 = vcmp.gt.f32.partialorder %v901, 0.0
        %vm1208 = vcmp.gt.f32.partialorder %v906, 0.0
        %vm1209 = vcmp.gt.f32.partialorder %v911, 0.0
        %vm1210 = vcmp.gt.f32.partialorder %v916, 0.0
        %vm1211 = vcmp.gt.f32.partialorder %v921, 0.0
        %vm1212 = vcmp.gt.f32.partialorder %v926, 0.0
        %vm1213 = vcmp.gt.f32.partialorder %v931, 0.0
        %vm1214 = vcmp.gt.f32.partialorder %v936, 0.0
        %vm1215 = vcmp.gt.f32.partialorder %v941, 0.0
        %vm1216 = vcmp.gt.f32.partialorder %v946, 0.0
        %vm1217 = vcmp.gt.f32.partialorder %v951, 0.0
        %vm1218 = vcmp.gt.f32.partialorder %v956, 0.0
        %vm1219 = vcmp.gt.f32.partialorder %v961, 0.0
        %vm1220 = vcmp.gt.f32.partialorder %v966, 0.0
        %vm1221 = vcmp.gt.f32.partialorder %v971, 0.0
        %vm1222 = vcmp.gt.f32.partialorder %v976, 0.0
        %vm1223 = vcmp.gt.f32.partialorder %v981, 0.0
        %vm1224 = vcmp.gt.f32.partialorder %v986, 0.0
        %vm1225 = vcmp.gt.f32.partialorder %v991, 0.0
        %vm1226 = vcmp.gt.f32.partialorder %v996, 0.0
        %vm1227 = vcmp.gt.f32.partialorder %v1001, 0.0
        %vm1228 = vcmp.gt.f32.partialorder %v1006, 0.0
        %vm1229 = vcmp.gt.f32.partialorder %v1011, 0.0
        %vm1230 = vcmp.gt.f32.partialorder %v1016, 0.0
        %vm1231 = vcmp.gt.f32.partialorder %v1021, 0.0
        %vm1232 = vcmp.gt.f32.partialorder %v1026, 0.0
        %vm1233 = vcmp.gt.f32.partialorder %v1031, 0.0
        %vm1234 = vcmp.gt.f32.partialorder %v1036, 0.0
        %vm1235 = vcmp.gt.f32.partialorder %v1041, 0.0
        %vm1236 = vcmp.gt.f32.partialorder %v1046, 0.0
        %vm1237 = vcmp.gt.f32.partialorder %v1051, 0.0
        %vm1238 = vcmp.gt.f32.partialorder %v1056, 0.0
        %vm1239 = vcmp.gt.f32.partialorder %v1061, 0.0
        %vm1240 = vcmp.gt.f32.partialorder %v1066, 0.0
        %vm1241 = vcmp.gt.f32.partialorder %v1071, 0.0
        %vm1242 = vcmp.gt.f32.partialorder %v1076, 0.0
        %vm1243 = vcmp.gt.f32.partialorder %v1081, 0.0
        %vm1244 = vcmp.gt.f32.partialorder %v1086, 0.0
        %vm1245 = vcmp.gt.f32.partialorder %v1091, 0.0
        %vm1246 = vcmp.gt.f32.partialorder %v1096, 0.0
        %vm1247 = vcmp.gt.f32.partialorder %v1101, 0.0
        %vm1248 = vcmp.gt.f32.partialorder %v1106, 0.0
        %vm1249 = vcmp.gt.f32.partialorder %v1111, 0.0
        %vm1250 = vcmp.gt.f32.partialorder %v1116, 0.0
        %vm1251 = vcmp.gt.f32.partialorder %v1121, 0.0
        %vm1252 = vcmp.gt.f32.partialorder %v1126, 0.0
        %vm1253 = vcmp.gt.f32.partialorder %v1131, 0.0
        %vm1254 = vcmp.gt.f32.partialorder %v1136, 0.0
        %vm1255 = vcmp.gt.f32.partialorder %v1141, 0.0
        %vm1256 = vcmp.gt.f32.partialorder %v1146, 0.0
        %vm1257 = vcmp.gt.f32.partialorder %v1151, 0.0
        %vm1258 = vcmp.gt.f32.partialorder %v1156, 0.0
        %vm1259 = vcmp.gt.f32.partialorder %v1161, 0.0
        %vm1260 = vcmp.gt.f32.partialorder %v1166, 0.0
        %vm1261 = vcmp.gt.f32.partialorder %v1171, 0.0
        %vm1262 = vcmp.gt.f32.partialorder %v1176, 0.0
        %vm1263 = vcmp.gt.f32.partialorder %v1181, 0.0
        %vm1264 = vcmp.gt.f32.partialorder %v1186, 0.0
        %vm1265 = vcmp.gt.f32.partialorder %v1191, 0.0
        %v1266 = vmin.f32 %v836, 0.0
        %v1267 = vmin.f32 %v841, 0.0
        %v1268 = vmin.f32 %v846, 0.0
        %v1269 = vmin.f32 %v851, 0.0
        %v1270 = vmin.f32 %v856, 0.0
        %v1271 = vmin.f32 %v861, 0.0
        %v1272 = vmin.f32 %v866, 0.0
        %v1273 = vmin.f32 %v871, 0.0
        %v1274 = vmin.f32 %v876, 0.0
        %v1275 = vmin.f32 %v881, 0.0
        %v1276 = vmin.f32 %v886, 0.0
        %v1277 = vmin.f32 %v891, 0.0
        %v1278 = vmin.f32 %v896, 0.0
        %v1279 = vmin.f32 %v901, 0.0
        %v1280 = vmin.f32 %v906, 0.0
        %v1281 = vmin.f32 %v911, 0.0
        %v1282 = vmin.f32 %v916, 0.0
        %v1283 = vmin.f32 %v921, 0.0
        %v1284 = vmin.f32 %v926, 0.0
        %v1285 = vmin.f32 %v931, 0.0
        %v1286 = vmin.f32 %v936, 0.0
        %v1287 = vmin.f32 %v941, 0.0
        %v1288 = vmin.f32 %v946, 0.0
        %v1289 = vmin.f32 %v951, 0.0
        %v1290 = vmin.f32 %v956, 0.0
        %v1291 = vmin.f32 %v961, 0.0
        %v1292 = vmin.f32 %v966, 0.0
        %v1293 = vmin.f32 %v971, 0.0
        %v1294 = vmin.f32 %v976, 0.0
        %v1295 = vmin.f32 %v981, 0.0
        %v1296 = vmin.f32 %v986, 0.0
        %v1297 = vmin.f32 %v991, 0.0
        %v1298 = vmin.f32 %v996, 0.0
        %v1299 = vmin.f32 %v1001, 0.0
        %v1300 = vmin.f32 %v1006, 0.0
        %v1301 = vmin.f32 %v1011, 0.0
        %v1302 = vmin.f32 %v1016, 0.0
        %v1303 = vmin.f32 %v1021, 0.0
        %v1304 = vmin.f32 %v1026, 0.0
        %v1305 = vmin.f32 %v1031, 0.0
        %v1306 = vmin.f32 %v1036, 0.0
        %v1307 = vmin.f32 %v1041, 0.0
        %v1308 = vmin.f32 %v1046, 0.0
        %v1309 = vmin.f32 %v1051, 0.0
        %v1310 = vmin.f32 %v1056, 0.0
        %v1311 = vmin.f32 %v1061, 0.0
        %v1312 = vmin.f32 %v1066, 0.0
        %v1313 = vmin.f32 %v1071, 0.0
        %v1314 = vmin.f32 %v1076, 0.0
        %v1315 = vmin.f32 %v1081, 0.0
        %v1316 = vmin.f32 %v1086, 0.0
        %v1317 = vmin.f32 %v1091, 0.0
        %v1318 = vmin.f32 %v1096, 0.0
        %v1319 = vmin.f32 %v1101, 0.0
        %v1320 = vmin.f32 %v1106, 0.0
        %v1321 = vmin.f32 %v1111, 0.0
        %v1322 = vmin.f32 %v1116, 0.0
        %v1323 = vmin.f32 %v1121, 0.0
        %v1324 = vmin.f32 %v1126, 0.0
        %v1325 = vmin.f32 %v1131, 0.0
        %v1326 = vmin.f32 %v1136, 0.0
        %v1327 = vmin.f32 %v1141, 0.0
        %v1328 = vmin.f32 %v1146, 0.0
        %v1329 = vmin.f32 %v1151, 0.0
        %v1330 = vmin.f32 %v1156, 0.0
        %v1331 = vmin.f32 %v1161, 0.0
        %v1332 = vmin.f32 %v1166, 0.0
        %v1333 = vmin.f32 %v1171, 0.0
        %v1334 = vmin.f32 %v1176, 0.0
        %v1335 = vmin.f32 %v1181, 0.0
        %v1336 = vmin.f32 %v1186, 0.0
        %v1337 = vmin.f32 %v1191, 0.0
        %v1338 = vmul.f32 %v1266, 1.442695
        %v1339 = vpow.pop %v1338
        %v1340 = vmul.f32 %v1267, 1.442695
        %v1341 = vpow.pop %v1340
        %v1342 = vmul.f32 %v1268, 1.442695
        %v1343 = vpow.pop %v1342
        %v1344 = vmul.f32 %v1269, 1.442695
        %v1345 = vpow.pop %v1344
        %v1346 = vmul.f32 %v1270, 1.442695
        %v1347 = vpow.pop %v1346
        %v1348 = vmul.f32 %v1271, 1.442695
        %v1349 = vpow.pop %v1348
        %v1350 = vmul.f32 %v1272, 1.442695
        %v1351 = vpow.pop %v1350
        %v1352 = vmul.f32 %v1273, 1.442695
        %v1353 = vpow.pop %v1352
        %v1354 = vmul.f32 %v1274, 1.442695
        %v1355 = vpow.pop %v1354
        %v1356 = vmul.f32 %v1275, 1.442695
        %v1357 = vpow.pop %v1356
        %v1358 = vmul.f32 %v1276, 1.442695
        %v1359 = vpow.pop %v1358
        %v1360 = vmul.f32 %v1277, 1.442695
        %v1361 = vpow.pop %v1360
        %v1362 = vmul.f32 %v1278, 1.442695
        %v1363 = vpow.pop %v1362
        %v1364 = vmul.f32 %v1279, 1.442695
        %v1365 = vpow.pop %v1364
        %v1366 = vmul.f32 %v1280, 1.442695
        %v1367 = vpow.pop %v1366
        %v1368 = vmul.f32 %v1281, 1.442695
        %v1369 = vpow.pop %v1368
        %v1370 = vmul.f32 %v1282, 1.442695
        %v1371 = vpow.pop %v1370
        %v1372 = vmul.f32 %v1283, 1.442695
        %v1373 = vpow.pop %v1372
        %v1374 = vmul.f32 %v1284, 1.442695
        %v1375 = vpow.pop %v1374
        %v1376 = vmul.f32 %v1285, 1.442695
        %v1377 = vpow.pop %v1376
        %v1378 = vmul.f32 %v1286, 1.442695
        %v1379 = vpow.pop %v1378
        %v1380 = vmul.f32 %v1287, 1.442695
        %v1381 = vpow.pop %v1380
        %v1382 = vmul.f32 %v1288, 1.442695
        %v1383 = vpow.pop %v1382
        %v1384 = vmul.f32 %v1289, 1.442695
        %v1385 = vpow.pop %v1384
        %v1386 = vmul.f32 %v1290, 1.442695
        %v1387 = vpow.pop %v1386
        %v1388 = vmul.f32 %v1291, 1.442695
        %v1389 = vpow.pop %v1388
        %v1390 = vmul.f32 %v1292, 1.442695
        %v1391 = vpow.pop %v1390
        %v1392 = vmul.f32 %v1293, 1.442695
        %v1393 = vpow.pop %v1392
        %v1394 = vmul.f32 %v1294, 1.442695
        %v1395 = vpow.pop %v1394
        %v1396 = vmul.f32 %v1295, 1.442695
        %v1397 = vpow.pop %v1396
        %v1398 = vmul.f32 %v1296, 1.442695
        %v1399 = vpow.pop %v1398
        %v1400 = vmul.f32 %v1297, 1.442695
        %v1401 = vpow.pop %v1400
        %v1402 = vmul.f32 %v1298, 1.442695
        %v1403 = vpow.pop %v1402
        %v1404 = vmul.f32 %v1299, 1.442695
        %v1405 = vpow.pop %v1404
        %v1406 = vmul.f32 %v1300, 1.442695
        %v1407 = vpow.pop %v1406
        %v1408 = vmul.f32 %v1301, 1.442695
        %v1409 = vpow.pop %v1408
        %v1410 = vmul.f32 %v1302, 1.442695
        %v1411 = vpow.pop %v1410
        %v1412 = vmul.f32 %v1303, 1.442695
        %v1413 = vpow.pop %v1412
        %v1414 = vmul.f32 %v1304, 1.442695
        %v1415 = vpow.pop %v1414
        %v1416 = vmul.f32 %v1305, 1.442695
        %v1417 = vpow.pop %v1416
        %v1418 = vmul.f32 %v1306, 1.442695
        %v1419 = vpow.pop %v1418
        %v1420 = vmul.f32 %v1307, 1.442695
        %v1421 = vpow.pop %v1420
        %v1422 = vmul.f32 %v1308, 1.442695
        %v1423 = vpow.pop %v1422
        %v1424 = vmul.f32 %v1309, 1.442695
        %v1425 = vpow.pop %v1424
        %v1426 = vmul.f32 %v1310, 1.442695
        %v1427 = vpow.pop %v1426
        %v1428 = vmul.f32 %v1311, 1.442695
        %v1429 = vpow.pop %v1428
        %v1430 = vmul.f32 %v1312, 1.442695
        %v1431 = vpow.pop %v1430
        %v1432 = vmul.f32 %v1313, 1.442695
        %v1433 = vpow.pop %v1432
        %v1434 = vmul.f32 %v1314, 1.442695
        %v1435 = vpow.pop %v1434
        %v1436 = vmul.f32 %v1315, 1.442695
        %v1437 = vpow.pop %v1436
        %v1438 = vmul.f32 %v1316, 1.442695
        %v1439 = vpow.pop %v1438
        %v1440 = vmul.f32 %v1317, 1.442695
        %v1441 = vpow.pop %v1440
        %v1442 = vmul.f32 %v1318, 1.442695
        %v1443 = vpow.pop %v1442
        %v1444 = vmul.f32 %v1319, 1.442695
        %v1445 = vpow.pop %v1444
        %v1446 = vmul.f32 %v1320, 1.442695
        %v1447 = vpow.pop %v1446
        %v1448 = vmul.f32 %v1321, 1.442695
        %v1449 = vpow.pop %v1448
        %v1450 = vmul.f32 %v1322, 1.442695
        %v1451 = vpow.pop %v1450
        %v1452 = vmul.f32 %v1323, 1.442695
        %v1453 = vpow.pop %v1452
        %v1454 = vmul.f32 %v1324, 1.442695
        %v1455 = vpow.pop %v1454
        %v1456 = vmul.f32 %v1325, 1.442695
        %v1457 = vpow.pop %v1456
        %v1458 = vmul.f32 %v1326, 1.442695
        %v1459 = vpow.pop %v1458
        %v1460 = vmul.f32 %v1327, 1.442695
        %v1461 = vpow.pop %v1460
        %v1462 = vmul.f32 %v1328, 1.442695
        %v1463 = vpow.pop %v1462
        %v1464 = vmul.f32 %v1329, 1.442695
        %v1465 = vpow.pop %v1464
        %v1466 = vmul.f32 %v1330, 1.442695
        %v1467 = vpow.pop %v1466
        %v1468 = vmul.f32 %v1331, 1.442695
        %v1469 = vpow.pop %v1468
        %v1470 = vmul.f32 %v1332, 1.442695
        %v1471 = vpow.pop %v1470
        %v1472 = vmul.f32 %v1333, 1.442695
        %v1473 = vpow.pop %v1472
        %v1474 = vmul.f32 %v1334, 1.442695
        %v1475 = vpow.pop %v1474
        %v1476 = vmul.f32 %v1335, 1.442695
        %v1477 = vpow.pop %v1476
        %v1478 = vmul.f32 %v1336, 1.442695
        %v1479 = vpow.pop %v1478
        %v1480 = vmul.f32 %v1337, 1.442695
        %v1481 = vpow.pop %v1480
        %v1482 = vsub.f32 %v1339, 1.0
        %v1483 = vsub.f32 %v1341, 1.0
        %v1484 = vsub.f32 %v1343, 1.0
        %v1485 = vsub.f32 %v1345, 1.0
        %v1486 = vsub.f32 %v1347, 1.0
        %v1487 = vsub.f32 %v1349, 1.0
        %v1488 = vsub.f32 %v1351, 1.0
        %v1489 = vsub.f32 %v1353, 1.0
        %v1490 = vsub.f32 %v1355, 1.0
        %v1491 = vsub.f32 %v1357, 1.0
        %v1492 = vsub.f32 %v1359, 1.0
        %v1493 = vsub.f32 %v1361, 1.0
        %v1494 = vsub.f32 %v1363, 1.0
        %v1495 = vsub.f32 %v1365, 1.0
        %v1496 = vsub.f32 %v1367, 1.0
        %v1497 = vsub.f32 %v1369, 1.0
        %v1498 = vsub.f32 %v1371, 1.0
        %v1499 = vsub.f32 %v1373, 1.0
        %v1500 = vsub.f32 %v1375, 1.0
        %v1501 = vsub.f32 %v1377, 1.0
        %v1502 = vsub.f32 %v1379, 1.0
        %v1503 = vsub.f32 %v1381, 1.0
        %v1504 = vsub.f32 %v1383, 1.0
        %v1505 = vsub.f32 %v1385, 1.0
        %v1506 = vsub.f32 %v1387, 1.0
        %v1507 = vsub.f32 %v1389, 1.0
        %v1508 = vsub.f32 %v1391, 1.0
        %v1509 = vsub.f32 %v1393, 1.0
        %v1510 = vsub.f32 %v1395, 1.0
        %v1511 = vsub.f32 %v1397, 1.0
        %v1512 = vsub.f32 %v1399, 1.0
        %v1513 = vsub.f32 %v1401, 1.0
        %v1514 = vsub.f32 %v1403, 1.0
        %v1515 = vsub.f32 %v1405, 1.0
        %v1516 = vsub.f32 %v1407, 1.0
        %v1517 = vsub.f32 %v1409, 1.0
        %v1518 = vsub.f32 %v1411, 1.0
        %v1519 = vsub.f32 %v1413, 1.0
        %v1520 = vsub.f32 %v1415, 1.0
        %v1521 = vsub.f32 %v1417, 1.0
        %v1522 = vsub.f32 %v1419, 1.0
        %v1523 = vsub.f32 %v1421, 1.0
        %v1524 = vsub.f32 %v1423, 1.0
        %v1525 = vsub.f32 %v1425, 1.0
        %v1526 = vsub.f32 %v1427, 1.0
        %v1527 = vsub.f32 %v1429, 1.0
        %v1528 = vsub.f32 %v1431, 1.0
        %v1529 = vsub.f32 %v1433, 1.0
        %v1530 = vsub.f32 %v1435, 1.0
        %v1531 = vsub.f32 %v1437, 1.0
        %v1532 = vsub.f32 %v1439, 1.0
        %v1533 = vsub.f32 %v1441, 1.0
        %v1534 = vsub.f32 %v1443, 1.0
        %v1535 = vsub.f32 %v1445, 1.0
        %v1536 = vsub.f32 %v1447, 1.0
        %v1537 = vsub.f32 %v1449, 1.0
        %v1538 = vsub.f32 %v1451, 1.0
        %v1539 = vsub.f32 %v1453, 1.0
        %v1540 = vsub.f32 %v1455, 1.0
        %v1541 = vsub.f32 %v1457, 1.0
        %v1542 = vsub.f32 %v1459, 1.0
        %v1543 = vsub.f32 %v1461, 1.0
        %v1544 = vsub.f32 %v1463, 1.0
        %v1545 = vsub.f32 %v1465, 1.0
        %v1546 = vsub.f32 %v1467, 1.0
        %v1547 = vsub.f32 %v1469, 1.0
        %v1548 = vsub.f32 %v1471, 1.0
        %v1549 = vsub.f32 %v1473, 1.0
        %v1550 = vsub.f32 %v1475, 1.0
        %v1551 = vsub.f32 %v1477, 1.0
        %v1552 = vsub.f32 %v1479, 1.0
        %v1553 = vsub.f32 %v1481, 1.0
        %v1554 = vsel %vm1194, %v836, %v1482
        %v1555 = vsel %vm1195, %v841, %v1483
        %v1556 = vsel %vm1196, %v846, %v1484
        %v1557 = vsel %vm1197, %v851, %v1485
        %v1558 = vsel %vm1198, %v856, %v1486
        %v1559 = vsel %vm1199, %v861, %v1487
        %v1560 = vsel %vm1200, %v866, %v1488
        %v1561 = vsel %vm1201, %v871, %v1489
        %v1562 = vsel %vm1202, %v876, %v1490
        %v1563 = vsel %vm1203, %v881, %v1491
        %v1564 = vsel %vm1204, %v886, %v1492
        %v1565 = vsel %vm1205, %v891, %v1493
        %v1566 = vsel %vm1206, %v896, %v1494
        %v1567 = vsel %vm1207, %v901, %v1495
        %v1568 = vsel %vm1208, %v906, %v1496
        %v1569 = vsel %vm1209, %v911, %v1497
        %v1570 = vsel %vm1210, %v916, %v1498
        %v1571 = vsel %vm1211, %v921, %v1499
        %v1572 = vsel %vm1212, %v926, %v1500
        %v1573 = vsel %vm1213, %v931, %v1501
        %v1574 = vsel %vm1214, %v936, %v1502
        %v1575 = vsel %vm1215, %v941, %v1503
        %v1576 = vsel %vm1216, %v946, %v1504
        %v1577 = vsel %vm1217, %v951, %v1505
        %v1578 = vsel %vm1218, %v956, %v1506
        %v1579 = vsel %vm1219, %v961, %v1507
        %v1580 = vsel %vm1220, %v966, %v1508
        %v1581 = vsel %vm1221, %v971, %v1509
        %v1582 = vsel %vm1222, %v976, %v1510
        %v1583 = vsel %vm1223, %v981, %v1511
        %v1584 = vsel %vm1224, %v986, %v1512
        %v1585 = vsel %vm1225, %v991, %v1513
        %v1586 = vsel %vm1226, %v996, %v1514
        %v1587 = vsel %vm1227, %v1001, %v1515
        %v1588 = vsel %vm1228, %v1006, %v1516
        %v1589 = vsel %vm1229, %v1011, %v1517
        %v1590 = vsel %vm1230, %v1016, %v1518
        %v1591 = vsel %vm1231, %v1021, %v1519
        %v1592 = vsel %vm1232, %v1026, %v1520
        %v1593 = vsel %vm1233, %v1031, %v1521
        %v1594 = vsel %vm1234, %v1036, %v1522
        %v1595 = vsel %vm1235, %v1041, %v1523
        %v1596 = vsel %vm1236, %v1046, %v1524
        %v1597 = vsel %vm1237, %v1051, %v1525
        %v1598 = vsel %vm1238, %v1056, %v1526
        %v1599 = vsel %vm1239, %v1061, %v1527
        %v1600 = vsel %vm1240, %v1066, %v1528
        %v1601 = vsel %vm1241, %v1071, %v1529
        %v1602 = vsel %vm1242, %v1076, %v1530
        %v1603 = vsel %vm1243, %v1081, %v1531
        %v1604 = vsel %vm1244, %v1086, %v1532
        %v1605 = vsel %vm1245, %v1091, %v1533
        %v1606 = vsel %vm1246, %v1096, %v1534
        %v1607 = vsel %vm1247, %v1101, %v1535
        %v1608 = vsel %vm1248, %v1106, %v1536
        %v1609 = vsel %vm1249, %v1111, %v1537
        %v1610 = vsel %vm1250, %v1116, %v1538
        %v1611 = vsel %vm1251, %v1121, %v1539
        %v1612 = vsel %vm1252, %v1126, %v1540
        %v1613 = vsel %vm1253, %v1131, %v1541
        %v1614 = vsel %vm1254, %v1136, %v1542
        %v1615 = vsel %vm1255, %v1141, %v1543
        %v1616 = vsel %vm1256, %v1146, %v1544
        %v1617 = vsel %vm1257, %v1151, %v1545
        %v1618 = vsel %vm1258, %v1156, %v1546
        %v1619 = vsel %vm1259, %v1161, %v1547
        %v1620 = vsel %vm1260, %v1166, %v1548
        %v1621 = vsel %vm1261, %v1171, %v1549
        %v1622 = vsel %vm1262, %v1176, %v1550
        %v1623 = vsel %vm1263, %v1181, %v1551
        %v1624 = vsel %vm1264, %v1186, %v1552
        %v1625 = vsel %vm1265, %v1191, %v1553
        %v1698 = vcombine.high %v1554, %v1554
        %v1700 = vunpack.c.l.s4 1983009808
        %v1701 = vunpack.c.0.s8 %v1700
        %v1702 = vlaneseq
        %v1703 = vshrl.u32 %v1702, 7
        %v1704 = vsub.s32 %v1701, %v1703
        %v1705 = vrot.slane %v1554, %v1704
        %v1707 = vunpack.c.l.s4 1983009808
        %v1708 = vunpack.c.0.s8 %v1707
        %v1709 = vlaneseq
        %v1710 = vshrl.u32 %v1709, 7
        %v1711 = vsub.s32 %v1708, %v1710
        %v1712 = vrot.slane %v1698, %v1711
        %v1713 = vcombine.high %v1705, %v1705
        %v1714 = vcombine.high %v1712, %v1712
        %v1715 = vcombine.high %v1555, %v1555
        %v1717 = vunpack.c.l.s4 1983009808
        %v1718 = vunpack.c.0.s8 %v1717
        %v1719 = vlaneseq
        %v1720 = vshrl.u32 %v1719, 7
        %v1721 = vsub.s32 %v1718, %v1720
        %v1722 = vrot.slane %v1555, %v1721
        %v1724 = vunpack.c.l.s4 1983009808
        %v1725 = vunpack.c.0.s8 %v1724
        %v1726 = vlaneseq
        %v1727 = vshrl.u32 %v1726, 7
        %v1728 = vsub.s32 %v1725, %v1727
        %v1729 = vrot.slane %v1715, %v1728
        %v1730 = vcombine.high %v1722, %v1722
        %v1731 = vcombine.high %v1729, %v1729
        %v1732 = vcombine.high %v1556, %v1556
        %v1734 = vunpack.c.l.s4 1983009808
        %v1735 = vunpack.c.0.s8 %v1734
        %v1736 = vlaneseq
        %v1737 = vshrl.u32 %v1736, 7
        %v1738 = vsub.s32 %v1735, %v1737
        %v1739 = vrot.slane %v1556, %v1738
        %v1741 = vunpack.c.l.s4 1983009808
        %v1742 = vunpack.c.0.s8 %v1741
        %v1743 = vlaneseq
        %v1744 = vshrl.u32 %v1743, 7
        %v1745 = vsub.s32 %v1742, %v1744
        %v1746 = vrot.slane %v1732, %v1745
        %v1747 = vcombine.high %v1739, %v1739
        %v1748 = vcombine.high %v1746, %v1746
        %v1749 = vcombine.high %v1557, %v1557
        %v1751 = vunpack.c.l.s4 1983009808
        %v1752 = vunpack.c.0.s8 %v1751
        %v1753 = vlaneseq
        %v1754 = vshrl.u32 %v1753, 7
        %v1755 = vsub.s32 %v1752, %v1754
        %v1756 = vrot.slane %v1557, %v1755
        %v1758 = vunpack.c.l.s4 1983009808
        %v1759 = vunpack.c.0.s8 %v1758
        %v1760 = vlaneseq
        %v1761 = vshrl.u32 %v1760, 7
        %v1762 = vsub.s32 %v1759, %v1761
        %v1763 = vrot.slane %v1749, %v1762
        %v1764 = vcombine.high %v1756, %v1756
        %v1765 = vcombine.high %v1763, %v1763
        %v1766 = vcombine.high %v1558, %v1558
        %v1768 = vunpack.c.l.s4 1983009808
        %v1769 = vunpack.c.0.s8 %v1768
        %v1770 = vlaneseq
        %v1771 = vshrl.u32 %v1770, 7
        %v1772 = vsub.s32 %v1769, %v1771
        %v1773 = vrot.slane %v1558, %v1772
        %v1775 = vunpack.c.l.s4 1983009808
        %v1776 = vunpack.c.0.s8 %v1775
        %v1777 = vlaneseq
        %v1778 = vshrl.u32 %v1777, 7
        %v1779 = vsub.s32 %v1776, %v1778
        %v1780 = vrot.slane %v1766, %v1779
        %v1781 = vcombine.high %v1773, %v1773
        %v1782 = vcombine.high %v1780, %v1780
        %v1783 = vcombine.high %v1559, %v1559
        %v1785 = vunpack.c.l.s4 1983009808
        %v1786 = vunpack.c.0.s8 %v1785
        %v1787 = vlaneseq
        %v1788 = vshrl.u32 %v1787, 7
        %v1789 = vsub.s32 %v1786, %v1788
        %v1790 = vrot.slane %v1559, %v1789
        %v1792 = vunpack.c.l.s4 1983009808
        %v1793 = vunpack.c.0.s8 %v1792
        %v1794 = vlaneseq
        %v1795 = vshrl.u32 %v1794, 7
        %v1796 = vsub.s32 %v1793, %v1795
        %v1797 = vrot.slane %v1783, %v1796
        %v1798 = vcombine.high %v1790, %v1790
        %v1799 = vcombine.high %v1797, %v1797
        %v1800 = vcombine.high %v1560, %v1560
        %v1802 = vunpack.c.l.s4 1983009808
        %v1803 = vunpack.c.0.s8 %v1802
        %v1804 = vlaneseq
        %v1805 = vshrl.u32 %v1804, 7
        %v1806 = vsub.s32 %v1803, %v1805
        %v1807 = vrot.slane %v1560, %v1806
        %v1809 = vunpack.c.l.s4 1983009808
        %v1810 = vunpack.c.0.s8 %v1809
        %v1811 = vlaneseq
        %v1812 = vshrl.u32 %v1811, 7
        %v1813 = vsub.s32 %v1810, %v1812
        %v1814 = vrot.slane %v1800, %v1813
        %v1815 = vcombine.high %v1807, %v1807
        %v1816 = vcombine.high %v1814, %v1814
        %v1817 = vcombine.high %v1561, %v1561
        %v1819 = vunpack.c.l.s4 1983009808
        %v1820 = vunpack.c.0.s8 %v1819
        %v1821 = vlaneseq
        %v1822 = vshrl.u32 %v1821, 7
        %v1823 = vsub.s32 %v1820, %v1822
        %v1824 = vrot.slane %v1561, %v1823
        %v1826 = vunpack.c.l.s4 1983009808
        %v1827 = vunpack.c.0.s8 %v1826
        %v1828 = vlaneseq
        %v1829 = vshrl.u32 %v1828, 7
        %v1830 = vsub.s32 %v1827, %v1829
        %v1831 = vrot.slane %v1817, %v1830
        %v1832 = vcombine.high %v1824, %v1824
        %v1833 = vcombine.high %v1831, %v1831
        %v1834 = vcombine.high %v1562, %v1562
        %v1836 = vunpack.c.l.s4 1983009808
        %v1837 = vunpack.c.0.s8 %v1836
        %v1838 = vlaneseq
        %v1839 = vshrl.u32 %v1838, 7
        %v1840 = vsub.s32 %v1837, %v1839
        %v1841 = vrot.slane %v1562, %v1840
        %v1843 = vunpack.c.l.s4 1983009808
        %v1844 = vunpack.c.0.s8 %v1843
        %v1845 = vlaneseq
        %v1846 = vshrl.u32 %v1845, 7
        %v1847 = vsub.s32 %v1844, %v1846
        %v1848 = vrot.slane %v1834, %v1847
        %v1849 = vcombine.high %v1841, %v1841
        %v1850 = vcombine.high %v1848, %v1848
        %v1851 = vcombine.high %v1563, %v1563
        %v1853 = vunpack.c.l.s4 1983009808
        %v1854 = vunpack.c.0.s8 %v1853
        %v1855 = vlaneseq
        %v1856 = vshrl.u32 %v1855, 7
        %v1857 = vsub.s32 %v1854, %v1856
        %v1858 = vrot.slane %v1563, %v1857
        %v1860 = vunpack.c.l.s4 1983009808
        %v1861 = vunpack.c.0.s8 %v1860
        %v1862 = vlaneseq
        %v1863 = vshrl.u32 %v1862, 7
        %v1864 = vsub.s32 %v1861, %v1863
        %v1865 = vrot.slane %v1851, %v1864
        %v1866 = vcombine.high %v1858, %v1858
        %v1867 = vcombine.high %v1865, %v1865
        %v1868 = vcombine.high %v1564, %v1564
        %v1870 = vunpack.c.l.s4 1983009808
        %v1871 = vunpack.c.0.s8 %v1870
        %v1872 = vlaneseq
        %v1873 = vshrl.u32 %v1872, 7
        %v1874 = vsub.s32 %v1871, %v1873
        %v1875 = vrot.slane %v1564, %v1874
        %v1877 = vunpack.c.l.s4 1983009808
        %v1878 = vunpack.c.0.s8 %v1877
        %v1879 = vlaneseq
        %v1880 = vshrl.u32 %v1879, 7
        %v1881 = vsub.s32 %v1878, %v1880
        %v1882 = vrot.slane %v1868, %v1881
        %v1883 = vcombine.high %v1875, %v1875
        %v1884 = vcombine.high %v1882, %v1882
        %v1885 = vcombine.high %v1565, %v1565
        %v1887 = vunpack.c.l.s4 1983009808
        %v1888 = vunpack.c.0.s8 %v1887
        %v1889 = vlaneseq
        %v1890 = vshrl.u32 %v1889, 7
        %v1891 = vsub.s32 %v1888, %v1890
        %v1892 = vrot.slane %v1565, %v1891
        %v1894 = vunpack.c.l.s4 1983009808
        %v1895 = vunpack.c.0.s8 %v1894
        %v1896 = vlaneseq
        %v1897 = vshrl.u32 %v1896, 7
        %v1898 = vsub.s32 %v1895, %v1897
        %v1899 = vrot.slane %v1885, %v1898
        %v1900 = vcombine.high %v1892, %v1892
        %v1901 = vcombine.high %v1899, %v1899
        %v1902 = vcombine.high %v1566, %v1566
        %v1904 = vunpack.c.l.s4 1983009808
        %v1905 = vunpack.c.0.s8 %v1904
        %v1906 = vlaneseq
        %v1907 = vshrl.u32 %v1906, 7
        %v1908 = vsub.s32 %v1905, %v1907
        %v1909 = vrot.slane %v1566, %v1908
        %v1911 = vunpack.c.l.s4 1983009808
        %v1912 = vunpack.c.0.s8 %v1911
        %v1913 = vlaneseq
        %v1914 = vshrl.u32 %v1913, 7
        %v1915 = vsub.s32 %v1912, %v1914
        %v1916 = vrot.slane %v1902, %v1915
        %v1917 = vcombine.high %v1909, %v1909
        %v1918 = vcombine.high %v1916, %v1916
        %v1919 = vcombine.high %v1567, %v1567
        %v1921 = vunpack.c.l.s4 1983009808
        %v1922 = vunpack.c.0.s8 %v1921
        %v1923 = vlaneseq
        %v1924 = vshrl.u32 %v1923, 7
        %v1925 = vsub.s32 %v1922, %v1924
        %v1926 = vrot.slane %v1567, %v1925
        %v1928 = vunpack.c.l.s4 1983009808
        %v1929 = vunpack.c.0.s8 %v1928
        %v1930 = vlaneseq
        %v1931 = vshrl.u32 %v1930, 7
        %v1932 = vsub.s32 %v1929, %v1931
        %v1933 = vrot.slane %v1919, %v1932
        %v1934 = vcombine.high %v1926, %v1926
        %v1935 = vcombine.high %v1933, %v1933
        %v1936 = vcombine.high %v1568, %v1568
        %v1938 = vunpack.c.l.s4 1983009808
        %v1939 = vunpack.c.0.s8 %v1938
        %v1940 = vlaneseq
        %v1941 = vshrl.u32 %v1940, 7
        %v1942 = vsub.s32 %v1939, %v1941
        %v1943 = vrot.slane %v1568, %v1942
        %v1945 = vunpack.c.l.s4 1983009808
        %v1946 = vunpack.c.0.s8 %v1945
        %v1947 = vlaneseq
        %v1948 = vshrl.u32 %v1947, 7
        %v1949 = vsub.s32 %v1946, %v1948
        %v1950 = vrot.slane %v1936, %v1949
        %v1951 = vcombine.high %v1943, %v1943
        %v1952 = vcombine.high %v1950, %v1950
        %v1953 = vcombine.high %v1569, %v1569
        %v1955 = vunpack.c.l.s4 1983009808
        %v1956 = vunpack.c.0.s8 %v1955
        %v1957 = vlaneseq
        %v1958 = vshrl.u32 %v1957, 7
        %v1959 = vsub.s32 %v1956, %v1958
        %v1960 = vrot.slane %v1569, %v1959
        %v1962 = vunpack.c.l.s4 1983009808
        %v1963 = vunpack.c.0.s8 %v1962
        %v1964 = vlaneseq
        %v1965 = vshrl.u32 %v1964, 7
        %v1966 = vsub.s32 %v1963, %v1965
        %v1967 = vrot.slane %v1953, %v1966
        %v1968 = vcombine.high %v1960, %v1960
        %v1969 = vcombine.high %v1967, %v1967
        %v1970 = vcombine.high %v1570, %v1570
        %v1972 = vunpack.c.l.s4 1983009808
        %v1973 = vunpack.c.0.s8 %v1972
        %v1974 = vlaneseq
        %v1975 = vshrl.u32 %v1974, 7
        %v1976 = vsub.s32 %v1973, %v1975
        %v1977 = vrot.slane %v1570, %v1976
        %v1979 = vunpack.c.l.s4 1983009808
        %v1980 = vunpack.c.0.s8 %v1979
        %v1981 = vlaneseq
        %v1982 = vshrl.u32 %v1981, 7
        %v1983 = vsub.s32 %v1980, %v1982
        %v1984 = vrot.slane %v1970, %v1983
        %v1985 = vcombine.high %v1977, %v1977
        %v1986 = vcombine.high %v1984, %v1984
        %v1987 = vcombine.high %v1571, %v1571
        %v1989 = vunpack.c.l.s4 1983009808
        %v1990 = vunpack.c.0.s8 %v1989
        %v1991 = vlaneseq
        %v1992 = vshrl.u32 %v1991, 7
        %v1993 = vsub.s32 %v1990, %v1992
        %v1994 = vrot.slane %v1571, %v1993
        %v1996 = vunpack.c.l.s4 1983009808
        %v1997 = vunpack.c.0.s8 %v1996
        %v1998 = vlaneseq
        %v1999 = vshrl.u32 %v1998, 7
        %v2000 = vsub.s32 %v1997, %v1999
        %v2001 = vrot.slane %v1987, %v2000
        %v2002 = vcombine.high %v1994, %v1994
        %v2003 = vcombine.high %v2001, %v2001
        %v2004 = vcombine.high %v1572, %v1572
        %v2006 = vunpack.c.l.s4 1983009808
        %v2007 = vunpack.c.0.s8 %v2006
        %v2008 = vlaneseq
        %v2009 = vshrl.u32 %v2008, 7
        %v2010 = vsub.s32 %v2007, %v2009
        %v2011 = vrot.slane %v1572, %v2010
        %v2013 = vunpack.c.l.s4 1983009808
        %v2014 = vunpack.c.0.s8 %v2013
        %v2015 = vlaneseq
        %v2016 = vshrl.u32 %v2015, 7
        %v2017 = vsub.s32 %v2014, %v2016
        %v2018 = vrot.slane %v2004, %v2017
        %v2019 = vcombine.high %v2011, %v2011
        %v2020 = vcombine.high %v2018, %v2018
        %v2021 = vcombine.high %v1573, %v1573
        %v2023 = vunpack.c.l.s4 1983009808
        %v2024 = vunpack.c.0.s8 %v2023
        %v2025 = vlaneseq
        %v2026 = vshrl.u32 %v2025, 7
        %v2027 = vsub.s32 %v2024, %v2026
        %v2028 = vrot.slane %v1573, %v2027
        %v2030 = vunpack.c.l.s4 1983009808
        %v2031 = vunpack.c.0.s8 %v2030
        %v2032 = vlaneseq
        %v2033 = vshrl.u32 %v2032, 7
        %v2034 = vsub.s32 %v2031, %v2033
        %v2035 = vrot.slane %v2021, %v2034
        %v2036 = vcombine.high %v2028, %v2028
        %v2037 = vcombine.high %v2035, %v2035
        %v2038 = vcombine.high %v1574, %v1574
        %v2040 = vunpack.c.l.s4 1983009808
        %v2041 = vunpack.c.0.s8 %v2040
        %v2042 = vlaneseq
        %v2043 = vshrl.u32 %v2042, 7
        %v2044 = vsub.s32 %v2041, %v2043
        %v2045 = vrot.slane %v1574, %v2044
        %v2047 = vunpack.c.l.s4 1983009808
        %v2048 = vunpack.c.0.s8 %v2047
        %v2049 = vlaneseq
        %v2050 = vshrl.u32 %v2049, 7
        %v2051 = vsub.s32 %v2048, %v2050
        %v2052 = vrot.slane %v2038, %v2051
        %v2053 = vcombine.high %v2045, %v2045
        %v2054 = vcombine.high %v2052, %v2052
        %v2055 = vcombine.high %v1575, %v1575
        %v2057 = vunpack.c.l.s4 1983009808
        %v2058 = vunpack.c.0.s8 %v2057
        %v2059 = vlaneseq
        %v2060 = vshrl.u32 %v2059, 7
        %v2061 = vsub.s32 %v2058, %v2060
        %v2062 = vrot.slane %v1575, %v2061
        %v2064 = vunpack.c.l.s4 1983009808
        %v2065 = vunpack.c.0.s8 %v2064
        %v2066 = vlaneseq
        %v2067 = vshrl.u32 %v2066, 7
        %v2068 = vsub.s32 %v2065, %v2067
        %v2069 = vrot.slane %v2055, %v2068
        %v2070 = vcombine.high %v2062, %v2062
        %v2071 = vcombine.high %v2069, %v2069
        %v2072 = vcombine.high %v1576, %v1576
        %v2074 = vunpack.c.l.s4 1983009808
        %v2075 = vunpack.c.0.s8 %v2074
        %v2076 = vlaneseq
        %v2077 = vshrl.u32 %v2076, 7
        %v2078 = vsub.s32 %v2075, %v2077
        %v2079 = vrot.slane %v1576, %v2078
        %v2081 = vunpack.c.l.s4 1983009808
        %v2082 = vunpack.c.0.s8 %v2081
        %v2083 = vlaneseq
        %v2084 = vshrl.u32 %v2083, 7
        %v2085 = vsub.s32 %v2082, %v2084
        %v2086 = vrot.slane %v2072, %v2085
        %v2087 = vcombine.high %v2079, %v2079
        %v2088 = vcombine.high %v2086, %v2086
        %v2089 = vcombine.high %v1577, %v1577
        %v2091 = vunpack.c.l.s4 1983009808
        %v2092 = vunpack.c.0.s8 %v2091
        %v2093 = vlaneseq
        %v2094 = vshrl.u32 %v2093, 7
        %v2095 = vsub.s32 %v2092, %v2094
        %v2096 = vrot.slane %v1577, %v2095
        %v2098 = vunpack.c.l.s4 1983009808
        %v2099 = vunpack.c.0.s8 %v2098
        %v2100 = vlaneseq
        %v2101 = vshrl.u32 %v2100, 7
        %v2102 = vsub.s32 %v2099, %v2101
        %v2103 = vrot.slane %v2089, %v2102
        %v2104 = vcombine.high %v2096, %v2096
        %v2105 = vcombine.high %v2103, %v2103
        %v2106 = vcombine.high %v1578, %v1578
        %v2108 = vunpack.c.l.s4 1983009808
        %v2109 = vunpack.c.0.s8 %v2108
        %v2110 = vlaneseq
        %v2111 = vshrl.u32 %v2110, 7
        %v2112 = vsub.s32 %v2109, %v2111
        %v2113 = vrot.slane %v1578, %v2112
        %v2115 = vunpack.c.l.s4 1983009808
        %v2116 = vunpack.c.0.s8 %v2115
        %v2117 = vlaneseq
        %v2118 = vshrl.u32 %v2117, 7
        %v2119 = vsub.s32 %v2116, %v2118
        %v2120 = vrot.slane %v2106, %v2119
        %v2121 = vcombine.high %v2113, %v2113
        %v2122 = vcombine.high %v2120, %v2120
        %v2123 = vcombine.high %v1579, %v1579
        %v2125 = vunpack.c.l.s4 1983009808
        %v2126 = vunpack.c.0.s8 %v2125
        %v2127 = vlaneseq
        %v2128 = vshrl.u32 %v2127, 7
        %v2129 = vsub.s32 %v2126, %v2128
        %v2130 = vrot.slane %v1579, %v2129
        %v2132 = vunpack.c.l.s4 1983009808
        %v2133 = vunpack.c.0.s8 %v2132
        %v2134 = vlaneseq
        %v2135 = vshrl.u32 %v2134, 7
        %v2136 = vsub.s32 %v2133, %v2135
        %v2137 = vrot.slane %v2123, %v2136
        %v2138 = vcombine.high %v2130, %v2130
        %v2139 = vcombine.high %v2137, %v2137
        %v2140 = vcombine.high %v1580, %v1580
        %v2142 = vunpack.c.l.s4 1983009808
        %v2143 = vunpack.c.0.s8 %v2142
        %v2144 = vlaneseq
        %v2145 = vshrl.u32 %v2144, 7
        %v2146 = vsub.s32 %v2143, %v2145
        %v2147 = vrot.slane %v1580, %v2146
        %v2149 = vunpack.c.l.s4 1983009808
        %v2150 = vunpack.c.0.s8 %v2149
        %v2151 = vlaneseq
        %v2152 = vshrl.u32 %v2151, 7
        %v2153 = vsub.s32 %v2150, %v2152
        %v2154 = vrot.slane %v2140, %v2153
        %v2155 = vcombine.high %v2147, %v2147
        %v2156 = vcombine.high %v2154, %v2154
        %v2157 = vcombine.high %v1581, %v1581
        %v2159 = vunpack.c.l.s4 1983009808
        %v2160 = vunpack.c.0.s8 %v2159
        %v2161 = vlaneseq
        %v2162 = vshrl.u32 %v2161, 7
        %v2163 = vsub.s32 %v2160, %v2162
        %v2164 = vrot.slane %v1581, %v2163
        %v2166 = vunpack.c.l.s4 1983009808
        %v2167 = vunpack.c.0.s8 %v2166
        %v2168 = vlaneseq
        %v2169 = vshrl.u32 %v2168, 7
        %v2170 = vsub.s32 %v2167, %v2169
        %v2171 = vrot.slane %v2157, %v2170
        %v2172 = vcombine.high %v2164, %v2164
        %v2173 = vcombine.high %v2171, %v2171
        %v2174 = vcombine.high %v1582, %v1582
        %v2176 = vunpack.c.l.s4 1983009808
        %v2177 = vunpack.c.0.s8 %v2176
        %v2178 = vlaneseq
        %v2179 = vshrl.u32 %v2178, 7
        %v2180 = vsub.s32 %v2177, %v2179
        %v2181 = vrot.slane %v1582, %v2180
        %v2183 = vunpack.c.l.s4 1983009808
        %v2184 = vunpack.c.0.s8 %v2183
        %v2185 = vlaneseq
        %v2186 = vshrl.u32 %v2185, 7
        %v2187 = vsub.s32 %v2184, %v2186
        %v2188 = vrot.slane %v2174, %v2187
        %v2189 = vcombine.high %v2181, %v2181
        %v2190 = vcombine.high %v2188, %v2188
        %v2191 = vcombine.high %v1583, %v1583
        %v2193 = vunpack.c.l.s4 1983009808
        %v2194 = vunpack.c.0.s8 %v2193
        %v2195 = vlaneseq
        %v2196 = vshrl.u32 %v2195, 7
        %v2197 = vsub.s32 %v2194, %v2196
        %v2198 = vrot.slane %v1583, %v2197
        %v2200 = vunpack.c.l.s4 1983009808
        %v2201 = vunpack.c.0.s8 %v2200
        %v2202 = vlaneseq
        %v2203 = vshrl.u32 %v2202, 7
        %v2204 = vsub.s32 %v2201, %v2203
        %v2205 = vrot.slane %v2191, %v2204
        %v2206 = vcombine.high %v2198, %v2198
        %v2207 = vcombine.high %v2205, %v2205
        %v2208 = vcombine.high %v1584, %v1584
        %v2210 = vunpack.c.l.s4 1983009808
        %v2211 = vunpack.c.0.s8 %v2210
        %v2212 = vlaneseq
        %v2213 = vshrl.u32 %v2212, 7
        %v2214 = vsub.s32 %v2211, %v2213
        %v2215 = vrot.slane %v1584, %v2214
        %v2217 = vunpack.c.l.s4 1983009808
        %v2218 = vunpack.c.0.s8 %v2217
        %v2219 = vlaneseq
        %v2220 = vshrl.u32 %v2219, 7
        %v2221 = vsub.s32 %v2218, %v2220
        %v2222 = vrot.slane %v2208, %v2221
        %v2223 = vcombine.high %v2215, %v2215
        %v2224 = vcombine.high %v2222, %v2222
        %v2225 = vcombine.high %v1585, %v1585
        %v2227 = vunpack.c.l.s4 1983009808
        %v2228 = vunpack.c.0.s8 %v2227
        %v2229 = vlaneseq
        %v2230 = vshrl.u32 %v2229, 7
        %v2231 = vsub.s32 %v2228, %v2230
        %v2232 = vrot.slane %v1585, %v2231
        %v2234 = vunpack.c.l.s4 1983009808
        %v2235 = vunpack.c.0.s8 %v2234
        %v2236 = vlaneseq
        %v2237 = vshrl.u32 %v2236, 7
        %v2238 = vsub.s32 %v2235, %v2237
        %v2239 = vrot.slane %v2225, %v2238
        %v2240 = vcombine.high %v2232, %v2232
        %v2241 = vcombine.high %v2239, %v2239
        %v2242 = vcombine.high %v1586, %v1586
        %v2244 = vunpack.c.l.s4 1983009808
        %v2245 = vunpack.c.0.s8 %v2244
        %v2246 = vlaneseq
        %v2247 = vshrl.u32 %v2246, 7
        %v2248 = vsub.s32 %v2245, %v2247
        %v2249 = vrot.slane %v1586, %v2248
        %v2251 = vunpack.c.l.s4 1983009808
        %v2252 = vunpack.c.0.s8 %v2251
        %v2253 = vlaneseq
        %v2254 = vshrl.u32 %v2253, 7
        %v2255 = vsub.s32 %v2252, %v2254
        %v2256 = vrot.slane %v2242, %v2255
        %v2257 = vcombine.high %v2249, %v2249
        %v2258 = vcombine.high %v2256, %v2256
        %v2259 = vcombine.high %v1587, %v1587
        %v2261 = vunpack.c.l.s4 1983009808
        %v2262 = vunpack.c.0.s8 %v2261
        %v2263 = vlaneseq
        %v2264 = vshrl.u32 %v2263, 7
        %v2265 = vsub.s32 %v2262, %v2264
        %v2266 = vrot.slane %v1587, %v2265
        %v2268 = vunpack.c.l.s4 1983009808
        %v2269 = vunpack.c.0.s8 %v2268
        %v2270 = vlaneseq
        %v2271 = vshrl.u32 %v2270, 7
        %v2272 = vsub.s32 %v2269, %v2271
        %v2273 = vrot.slane %v2259, %v2272
        %v2274 = vcombine.high %v2266, %v2266
        %v2275 = vcombine.high %v2273, %v2273
        %v2276 = vcombine.high %v1588, %v1588
        %v2278 = vunpack.c.l.s4 1983009808
        %v2279 = vunpack.c.0.s8 %v2278
        %v2280 = vlaneseq
        %v2281 = vshrl.u32 %v2280, 7
        %v2282 = vsub.s32 %v2279, %v2281
        %v2283 = vrot.slane %v1588, %v2282
        %v2285 = vunpack.c.l.s4 1983009808
        %v2286 = vunpack.c.0.s8 %v2285
        %v2287 = vlaneseq
        %v2288 = vshrl.u32 %v2287, 7
        %v2289 = vsub.s32 %v2286, %v2288
        %v2290 = vrot.slane %v2276, %v2289
        %v2291 = vcombine.high %v2283, %v2283
        %v2292 = vcombine.high %v2290, %v2290
        %v2293 = vcombine.high %v1589, %v1589
        %v2295 = vunpack.c.l.s4 1983009808
        %v2296 = vunpack.c.0.s8 %v2295
        %v2297 = vlaneseq
        %v2298 = vshrl.u32 %v2297, 7
        %v2299 = vsub.s32 %v2296, %v2298
        %v2300 = vrot.slane %v1589, %v2299
        %v2302 = vunpack.c.l.s4 1983009808
        %v2303 = vunpack.c.0.s8 %v2302
        %v2304 = vlaneseq
        %v2305 = vshrl.u32 %v2304, 7
        %v2306 = vsub.s32 %v2303, %v2305
        %v2307 = vrot.slane %v2293, %v2306
        %v2308 = vcombine.high %v2300, %v2300
        %v2309 = vcombine.high %v2307, %v2307
        %v2310 = vcombine.high %v1590, %v1590
        %v2312 = vunpack.c.l.s4 1983009808
        %v2313 = vunpack.c.0.s8 %v2312
        %v2314 = vlaneseq
        %v2315 = vshrl.u32 %v2314, 7
        %v2316 = vsub.s32 %v2313, %v2315
        %v2317 = vrot.slane %v1590, %v2316
        %v2319 = vunpack.c.l.s4 1983009808
        %v2320 = vunpack.c.0.s8 %v2319
        %v2321 = vlaneseq
        %v2322 = vshrl.u32 %v2321, 7
        %v2323 = vsub.s32 %v2320, %v2322
        %v2324 = vrot.slane %v2310, %v2323
        %v2325 = vcombine.high %v2317, %v2317
        %v2326 = vcombine.high %v2324, %v2324
        %v2327 = vcombine.high %v1591, %v1591
        %v2329 = vunpack.c.l.s4 1983009808
        %v2330 = vunpack.c.0.s8 %v2329
        %v2331 = vlaneseq
        %v2332 = vshrl.u32 %v2331, 7
        %v2333 = vsub.s32 %v2330, %v2332
        %v2334 = vrot.slane %v1591, %v2333
        %v2336 = vunpack.c.l.s4 1983009808
        %v2337 = vunpack.c.0.s8 %v2336
        %v2338 = vlaneseq
        %v2339 = vshrl.u32 %v2338, 7
        %v2340 = vsub.s32 %v2337, %v2339
        %v2341 = vrot.slane %v2327, %v2340
        %v2342 = vcombine.high %v2334, %v2334
        %v2343 = vcombine.high %v2341, %v2341
        %v2344 = vcombine.high %v1592, %v1592
        %v2346 = vunpack.c.l.s4 1983009808
        %v2347 = vunpack.c.0.s8 %v2346
        %v2348 = vlaneseq
        %v2349 = vshrl.u32 %v2348, 7
        %v2350 = vsub.s32 %v2347, %v2349
        %v2351 = vrot.slane %v1592, %v2350
        %v2353 = vunpack.c.l.s4 1983009808
        %v2354 = vunpack.c.0.s8 %v2353
        %v2355 = vlaneseq
        %v2356 = vshrl.u32 %v2355, 7
        %v2357 = vsub.s32 %v2354, %v2356
        %v2358 = vrot.slane %v2344, %v2357
        %v2359 = vcombine.high %v2351, %v2351
        %v2360 = vcombine.high %v2358, %v2358
        %v2361 = vcombine.high %v1593, %v1593
        %v2363 = vunpack.c.l.s4 1983009808
        %v2364 = vunpack.c.0.s8 %v2363
        %v2365 = vlaneseq
        %v2366 = vshrl.u32 %v2365, 7
        %v2367 = vsub.s32 %v2364, %v2366
        %v2368 = vrot.slane %v1593, %v2367
        %v2370 = vunpack.c.l.s4 1983009808
        %v2371 = vunpack.c.0.s8 %v2370
        %v2372 = vlaneseq
        %v2373 = vshrl.u32 %v2372, 7
        %v2374 = vsub.s32 %v2371, %v2373
        %v2375 = vrot.slane %v2361, %v2374
        %v2376 = vcombine.high %v2368, %v2368
        %v2377 = vcombine.high %v2375, %v2375
        %v2378 = vcombine.high %v1594, %v1594
        %v2380 = vunpack.c.l.s4 1983009808
        %v2381 = vunpack.c.0.s8 %v2380
        %v2382 = vlaneseq
        %v2383 = vshrl.u32 %v2382, 7
        %v2384 = vsub.s32 %v2381, %v2383
        %v2385 = vrot.slane %v1594, %v2384
        %v2387 = vunpack.c.l.s4 1983009808
        %v2388 = vunpack.c.0.s8 %v2387
        %v2389 = vlaneseq
        %v2390 = vshrl.u32 %v2389, 7
        %v2391 = vsub.s32 %v2388, %v2390
        %v2392 = vrot.slane %v2378, %v2391
        %v2393 = vcombine.high %v2385, %v2385
        %v2394 = vcombine.high %v2392, %v2392
        %v2395 = vcombine.high %v1595, %v1595
        %v2397 = vunpack.c.l.s4 1983009808
        %v2398 = vunpack.c.0.s8 %v2397
        %v2399 = vlaneseq
        %v2400 = vshrl.u32 %v2399, 7
        %v2401 = vsub.s32 %v2398, %v2400
        %v2402 = vrot.slane %v1595, %v2401
        %v2404 = vunpack.c.l.s4 1983009808
        %v2405 = vunpack.c.0.s8 %v2404
        %v2406 = vlaneseq
        %v2407 = vshrl.u32 %v2406, 7
        %v2408 = vsub.s32 %v2405, %v2407
        %v2409 = vrot.slane %v2395, %v2408
        %v2410 = vcombine.high %v2402, %v2402
        %v2411 = vcombine.high %v2409, %v2409
        %v2412 = vcombine.high %v1596, %v1596
        %v2414 = vunpack.c.l.s4 1983009808
        %v2415 = vunpack.c.0.s8 %v2414
        %v2416 = vlaneseq
        %v2417 = vshrl.u32 %v2416, 7
        %v2418 = vsub.s32 %v2415, %v2417
        %v2419 = vrot.slane %v1596, %v2418
        %v2421 = vunpack.c.l.s4 1983009808
        %v2422 = vunpack.c.0.s8 %v2421
        %v2423 = vlaneseq
        %v2424 = vshrl.u32 %v2423, 7
        %v2425 = vsub.s32 %v2422, %v2424
        %v2426 = vrot.slane %v2412, %v2425
        %v2427 = vcombine.high %v2419, %v2419
        %v2428 = vcombine.high %v2426, %v2426
        %v2429 = vcombine.high %v1597, %v1597
        %v2431 = vunpack.c.l.s4 1983009808
        %v2432 = vunpack.c.0.s8 %v2431
        %v2433 = vlaneseq
        %v2434 = vshrl.u32 %v2433, 7
        %v2435 = vsub.s32 %v2432, %v2434
        %v2436 = vrot.slane %v1597, %v2435
        %v2438 = vunpack.c.l.s4 1983009808
        %v2439 = vunpack.c.0.s8 %v2438
        %v2440 = vlaneseq
        %v2441 = vshrl.u32 %v2440, 7
        %v2442 = vsub.s32 %v2439, %v2441
        %v2443 = vrot.slane %v2429, %v2442
        %v2444 = vcombine.high %v2436, %v2436
        %v2445 = vcombine.high %v2443, %v2443
        %v2446 = vcombine.high %v1598, %v1598
        %v2448 = vunpack.c.l.s4 1983009808
        %v2449 = vunpack.c.0.s8 %v2448
        %v2450 = vlaneseq
        %v2451 = vshrl.u32 %v2450, 7
        %v2452 = vsub.s32 %v2449, %v2451
        %v2453 = vrot.slane %v1598, %v2452
        %v2455 = vunpack.c.l.s4 1983009808
        %v2456 = vunpack.c.0.s8 %v2455
        %v2457 = vlaneseq
        %v2458 = vshrl.u32 %v2457, 7
        %v2459 = vsub.s32 %v2456, %v2458
        %v2460 = vrot.slane %v2446, %v2459
        %v2461 = vcombine.high %v2453, %v2453
        %v2462 = vcombine.high %v2460, %v2460
        %v2463 = vcombine.high %v1599, %v1599
        %v2465 = vunpack.c.l.s4 1983009808
        %v2466 = vunpack.c.0.s8 %v2465
        %v2467 = vlaneseq
        %v2468 = vshrl.u32 %v2467, 7
        %v2469 = vsub.s32 %v2466, %v2468
        %v2470 = vrot.slane %v1599, %v2469
        %v2472 = vunpack.c.l.s4 1983009808
        %v2473 = vunpack.c.0.s8 %v2472
        %v2474 = vlaneseq
        %v2475 = vshrl.u32 %v2474, 7
        %v2476 = vsub.s32 %v2473, %v2475
        %v2477 = vrot.slane %v2463, %v2476
        %v2478 = vcombine.high %v2470, %v2470
        %v2479 = vcombine.high %v2477, %v2477
        %v2480 = vcombine.high %v1600, %v1600
        %v2482 = vunpack.c.l.s4 1983009808
        %v2483 = vunpack.c.0.s8 %v2482
        %v2484 = vlaneseq
        %v2485 = vshrl.u32 %v2484, 7
        %v2486 = vsub.s32 %v2483, %v2485
        %v2487 = vrot.slane %v1600, %v2486
        %v2489 = vunpack.c.l.s4 1983009808
        %v2490 = vunpack.c.0.s8 %v2489
        %v2491 = vlaneseq
        %v2492 = vshrl.u32 %v2491, 7
        %v2493 = vsub.s32 %v2490, %v2492
        %v2494 = vrot.slane %v2480, %v2493
        %v2495 = vcombine.high %v2487, %v2487
        %v2496 = vcombine.high %v2494, %v2494
        %v2497 = vcombine.high %v1601, %v1601
        %v2499 = vunpack.c.l.s4 1983009808
        %v2500 = vunpack.c.0.s8 %v2499
        %v2501 = vlaneseq
        %v2502 = vshrl.u32 %v2501, 7
        %v2503 = vsub.s32 %v2500, %v2502
        %v2504 = vrot.slane %v1601, %v2503
        %v2506 = vunpack.c.l.s4 1983009808
        %v2507 = vunpack.c.0.s8 %v2506
        %v2508 = vlaneseq
        %v2509 = vshrl.u32 %v2508, 7
        %v2510 = vsub.s32 %v2507, %v2509
        %v2511 = vrot.slane %v2497, %v2510
        %v2512 = vcombine.high %v2504, %v2504
        %v2513 = vcombine.high %v2511, %v2511
        %v2514 = vcombine.high %v1602, %v1602
        %v2516 = vunpack.c.l.s4 1983009808
        %v2517 = vunpack.c.0.s8 %v2516
        %v2518 = vlaneseq
        %v2519 = vshrl.u32 %v2518, 7
        %v2520 = vsub.s32 %v2517, %v2519
        %v2521 = vrot.slane %v1602, %v2520
        %v2523 = vunpack.c.l.s4 1983009808
        %v2524 = vunpack.c.0.s8 %v2523
        %v2525 = vlaneseq
        %v2526 = vshrl.u32 %v2525, 7
        %v2527 = vsub.s32 %v2524, %v2526
        %v2528 = vrot.slane %v2514, %v2527
        %v2529 = vcombine.high %v2521, %v2521
        %v2530 = vcombine.high %v2528, %v2528
        %v2531 = vcombine.high %v1603, %v1603
        %v2533 = vunpack.c.l.s4 1983009808
        %v2534 = vunpack.c.0.s8 %v2533
        %v2535 = vlaneseq
        %v2536 = vshrl.u32 %v2535, 7
        %v2537 = vsub.s32 %v2534, %v2536
        %v2538 = vrot.slane %v1603, %v2537
        %v2540 = vunpack.c.l.s4 1983009808
        %v2541 = vunpack.c.0.s8 %v2540
        %v2542 = vlaneseq
        %v2543 = vshrl.u32 %v2542, 7
        %v2544 = vsub.s32 %v2541, %v2543
        %v2545 = vrot.slane %v2531, %v2544
        %v2546 = vcombine.high %v2538, %v2538
        %v2547 = vcombine.high %v2545, %v2545
        %v2548 = vcombine.high %v1604, %v1604
        %v2550 = vunpack.c.l.s4 1983009808
        %v2551 = vunpack.c.0.s8 %v2550
        %v2552 = vlaneseq
        %v2553 = vshrl.u32 %v2552, 7
        %v2554 = vsub.s32 %v2551, %v2553
        %v2555 = vrot.slane %v1604, %v2554
        %v2557 = vunpack.c.l.s4 1983009808
        %v2558 = vunpack.c.0.s8 %v2557
        %v2559 = vlaneseq
        %v2560 = vshrl.u32 %v2559, 7
        %v2561 = vsub.s32 %v2558, %v2560
        %v2562 = vrot.slane %v2548, %v2561
        %v2563 = vcombine.high %v2555, %v2555
        %v2564 = vcombine.high %v2562, %v2562
        %v2565 = vcombine.high %v1605, %v1605
        %v2567 = vunpack.c.l.s4 1983009808
        %v2568 = vunpack.c.0.s8 %v2567
        %v2569 = vlaneseq
        %v2570 = vshrl.u32 %v2569, 7
        %v2571 = vsub.s32 %v2568, %v2570
        %v2572 = vrot.slane %v1605, %v2571
        %v2574 = vunpack.c.l.s4 1983009808
        %v2575 = vunpack.c.0.s8 %v2574
        %v2576 = vlaneseq
        %v2577 = vshrl.u32 %v2576, 7
        %v2578 = vsub.s32 %v2575, %v2577
        %v2579 = vrot.slane %v2565, %v2578
        %v2580 = vcombine.high %v2572, %v2572
        %v2581 = vcombine.high %v2579, %v2579
        %v2582 = vcombine.high %v1606, %v1606
        %v2584 = vunpack.c.l.s4 1983009808
        %v2585 = vunpack.c.0.s8 %v2584
        %v2586 = vlaneseq
        %v2587 = vshrl.u32 %v2586, 7
        %v2588 = vsub.s32 %v2585, %v2587
        %v2589 = vrot.slane %v1606, %v2588
        %v2591 = vunpack.c.l.s4 1983009808
        %v2592 = vunpack.c.0.s8 %v2591
        %v2593 = vlaneseq
        %v2594 = vshrl.u32 %v2593, 7
        %v2595 = vsub.s32 %v2592, %v2594
        %v2596 = vrot.slane %v2582, %v2595
        %v2597 = vcombine.high %v2589, %v2589
        %v2598 = vcombine.high %v2596, %v2596
        %v2599 = vcombine.high %v1607, %v1607
        %v2601 = vunpack.c.l.s4 1983009808
        %v2602 = vunpack.c.0.s8 %v2601
        %v2603 = vlaneseq
        %v2604 = vshrl.u32 %v2603, 7
        %v2605 = vsub.s32 %v2602, %v2604
        %v2606 = vrot.slane %v1607, %v2605
        %v2608 = vunpack.c.l.s4 1983009808
        %v2609 = vunpack.c.0.s8 %v2608
        %v2610 = vlaneseq
        %v2611 = vshrl.u32 %v2610, 7
        %v2612 = vsub.s32 %v2609, %v2611
        %v2613 = vrot.slane %v2599, %v2612
        %v2614 = vcombine.high %v2606, %v2606
        %v2615 = vcombine.high %v2613, %v2613
        %v2616 = vcombine.high %v1608, %v1608
        %v2618 = vunpack.c.l.s4 1983009808
        %v2619 = vunpack.c.0.s8 %v2618
        %v2620 = vlaneseq
        %v2621 = vshrl.u32 %v2620, 7
        %v2622 = vsub.s32 %v2619, %v2621
        %v2623 = vrot.slane %v1608, %v2622
        %v2625 = vunpack.c.l.s4 1983009808
        %v2626 = vunpack.c.0.s8 %v2625
        %v2627 = vlaneseq
        %v2628 = vshrl.u32 %v2627, 7
        %v2629 = vsub.s32 %v2626, %v2628
        %v2630 = vrot.slane %v2616, %v2629
        %v2631 = vcombine.high %v2623, %v2623
        %v2632 = vcombine.high %v2630, %v2630
        %v2633 = vcombine.high %v1609, %v1609
        %v2635 = vunpack.c.l.s4 1983009808
        %v2636 = vunpack.c.0.s8 %v2635
        %v2637 = vlaneseq
        %v2638 = vshrl.u32 %v2637, 7
        %v2639 = vsub.s32 %v2636, %v2638
        %v2640 = vrot.slane %v1609, %v2639
        %v2642 = vunpack.c.l.s4 1983009808
        %v2643 = vunpack.c.0.s8 %v2642
        %v2644 = vlaneseq
        %v2645 = vshrl.u32 %v2644, 7
        %v2646 = vsub.s32 %v2643, %v2645
        %v2647 = vrot.slane %v2633, %v2646
        %v2648 = vcombine.high %v2640, %v2640
        %v2649 = vcombine.high %v2647, %v2647
        %v2650 = vcombine.high %v1610, %v1610
        %v2652 = vunpack.c.l.s4 1983009808
        %v2653 = vunpack.c.0.s8 %v2652
        %v2654 = vlaneseq
        %v2655 = vshrl.u32 %v2654, 7
        %v2656 = vsub.s32 %v2653, %v2655
        %v2657 = vrot.slane %v1610, %v2656
        %v2659 = vunpack.c.l.s4 1983009808
        %v2660 = vunpack.c.0.s8 %v2659
        %v2661 = vlaneseq
        %v2662 = vshrl.u32 %v2661, 7
        %v2663 = vsub.s32 %v2660, %v2662
        %v2664 = vrot.slane %v2650, %v2663
        %v2665 = vcombine.high %v2657, %v2657
        %v2666 = vcombine.high %v2664, %v2664
        %v2667 = vcombine.high %v1611, %v1611
        %v2669 = vunpack.c.l.s4 1983009808
        %v2670 = vunpack.c.0.s8 %v2669
        %v2671 = vlaneseq
        %v2672 = vshrl.u32 %v2671, 7
        %v2673 = vsub.s32 %v2670, %v2672
        %v2674 = vrot.slane %v1611, %v2673
        %v2676 = vunpack.c.l.s4 1983009808
        %v2677 = vunpack.c.0.s8 %v2676
        %v2678 = vlaneseq
        %v2679 = vshrl.u32 %v2678, 7
        %v2680 = vsub.s32 %v2677, %v2679
        %v2681 = vrot.slane %v2667, %v2680
        %v2682 = vcombine.high %v2674, %v2674
        %v2683 = vcombine.high %v2681, %v2681
        %v2684 = vcombine.high %v1612, %v1612
        %v2686 = vunpack.c.l.s4 1983009808
        %v2687 = vunpack.c.0.s8 %v2686
        %v2688 = vlaneseq
        %v2689 = vshrl.u32 %v2688, 7
        %v2690 = vsub.s32 %v2687, %v2689
        %v2691 = vrot.slane %v1612, %v2690
        %v2693 = vunpack.c.l.s4 1983009808
        %v2694 = vunpack.c.0.s8 %v2693
        %v2695 = vlaneseq
        %v2696 = vshrl.u32 %v2695, 7
        %v2697 = vsub.s32 %v2694, %v2696
        %v2698 = vrot.slane %v2684, %v2697
        %v2699 = vcombine.high %v2691, %v2691
        %v2700 = vcombine.high %v2698, %v2698
        %v2701 = vcombine.high %v1613, %v1613
        %v2703 = vunpack.c.l.s4 1983009808
        %v2704 = vunpack.c.0.s8 %v2703
        %v2705 = vlaneseq
        %v2706 = vshrl.u32 %v2705, 7
        %v2707 = vsub.s32 %v2704, %v2706
        %v2708 = vrot.slane %v1613, %v2707
        %v2710 = vunpack.c.l.s4 1983009808
        %v2711 = vunpack.c.0.s8 %v2710
        %v2712 = vlaneseq
        %v2713 = vshrl.u32 %v2712, 7
        %v2714 = vsub.s32 %v2711, %v2713
        %v2715 = vrot.slane %v2701, %v2714
        %v2716 = vcombine.high %v2708, %v2708
        %v2717 = vcombine.high %v2715, %v2715
        %v2718 = vcombine.high %v1614, %v1614
        %v2720 = vunpack.c.l.s4 1983009808
        %v2721 = vunpack.c.0.s8 %v2720
        %v2722 = vlaneseq
        %v2723 = vshrl.u32 %v2722, 7
        %v2724 = vsub.s32 %v2721, %v2723
        %v2725 = vrot.slane %v1614, %v2724
        %v2727 = vunpack.c.l.s4 1983009808
        %v2728 = vunpack.c.0.s8 %v2727
        %v2729 = vlaneseq
        %v2730 = vshrl.u32 %v2729, 7
        %v2731 = vsub.s32 %v2728, %v2730
        %v2732 = vrot.slane %v2718, %v2731
        %v2733 = vcombine.high %v2725, %v2725
        %v2734 = vcombine.high %v2732, %v2732
        %v2735 = vcombine.high %v1615, %v1615
        %v2737 = vunpack.c.l.s4 1983009808
        %v2738 = vunpack.c.0.s8 %v2737
        %v2739 = vlaneseq
        %v2740 = vshrl.u32 %v2739, 7
        %v2741 = vsub.s32 %v2738, %v2740
        %v2742 = vrot.slane %v1615, %v2741
        %v2744 = vunpack.c.l.s4 1983009808
        %v2745 = vunpack.c.0.s8 %v2744
        %v2746 = vlaneseq
        %v2747 = vshrl.u32 %v2746, 7
        %v2748 = vsub.s32 %v2745, %v2747
        %v2749 = vrot.slane %v2735, %v2748
        %v2750 = vcombine.high %v2742, %v2742
        %v2751 = vcombine.high %v2749, %v2749
        %v2752 = vcombine.high %v1616, %v1616
        %v2754 = vunpack.c.l.s4 1983009808
        %v2755 = vunpack.c.0.s8 %v2754
        %v2756 = vlaneseq
        %v2757 = vshrl.u32 %v2756, 7
        %v2758 = vsub.s32 %v2755, %v2757
        %v2759 = vrot.slane %v1616, %v2758
        %v2761 = vunpack.c.l.s4 1983009808
        %v2762 = vunpack.c.0.s8 %v2761
        %v2763 = vlaneseq
        %v2764 = vshrl.u32 %v2763, 7
        %v2765 = vsub.s32 %v2762, %v2764
        %v2766 = vrot.slane %v2752, %v2765
        %v2767 = vcombine.high %v2759, %v2759
        %v2768 = vcombine.high %v2766, %v2766
        %v2769 = vcombine.high %v1617, %v1617
        %v2771 = vunpack.c.l.s4 1983009808
        %v2772 = vunpack.c.0.s8 %v2771
        %v2773 = vlaneseq
        %v2774 = vshrl.u32 %v2773, 7
        %v2775 = vsub.s32 %v2772, %v2774
        %v2776 = vrot.slane %v1617, %v2775
        %v2778 = vunpack.c.l.s4 1983009808
        %v2779 = vunpack.c.0.s8 %v2778
        %v2780 = vlaneseq
        %v2781 = vshrl.u32 %v2780, 7
        %v2782 = vsub.s32 %v2779, %v2781
        %v2783 = vrot.slane %v2769, %v2782
        %v2784 = vcombine.high %v2776, %v2776
        %v2785 = vcombine.high %v2783, %v2783
        %v2786 = vcombine.high %v1618, %v1618
        %v2788 = vunpack.c.l.s4 1983009808
        %v2789 = vunpack.c.0.s8 %v2788
        %v2790 = vlaneseq
        %v2791 = vshrl.u32 %v2790, 7
        %v2792 = vsub.s32 %v2789, %v2791
        %v2793 = vrot.slane %v1618, %v2792
        %v2795 = vunpack.c.l.s4 1983009808
        %v2796 = vunpack.c.0.s8 %v2795
        %v2797 = vlaneseq
        %v2798 = vshrl.u32 %v2797, 7
        %v2799 = vsub.s32 %v2796, %v2798
        %v2800 = vrot.slane %v2786, %v2799
        %v2801 = vcombine.high %v2793, %v2793
        %v2802 = vcombine.high %v2800, %v2800
        %v2803 = vcombine.high %v1619, %v1619
        %v2805 = vunpack.c.l.s4 1983009808
        %v2806 = vunpack.c.0.s8 %v2805
        %v2807 = vlaneseq
        %v2808 = vshrl.u32 %v2807, 7
        %v2809 = vsub.s32 %v2806, %v2808
        %v2810 = vrot.slane %v1619, %v2809
        %v2812 = vunpack.c.l.s4 1983009808
        %v2813 = vunpack.c.0.s8 %v2812
        %v2814 = vlaneseq
        %v2815 = vshrl.u32 %v2814, 7
        %v2816 = vsub.s32 %v2813, %v2815
        %v2817 = vrot.slane %v2803, %v2816
        %v2818 = vcombine.high %v2810, %v2810
        %v2819 = vcombine.high %v2817, %v2817
        %v2820 = vcombine.high %v1620, %v1620
        %v2822 = vunpack.c.l.s4 1983009808
        %v2823 = vunpack.c.0.s8 %v2822
        %v2824 = vlaneseq
        %v2825 = vshrl.u32 %v2824, 7
        %v2826 = vsub.s32 %v2823, %v2825
        %v2827 = vrot.slane %v1620, %v2826
        %v2829 = vunpack.c.l.s4 1983009808
        %v2830 = vunpack.c.0.s8 %v2829
        %v2831 = vlaneseq
        %v2832 = vshrl.u32 %v2831, 7
        %v2833 = vsub.s32 %v2830, %v2832
        %v2834 = vrot.slane %v2820, %v2833
        %v2835 = vcombine.high %v2827, %v2827
        %v2836 = vcombine.high %v2834, %v2834
        %v2837 = vcombine.high %v1621, %v1621
        %v2839 = vunpack.c.l.s4 1983009808
        %v2840 = vunpack.c.0.s8 %v2839
        %v2841 = vlaneseq
        %v2842 = vshrl.u32 %v2841, 7
        %v2843 = vsub.s32 %v2840, %v2842
        %v2844 = vrot.slane %v1621, %v2843
        %v2846 = vunpack.c.l.s4 1983009808
        %v2847 = vunpack.c.0.s8 %v2846
        %v2848 = vlaneseq
        %v2849 = vshrl.u32 %v2848, 7
        %v2850 = vsub.s32 %v2847, %v2849
        %v2851 = vrot.slane %v2837, %v2850
        %v2852 = vcombine.high %v2844, %v2844
        %v2853 = vcombine.high %v2851, %v2851
        %v2854 = vcombine.high %v1622, %v1622
        %v2856 = vunpack.c.l.s4 1983009808
        %v2857 = vunpack.c.0.s8 %v2856
        %v2858 = vlaneseq
        %v2859 = vshrl.u32 %v2858, 7
        %v2860 = vsub.s32 %v2857, %v2859
        %v2861 = vrot.slane %v1622, %v2860
        %v2863 = vunpack.c.l.s4 1983009808
        %v2864 = vunpack.c.0.s8 %v2863
        %v2865 = vlaneseq
        %v2866 = vshrl.u32 %v2865, 7
        %v2867 = vsub.s32 %v2864, %v2866
        %v2868 = vrot.slane %v2854, %v2867
        %v2869 = vcombine.high %v2861, %v2861
        %v2870 = vcombine.high %v2868, %v2868
        %v2871 = vcombine.high %v1623, %v1623
        %v2873 = vunpack.c.l.s4 1983009808
        %v2874 = vunpack.c.0.s8 %v2873
        %v2875 = vlaneseq
        %v2876 = vshrl.u32 %v2875, 7
        %v2877 = vsub.s32 %v2874, %v2876
        %v2878 = vrot.slane %v1623, %v2877
        %v2880 = vunpack.c.l.s4 1983009808
        %v2881 = vunpack.c.0.s8 %v2880
        %v2882 = vlaneseq
        %v2883 = vshrl.u32 %v2882, 7
        %v2884 = vsub.s32 %v2881, %v2883
        %v2885 = vrot.slane %v2871, %v2884
        %v2886 = vcombine.high %v2878, %v2878
        %v2887 = vcombine.high %v2885, %v2885
        %v2888 = vcombine.high %v1624, %v1624
        %v2890 = vunpack.c.l.s4 1983009808
        %v2891 = vunpack.c.0.s8 %v2890
        %v2892 = vlaneseq
        %v2893 = vshrl.u32 %v2892, 7
        %v2894 = vsub.s32 %v2891, %v2893
        %v2895 = vrot.slane %v1624, %v2894
        %v2897 = vunpack.c.l.s4 1983009808
        %v2898 = vunpack.c.0.s8 %v2897
        %v2899 = vlaneseq
        %v2900 = vshrl.u32 %v2899, 7
        %v2901 = vsub.s32 %v2898, %v2900
        %v2902 = vrot.slane %v2888, %v2901
        %v2903 = vcombine.high %v2895, %v2895
        %v2904 = vcombine.high %v2902, %v2902
        %v2905 = vcombine.high %v1625, %v1625
        %v2907 = vunpack.c.l.s4 1983009808
        %v2908 = vunpack.c.0.s8 %v2907
        %v2909 = vlaneseq
        %v2910 = vshrl.u32 %v2909, 7
        %v2911 = vsub.s32 %v2908, %v2910
        %v2912 = vrot.slane %v1625, %v2911
        %v2914 = vunpack.c.l.s4 1983009808
        %v2915 = vunpack.c.0.s8 %v2914
        %v2916 = vlaneseq
        %v2917 = vshrl.u32 %v2916, 7
        %v2918 = vsub.s32 %v2915, %v2917
        %v2919 = vrot.slane %v2905, %v2918
        %v2920 = vcombine.high %v2912, %v2912
        %v2921 = vcombine.high %v2919, %v2919
        %v3210 = vrot.slane %v1705, 7
        %v3211 = vrot.slane %v3210, 2
        %v3212 = vrot.slane %v1713, 7
        %v3213 = vrot.slane %v3212, 2
        %v3214 = vrot.slane %v1712, 7
        %v3215 = vrot.slane %v3214, 2
        %v3216 = vrot.slane %v1714, 7
        %v3217 = vrot.slane %v3216, 2
        %v3218 = vrot.slane %v1722, 7
        %v3219 = vrot.slane %v3218, 2
        %v3220 = vrot.slane %v1730, 7
        %v3221 = vrot.slane %v3220, 2
        %v3222 = vrot.slane %v1729, 7
        %v3223 = vrot.slane %v3222, 2
        %v3224 = vrot.slane %v1731, 7
        %v3225 = vrot.slane %v3224, 2
        %v3226 = vrot.slane %v1739, 7
        %v3227 = vrot.slane %v3226, 2
        %v3228 = vrot.slane %v1747, 7
        %v3229 = vrot.slane %v3228, 2
        %v3230 = vrot.slane %v1746, 7
        %v3231 = vrot.slane %v3230, 2
        %v3232 = vrot.slane %v1748, 7
        %v3233 = vrot.slane %v3232, 2
        %v3234 = vrot.slane %v1756, 7
        %v3235 = vrot.slane %v3234, 2
        %v3236 = vrot.slane %v1764, 7
        %v3237 = vrot.slane %v3236, 2
        %v3238 = vrot.slane %v1763, 7
        %v3239 = vrot.slane %v3238, 2
        %v3240 = vrot.slane %v1765, 7
        %v3241 = vrot.slane %v3240, 2
        %v3242 = vrot.slane %v1773, 7
        %v3243 = vrot.slane %v3242, 2
        %v3244 = vrot.slane %v1781, 7
        %v3245 = vrot.slane %v3244, 2
        %v3246 = vrot.slane %v1780, 7
        %v3247 = vrot.slane %v3246, 2
        %v3248 = vrot.slane %v1782, 7
        %v3249 = vrot.slane %v3248, 2
        %v3250 = vrot.slane %v1790, 7
        %v3251 = vrot.slane %v3250, 2
        %v3252 = vrot.slane %v1798, 7
        %v3253 = vrot.slane %v3252, 2
        %v3254 = vrot.slane %v1797, 7
        %v3255 = vrot.slane %v3254, 2
        %v3256 = vrot.slane %v1799, 7
        %v3257 = vrot.slane %v3256, 2
        %v3258 = vrot.slane %v1807, 7
        %v3259 = vrot.slane %v3258, 2
        %v3260 = vrot.slane %v1815, 7
        %v3261 = vrot.slane %v3260, 2
        %v3262 = vrot.slane %v1814, 7
        %v3263 = vrot.slane %v3262, 2
        %v3264 = vrot.slane %v1816, 7
        %v3265 = vrot.slane %v3264, 2
        %v3266 = vrot.slane %v1824, 7
        %v3267 = vrot.slane %v3266, 2
        %v3268 = vrot.slane %v1832, 7
        %v3269 = vrot.slane %v3268, 2
        %v3270 = vrot.slane %v1831, 7
        %v3271 = vrot.slane %v3270, 2
        %v3272 = vrot.slane %v1833, 7
        %v3273 = vrot.slane %v3272, 2
        %v3274 = vrot.slane %v1841, 7
        %v3275 = vrot.slane %v3274, 2
        %v3276 = vrot.slane %v1849, 7
        %v3277 = vrot.slane %v3276, 2
        %v3278 = vrot.slane %v1848, 7
        %v3279 = vrot.slane %v3278, 2
        %v3280 = vrot.slane %v1850, 7
        %v3281 = vrot.slane %v3280, 2
        %v3282 = vrot.slane %v1858, 7
        %v3283 = vrot.slane %v3282, 2
        %v3284 = vrot.slane %v1866, 7
        %v3285 = vrot.slane %v3284, 2
        %v3286 = vrot.slane %v1865, 7
        %v3287 = vrot.slane %v3286, 2
        %v3288 = vrot.slane %v1867, 7
        %v3289 = vrot.slane %v3288, 2
        %v3290 = vrot.slane %v1875, 7
        %v3291 = vrot.slane %v3290, 2
        %v3292 = vrot.slane %v1883, 7
        %v3293 = vrot.slane %v3292, 2
        %v3294 = vrot.slane %v1882, 7
        %v3295 = vrot.slane %v3294, 2
        %v3296 = vrot.slane %v1884, 7
        %v3297 = vrot.slane %v3296, 2
        %v3298 = vrot.slane %v1892, 7
        %v3299 = vrot.slane %v3298, 2
        %v3300 = vrot.slane %v1900, 7
        %v3301 = vrot.slane %v3300, 2
        %v3302 = vrot.slane %v1899, 7
        %v3303 = vrot.slane %v3302, 2
        %v3304 = vrot.slane %v1901, 7
        %v3305 = vrot.slane %v3304, 2
        %v3306 = vrot.slane %v1909, 7
        %v3307 = vrot.slane %v3306, 2
        %v3308 = vrot.slane %v1917, 7
        %v3309 = vrot.slane %v3308, 2
        %v3310 = vrot.slane %v1916, 7
        %v3311 = vrot.slane %v3310, 2
        %v3312 = vrot.slane %v1918, 7
        %v3313 = vrot.slane %v3312, 2
        %v3314 = vrot.slane %v1926, 7
        %v3315 = vrot.slane %v3314, 2
        %v3316 = vrot.slane %v1934, 7
        %v3317 = vrot.slane %v3316, 2
        %v3318 = vrot.slane %v1933, 7
        %v3319 = vrot.slane %v3318, 2
        %v3320 = vrot.slane %v1935, 7
        %v3321 = vrot.slane %v3320, 2
        %v3322 = vrot.slane %v1943, 7
        %v3323 = vrot.slane %v3322, 2
        %v3324 = vrot.slane %v1951, 7
        %v3325 = vrot.slane %v3324, 2
        %v3326 = vrot.slane %v1950, 7
        %v3327 = vrot.slane %v3326, 2
        %v3328 = vrot.slane %v1952, 7
        %v3329 = vrot.slane %v3328, 2
        %v3330 = vrot.slane %v1960, 7
        %v3331 = vrot.slane %v3330, 2
        %v3332 = vrot.slane %v1968, 7
        %v3333 = vrot.slane %v3332, 2
        %v3334 = vrot.slane %v1967, 7
        %v3335 = vrot.slane %v3334, 2
        %v3336 = vrot.slane %v1969, 7
        %v3337 = vrot.slane %v3336, 2
        %v3338 = vrot.slane %v1977, 7
        %v3339 = vrot.slane %v3338, 2
        %v3340 = vrot.slane %v1985, 7
        %v3341 = vrot.slane %v3340, 2
        %v3342 = vrot.slane %v1984, 7
        %v3343 = vrot.slane %v3342, 2
        %v3344 = vrot.slane %v1986, 7
        %v3345 = vrot.slane %v3344, 2
        %v3346 = vrot.slane %v1994, 7
        %v3347 = vrot.slane %v3346, 2
        %v3348 = vrot.slane %v2002, 7
        %v3349 = vrot.slane %v3348, 2
        %v3350 = vrot.slane %v2001, 7
        %v3351 = vrot.slane %v3350, 2
        %v3352 = vrot.slane %v2003, 7
        %v3353 = vrot.slane %v3352, 2
        %v3354 = vrot.slane %v2011, 7
        %v3355 = vrot.slane %v3354, 2
        %v3356 = vrot.slane %v2019, 7
        %v3357 = vrot.slane %v3356, 2
        %v3358 = vrot.slane %v2018, 7
        %v3359 = vrot.slane %v3358, 2
        %v3360 = vrot.slane %v2020, 7
        %v3361 = vrot.slane %v3360, 2
        %v3362 = vrot.slane %v2028, 7
        %v3363 = vrot.slane %v3362, 2
        %v3364 = vrot.slane %v2036, 7
        %v3365 = vrot.slane %v3364, 2
        %v3366 = vrot.slane %v2035, 7
        %v3367 = vrot.slane %v3366, 2
        %v3368 = vrot.slane %v2037, 7
        %v3369 = vrot.slane %v3368, 2
        %v3370 = vrot.slane %v2045, 7
        %v3371 = vrot.slane %v3370, 2
        %v3372 = vrot.slane %v2053, 7
        %v3373 = vrot.slane %v3372, 2
        %v3374 = vrot.slane %v2052, 7
        %v3375 = vrot.slane %v3374, 2
        %v3376 = vrot.slane %v2054, 7
        %v3377 = vrot.slane %v3376, 2
        %v3378 = vrot.slane %v2062, 7
        %v3379 = vrot.slane %v3378, 2
        %v3380 = vrot.slane %v2070, 7
        %v3381 = vrot.slane %v3380, 2
        %v3382 = vrot.slane %v2069, 7
        %v3383 = vrot.slane %v3382, 2
        %v3384 = vrot.slane %v2071, 7
        %v3385 = vrot.slane %v3384, 2
        %v3386 = vrot.slane %v2079, 7
        %v3387 = vrot.slane %v3386, 2
        %v3388 = vrot.slane %v2087, 7
        %v3389 = vrot.slane %v3388, 2
        %v3390 = vrot.slane %v2086, 7
        %v3391 = vrot.slane %v3390, 2
        %v3392 = vrot.slane %v2088, 7
        %v3393 = vrot.slane %v3392, 2
        %v3394 = vrot.slane %v2096, 7
        %v3395 = vrot.slane %v3394, 2
        %v3396 = vrot.slane %v2104, 7
        %v3397 = vrot.slane %v3396, 2
        %v3398 = vrot.slane %v2103, 7
        %v3399 = vrot.slane %v3398, 2
        %v3400 = vrot.slane %v2105, 7
        %v3401 = vrot.slane %v3400, 2
        %v3402 = vrot.slane %v2113, 7
        %v3403 = vrot.slane %v3402, 2
        %v3404 = vrot.slane %v2121, 7
        %v3405 = vrot.slane %v3404, 2
        %v3406 = vrot.slane %v2120, 7
        %v3407 = vrot.slane %v3406, 2
        %v3408 = vrot.slane %v2122, 7
        %v3409 = vrot.slane %v3408, 2
        %v3410 = vrot.slane %v2130, 7
        %v3411 = vrot.slane %v3410, 2
        %v3412 = vrot.slane %v2138, 7
        %v3413 = vrot.slane %v3412, 2
        %v3414 = vrot.slane %v2137, 7
        %v3415 = vrot.slane %v3414, 2
        %v3416 = vrot.slane %v2139, 7
        %v3417 = vrot.slane %v3416, 2
        %v3418 = vrot.slane %v2147, 7
        %v3419 = vrot.slane %v3418, 2
        %v3420 = vrot.slane %v2155, 7
        %v3421 = vrot.slane %v3420, 2
        %v3422 = vrot.slane %v2154, 7
        %v3423 = vrot.slane %v3422, 2
        %v3424 = vrot.slane %v2156, 7
        %v3425 = vrot.slane %v3424, 2
        %v3426 = vrot.slane %v2164, 7
        %v3427 = vrot.slane %v3426, 2
        %v3428 = vrot.slane %v2172, 7
        %v3429 = vrot.slane %v3428, 2
        %v3430 = vrot.slane %v2171, 7
        %v3431 = vrot.slane %v3430, 2
        %v3432 = vrot.slane %v2173, 7
        %v3433 = vrot.slane %v3432, 2
        %v3434 = vrot.slane %v2181, 7
        %v3435 = vrot.slane %v3434, 2
        %v3436 = vrot.slane %v2189, 7
        %v3437 = vrot.slane %v3436, 2
        %v3438 = vrot.slane %v2188, 7
        %v3439 = vrot.slane %v3438, 2
        %v3440 = vrot.slane %v2190, 7
        %v3441 = vrot.slane %v3440, 2
        %v3442 = vrot.slane %v2198, 7
        %v3443 = vrot.slane %v3442, 2
        %v3444 = vrot.slane %v2206, 7
        %v3445 = vrot.slane %v3444, 2
        %v3446 = vrot.slane %v2205, 7
        %v3447 = vrot.slane %v3446, 2
        %v3448 = vrot.slane %v2207, 7
        %v3449 = vrot.slane %v3448, 2
        %v3450 = vrot.slane %v2215, 7
        %v3451 = vrot.slane %v3450, 2
        %v3452 = vrot.slane %v2223, 7
        %v3453 = vrot.slane %v3452, 2
        %v3454 = vrot.slane %v2222, 7
        %v3455 = vrot.slane %v3454, 2
        %v3456 = vrot.slane %v2224, 7
        %v3457 = vrot.slane %v3456, 2
        %v3458 = vrot.slane %v2232, 7
        %v3459 = vrot.slane %v3458, 2
        %v3460 = vrot.slane %v2240, 7
        %v3461 = vrot.slane %v3460, 2
        %v3462 = vrot.slane %v2239, 7
        %v3463 = vrot.slane %v3462, 2
        %v3464 = vrot.slane %v2241, 7
        %v3465 = vrot.slane %v3464, 2
        %v3466 = vrot.slane %v2249, 7
        %v3467 = vrot.slane %v3466, 2
        %v3468 = vrot.slane %v2257, 7
        %v3469 = vrot.slane %v3468, 2
        %v3470 = vrot.slane %v2256, 7
        %v3471 = vrot.slane %v3470, 2
        %v3472 = vrot.slane %v2258, 7
        %v3473 = vrot.slane %v3472, 2
        %v3474 = vrot.slane %v2266, 7
        %v3475 = vrot.slane %v3474, 2
        %v3476 = vrot.slane %v2274, 7
        %v3477 = vrot.slane %v3476, 2
        %v3478 = vrot.slane %v2273, 7
        %v3479 = vrot.slane %v3478, 2
        %v3480 = vrot.slane %v2275, 7
        %v3481 = vrot.slane %v3480, 2
        %v3482 = vrot.slane %v2283, 7
        %v3483 = vrot.slane %v3482, 2
        %v3484 = vrot.slane %v2291, 7
        %v3485 = vrot.slane %v3484, 2
        %v3486 = vrot.slane %v2290, 7
        %v3487 = vrot.slane %v3486, 2
        %v3488 = vrot.slane %v2292, 7
        %v3489 = vrot.slane %v3488, 2
        %v3490 = vrot.slane %v2300, 7
        %v3491 = vrot.slane %v3490, 2
        %v3492 = vrot.slane %v2308, 7
        %v3493 = vrot.slane %v3492, 2
        %v3494 = vrot.slane %v2307, 7
        %v3495 = vrot.slane %v3494, 2
        %v3496 = vrot.slane %v2309, 7
        %v3497 = vrot.slane %v3496, 2
        %v3498 = vrot.slane %v2317, 7
        %v3499 = vrot.slane %v3498, 2
        %v3500 = vrot.slane %v2325, 7
        %v3501 = vrot.slane %v3500, 2
        %v3502 = vrot.slane %v2324, 7
        %v3503 = vrot.slane %v3502, 2
        %v3504 = vrot.slane %v2326, 7
        %v3505 = vrot.slane %v3504, 2
        %v3506 = vrot.slane %v2334, 7
        %v3507 = vrot.slane %v3506, 2
        %v3508 = vrot.slane %v2342, 7
        %v3509 = vrot.slane %v3508, 2
        %v3510 = vrot.slane %v2341, 7
        %v3511 = vrot.slane %v3510, 2
        %v3512 = vrot.slane %v2343, 7
        %v3513 = vrot.slane %v3512, 2
        %v3514 = vrot.slane %v2351, 7
        %v3515 = vrot.slane %v3514, 2
        %v3516 = vrot.slane %v2359, 7
        %v3517 = vrot.slane %v3516, 2
        %v3518 = vrot.slane %v2358, 7
        %v3519 = vrot.slane %v3518, 2
        %v3520 = vrot.slane %v2360, 7
        %v3521 = vrot.slane %v3520, 2
        %v3522 = vrot.slane %v2368, 7
        %v3523 = vrot.slane %v3522, 2
        %v3524 = vrot.slane %v2376, 7
        %v3525 = vrot.slane %v3524, 2
        %v3526 = vrot.slane %v2375, 7
        %v3527 = vrot.slane %v3526, 2
        %v3528 = vrot.slane %v2377, 7
        %v3529 = vrot.slane %v3528, 2
        %v3530 = vrot.slane %v2385, 7
        %v3531 = vrot.slane %v3530, 2
        %v3532 = vrot.slane %v2393, 7
        %v3533 = vrot.slane %v3532, 2
        %v3534 = vrot.slane %v2392, 7
        %v3535 = vrot.slane %v3534, 2
        %v3536 = vrot.slane %v2394, 7
        %v3537 = vrot.slane %v3536, 2
        %v3538 = vrot.slane %v2402, 7
        %v3539 = vrot.slane %v3538, 2
        %v3540 = vrot.slane %v2410, 7
        %v3541 = vrot.slane %v3540, 2
        %v3542 = vrot.slane %v2409, 7
        %v3543 = vrot.slane %v3542, 2
        %v3544 = vrot.slane %v2411, 7
        %v3545 = vrot.slane %v3544, 2
        %v3546 = vrot.slane %v2419, 7
        %v3547 = vrot.slane %v3546, 2
        %v3548 = vrot.slane %v2427, 7
        %v3549 = vrot.slane %v3548, 2
        %v3550 = vrot.slane %v2426, 7
        %v3551 = vrot.slane %v3550, 2
        %v3552 = vrot.slane %v2428, 7
        %v3553 = vrot.slane %v3552, 2
        %v3554 = vrot.slane %v2436, 7
        %v3555 = vrot.slane %v3554, 2
        %v3556 = vrot.slane %v2444, 7
        %v3557 = vrot.slane %v3556, 2
        %v3558 = vrot.slane %v2443, 7
        %v3559 = vrot.slane %v3558, 2
        %v3560 = vrot.slane %v2445, 7
        %v3561 = vrot.slane %v3560, 2
        %v3562 = vrot.slane %v2453, 7
        %v3563 = vrot.slane %v3562, 2
        %v3564 = vrot.slane %v2461, 7
        %v3565 = vrot.slane %v3564, 2
        %v3566 = vrot.slane %v2460, 7
        %v3567 = vrot.slane %v3566, 2
        %v3568 = vrot.slane %v2462, 7
        %v3569 = vrot.slane %v3568, 2
        %v3570 = vrot.slane %v2470, 7
        %v3571 = vrot.slane %v3570, 2
        %v3572 = vrot.slane %v2478, 7
        %v3573 = vrot.slane %v3572, 2
        %v3574 = vrot.slane %v2477, 7
        %v3575 = vrot.slane %v3574, 2
        %v3576 = vrot.slane %v2479, 7
        %v3577 = vrot.slane %v3576, 2
        %v3578 = vrot.slane %v2487, 7
        %v3579 = vrot.slane %v3578, 2
        %v3580 = vrot.slane %v2495, 7
        %v3581 = vrot.slane %v3580, 2
        %v3582 = vrot.slane %v2494, 7
        %v3583 = vrot.slane %v3582, 2
        %v3584 = vrot.slane %v2496, 7
        %v3585 = vrot.slane %v3584, 2
        %v3586 = vrot.slane %v2504, 7
        %v3587 = vrot.slane %v3586, 2
        %v3588 = vrot.slane %v2512, 7
        %v3589 = vrot.slane %v3588, 2
        %v3590 = vrot.slane %v2511, 7
        %v3591 = vrot.slane %v3590, 2
        %v3592 = vrot.slane %v2513, 7
        %v3593 = vrot.slane %v3592, 2
        %v3594 = vrot.slane %v2521, 7
        %v3595 = vrot.slane %v3594, 2
        %v3596 = vrot.slane %v2529, 7
        %v3597 = vrot.slane %v3596, 2
        %v3598 = vrot.slane %v2528, 7
        %v3599 = vrot.slane %v3598, 2
        %v3600 = vrot.slane %v2530, 7
        %v3601 = vrot.slane %v3600, 2
        %v3602 = vrot.slane %v2538, 7
        %v3603 = vrot.slane %v3602, 2
        %v3604 = vrot.slane %v2546, 7
        %v3605 = vrot.slane %v3604, 2
        %v3606 = vrot.slane %v2545, 7
        %v3607 = vrot.slane %v3606, 2
        %v3608 = vrot.slane %v2547, 7
        %v3609 = vrot.slane %v3608, 2
        %v3610 = vrot.slane %v2555, 7
        %v3611 = vrot.slane %v3610, 2
        %v3612 = vrot.slane %v2563, 7
        %v3613 = vrot.slane %v3612, 2
        %v3614 = vrot.slane %v2562, 7
        %v3615 = vrot.slane %v3614, 2
        %v3616 = vrot.slane %v2564, 7
        %v3617 = vrot.slane %v3616, 2
        %v3618 = vrot.slane %v2572, 7
        %v3619 = vrot.slane %v3618, 2
        %v3620 = vrot.slane %v2580, 7
        %v3621 = vrot.slane %v3620, 2
        %v3622 = vrot.slane %v2579, 7
        %v3623 = vrot.slane %v3622, 2
        %v3624 = vrot.slane %v2581, 7
        %v3625 = vrot.slane %v3624, 2
        %v3626 = vrot.slane %v2589, 7
        %v3627 = vrot.slane %v3626, 2
        %v3628 = vrot.slane %v2597, 7
        %v3629 = vrot.slane %v3628, 2
        %v3630 = vrot.slane %v2596, 7
        %v3631 = vrot.slane %v3630, 2
        %v3632 = vrot.slane %v2598, 7
        %v3633 = vrot.slane %v3632, 2
        %v3634 = vrot.slane %v2606, 7
        %v3635 = vrot.slane %v3634, 2
        %v3636 = vrot.slane %v2614, 7
        %v3637 = vrot.slane %v3636, 2
        %v3638 = vrot.slane %v2613, 7
        %v3639 = vrot.slane %v3638, 2
        %v3640 = vrot.slane %v2615, 7
        %v3641 = vrot.slane %v3640, 2
        %v3642 = vrot.slane %v2623, 7
        %v3643 = vrot.slane %v3642, 2
        %v3644 = vrot.slane %v2631, 7
        %v3645 = vrot.slane %v3644, 2
        %v3646 = vrot.slane %v2630, 7
        %v3647 = vrot.slane %v3646, 2
        %v3648 = vrot.slane %v2632, 7
        %v3649 = vrot.slane %v3648, 2
        %v3650 = vrot.slane %v2640, 7
        %v3651 = vrot.slane %v3650, 2
        %v3652 = vrot.slane %v2648, 7
        %v3653 = vrot.slane %v3652, 2
        %v3654 = vrot.slane %v2647, 7
        %v3655 = vrot.slane %v3654, 2
        %v3656 = vrot.slane %v2649, 7
        %v3657 = vrot.slane %v3656, 2
        %v3658 = vrot.slane %v2657, 7
        %v3659 = vrot.slane %v3658, 2
        %v3660 = vrot.slane %v2665, 7
        %v3661 = vrot.slane %v3660, 2
        %v3662 = vrot.slane %v2664, 7
        %v3663 = vrot.slane %v3662, 2
        %v3664 = vrot.slane %v2666, 7
        %v3665 = vrot.slane %v3664, 2
        %v3666 = vrot.slane %v2674, 7
        %v3667 = vrot.slane %v3666, 2
        %v3668 = vrot.slane %v2682, 7
        %v3669 = vrot.slane %v3668, 2
        %v3670 = vrot.slane %v2681, 7
        %v3671 = vrot.slane %v3670, 2
        %v3672 = vrot.slane %v2683, 7
        %v3673 = vrot.slane %v3672, 2
        %v3674 = vrot.slane %v2691, 7
        %v3675 = vrot.slane %v3674, 2
        %v3676 = vrot.slane %v2699, 7
        %v3677 = vrot.slane %v3676, 2
        %v3678 = vrot.slane %v2698, 7
        %v3679 = vrot.slane %v3678, 2
        %v3680 = vrot.slane %v2700, 7
        %v3681 = vrot.slane %v3680, 2
        %v3682 = vrot.slane %v2708, 7
        %v3683 = vrot.slane %v3682, 2
        %v3684 = vrot.slane %v2716, 7
        %v3685 = vrot.slane %v3684, 2
        %v3686 = vrot.slane %v2715, 7
        %v3687 = vrot.slane %v3686, 2
        %v3688 = vrot.slane %v2717, 7
        %v3689 = vrot.slane %v3688, 2
        %v3690 = vrot.slane %v2725, 7
        %v3691 = vrot.slane %v3690, 2
        %v3692 = vrot.slane %v2733, 7
        %v3693 = vrot.slane %v3692, 2
        %v3694 = vrot.slane %v2732, 7
        %v3695 = vrot.slane %v3694, 2
        %v3696 = vrot.slane %v2734, 7
        %v3697 = vrot.slane %v3696, 2
        %v3698 = vrot.slane %v2742, 7
        %v3699 = vrot.slane %v3698, 2
        %v3700 = vrot.slane %v2750, 7
        %v3701 = vrot.slane %v3700, 2
        %v3702 = vrot.slane %v2749, 7
        %v3703 = vrot.slane %v3702, 2
        %v3704 = vrot.slane %v2751, 7
        %v3705 = vrot.slane %v3704, 2
        %v3706 = vrot.slane %v2759, 7
        %v3707 = vrot.slane %v3706, 2
        %v3708 = vrot.slane %v2767, 7
        %v3709 = vrot.slane %v3708, 2
        %v3710 = vrot.slane %v2766, 7
        %v3711 = vrot.slane %v3710, 2
        %v3712 = vrot.slane %v2768, 7
        %v3713 = vrot.slane %v3712, 2
        %v3714 = vrot.slane %v2776, 7
        %v3715 = vrot.slane %v3714, 2
        %v3716 = vrot.slane %v2784, 7
        %v3717 = vrot.slane %v3716, 2
        %v3718 = vrot.slane %v2783, 7
        %v3719 = vrot.slane %v3718, 2
        %v3720 = vrot.slane %v2785, 7
        %v3721 = vrot.slane %v3720, 2
        %v3722 = vrot.slane %v2793, 7
        %v3723 = vrot.slane %v3722, 2
        %v3724 = vrot.slane %v2801, 7
        %v3725 = vrot.slane %v3724, 2
        %v3726 = vrot.slane %v2800, 7
        %v3727 = vrot.slane %v3726, 2
        %v3728 = vrot.slane %v2802, 7
        %v3729 = vrot.slane %v3728, 2
        %v3730 = vrot.slane %v2810, 7
        %v3731 = vrot.slane %v3730, 2
        %v3732 = vrot.slane %v2818, 7
        %v3733 = vrot.slane %v3732, 2
        %v3734 = vrot.slane %v2817, 7
        %v3735 = vrot.slane %v3734, 2
        %v3736 = vrot.slane %v2819, 7
        %v3737 = vrot.slane %v3736, 2
        %v3738 = vrot.slane %v2827, 7
        %v3739 = vrot.slane %v3738, 2
        %v3740 = vrot.slane %v2835, 7
        %v3741 = vrot.slane %v3740, 2
        %v3742 = vrot.slane %v2834, 7
        %v3743 = vrot.slane %v3742, 2
        %v3744 = vrot.slane %v2836, 7
        %v3745 = vrot.slane %v3744, 2
        %v3746 = vrot.slane %v2844, 7
        %v3747 = vrot.slane %v3746, 2
        %v3748 = vrot.slane %v2852, 7
        %v3749 = vrot.slane %v3748, 2
        %v3750 = vrot.slane %v2851, 7
        %v3751 = vrot.slane %v3750, 2
        %v3752 = vrot.slane %v2853, 7
        %v3753 = vrot.slane %v3752, 2
        %v3754 = vrot.slane %v2861, 7
        %v3755 = vrot.slane %v3754, 2
        %v3756 = vrot.slane %v2869, 7
        %v3757 = vrot.slane %v3756, 2
        %v3758 = vrot.slane %v2868, 7
        %v3759 = vrot.slane %v3758, 2
        %v3760 = vrot.slane %v2870, 7
        %v3761 = vrot.slane %v3760, 2
        %v3762 = vrot.slane %v2878, 7
        %v3763 = vrot.slane %v3762, 2
        %v3764 = vrot.slane %v2886, 7
        %v3765 = vrot.slane %v3764, 2
        %v3766 = vrot.slane %v2885, 7
        %v3767 = vrot.slane %v3766, 2
        %v3768 = vrot.slane %v2887, 7
        %v3769 = vrot.slane %v3768, 2
        %v3770 = vrot.slane %v2895, 7
        %v3771 = vrot.slane %v3770, 2
        %v3772 = vrot.slane %v2903, 7
        %v3773 = vrot.slane %v3772, 2
        %v3774 = vrot.slane %v2902, 7
        %v3775 = vrot.slane %v3774, 2
        %v3776 = vrot.slane %v2904, 7
        %v3777 = vrot.slane %v3776, 2
        %v3778 = vrot.slane %v2912, 7
        %v3779 = vrot.slane %v3778, 2
        %v3780 = vrot.slane %v2920, 7
        %v3781 = vrot.slane %v3780, 2
        %v3782 = vrot.slane %v2919, 7
        %v3783 = vrot.slane %v3782, 2
        %v3784 = vrot.slane %v2921, 7
        %v3785 = vrot.slane %v3784, 2
        %v4074 = vmax.f32 %v1705, %v3211
        %v4075 = vmax.f32 %v1713, %v3213
        %v4076 = vmax.f32 %v1712, %v3215
        %v4077 = vmax.f32 %v1714, %v3217
        %v4078 = vmax.f32 %v1722, %v3219
        %v4079 = vmax.f32 %v1730, %v3221
        %v4080 = vmax.f32 %v1729, %v3223
        %v4081 = vmax.f32 %v1731, %v3225
        %v4082 = vmax.f32 %v1739, %v3227
        %v4083 = vmax.f32 %v1747, %v3229
        %v4084 = vmax.f32 %v1746, %v3231
        %v4085 = vmax.f32 %v1748, %v3233
        %v4086 = vmax.f32 %v1756, %v3235
        %v4087 = vmax.f32 %v1764, %v3237
        %v4088 = vmax.f32 %v1763, %v3239
        %v4089 = vmax.f32 %v1765, %v3241
        %v4090 = vmax.f32 %v1773, %v3243
        %v4091 = vmax.f32 %v1781, %v3245
        %v4092 = vmax.f32 %v1780, %v3247
        %v4093 = vmax.f32 %v1782, %v3249
        %v4094 = vmax.f32 %v1790, %v3251
        %v4095 = vmax.f32 %v1798, %v3253
        %v4096 = vmax.f32 %v1797, %v3255
        %v4097 = vmax.f32 %v1799, %v3257
        %v4098 = vmax.f32 %v1807, %v3259
        %v4099 = vmax.f32 %v1815, %v3261
        %v4100 = vmax.f32 %v1814, %v3263
        %v4101 = vmax.f32 %v1816, %v3265
        %v4102 = vmax.f32 %v1824, %v3267
        %v4103 = vmax.f32 %v1832, %v3269
        %v4104 = vmax.f32 %v1831, %v3271
        %v4105 = vmax.f32 %v1833, %v3273
        %v4106 = vmax.f32 %v1841, %v3275
        %v4107 = vmax.f32 %v1849, %v3277
        %v4108 = vmax.f32 %v1848, %v3279
        %v4109 = vmax.f32 %v1850, %v3281
        %v4110 = vmax.f32 %v1858, %v3283
        %v4111 = vmax.f32 %v1866, %v3285
        %v4112 = vmax.f32 %v1865, %v3287
        %v4113 = vmax.f32 %v1867, %v3289
        %v4114 = vmax.f32 %v1875, %v3291
        %v4115 = vmax.f32 %v1883, %v3293
        %v4116 = vmax.f32 %v1882, %v3295
        %v4117 = vmax.f32 %v1884, %v3297
        %v4118 = vmax.f32 %v1892, %v3299
        %v4119 = vmax.f32 %v1900, %v3301
        %v4120 = vmax.f32 %v1899, %v3303
        %v4121 = vmax.f32 %v1901, %v3305
        %v4122 = vmax.f32 %v1909, %v3307
        %v4123 = vmax.f32 %v1917, %v3309
        %v4124 = vmax.f32 %v1916, %v3311
        %v4125 = vmax.f32 %v1918, %v3313
        %v4126 = vmax.f32 %v1926, %v3315
        %v4127 = vmax.f32 %v1934, %v3317
        %v4128 = vmax.f32 %v1933, %v3319
        %v4129 = vmax.f32 %v1935, %v3321
        %v4130 = vmax.f32 %v1943, %v3323
        %v4131 = vmax.f32 %v1951, %v3325
        %v4132 = vmax.f32 %v1950, %v3327
        %v4133 = vmax.f32 %v1952, %v3329
        %v4134 = vmax.f32 %v1960, %v3331
        %v4135 = vmax.f32 %v1968, %v3333
        %v4136 = vmax.f32 %v1967, %v3335
        %v4137 = vmax.f32 %v1969, %v3337
        %v4138 = vmax.f32 %v1977, %v3339
        %v4139 = vmax.f32 %v1985, %v3341
        %v4140 = vmax.f32 %v1984, %v3343
        %v4141 = vmax.f32 %v1986, %v3345
        %v4142 = vmax.f32 %v1994, %v3347
        %v4143 = vmax.f32 %v2002, %v3349
        %v4144 = vmax.f32 %v2001, %v3351
        %v4145 = vmax.f32 %v2003, %v3353
        %v4146 = vmax.f32 %v2011, %v3355
        %v4147 = vmax.f32 %v2019, %v3357
        %v4148 = vmax.f32 %v2018, %v3359
        %v4149 = vmax.f32 %v2020, %v3361
        %v4150 = vmax.f32 %v2028, %v3363
        %v4151 = vmax.f32 %v2036, %v3365
        %v4152 = vmax.f32 %v2035, %v3367
        %v4153 = vmax.f32 %v2037, %v3369
        %v4154 = vmax.f32 %v2045, %v3371
        %v4155 = vmax.f32 %v2053, %v3373
        %v4156 = vmax.f32 %v2052, %v3375
        %v4157 = vmax.f32 %v2054, %v3377
        %v4158 = vmax.f32 %v2062, %v3379
        %v4159 = vmax.f32 %v2070, %v3381
        %v4160 = vmax.f32 %v2069, %v3383
        %v4161 = vmax.f32 %v2071, %v3385
        %v4162 = vmax.f32 %v2079, %v3387
        %v4163 = vmax.f32 %v2087, %v3389
        %v4164 = vmax.f32 %v2086, %v3391
        %v4165 = vmax.f32 %v2088, %v3393
        %v4166 = vmax.f32 %v2096, %v3395
        %v4167 = vmax.f32 %v2104, %v3397
        %v4168 = vmax.f32 %v2103, %v3399
        %v4169 = vmax.f32 %v2105, %v3401
        %v4170 = vmax.f32 %v2113, %v3403
        %v4171 = vmax.f32 %v2121, %v3405
        %v4172 = vmax.f32 %v2120, %v3407
        %v4173 = vmax.f32 %v2122, %v3409
        %v4174 = vmax.f32 %v2130, %v3411
        %v4175 = vmax.f32 %v2138, %v3413
        %v4176 = vmax.f32 %v2137, %v3415
        %v4177 = vmax.f32 %v2139, %v3417
        %v4178 = vmax.f32 %v2147, %v3419
        %v4179 = vmax.f32 %v2155, %v3421
        %v4180 = vmax.f32 %v2154, %v3423
        %v4181 = vmax.f32 %v2156, %v3425
        %v4182 = vmax.f32 %v2164, %v3427
        %v4183 = vmax.f32 %v2172, %v3429
        %v4184 = vmax.f32 %v2171, %v3431
        %v4185 = vmax.f32 %v2173, %v3433
        %v4186 = vmax.f32 %v2181, %v3435
        %v4187 = vmax.f32 %v2189, %v3437
        %v4188 = vmax.f32 %v2188, %v3439
        %v4189 = vmax.f32 %v2190, %v3441
        %v4190 = vmax.f32 %v2198, %v3443
        %v4191 = vmax.f32 %v2206, %v3445
        %v4192 = vmax.f32 %v2205, %v3447
        %v4193 = vmax.f32 %v2207, %v3449
        %v4194 = vmax.f32 %v2215, %v3451
        %v4195 = vmax.f32 %v2223, %v3453
        %v4196 = vmax.f32 %v2222, %v3455
        %v4197 = vmax.f32 %v2224, %v3457
        %v4198 = vmax.f32 %v2232, %v3459
        %v4199 = vmax.f32 %v2240, %v3461
        %v4200 = vmax.f32 %v2239, %v3463
        %v4201 = vmax.f32 %v2241, %v3465
        %v4202 = vmax.f32 %v2249, %v3467
        %v4203 = vmax.f32 %v2257, %v3469
        %v4204 = vmax.f32 %v2256, %v3471
        %v4205 = vmax.f32 %v2258, %v3473
        %v4206 = vmax.f32 %v2266, %v3475
        %v4207 = vmax.f32 %v2274, %v3477
        %v4208 = vmax.f32 %v2273, %v3479
        %v4209 = vmax.f32 %v2275, %v3481
        %v4210 = vmax.f32 %v2283, %v3483
        %v4211 = vmax.f32 %v2291, %v3485
        %v4212 = vmax.f32 %v2290, %v3487
        %v4213 = vmax.f32 %v2292, %v3489
        %v4214 = vmax.f32 %v2300, %v3491
        %v4215 = vmax.f32 %v2308, %v3493
        %v4216 = vmax.f32 %v2307, %v3495
        %v4217 = vmax.f32 %v2309, %v3497
        %v4218 = vmax.f32 %v2317, %v3499
        %v4219 = vmax.f32 %v2325, %v3501
        %v4220 = vmax.f32 %v2324, %v3503
        %v4221 = vmax.f32 %v2326, %v3505
        %v4222 = vmax.f32 %v2334, %v3507
        %v4223 = vmax.f32 %v2342, %v3509
        %v4224 = vmax.f32 %v2341, %v3511
        %v4225 = vmax.f32 %v2343, %v3513
        %v4226 = vmax.f32 %v2351, %v3515
        %v4227 = vmax.f32 %v2359, %v3517
        %v4228 = vmax.f32 %v2358, %v3519
        %v4229 = vmax.f32 %v2360, %v3521
        %v4230 = vmax.f32 %v2368, %v3523
        %v4231 = vmax.f32 %v2376, %v3525
        %v4232 = vmax.f32 %v2375, %v3527
        %v4233 = vmax.f32 %v2377, %v3529
        %v4234 = vmax.f32 %v2385, %v3531
        %v4235 = vmax.f32 %v2393, %v3533
        %v4236 = vmax.f32 %v2392, %v3535
        %v4237 = vmax.f32 %v2394, %v3537
        %v4238 = vmax.f32 %v2402, %v3539
        %v4239 = vmax.f32 %v2410, %v3541
        %v4240 = vmax.f32 %v2409, %v3543
        %v4241 = vmax.f32 %v2411, %v3545
        %v4242 = vmax.f32 %v2419, %v3547
        %v4243 = vmax.f32 %v2427, %v3549
        %v4244 = vmax.f32 %v2426, %v3551
        %v4245 = vmax.f32 %v2428, %v3553
        %v4246 = vmax.f32 %v2436, %v3555
        %v4247 = vmax.f32 %v2444, %v3557
        %v4248 = vmax.f32 %v2443, %v3559
        %v4249 = vmax.f32 %v2445, %v3561
        %v4250 = vmax.f32 %v2453, %v3563
        %v4251 = vmax.f32 %v2461, %v3565
        %v4252 = vmax.f32 %v2460, %v3567
        %v4253 = vmax.f32 %v2462, %v3569
        %v4254 = vmax.f32 %v2470, %v3571
        %v4255 = vmax.f32 %v2478, %v3573
        %v4256 = vmax.f32 %v2477, %v3575
        %v4257 = vmax.f32 %v2479, %v3577
        %v4258 = vmax.f32 %v2487, %v3579
        %v4259 = vmax.f32 %v2495, %v3581
        %v4260 = vmax.f32 %v2494, %v3583
        %v4261 = vmax.f32 %v2496, %v3585
        %v4262 = vmax.f32 %v2504, %v3587
        %v4263 = vmax.f32 %v2512, %v3589
        %v4264 = vmax.f32 %v2511, %v3591
        %v4265 = vmax.f32 %v2513, %v3593
        %v4266 = vmax.f32 %v2521, %v3595
        %v4267 = vmax.f32 %v2529, %v3597
        %v4268 = vmax.f32 %v2528, %v3599
        %v4269 = vmax.f32 %v2530, %v3601
        %v4270 = vmax.f32 %v2538, %v3603
        %v4271 = vmax.f32 %v2546, %v3605
        %v4272 = vmax.f32 %v2545, %v3607
        %v4273 = vmax.f32 %v2547, %v3609
        %v4274 = vmax.f32 %v2555, %v3611
        %v4275 = vmax.f32 %v2563, %v3613
        %v4276 = vmax.f32 %v2562, %v3615
        %v4277 = vmax.f32 %v2564, %v3617
        %v4278 = vmax.f32 %v2572, %v3619
        %v4279 = vmax.f32 %v2580, %v3621
        %v4280 = vmax.f32 %v2579, %v3623
        %v4281 = vmax.f32 %v2581, %v3625
        %v4282 = vmax.f32 %v2589, %v3627
        %v4283 = vmax.f32 %v2597, %v3629
        %v4284 = vmax.f32 %v2596, %v3631
        %v4285 = vmax.f32 %v2598, %v3633
        %v4286 = vmax.f32 %v2606, %v3635
        %v4287 = vmax.f32 %v2614, %v3637
        %v4288 = vmax.f32 %v2613, %v3639
        %v4289 = vmax.f32 %v2615, %v3641
        %v4290 = vmax.f32 %v2623, %v3643
        %v4291 = vmax.f32 %v2631, %v3645
        %v4292 = vmax.f32 %v2630, %v3647
        %v4293 = vmax.f32 %v2632, %v3649
        %v4294 = vmax.f32 %v2640, %v3651
        %v4295 = vmax.f32 %v2648, %v3653
        %v4296 = vmax.f32 %v2647, %v3655
        %v4297 = vmax.f32 %v2649, %v3657
        %v4298 = vmax.f32 %v2657, %v3659
        %v4299 = vmax.f32 %v2665, %v3661
        %v4300 = vmax.f32 %v2664, %v3663
        %v4301 = vmax.f32 %v2666, %v3665
        %v4302 = vmax.f32 %v2674, %v3667
        %v4303 = vmax.f32 %v2682, %v3669
        %v4304 = vmax.f32 %v2681, %v3671
        %v4305 = vmax.f32 %v2683, %v3673
        %v4306 = vmax.f32 %v2691, %v3675
        %v4307 = vmax.f32 %v2699, %v3677
        %v4308 = vmax.f32 %v2698, %v3679
        %v4309 = vmax.f32 %v2700, %v3681
        %v4310 = vmax.f32 %v2708, %v3683
        %v4311 = vmax.f32 %v2716, %v3685
        %v4312 = vmax.f32 %v2715, %v3687
        %v4313 = vmax.f32 %v2717, %v3689
        %v4314 = vmax.f32 %v2725, %v3691
        %v4315 = vmax.f32 %v2733, %v3693
        %v4316 = vmax.f32 %v2732, %v3695
        %v4317 = vmax.f32 %v2734, %v3697
        %v4318 = vmax.f32 %v2742, %v3699
        %v4319 = vmax.f32 %v2750, %v3701
        %v4320 = vmax.f32 %v2749, %v3703
        %v4321 = vmax.f32 %v2751, %v3705
        %v4322 = vmax.f32 %v2759, %v3707
        %v4323 = vmax.f32 %v2767, %v3709
        %v4324 = vmax.f32 %v2766, %v3711
        %v4325 = vmax.f32 %v2768, %v3713
        %v4326 = vmax.f32 %v2776, %v3715
        %v4327 = vmax.f32 %v2784, %v3717
        %v4328 = vmax.f32 %v2783, %v3719
        %v4329 = vmax.f32 %v2785, %v3721
        %v4330 = vmax.f32 %v2793, %v3723
        %v4331 = vmax.f32 %v2801, %v3725
        %v4332 = vmax.f32 %v2800, %v3727
        %v4333 = vmax.f32 %v2802, %v3729
        %v4334 = vmax.f32 %v2810, %v3731
        %v4335 = vmax.f32 %v2818, %v3733
        %v4336 = vmax.f32 %v2817, %v3735
        %v4337 = vmax.f32 %v2819, %v3737
        %v4338 = vmax.f32 %v2827, %v3739
        %v4339 = vmax.f32 %v2835, %v3741
        %v4340 = vmax.f32 %v2834, %v3743
        %v4341 = vmax.f32 %v2836, %v3745
        %v4342 = vmax.f32 %v2844, %v3747
        %v4343 = vmax.f32 %v2852, %v3749
        %v4344 = vmax.f32 %v2851, %v3751
        %v4345 = vmax.f32 %v2853, %v3753
        %v4346 = vmax.f32 %v2861, %v3755
        %v4347 = vmax.f32 %v2869, %v3757
        %v4348 = vmax.f32 %v2868, %v3759
        %v4349 = vmax.f32 %v2870, %v3761
        %v4350 = vmax.f32 %v2878, %v3763
        %v4351 = vmax.f32 %v2886, %v3765
        %v4352 = vmax.f32 %v2885, %v3767
        %v4353 = vmax.f32 %v2887, %v3769
        %v4354 = vmax.f32 %v2895, %v3771
        %v4355 = vmax.f32 %v2903, %v3773
        %v4356 = vmax.f32 %v2902, %v3775
        %v4357 = vmax.f32 %v2904, %v3777
        %v4358 = vmax.f32 %v2912, %v3779
        %v4359 = vmax.f32 %v2920, %v3781
        %v4360 = vmax.f32 %v2919, %v3783
        %v4361 = vmax.f32 %v2921, %v3785
        %v4362 = vmax.f32 %v4074, %v4086
        %v4363 = vmax.f32 %v4075, %v4087
        %v4364 = vmax.f32 %v4076, %v4088
        %v4365 = vmax.f32 %v4077, %v4089
        %v4366 = vmax.f32 %v4078, %v4090
        %v4367 = vmax.f32 %v4079, %v4091
        %v4368 = vmax.f32 %v4080, %v4092
        %v4369 = vmax.f32 %v4081, %v4093
        %v4370 = vmax.f32 %v4082, %v4094
        %v4371 = vmax.f32 %v4083, %v4095
        %v4372 = vmax.f32 %v4084, %v4096
        %v4373 = vmax.f32 %v4085, %v4097
        %v4374 = vmax.f32 %v4098, %v4110
        %v4375 = vmax.f32 %v4099, %v4111
        %v4376 = vmax.f32 %v4100, %v4112
        %v4377 = vmax.f32 %v4101, %v4113
        %v4378 = vmax.f32 %v4102, %v4114
        %v4379 = vmax.f32 %v4103, %v4115
        %v4380 = vmax.f32 %v4104, %v4116
        %v4381 = vmax.f32 %v4105, %v4117
        %v4382 = vmax.f32 %v4106, %v4118
        %v4383 = vmax.f32 %v4107, %v4119
        %v4384 = vmax.f32 %v4108, %v4120
        %v4385 = vmax.f32 %v4109, %v4121
        %v4386 = vmax.f32 %v4122, %v4134
        %v4387 = vmax.f32 %v4123, %v4135
        %v4388 = vmax.f32 %v4124, %v4136
        %v4389 = vmax.f32 %v4125, %v4137
        %v4390 = vmax.f32 %v4126, %v4138
        %v4391 = vmax.f32 %v4127, %v4139
        %v4392 = vmax.f32 %v4128, %v4140
        %v4393 = vmax.f32 %v4129, %v4141
        %v4394 = vmax.f32 %v4130, %v4142
        %v4395 = vmax.f32 %v4131, %v4143
        %v4396 = vmax.f32 %v4132, %v4144
        %v4397 = vmax.f32 %v4133, %v4145
        %v4398 = vmax.f32 %v4146, %v4158
        %v4399 = vmax.f32 %v4147, %v4159
        %v4400 = vmax.f32 %v4148, %v4160
        %v4401 = vmax.f32 %v4149, %v4161
        %v4402 = vmax.f32 %v4150, %v4162
        %v4403 = vmax.f32 %v4151, %v4163
        %v4404 = vmax.f32 %v4152, %v4164
        %v4405 = vmax.f32 %v4153, %v4165
        %v4406 = vmax.f32 %v4154, %v4166
        %v4407 = vmax.f32 %v4155, %v4167
        %v4408 = vmax.f32 %v4156, %v4168
        %v4409 = vmax.f32 %v4157, %v4169
        %v4410 = vmax.f32 %v4170, %v4182
        %v4411 = vmax.f32 %v4171, %v4183
        %v4412 = vmax.f32 %v4172, %v4184
        %v4413 = vmax.f32 %v4173, %v4185
        %v4414 = vmax.f32 %v4174, %v4186
        %v4415 = vmax.f32 %v4175, %v4187
        %v4416 = vmax.f32 %v4176, %v4188
        %v4417 = vmax.f32 %v4177, %v4189
        %v4418 = vmax.f32 %v4178, %v4190
        %v4419 = vmax.f32 %v4179, %v4191
        %v4420 = vmax.f32 %v4180, %v4192
        %v4421 = vmax.f32 %v4181, %v4193
        %v4422 = vmax.f32 %v4194, %v4206
        %v4423 = vmax.f32 %v4195, %v4207
        %v4424 = vmax.f32 %v4196, %v4208
        %v4425 = vmax.f32 %v4197, %v4209
        %v4426 = vmax.f32 %v4198, %v4210
        %v4427 = vmax.f32 %v4199, %v4211
        %v4428 = vmax.f32 %v4200, %v4212
        %v4429 = vmax.f32 %v4201, %v4213
        %v4430 = vmax.f32 %v4202, %v4214
        %v4431 = vmax.f32 %v4203, %v4215
        %v4432 = vmax.f32 %v4204, %v4216
        %v4433 = vmax.f32 %v4205, %v4217
        %v4434 = vmax.f32 %v4218, %v4230
        %v4435 = vmax.f32 %v4219, %v4231
        %v4436 = vmax.f32 %v4220, %v4232
        %v4437 = vmax.f32 %v4221, %v4233
        %v4438 = vmax.f32 %v4222, %v4234
        %v4439 = vmax.f32 %v4223, %v4235
        %v4440 = vmax.f32 %v4224, %v4236
        %v4441 = vmax.f32 %v4225, %v4237
        %v4442 = vmax.f32 %v4226, %v4238
        %v4443 = vmax.f32 %v4227, %v4239
        %v4444 = vmax.f32 %v4228, %v4240
        %v4445 = vmax.f32 %v4229, %v4241
        %v4446 = vmax.f32 %v4242, %v4254
        %v4447 = vmax.f32 %v4243, %v4255
        %v4448 = vmax.f32 %v4244, %v4256
        %v4449 = vmax.f32 %v4245, %v4257
        %v4450 = vmax.f32 %v4246, %v4258
        %v4451 = vmax.f32 %v4247, %v4259
        %v4452 = vmax.f32 %v4248, %v4260
        %v4453 = vmax.f32 %v4249, %v4261
        %v4454 = vmax.f32 %v4250, %v4262
        %v4455 = vmax.f32 %v4251, %v4263
        %v4456 = vmax.f32 %v4252, %v4264
        %v4457 = vmax.f32 %v4253, %v4265
        %v4458 = vmax.f32 %v4266, %v4278
        %v4459 = vmax.f32 %v4267, %v4279
        %v4460 = vmax.f32 %v4268, %v4280
        %v4461 = vmax.f32 %v4269, %v4281
        %v4462 = vmax.f32 %v4270, %v4282
        %v4463 = vmax.f32 %v4271, %v4283
        %v4464 = vmax.f32 %v4272, %v4284
        %v4465 = vmax.f32 %v4273, %v4285
        %v4466 = vmax.f32 %v4274, %v4286
        %v4467 = vmax.f32 %v4275, %v4287
        %v4468 = vmax.f32 %v4276, %v4288
        %v4469 = vmax.f32 %v4277, %v4289
        %v4470 = vmax.f32 %v4290, %v4302
        %v4471 = vmax.f32 %v4291, %v4303
        %v4472 = vmax.f32 %v4292, %v4304
        %v4473 = vmax.f32 %v4293, %v4305
        %v4474 = vmax.f32 %v4294, %v4306
        %v4475 = vmax.f32 %v4295, %v4307
        %v4476 = vmax.f32 %v4296, %v4308
        %v4477 = vmax.f32 %v4297, %v4309
        %v4478 = vmax.f32 %v4298, %v4310
        %v4479 = vmax.f32 %v4299, %v4311
        %v4480 = vmax.f32 %v4300, %v4312
        %v4481 = vmax.f32 %v4301, %v4313
        %v4482 = vmax.f32 %v4314, %v4326
        %v4483 = vmax.f32 %v4315, %v4327
        %v4484 = vmax.f32 %v4316, %v4328
        %v4485 = vmax.f32 %v4317, %v4329
        %v4486 = vmax.f32 %v4318, %v4330
        %v4487 = vmax.f32 %v4319, %v4331
        %v4488 = vmax.f32 %v4320, %v4332
        %v4489 = vmax.f32 %v4321, %v4333
        %v4490 = vmax.f32 %v4322, %v4334
        %v4491 = vmax.f32 %v4323, %v4335
        %v4492 = vmax.f32 %v4324, %v4336
        %v4493 = vmax.f32 %v4325, %v4337
        %v4494 = vmax.f32 %v4338, %v4350
        %v4495 = vmax.f32 %v4339, %v4351
        %v4496 = vmax.f32 %v4340, %v4352
        %v4497 = vmax.f32 %v4341, %v4353
        %v4498 = vmax.f32 %v4342, %v4354
        %v4499 = vmax.f32 %v4343, %v4355
        %v4500 = vmax.f32 %v4344, %v4356
        %v4501 = vmax.f32 %v4345, %v4357
        %v4502 = vmax.f32 %v4346, %v4358
        %v4503 = vmax.f32 %v4347, %v4359
        %v4504 = vmax.f32 %v4348, %v4360
        %v4505 = vmax.f32 %v4349, %v4361
        %v4570 = vlaneseq
        %v4571 = vshrl.u32 %v4570, 7
        %v4572 = vsub.s32 0, %v4571
        %v4573 = vrot.slane %v4362, %v4572
        %v4574 = vlaneseq
        %v4575 = vshrl.u32 %v4574, 7
        %v4576 = vsub.s32 0, %v4575
        %v4577 = vrot.slane %v4363, %v4576
        %v4578 = vlaneseq
        %v4579 = vshrl.u32 %v4578, 7
        %v4580 = vsub.s32 0, %v4579
        %v4581 = vrot.slane %v4364, %v4580
        %v4582 = vlaneseq
        %v4583 = vshrl.u32 %v4582, 7
        %v4584 = vsub.s32 0, %v4583
        %v4585 = vrot.slane %v4365, %v4584
        %v4586 = vlaneseq
        %v4587 = vshrl.u32 %v4586, 7
        %v4588 = vsub.s32 0, %v4587
        %v4589 = vrot.slane %v4366, %v4588
        %v4590 = vlaneseq
        %v4591 = vshrl.u32 %v4590, 7
        %v4592 = vsub.s32 0, %v4591
        %v4593 = vrot.slane %v4367, %v4592
        %v4594 = vlaneseq
        %v4595 = vshrl.u32 %v4594, 7
        %v4596 = vsub.s32 0, %v4595
        %v4597 = vrot.slane %v4368, %v4596
        %v4598 = vlaneseq
        %v4599 = vshrl.u32 %v4598, 7
        %v4600 = vsub.s32 0, %v4599
        %v4601 = vrot.slane %v4369, %v4600
        %v4602 = vlaneseq
        %v4603 = vshrl.u32 %v4602, 7
        %v4604 = vsub.s32 0, %v4603
        %v4605 = vrot.slane %v4374, %v4604
        %v4606 = vlaneseq
        %v4607 = vshrl.u32 %v4606, 7
        %v4608 = vsub.s32 0, %v4607
        %v4609 = vrot.slane %v4375, %v4608
        %v4610 = vlaneseq
        %v4611 = vshrl.u32 %v4610, 7
        %v4612 = vsub.s32 0, %v4611
        %v4613 = vrot.slane %v4376, %v4612
        %v4614 = vlaneseq
        %v4615 = vshrl.u32 %v4614, 7
        %v4616 = vsub.s32 0, %v4615
        %v4617 = vrot.slane %v4377, %v4616
        %v4618 = vlaneseq
        %v4619 = vshrl.u32 %v4618, 7
        %v4620 = vsub.s32 0, %v4619
        %v4621 = vrot.slane %v4378, %v4620
        %v4622 = vlaneseq
        %v4623 = vshrl.u32 %v4622, 7
        %v4624 = vsub.s32 0, %v4623
        %v4625 = vrot.slane %v4379, %v4624
        %v4626 = vlaneseq
        %v4627 = vshrl.u32 %v4626, 7
        %v4628 = vsub.s32 0, %v4627
        %v4629 = vrot.slane %v4380, %v4628
        %v4630 = vlaneseq
        %v4631 = vshrl.u32 %v4630, 7
        %v4632 = vsub.s32 0, %v4631
        %v4633 = vrot.slane %v4381, %v4632
        %v4634 = vlaneseq
        %v4635 = vshrl.u32 %v4634, 7
        %v4636 = vsub.s32 0, %v4635
        %v4637 = vrot.slane %v4386, %v4636
        %v4638 = vlaneseq
        %v4639 = vshrl.u32 %v4638, 7
        %v4640 = vsub.s32 0, %v4639
        %v4641 = vrot.slane %v4387, %v4640
        %v4642 = vlaneseq
        %v4643 = vshrl.u32 %v4642, 7
        %v4644 = vsub.s32 0, %v4643
        %v4645 = vrot.slane %v4388, %v4644
        %v4646 = vlaneseq
        %v4647 = vshrl.u32 %v4646, 7
        %v4648 = vsub.s32 0, %v4647
        %v4649 = vrot.slane %v4389, %v4648
        %v4650 = vlaneseq
        %v4651 = vshrl.u32 %v4650, 7
        %v4652 = vsub.s32 0, %v4651
        %v4653 = vrot.slane %v4390, %v4652
        %v4654 = vlaneseq
        %v4655 = vshrl.u32 %v4654, 7
        %v4656 = vsub.s32 0, %v4655
        %v4657 = vrot.slane %v4391, %v4656
        %v4658 = vlaneseq
        %v4659 = vshrl.u32 %v4658, 7
        %v4660 = vsub.s32 0, %v4659
        %v4661 = vrot.slane %v4392, %v4660
        %v4662 = vlaneseq
        %v4663 = vshrl.u32 %v4662, 7
        %v4664 = vsub.s32 0, %v4663
        %v4665 = vrot.slane %v4393, %v4664
        %v4666 = vlaneseq
        %v4667 = vshrl.u32 %v4666, 7
        %v4668 = vsub.s32 0, %v4667
        %v4669 = vrot.slane %v4398, %v4668
        %v4670 = vlaneseq
        %v4671 = vshrl.u32 %v4670, 7
        %v4672 = vsub.s32 0, %v4671
        %v4673 = vrot.slane %v4399, %v4672
        %v4674 = vlaneseq
        %v4675 = vshrl.u32 %v4674, 7
        %v4676 = vsub.s32 0, %v4675
        %v4677 = vrot.slane %v4400, %v4676
        %v4678 = vlaneseq
        %v4679 = vshrl.u32 %v4678, 7
        %v4680 = vsub.s32 0, %v4679
        %v4681 = vrot.slane %v4401, %v4680
        %v4682 = vlaneseq
        %v4683 = vshrl.u32 %v4682, 7
        %v4684 = vsub.s32 0, %v4683
        %v4685 = vrot.slane %v4402, %v4684
        %v4686 = vlaneseq
        %v4687 = vshrl.u32 %v4686, 7
        %v4688 = vsub.s32 0, %v4687
        %v4689 = vrot.slane %v4403, %v4688
        %v4690 = vlaneseq
        %v4691 = vshrl.u32 %v4690, 7
        %v4692 = vsub.s32 0, %v4691
        %v4693 = vrot.slane %v4404, %v4692
        %v4694 = vlaneseq
        %v4695 = vshrl.u32 %v4694, 7
        %v4696 = vsub.s32 0, %v4695
        %v4697 = vrot.slane %v4405, %v4696
        %v4698 = vlaneseq
        %v4699 = vshrl.u32 %v4698, 7
        %v4700 = vsub.s32 0, %v4699
        %v4701 = vrot.slane %v4410, %v4700
        %v4702 = vlaneseq
        %v4703 = vshrl.u32 %v4702, 7
        %v4704 = vsub.s32 0, %v4703
        %v4705 = vrot.slane %v4411, %v4704
        %v4706 = vlaneseq
        %v4707 = vshrl.u32 %v4706, 7
        %v4708 = vsub.s32 0, %v4707
        %v4709 = vrot.slane %v4412, %v4708
        %v4710 = vlaneseq
        %v4711 = vshrl.u32 %v4710, 7
        %v4712 = vsub.s32 0, %v4711
        %v4713 = vrot.slane %v4413, %v4712
        %v4714 = vlaneseq
        %v4715 = vshrl.u32 %v4714, 7
        %v4716 = vsub.s32 0, %v4715
        %v4717 = vrot.slane %v4414, %v4716
        %v4718 = vlaneseq
        %v4719 = vshrl.u32 %v4718, 7
        %v4720 = vsub.s32 0, %v4719
        %v4721 = vrot.slane %v4415, %v4720
        %v4722 = vlaneseq
        %v4723 = vshrl.u32 %v4722, 7
        %v4724 = vsub.s32 0, %v4723
        %v4725 = vrot.slane %v4416, %v4724
        %v4726 = vlaneseq
        %v4727 = vshrl.u32 %v4726, 7
        %v4728 = vsub.s32 0, %v4727
        %v4729 = vrot.slane %v4417, %v4728
        %v4730 = vlaneseq
        %v4731 = vshrl.u32 %v4730, 7
        %v4732 = vsub.s32 0, %v4731
        %v4733 = vrot.slane %v4422, %v4732
        %v4734 = vlaneseq
        %v4735 = vshrl.u32 %v4734, 7
        %v4736 = vsub.s32 0, %v4735
        %v4737 = vrot.slane %v4423, %v4736
        %v4738 = vlaneseq
        %v4739 = vshrl.u32 %v4738, 7
        %v4740 = vsub.s32 0, %v4739
        %v4741 = vrot.slane %v4424, %v4740
        %v4742 = vlaneseq
        %v4743 = vshrl.u32 %v4742, 7
        %v4744 = vsub.s32 0, %v4743
        %v4745 = vrot.slane %v4425, %v4744
        %v4746 = vlaneseq
        %v4747 = vshrl.u32 %v4746, 7
        %v4748 = vsub.s32 0, %v4747
        %v4749 = vrot.slane %v4426, %v4748
        %v4750 = vlaneseq
        %v4751 = vshrl.u32 %v4750, 7
        %v4752 = vsub.s32 0, %v4751
        %v4753 = vrot.slane %v4427, %v4752
        %v4754 = vlaneseq
        %v4755 = vshrl.u32 %v4754, 7
        %v4756 = vsub.s32 0, %v4755
        %v4757 = vrot.slane %v4428, %v4756
        %v4758 = vlaneseq
        %v4759 = vshrl.u32 %v4758, 7
        %v4760 = vsub.s32 0, %v4759
        %v4761 = vrot.slane %v4429, %v4760
        %v4762 = vlaneseq
        %v4763 = vshrl.u32 %v4762, 7
        %v4764 = vsub.s32 0, %v4763
        %v4765 = vrot.slane %v4434, %v4764
        %v4766 = vlaneseq
        %v4767 = vshrl.u32 %v4766, 7
        %v4768 = vsub.s32 0, %v4767
        %v4769 = vrot.slane %v4435, %v4768
        %v4770 = vlaneseq
        %v4771 = vshrl.u32 %v4770, 7
        %v4772 = vsub.s32 0, %v4771
        %v4773 = vrot.slane %v4436, %v4772
        %v4774 = vlaneseq
        %v4775 = vshrl.u32 %v4774, 7
        %v4776 = vsub.s32 0, %v4775
        %v4777 = vrot.slane %v4437, %v4776
        %v4778 = vlaneseq
        %v4779 = vshrl.u32 %v4778, 7
        %v4780 = vsub.s32 0, %v4779
        %v4781 = vrot.slane %v4438, %v4780
        %v4782 = vlaneseq
        %v4783 = vshrl.u32 %v4782, 7
        %v4784 = vsub.s32 0, %v4783
        %v4785 = vrot.slane %v4439, %v4784
        %v4786 = vlaneseq
        %v4787 = vshrl.u32 %v4786, 7
        %v4788 = vsub.s32 0, %v4787
        %v4789 = vrot.slane %v4440, %v4788
        %v4790 = vlaneseq
        %v4791 = vshrl.u32 %v4790, 7
        %v4792 = vsub.s32 0, %v4791
        %v4793 = vrot.slane %v4441, %v4792
        %v4794 = vlaneseq
        %v4795 = vshrl.u32 %v4794, 7
        %v4796 = vsub.s32 0, %v4795
        %v4797 = vrot.slane %v4446, %v4796
        %v4798 = vlaneseq
        %v4799 = vshrl.u32 %v4798, 7
        %v4800 = vsub.s32 0, %v4799
        %v4801 = vrot.slane %v4447, %v4800
        %v4802 = vlaneseq
        %v4803 = vshrl.u32 %v4802, 7
        %v4804 = vsub.s32 0, %v4803
        %v4805 = vrot.slane %v4448, %v4804
        %v4806 = vlaneseq
        %v4807 = vshrl.u32 %v4806, 7
        %v4808 = vsub.s32 0, %v4807
        %v4809 = vrot.slane %v4449, %v4808
        %v4810 = vlaneseq
        %v4811 = vshrl.u32 %v4810, 7
        %v4812 = vsub.s32 0, %v4811
        %v4813 = vrot.slane %v4450, %v4812
        %v4814 = vlaneseq
        %v4815 = vshrl.u32 %v4814, 7
        %v4816 = vsub.s32 0, %v4815
        %v4817 = vrot.slane %v4451, %v4816
        %v4818 = vlaneseq
        %v4819 = vshrl.u32 %v4818, 7
        %v4820 = vsub.s32 0, %v4819
        %v4821 = vrot.slane %v4452, %v4820
        %v4822 = vlaneseq
        %v4823 = vshrl.u32 %v4822, 7
        %v4824 = vsub.s32 0, %v4823
        %v4825 = vrot.slane %v4453, %v4824
        %vm4826 = vcmask 1041409
        %v4827 = vsel %vm4826, %v4577, %v4573
        %vm4828 = vcmask 1042434
        %v4829 = vsel %vm4828, %v4581, %v4827
        %vm4830 = vcmask 1043459
        %v4831 = vsel %vm4830, %v4585, %v4829
        %vm4832 = vcmask 1044484
        %v4833 = vsel %vm4832, %v4589, %v4831
        %vm4834 = vcmask 1045509
        %v4835 = vsel %vm4834, %v4593, %v4833
        %vm4836 = vcmask 1046534
        %v4837 = vsel %vm4836, %v4597, %v4835
        %vm4838 = vcmask 1047559
        %v4839 = vsel %vm4838, %v4601, %v4837
        %v4840 = vsel %vm4826, %v4609, %v4605
        %v4841 = vsel %vm4828, %v4613, %v4840
        %v4842 = vsel %vm4830, %v4617, %v4841
        %v4843 = vsel %vm4832, %v4621, %v4842
        %v4844 = vsel %vm4834, %v4625, %v4843
        %v4845 = vsel %vm4836, %v4629, %v4844
        %v4846 = vsel %vm4838, %v4633, %v4845
        %v4847 = vsel %vm4826, %v4641, %v4637
        %v4848 = vsel %vm4828, %v4645, %v4847
        %v4849 = vsel %vm4830, %v4649, %v4848
        %v4850 = vsel %vm4832, %v4653, %v4849
        %v4851 = vsel %vm4834, %v4657, %v4850
        %v4852 = vsel %vm4836, %v4661, %v4851
        %v4853 = vsel %vm4838, %v4665, %v4852
        %v4854 = vsel %vm4826, %v4673, %v4669
        %v4855 = vsel %vm4828, %v4677, %v4854
        %v4856 = vsel %vm4830, %v4681, %v4855
        %v4857 = vsel %vm4832, %v4685, %v4856
        %v4858 = vsel %vm4834, %v4689, %v4857
        %v4859 = vsel %vm4836, %v4693, %v4858
        %v4860 = vsel %vm4838, %v4697, %v4859
        %v4861 = vsel %vm4826, %v4705, %v4701
        %v4862 = vsel %vm4828, %v4709, %v4861
        %v4863 = vsel %vm4830, %v4713, %v4862
        %v4864 = vsel %vm4832, %v4717, %v4863
        %v4865 = vsel %vm4834, %v4721, %v4864
        %v4866 = vsel %vm4836, %v4725, %v4865
        %v4867 = vsel %vm4838, %v4729, %v4866
        %v4868 = vsel %vm4826, %v4737, %v4733
        %v4869 = vsel %vm4828, %v4741, %v4868
        %v4870 = vsel %vm4830, %v4745, %v4869
        %v4871 = vsel %vm4832, %v4749, %v4870
        %v4872 = vsel %vm4834, %v4753, %v4871
        %v4873 = vsel %vm4836, %v4757, %v4872
        %v4874 = vsel %vm4838, %v4761, %v4873
        %v4875 = vsel %vm4826, %v4769, %v4765
        %v4876 = vsel %vm4828, %v4773, %v4875
        %v4877 = vsel %vm4830, %v4777, %v4876
        %v4878 = vsel %vm4832, %v4781, %v4877
        %v4879 = vsel %vm4834, %v4785, %v4878
        %v4880 = vsel %vm4836, %v4789, %v4879
        %v4881 = vsel %vm4838, %v4793, %v4880
        %v4882 = vsel %vm4826, %v4801, %v4797
        %v4883 = vsel %vm4828, %v4805, %v4882
        %v4884 = vsel %vm4830, %v4809, %v4883
        %v4885 = vsel %vm4832, %v4813, %v4884
        %v4886 = vsel %vm4834, %v4817, %v4885
        %v4887 = vsel %vm4836, %v4821, %v4886
        %v4888 = vsel %vm4838, %v4825, %v4887
        %v4905 = vlaneseq
        %v4906 = vshrl.u32 %v4905, 7
        %v4907 = vsub.s32 0, %v4906
        %v4908 = vrot.slane %v4370, %v4907
        %v4909 = vlaneseq
        %v4910 = vshrl.u32 %v4909, 7
        %v4911 = vsub.s32 0, %v4910
        %v4912 = vrot.slane %v4382, %v4911
        %v4913 = vlaneseq
        %v4914 = vshrl.u32 %v4913, 7
        %v4915 = vsub.s32 0, %v4914
        %v4916 = vrot.slane %v4394, %v4915
        %v4917 = vlaneseq
        %v4918 = vshrl.u32 %v4917, 7
        %v4919 = vsub.s32 0, %v4918
        %v4920 = vrot.slane %v4406, %v4919
        %v4921 = vlaneseq
        %v4922 = vshrl.u32 %v4921, 7
        %v4923 = vsub.s32 0, %v4922
        %v4924 = vrot.slane %v4418, %v4923
        %v4925 = vlaneseq
        %v4926 = vshrl.u32 %v4925, 7
        %v4927 = vsub.s32 0, %v4926
        %v4928 = vrot.slane %v4430, %v4927
        %v4929 = vlaneseq
        %v4930 = vshrl.u32 %v4929, 7
        %v4931 = vsub.s32 0, %v4930
        %v4932 = vrot.slane %v4442, %v4931
        %v4933 = vlaneseq
        %v4934 = vshrl.u32 %v4933, 7
        %v4935 = vsub.s32 0, %v4934
        %v4936 = vrot.slane %v4454, %v4935
        %v4937 = vsel %vm4826, %v4581, %v4577
        %v4938 = vsel %vm4828, %v4585, %v4937
        %v4939 = vsel %vm4830, %v4589, %v4938
        %v4940 = vsel %vm4832, %v4593, %v4939
        %v4941 = vsel %vm4834, %v4597, %v4940
        %v4942 = vsel %vm4836, %v4601, %v4941
        %v4943 = vsel %vm4838, %v4908, %v4942
        %v4944 = vsel %vm4826, %v4613, %v4609
        %v4945 = vsel %vm4828, %v4617, %v4944
        %v4946 = vsel %vm4830, %v4621, %v4945
        %v4947 = vsel %vm4832, %v4625, %v4946
        %v4948 = vsel %vm4834, %v4629, %v4947
        %v4949 = vsel %vm4836, %v4633, %v4948
        %v4950 = vsel %vm4838, %v4912, %v4949
        %v4951 = vsel %vm4826, %v4645, %v4641
        %v4952 = vsel %vm4828, %v4649, %v4951
        %v4953 = vsel %vm4830, %v4653, %v4952
        %v4954 = vsel %vm4832, %v4657, %v4953
        %v4955 = vsel %vm4834, %v4661, %v4954
        %v4956 = vsel %vm4836, %v4665, %v4955
        %v4957 = vsel %vm4838, %v4916, %v4956
        %v4958 = vsel %vm4826, %v4677, %v4673
        %v4959 = vsel %vm4828, %v4681, %v4958
        %v4960 = vsel %vm4830, %v4685, %v4959
        %v4961 = vsel %vm4832, %v4689, %v4960
        %v4962 = vsel %vm4834, %v4693, %v4961
        %v4963 = vsel %vm4836, %v4697, %v4962
        %v4964 = vsel %vm4838, %v4920, %v4963
        %v4965 = vsel %vm4826, %v4709, %v4705
        %v4966 = vsel %vm4828, %v4713, %v4965
        %v4967 = vsel %vm4830, %v4717, %v4966
        %v4968 = vsel %vm4832, %v4721, %v4967
        %v4969 = vsel %vm4834, %v4725, %v4968
        %v4970 = vsel %vm4836, %v4729, %v4969
        %v4971 = vsel %vm4838, %v4924, %v4970
        %v4972 = vsel %vm4826, %v4741, %v4737
        %v4973 = vsel %vm4828, %v4745, %v4972
        %v4974 = vsel %vm4830, %v4749, %v4973
        %v4975 = vsel %vm4832, %v4753, %v4974
        %v4976 = vsel %vm4834, %v4757, %v4975
        %v4977 = vsel %vm4836, %v4761, %v4976
        %v4978 = vsel %vm4838, %v4928, %v4977
        %v4979 = vsel %vm4826, %v4773, %v4769
        %v4980 = vsel %vm4828, %v4777, %v4979
        %v4981 = vsel %vm4830, %v4781, %v4980
        %v4982 = vsel %vm4832, %v4785, %v4981
        %v4983 = vsel %vm4834, %v4789, %v4982
        %v4984 = vsel %vm4836, %v4793, %v4983
        %v4985 = vsel %vm4838, %v4932, %v4984
        %v4986 = vsel %vm4826, %v4805, %v4801
        %v4987 = vsel %vm4828, %v4809, %v4986
        %v4988 = vsel %vm4830, %v4813, %v4987
        %v4989 = vsel %vm4832, %v4817, %v4988
        %v4990 = vsel %vm4834, %v4821, %v4989
        %v4991 = vsel %vm4836, %v4825, %v4990
        %v4992 = vsel %vm4838, %v4936, %v4991
        %4993 = vrot.lane.b32.xlu0 %v4943, 64
        %v4994 = vpop.permute.xlu0 %4993
        %4995 = vrot.lane.b32.xlu0 %v4950, 64
        %v4996 = vpop.permute.xlu0 %4995
        %4997 = vrot.lane.b32.xlu0 %v4957, 64
        %v4998 = vpop.permute.xlu0 %4997
        %4999 = vrot.lane.b32.xlu0 %v4964, 64
        %v5000 = vpop.permute.xlu0 %4999
        %5001 = vrot.lane.b32.xlu0 %v4971, 64
        %v5002 = vpop.permute.xlu0 %5001
        %5003 = vrot.lane.b32.xlu0 %v4978, 64
        %v5004 = vpop.permute.xlu0 %5003
        %5005 = vrot.lane.b32.xlu0 %v4985, 64
        %v5006 = vpop.permute.xlu0 %5005
        %5007 = vrot.lane.b32.xlu0 %v4992, 64
        %v5008 = vpop.permute.xlu0 %5007
        %v5025 = vlaneseq
        %v5026 = vshrl.u32 %v5025, 7
        %v5027 = vsub.s32 0, %v5026
        %v5028 = vrot.slane %v4371, %v5027
        %v5029 = vlaneseq
        %v5030 = vshrl.u32 %v5029, 7
        %v5031 = vsub.s32 0, %v5030
        %v5032 = vrot.slane %v4383, %v5031
        %v5033 = vlaneseq
        %v5034 = vshrl.u32 %v5033, 7
        %v5035 = vsub.s32 0, %v5034
        %v5036 = vrot.slane %v4395, %v5035
        %v5037 = vlaneseq
        %v5038 = vshrl.u32 %v5037, 7
        %v5039 = vsub.s32 0, %v5038
        %v5040 = vrot.slane %v4407, %v5039
        %v5041 = vlaneseq
        %v5042 = vshrl.u32 %v5041, 7
        %v5043 = vsub.s32 0, %v5042
        %v5044 = vrot.slane %v4419, %v5043
        %v5045 = vlaneseq
        %v5046 = vshrl.u32 %v5045, 7
        %v5047 = vsub.s32 0, %v5046
        %v5048 = vrot.slane %v4431, %v5047
        %v5049 = vlaneseq
        %v5050 = vshrl.u32 %v5049, 7
        %v5051 = vsub.s32 0, %v5050
        %v5052 = vrot.slane %v4443, %v5051
        %v5053 = vlaneseq
        %v5054 = vshrl.u32 %v5053, 7
        %v5055 = vsub.s32 0, %v5054
        %v5056 = vrot.slane %v4455, %v5055
        %v5057 = vsel %vm4826, %v4585, %v4581
        %v5058 = vsel %vm4828, %v4589, %v5057
        %v5059 = vsel %vm4830, %v4593, %v5058
        %v5060 = vsel %vm4832, %v4597, %v5059
        %v5061 = vsel %vm4834, %v4601, %v5060
        %v5062 = vsel %vm4836, %v4908, %v5061
        %v5063 = vsel %vm4838, %v5028, %v5062
        %v5064 = vsel %vm4826, %v4617, %v4613
        %v5065 = vsel %vm4828, %v4621, %v5064
        %v5066 = vsel %vm4830, %v4625, %v5065
        %v5067 = vsel %vm4832, %v4629, %v5066
        %v5068 = vsel %vm4834, %v4633, %v5067
        %v5069 = vsel %vm4836, %v4912, %v5068
        %v5070 = vsel %vm4838, %v5032, %v5069
        %v5071 = vsel %vm4826, %v4649, %v4645
        %v5072 = vsel %vm4828, %v4653, %v5071
        %v5073 = vsel %vm4830, %v4657, %v5072
        %v5074 = vsel %vm4832, %v4661, %v5073
        %v5075 = vsel %vm4834, %v4665, %v5074
        %v5076 = vsel %vm4836, %v4916, %v5075
        %v5077 = vsel %vm4838, %v5036, %v5076
        %v5078 = vsel %vm4826, %v4681, %v4677
        %v5079 = vsel %vm4828, %v4685, %v5078
        %v5080 = vsel %vm4830, %v4689, %v5079
        %v5081 = vsel %vm4832, %v4693, %v5080
        %v5082 = vsel %vm4834, %v4697, %v5081
        %v5083 = vsel %vm4836, %v4920, %v5082
        %v5084 = vsel %vm4838, %v5040, %v5083
        %v5085 = vsel %vm4826, %v4713, %v4709
        %v5086 = vsel %vm4828, %v4717, %v5085
        %v5087 = vsel %vm4830, %v4721, %v5086
        %v5088 = vsel %vm4832, %v4725, %v5087
        %v5089 = vsel %vm4834, %v4729, %v5088
        %v5090 = vsel %vm4836, %v4924, %v5089
        %v5091 = vsel %vm4838, %v5044, %v5090
        %v5092 = vsel %vm4826, %v4745, %v4741
        %v5093 = vsel %vm4828, %v4749, %v5092
        %v5094 = vsel %vm4830, %v4753, %v5093
        %v5095 = vsel %vm4832, %v4757, %v5094
        %v5096 = vsel %vm4834, %v4761, %v5095
        %v5097 = vsel %vm4836, %v4928, %v5096
        %v5098 = vsel %vm4838, %v5048, %v5097
        %v5099 = vsel %vm4826, %v4777, %v4773
        %v5100 = vsel %vm4828, %v4781, %v5099
        %v5101 = vsel %vm4830, %v4785, %v5100
        %v5102 = vsel %vm4832, %v4789, %v5101
        %v5103 = vsel %vm4834, %v4793, %v5102
        %v5104 = vsel %vm4836, %v4932, %v5103
        %v5105 = vsel %vm4838, %v5052, %v5104
        %v5106 = vsel %vm4826, %v4809, %v4805
        %v5107 = vsel %vm4828, %v4813, %v5106
        %v5108 = vsel %vm4830, %v4817, %v5107
        %v5109 = vsel %vm4832, %v4821, %v5108
        %v5110 = vsel %vm4834, %v4825, %v5109
        %v5111 = vsel %vm4836, %v4936, %v5110
        %v5112 = vsel %vm4838, %v5056, %v5111
        %v5129 = vlaneseq
        %v5130 = vshrl.u32 %v5129, 7
        %v5131 = vsub.s32 0, %v5130
        %v5132 = vrot.slane %v4372, %v5131
        %v5133 = vlaneseq
        %v5134 = vshrl.u32 %v5133, 7
        %v5135 = vsub.s32 0, %v5134
        %v5136 = vrot.slane %v4384, %v5135
        %v5137 = vlaneseq
        %v5138 = vshrl.u32 %v5137, 7
        %v5139 = vsub.s32 0, %v5138
        %v5140 = vrot.slane %v4396, %v5139
        %v5141 = vlaneseq
        %v5142 = vshrl.u32 %v5141, 7
        %v5143 = vsub.s32 0, %v5142
        %v5144 = vrot.slane %v4408, %v5143
        %v5145 = vlaneseq
        %v5146 = vshrl.u32 %v5145, 7
        %v5147 = vsub.s32 0, %v5146
        %v5148 = vrot.slane %v4420, %v5147
        %v5149 = vlaneseq
        %v5150 = vshrl.u32 %v5149, 7
        %v5151 = vsub.s32 0, %v5150
        %v5152 = vrot.slane %v4432, %v5151
        %v5153 = vlaneseq
        %v5154 = vshrl.u32 %v5153, 7
        %v5155 = vsub.s32 0, %v5154
        %v5156 = vrot.slane %v4444, %v5155
        %v5157 = vlaneseq
        %v5158 = vshrl.u32 %v5157, 7
        %v5159 = vsub.s32 0, %v5158
        %v5160 = vrot.slane %v4456, %v5159
        %v5161 = vsel %vm4826, %v4589, %v4585
        %v5162 = vsel %vm4828, %v4593, %v5161
        %v5163 = vsel %vm4830, %v4597, %v5162
        %v5164 = vsel %vm4832, %v4601, %v5163
        %v5165 = vsel %vm4834, %v4908, %v5164
        %v5166 = vsel %vm4836, %v5028, %v5165
        %v5167 = vsel %vm4838, %v5132, %v5166
        %v5168 = vsel %vm4826, %v4621, %v4617
        %v5169 = vsel %vm4828, %v4625, %v5168
        %v5170 = vsel %vm4830, %v4629, %v5169
        %v5171 = vsel %vm4832, %v4633, %v5170
        %v5172 = vsel %vm4834, %v4912, %v5171
        %v5173 = vsel %vm4836, %v5032, %v5172
        %v5174 = vsel %vm4838, %v5136, %v5173
        %v5175 = vsel %vm4826, %v4653, %v4649
        %v5176 = vsel %vm4828, %v4657, %v5175
        %v5177 = vsel %vm4830, %v4661, %v5176
        %v5178 = vsel %vm4832, %v4665, %v5177
        %v5179 = vsel %vm4834, %v4916, %v5178
        %v5180 = vsel %vm4836, %v5036, %v5179
        %v5181 = vsel %vm4838, %v5140, %v5180
        %v5182 = vsel %vm4826, %v4685, %v4681
        %v5183 = vsel %vm4828, %v4689, %v5182
        %v5184 = vsel %vm4830, %v4693, %v5183
        %v5185 = vsel %vm4832, %v4697, %v5184
        %v5186 = vsel %vm4834, %v4920, %v5185
        %v5187 = vsel %vm4836, %v5040, %v5186
        %v5188 = vsel %vm4838, %v5144, %v5187
        %v5189 = vsel %vm4826, %v4717, %v4713
        %v5190 = vsel %vm4828, %v4721, %v5189
        %v5191 = vsel %vm4830, %v4725, %v5190
        %v5192 = vsel %vm4832, %v4729, %v5191
        %v5193 = vsel %vm4834, %v4924, %v5192
        %v5194 = vsel %vm4836, %v5044, %v5193
        %v5195 = vsel %vm4838, %v5148, %v5194
        %v5196 = vsel %vm4826, %v4749, %v4745
        %v5197 = vsel %vm4828, %v4753, %v5196
        %v5198 = vsel %vm4830, %v4757, %v5197
        %v5199 = vsel %vm4832, %v4761, %v5198
        %v5200 = vsel %vm4834, %v4928, %v5199
        %v5201 = vsel %vm4836, %v5048, %v5200
        %v5202 = vsel %vm4838, %v5152, %v5201
        %v5203 = vsel %vm4826, %v4781, %v4777
        %v5204 = vsel %vm4828, %v4785, %v5203
        %v5205 = vsel %vm4830, %v4789, %v5204
        %v5206 = vsel %vm4832, %v4793, %v5205
        %v5207 = vsel %vm4834, %v4932, %v5206
        %v5208 = vsel %vm4836, %v5052, %v5207
        %v5209 = vsel %vm4838, %v5156, %v5208
        %v5210 = vsel %vm4826, %v4813, %v4809
        %v5211 = vsel %vm4828, %v4817, %v5210
        %v5212 = vsel %vm4830, %v4821, %v5211
        %v5213 = vsel %vm4832, %v4825, %v5212
        %v5214 = vsel %vm4834, %v4936, %v5213
        %v5215 = vsel %vm4836, %v5056, %v5214
        %v5216 = vsel %vm4838, %v5160, %v5215
        %5217 = vrot.lane.b32.xlu0 %v5167, 64
        %v5218 = vpop.permute.xlu0 %5217
        %5219 = vrot.lane.b32.xlu0 %v5174, 64
        %v5220 = vpop.permute.xlu0 %5219
        %5221 = vrot.lane.b32.xlu0 %v5181, 64
        %v5222 = vpop.permute.xlu0 %5221
        %5223 = vrot.lane.b32.xlu0 %v5188, 64
        %v5224 = vpop.permute.xlu0 %5223
        %5225 = vrot.lane.b32.xlu0 %v5195, 64
        %v5226 = vpop.permute.xlu0 %5225
        %5227 = vrot.lane.b32.xlu0 %v5202, 64
        %v5228 = vpop.permute.xlu0 %5227
        %5229 = vrot.lane.b32.xlu0 %v5209, 64
        %v5230 = vpop.permute.xlu0 %5229
        %5231 = vrot.lane.b32.xlu0 %v5216, 64
        %v5232 = vpop.permute.xlu0 %5231
        %v5249 = vlaneseq
        %v5250 = vshrl.u32 %v5249, 7
        %v5251 = vsub.s32 0, %v5250
        %v5252 = vrot.slane %v4373, %v5251
        %v5253 = vlaneseq
        %v5254 = vshrl.u32 %v5253, 7
        %v5255 = vsub.s32 0, %v5254
        %v5256 = vrot.slane %v4385, %v5255
        %v5257 = vlaneseq
        %v5258 = vshrl.u32 %v5257, 7
        %v5259 = vsub.s32 0, %v5258
        %v5260 = vrot.slane %v4397, %v5259
        %v5261 = vlaneseq
        %v5262 = vshrl.u32 %v5261, 7
        %v5263 = vsub.s32 0, %v5262
        %v5264 = vrot.slane %v4409, %v5263
        %v5265 = vlaneseq
        %v5266 = vshrl.u32 %v5265, 7
        %v5267 = vsub.s32 0, %v5266
        %v5268 = vrot.slane %v4421, %v5267
        %v5269 = vlaneseq
        %v5270 = vshrl.u32 %v5269, 7
        %v5271 = vsub.s32 0, %v5270
        %v5272 = vrot.slane %v4433, %v5271
        %v5273 = vlaneseq
        %v5274 = vshrl.u32 %v5273, 7
        %v5275 = vsub.s32 0, %v5274
        %v5276 = vrot.slane %v4445, %v5275
        %v5277 = vlaneseq
        %v5278 = vshrl.u32 %v5277, 7
        %v5279 = vsub.s32 0, %v5278
        %v5280 = vrot.slane %v4457, %v5279
        %v5281 = vsel %vm4826, %v4593, %v4589
        %v5282 = vsel %vm4828, %v4597, %v5281
        %v5283 = vsel %vm4830, %v4601, %v5282
        %v5284 = vsel %vm4832, %v4908, %v5283
        %v5285 = vsel %vm4834, %v5028, %v5284
        %v5286 = vsel %vm4836, %v5132, %v5285
        %v5287 = vsel %vm4838, %v5252, %v5286
        %v5288 = vsel %vm4826, %v4625, %v4621
        %v5289 = vsel %vm4828, %v4629, %v5288
        %v5290 = vsel %vm4830, %v4633, %v5289
        %v5291 = vsel %vm4832, %v4912, %v5290
        %v5292 = vsel %vm4834, %v5032, %v5291
        %v5293 = vsel %vm4836, %v5136, %v5292
        %v5294 = vsel %vm4838, %v5256, %v5293
        %v5295 = vsel %vm4826, %v4657, %v4653
        %v5296 = vsel %vm4828, %v4661, %v5295
        %v5297 = vsel %vm4830, %v4665, %v5296
        %v5298 = vsel %vm4832, %v4916, %v5297
        %v5299 = vsel %vm4834, %v5036, %v5298
        %v5300 = vsel %vm4836, %v5140, %v5299
        %v5301 = vsel %vm4838, %v5260, %v5300
        %v5302 = vsel %vm4826, %v4689, %v4685
        %v5303 = vsel %vm4828, %v4693, %v5302
        %v5304 = vsel %vm4830, %v4697, %v5303
        %v5305 = vsel %vm4832, %v4920, %v5304
        %v5306 = vsel %vm4834, %v5040, %v5305
        %v5307 = vsel %vm4836, %v5144, %v5306
        %v5308 = vsel %vm4838, %v5264, %v5307
        %v5309 = vsel %vm4826, %v4721, %v4717
        %v5310 = vsel %vm4828, %v4725, %v5309
        %v5311 = vsel %vm4830, %v4729, %v5310
        %v5312 = vsel %vm4832, %v4924, %v5311
        %v5313 = vsel %vm4834, %v5044, %v5312
        %v5314 = vsel %vm4836, %v5148, %v5313
        %v5315 = vsel %vm4838, %v5268, %v5314
        %v5316 = vsel %vm4826, %v4753, %v4749
        %v5317 = vsel %vm4828, %v4757, %v5316
        %v5318 = vsel %vm4830, %v4761, %v5317
        %v5319 = vsel %vm4832, %v4928, %v5318
        %v5320 = vsel %vm4834, %v5048, %v5319
        %v5321 = vsel %vm4836, %v5152, %v5320
        %v5322 = vsel %vm4838, %v5272, %v5321
        %v5323 = vsel %vm4826, %v4785, %v4781
        %v5324 = vsel %vm4828, %v4789, %v5323
        %v5325 = vsel %vm4830, %v4793, %v5324
        %v5326 = vsel %vm4832, %v4932, %v5325
        %v5327 = vsel %vm4834, %v5052, %v5326
        %v5328 = vsel %vm4836, %v5156, %v5327
        %v5329 = vsel %vm4838, %v5276, %v5328
        %v5330 = vsel %vm4826, %v4817, %v4813
        %v5331 = vsel %vm4828, %v4821, %v5330
        %v5332 = vsel %vm4830, %v4825, %v5331
        %v5333 = vsel %vm4832, %v4936, %v5332
        %v5334 = vsel %vm4834, %v5056, %v5333
        %v5335 = vsel %vm4836, %v5160, %v5334
        %v5336 = vsel %vm4838, %v5280, %v5335
        %v5353 = vlaneseq
        %v5354 = vshrl.u32 %v5353, 7
        %v5355 = vsub.s32 0, %v5354
        %v5356 = vrot.slane %v4458, %v5355
        %v5357 = vlaneseq
        %v5358 = vshrl.u32 %v5357, 7
        %v5359 = vsub.s32 0, %v5358
        %v5360 = vrot.slane %v4459, %v5359
        %v5361 = vlaneseq
        %v5362 = vshrl.u32 %v5361, 7
        %v5363 = vsub.s32 0, %v5362
        %v5364 = vrot.slane %v4460, %v5363
        %v5365 = vlaneseq
        %v5366 = vshrl.u32 %v5365, 7
        %v5367 = vsub.s32 0, %v5366
        %v5368 = vrot.slane %v4461, %v5367
        %v5369 = vlaneseq
        %v5370 = vshrl.u32 %v5369, 7
        %v5371 = vsub.s32 0, %v5370
        %v5372 = vrot.slane %v4462, %v5371
        %v5373 = vlaneseq
        %v5374 = vshrl.u32 %v5373, 7
        %v5375 = vsub.s32 0, %v5374
        %v5376 = vrot.slane %v4463, %v5375
        %v5377 = vlaneseq
        %v5378 = vshrl.u32 %v5377, 7
        %v5379 = vsub.s32 0, %v5378
        %v5380 = vrot.slane %v4464, %v5379
        %v5381 = vlaneseq
        %v5382 = vshrl.u32 %v5381, 7
        %v5383 = vsub.s32 0, %v5382
        %v5384 = vrot.slane %v4465, %v5383
        %v5385 = vsel %vm4826, %v5360, %v5356
        %v5386 = vsel %vm4828, %v5364, %v5385
        %v5387 = vsel %vm4830, %v5368, %v5386
        %v5388 = vsel %vm4832, %v5372, %v5387
        %v5389 = vsel %vm4834, %v5376, %v5388
        %v5390 = vsel %vm4836, %v5380, %v5389
        %v5391 = vsel %vm4838, %v5384, %v5390
        %5392 = vrot.lane.b32.xlu0 %v4846, 64
        %v5393 = vpop.permute.xlu0 %5392
        %5394 = vrot.lane.b32.xlu0 %v4853, 64
        %v5395 = vpop.permute.xlu0 %5394
        %5396 = vrot.lane.b32.xlu0 %v4860, 64
        %v5397 = vpop.permute.xlu0 %5396
        %5398 = vrot.lane.b32.xlu0 %v4867, 64
        %v5399 = vpop.permute.xlu0 %5398
        %5400 = vrot.lane.b32.xlu0 %v4874, 64
        %v5401 = vpop.permute.xlu0 %5400
        %5402 = vrot.lane.b32.xlu0 %v4881, 64
        %v5403 = vpop.permute.xlu0 %5402
        %5404 = vrot.lane.b32.xlu0 %v4888, 64
        %v5405 = vpop.permute.xlu0 %5404
        %5406 = vrot.lane.b32.xlu0 %v5391, 64
        %v5407 = vpop.permute.xlu0 %5406
        %v5417 = vlaneseq
        %v5418 = vshrl.u32 %v5417, 7
        %v5419 = vsub.s32 0, %v5418
        %v5420 = vrot.slane %v4466, %v5419
        %v5421 = vsel %vm4826, %v5364, %v5360
        %v5422 = vsel %vm4828, %v5368, %v5421
        %v5423 = vsel %vm4830, %v5372, %v5422
        %v5424 = vsel %vm4832, %v5376, %v5423
        %v5425 = vsel %vm4834, %v5380, %v5424
        %v5426 = vsel %vm4836, %v5384, %v5425
        %v5427 = vsel %vm4838, %v5420, %v5426
        %v5437 = vlaneseq
        %v5438 = vshrl.u32 %v5437, 7
        %v5439 = vsub.s32 0, %v5438
        %v5440 = vrot.slane %v4467, %v5439
        %v5441 = vsel %vm4826, %v5368, %v5364
        %v5442 = vsel %vm4828, %v5372, %v5441
        %v5443 = vsel %vm4830, %v5376, %v5442
        %v5444 = vsel %vm4832, %v5380, %v5443
        %v5445 = vsel %vm4834, %v5384, %v5444
        %v5446 = vsel %vm4836, %v5420, %v5445
        %v5447 = vsel %vm4838, %v5440, %v5446
        %5448 = vrot.lane.b32.xlu0 %v5070, 64
        %v5449 = vpop.permute.xlu0 %5448
        %5450 = vrot.lane.b32.xlu0 %v5077, 64
        %v5451 = vpop.permute.xlu0 %5450
        %5452 = vrot.lane.b32.xlu0 %v5084, 64
        %v5453 = vpop.permute.xlu0 %5452
        %5454 = vrot.lane.b32.xlu0 %v5091, 64
        %v5455 = vpop.permute.xlu0 %5454
        %5456 = vrot.lane.b32.xlu0 %v5098, 64
        %v5457 = vpop.permute.xlu0 %5456
        %5458 = vrot.lane.b32.xlu0 %v5105, 64
        %v5459 = vpop.permute.xlu0 %5458
        %5460 = vrot.lane.b32.xlu0 %v5112, 64
        %v5461 = vpop.permute.xlu0 %5460
        %5462 = vrot.lane.b32.xlu0 %v5447, 64
        %v5463 = vpop.permute.xlu0 %5462
        %v5473 = vlaneseq
        %v5474 = vshrl.u32 %v5473, 7
        %v5475 = vsub.s32 0, %v5474
        %v5476 = vrot.slane %v4468, %v5475
        %v5477 = vsel %vm4826, %v5372, %v5368
        %v5478 = vsel %vm4828, %v5376, %v5477
        %v5479 = vsel %vm4830, %v5380, %v5478
        %v5480 = vsel %vm4832, %v5384, %v5479
        %v5481 = vsel %vm4834, %v5420, %v5480
        %v5482 = vsel %vm4836, %v5440, %v5481
        %v5483 = vsel %vm4838, %v5476, %v5482
        %v5493 = vlaneseq
        %v5494 = vshrl.u32 %v5493, 7
        %v5495 = vsub.s32 0, %v5494
        %v5496 = vrot.slane %v4469, %v5495
        %v5497 = vsel %vm4826, %v5376, %v5372
        %v5498 = vsel %vm4828, %v5380, %v5497
        %v5499 = vsel %vm4830, %v5384, %v5498
        %v5500 = vsel %vm4832, %v5420, %v5499
        %v5501 = vsel %vm4834, %v5440, %v5500
        %v5502 = vsel %vm4836, %v5476, %v5501
        %v5503 = vsel %vm4838, %v5496, %v5502
        %5504 = vrot.lane.b32.xlu0 %v5294, 64
        %v5505 = vpop.permute.xlu0 %5504
        %5506 = vrot.lane.b32.xlu0 %v5301, 64
        %v5507 = vpop.permute.xlu0 %5506
        %5508 = vrot.lane.b32.xlu0 %v5308, 64
        %v5509 = vpop.permute.xlu0 %5508
        %5510 = vrot.lane.b32.xlu0 %v5315, 64
        %v5511 = vpop.permute.xlu0 %5510
        %5512 = vrot.lane.b32.xlu0 %v5322, 64
        %v5513 = vpop.permute.xlu0 %5512
        %5514 = vrot.lane.b32.xlu0 %v5329, 64
        %v5515 = vpop.permute.xlu0 %5514
        %5516 = vrot.lane.b32.xlu0 %v5336, 64
        %v5517 = vpop.permute.xlu0 %5516
        %5518 = vrot.lane.b32.xlu0 %v5503, 64
        %v5519 = vpop.permute.xlu0 %5518
        %v5536 = vlaneseq
        %v5537 = vshrl.u32 %v5536, 7
        %v5538 = vsub.s32 0, %v5537
        %v5539 = vrot.slane %v4470, %v5538
        %v5540 = vlaneseq
        %v5541 = vshrl.u32 %v5540, 7
        %v5542 = vsub.s32 0, %v5541
        %v5543 = vrot.slane %v4471, %v5542
        %v5544 = vlaneseq
        %v5545 = vshrl.u32 %v5544, 7
        %v5546 = vsub.s32 0, %v5545
        %v5547 = vrot.slane %v4472, %v5546
        %v5548 = vlaneseq
        %v5549 = vshrl.u32 %v5548, 7
        %v5550 = vsub.s32 0, %v5549
        %v5551 = vrot.slane %v4473, %v5550
        %v5552 = vlaneseq
        %v5553 = vshrl.u32 %v5552, 7
        %v5554 = vsub.s32 0, %v5553
        %v5555 = vrot.slane %v4474, %v5554
        %v5556 = vlaneseq
        %v5557 = vshrl.u32 %v5556, 7
        %v5558 = vsub.s32 0, %v5557
        %v5559 = vrot.slane %v4475, %v5558
        %v5560 = vlaneseq
        %v5561 = vshrl.u32 %v5560, 7
        %v5562 = vsub.s32 0, %v5561
        %v5563 = vrot.slane %v4476, %v5562
        %v5564 = vlaneseq
        %v5565 = vshrl.u32 %v5564, 7
        %v5566 = vsub.s32 0, %v5565
        %v5567 = vrot.slane %v4477, %v5566
        %v5568 = vsel %vm4826, %v5543, %v5539
        %v5569 = vsel %vm4828, %v5547, %v5568
        %v5570 = vsel %vm4830, %v5551, %v5569
        %v5571 = vsel %vm4832, %v5555, %v5570
        %v5572 = vsel %vm4834, %v5559, %v5571
        %v5573 = vsel %vm4836, %v5563, %v5572
        %v5574 = vsel %vm4838, %v5567, %v5573
        %v5578 = vlaneseq
        %v5579 = vshrl.u32 %v5578, 7
        %v5580 = vsub.s32 0, %v5579
        %v5581 = vrot.slane %v4478, %v5580
        %v5582 = vsel %vm4826, %v5547, %v5543
        %v5583 = vsel %vm4828, %v5551, %v5582
        %v5584 = vsel %vm4830, %v5555, %v5583
        %v5585 = vsel %vm4832, %v5559, %v5584
        %v5586 = vsel %vm4834, %v5563, %v5585
        %v5587 = vsel %vm4836, %v5567, %v5586
        %v5588 = vsel %vm4838, %v5581, %v5587
        %5589 = vrot.lane.b32.xlu0 %v5427, 64
        %v5590 = vpop.permute.xlu0 %5589
        %5591 = vrot.lane.b32.xlu0 %v5588, 64
        %v5592 = vpop.permute.xlu0 %5591
        %v5596 = vlaneseq
        %v5597 = vshrl.u32 %v5596, 7
        %v5598 = vsub.s32 0, %v5597
        %v5599 = vrot.slane %v4479, %v5598
        %v5600 = vsel %vm4826, %v5551, %v5547
        %v5601 = vsel %vm4828, %v5555, %v5600
        %v5602 = vsel %vm4830, %v5559, %v5601
        %v5603 = vsel %vm4832, %v5563, %v5602
        %v5604 = vsel %vm4834, %v5567, %v5603
        %v5605 = vsel %vm4836, %v5581, %v5604
        %v5606 = vsel %vm4838, %v5599, %v5605
        %v5610 = vlaneseq
        %v5611 = vshrl.u32 %v5610, 7
        %v5612 = vsub.s32 0, %v5611
        %v5613 = vrot.slane %v4480, %v5612
        %v5614 = vsel %vm4826, %v5555, %v5551
        %v5615 = vsel %vm4828, %v5559, %v5614
        %v5616 = vsel %vm4830, %v5563, %v5615
        %v5617 = vsel %vm4832, %v5567, %v5616
        %v5618 = vsel %vm4834, %v5581, %v5617
        %v5619 = vsel %vm4836, %v5599, %v5618
        %v5620 = vsel %vm4838, %v5613, %v5619
        %5621 = vrot.lane.b32.xlu0 %v5483, 64
        %v5622 = vpop.permute.xlu0 %5621
        %5623 = vrot.lane.b32.xlu0 %v5620, 64
        %v5624 = vpop.permute.xlu0 %5623
        %v5628 = vlaneseq
        %v5629 = vshrl.u32 %v5628, 7
        %v5630 = vsub.s32 0, %v5629
        %v5631 = vrot.slane %v4481, %v5630
        %v5632 = vsel %vm4826, %v5559, %v5555
        %v5633 = vsel %vm4828, %v5563, %v5632
        %v5634 = vsel %vm4830, %v5567, %v5633
        %v5635 = vsel %vm4832, %v5581, %v5634
        %v5636 = vsel %vm4834, %v5599, %v5635
        %v5637 = vsel %vm4836, %v5613, %v5636
        %v5638 = vsel %vm4838, %v5631, %v5637
        %v5649 = vlaneseq
        %v5650 = vshrl.u32 %v5649, 7
        %v5651 = vsub.s32 0, %v5650
        %v5652 = vrot.slane %v4482, %v5651
        %v5653 = vlaneseq
        %v5654 = vshrl.u32 %v5653, 7
        %v5655 = vsub.s32 0, %v5654
        %v5656 = vrot.slane %v4483, %v5655
        %v5657 = vlaneseq
        %v5658 = vshrl.u32 %v5657, 7
        %v5659 = vsub.s32 0, %v5658
        %v5660 = vrot.slane %v4484, %v5659
        %v5661 = vlaneseq
        %v5662 = vshrl.u32 %v5661, 7
        %v5663 = vsub.s32 0, %v5662
        %v5664 = vrot.slane %v4485, %v5663
        %v5665 = vlaneseq
        %v5666 = vshrl.u32 %v5665, 7
        %v5667 = vsub.s32 0, %v5666
        %v5668 = vrot.slane %v4486, %v5667
        %v5669 = vlaneseq
        %v5670 = vshrl.u32 %v5669, 7
        %v5671 = vsub.s32 0, %v5670
        %v5672 = vrot.slane %v4487, %v5671
        %v5673 = vlaneseq
        %v5674 = vshrl.u32 %v5673, 7
        %v5675 = vsub.s32 0, %v5674
        %v5676 = vrot.slane %v4488, %v5675
        %v5677 = vlaneseq
        %v5678 = vshrl.u32 %v5677, 7
        %v5679 = vsub.s32 0, %v5678
        %v5680 = vrot.slane %v4489, %v5679
        %v5681 = vsel %vm4826, %v5656, %v5652
        %v5682 = vsel %vm4828, %v5660, %v5681
        %v5683 = vsel %vm4830, %v5664, %v5682
        %v5684 = vsel %vm4832, %v5668, %v5683
        %v5685 = vsel %vm4834, %v5672, %v5684
        %v5686 = vsel %vm4836, %v5676, %v5685
        %v5687 = vsel %vm4838, %v5680, %v5686
        %5688 = vrot.lane.b32.xlu0 %v5574, 64
        %v5689 = vpop.permute.xlu0 %5688
        %5690 = vrot.lane.b32.xlu0 %v5687, 64
        %v5691 = vpop.permute.xlu0 %5690
        %vm5694 = vcmask 523264
        %v5695 = vsel %vm5694, %v4839, %v4994
        %v5696 = vsel %vm5694, %v4846, %v4996
        %v5697 = vsel %vm5694, %v4853, %v4998
        %v5698 = vsel %vm5694, %v4860, %v5000
        %v5699 = vsel %vm5694, %v4867, %v5002
        %v5700 = vsel %vm5694, %v4874, %v5004
        %v5701 = vsel %vm5694, %v4881, %v5006
        %v5702 = vsel %vm5694, %v4888, %v5008
        %v5703 = vsel %vm5694, %v5063, %v5218
        %v5704 = vsel %vm5694, %v5070, %v5220
        %v5705 = vsel %vm5694, %v5077, %v5222
        %v5706 = vsel %vm5694, %v5084, %v5224
        %v5707 = vsel %vm5694, %v5091, %v5226
        %v5708 = vsel %vm5694, %v5098, %v5228
        %v5709 = vsel %vm5694, %v5105, %v5230
        %v5710 = vsel %vm5694, %v5112, %v5232
        %v5711 = vsel %vm5694, %v5287, %v5393
        %v5712 = vsel %vm5694, %v5294, %v5395
        %v5713 = vsel %vm5694, %v5301, %v5397
        %v5714 = vsel %vm5694, %v5308, %v5399
        %v5715 = vsel %vm5694, %v5315, %v5401
        %v5716 = vsel %vm5694, %v5322, %v5403
        %v5717 = vsel %vm5694, %v5329, %v5405
        %v5718 = vsel %vm5694, %v5336, %v5407
        %v5719 = vsel %vm5694, %v4950, %v5449
        %v5720 = vsel %vm5694, %v4957, %v5451
        %v5721 = vsel %vm5694, %v4964, %v5453
        %v5722 = vsel %vm5694, %v4971, %v5455
        %v5723 = vsel %vm5694, %v4978, %v5457
        %v5724 = vsel %vm5694, %v4985, %v5459
        %v5725 = vsel %vm5694, %v4992, %v5461
        %v5726 = vsel %vm5694, %v5427, %v5463
        %v5727 = vsel %vm5694, %v5174, %v5505
        %v5728 = vsel %vm5694, %v5181, %v5507
        %v5729 = vsel %vm5694, %v5188, %v5509
        %v5730 = vsel %vm5694, %v5195, %v5511
        %v5731 = vsel %vm5694, %v5202, %v5513
        %v5732 = vsel %vm5694, %v5209, %v5515
        %v5733 = vsel %vm5694, %v5216, %v5517
        %v5734 = vsel %vm5694, %v5483, %v5519
        %v5735 = vsel %vm5694, %v5391, %v5590
        %v5736 = vsel %vm5694, %v5574, %v5592
        %v5737 = vsel %vm5694, %v5447, %v5622
        %v5738 = vsel %vm5694, %v5606, %v5624
        %v5739 = vsel %vm5694, %v5503, %v5689
        %v5740 = vsel %vm5694, %v5638, %v5691
        %v5742 = vlaneseq
        %v5743 = vshrl.u32 %v5742, 7
        %v5744 = vsub.s32 0, %v5743
        %v5745 = vrot.slane %v4490, %v5744
        %v5746 = vsel %vm4826, %v5660, %v5656
        %v5747 = vsel %vm4828, %v5664, %v5746
        %v5748 = vsel %vm4830, %v5668, %v5747
        %v5749 = vsel %vm4832, %v5672, %v5748
        %v5750 = vsel %vm4834, %v5676, %v5749
        %v5751 = vsel %vm4836, %v5680, %v5750
        %v5752 = vsel %vm4838, %v5745, %v5751
        %v5756 = vlaneseq
        %v5757 = vshrl.u32 %v5756, 7
        %v5758 = vsub.s32 0, %v5757
        %v5759 = vrot.slane %v4491, %v5758
        %v5760 = vsel %vm4826, %v5664, %v5660
        %v5761 = vsel %vm4828, %v5668, %v5760
        %v5762 = vsel %vm4830, %v5672, %v5761
        %v5763 = vsel %vm4832, %v5676, %v5762
        %v5764 = vsel %vm4834, %v5680, %v5763
        %v5765 = vsel %vm4836, %v5745, %v5764
        %v5766 = vsel %vm4838, %v5759, %v5765
        %5767 = vrot.lane.b32.xlu0 %v5606, 64
        %v5768 = vpop.permute.xlu0 %5767
        %5769 = vrot.lane.b32.xlu0 %v5766, 64
        %v5770 = vpop.permute.xlu0 %5769
        %v5774 = vlaneseq
        %v5775 = vshrl.u32 %v5774, 7
        %v5776 = vsub.s32 0, %v5775
        %v5777 = vrot.slane %v4492, %v5776
        %v5778 = vsel %vm4826, %v5668, %v5664
        %v5779 = vsel %vm4828, %v5672, %v5778
        %v5780 = vsel %vm4830, %v5676, %v5779
        %v5781 = vsel %vm4832, %v5680, %v5780
        %v5782 = vsel %vm4834, %v5745, %v5781
        %v5783 = vsel %vm4836, %v5759, %v5782
        %v5784 = vsel %vm4838, %v5777, %v5783
        %v5788 = vlaneseq
        %v5789 = vshrl.u32 %v5788, 7
        %v5790 = vsub.s32 0, %v5789
        %v5791 = vrot.slane %v4493, %v5790
        %v5792 = vsel %vm4826, %v5672, %v5668
        %v5793 = vsel %vm4828, %v5676, %v5792
        %v5794 = vsel %vm4830, %v5680, %v5793
        %v5795 = vsel %vm4832, %v5745, %v5794
        %v5796 = vsel %vm4834, %v5759, %v5795
        %v5797 = vsel %vm4836, %v5777, %v5796
        %v5798 = vsel %vm4838, %v5791, %v5797
        %5799 = vrot.lane.b32.xlu0 %v5638, 64
        %v5800 = vpop.permute.xlu0 %5799
        %5801 = vrot.lane.b32.xlu0 %v5798, 64
        %v5802 = vpop.permute.xlu0 %5801
        %v5813 = vlaneseq
        %v5814 = vshrl.u32 %v5813, 7
        %v5815 = vsub.s32 0, %v5814
        %v5816 = vrot.slane %v4494, %v5815
        %v5817 = vlaneseq
        %v5818 = vshrl.u32 %v5817, 7
        %v5819 = vsub.s32 0, %v5818
        %v5820 = vrot.slane %v4495, %v5819
        %v5821 = vlaneseq
        %v5822 = vshrl.u32 %v5821, 7
        %v5823 = vsub.s32 0, %v5822
        %v5824 = vrot.slane %v4496, %v5823
        %v5825 = vlaneseq
        %v5826 = vshrl.u32 %v5825, 7
        %v5827 = vsub.s32 0, %v5826
        %v5828 = vrot.slane %v4497, %v5827
        %v5829 = vlaneseq
        %v5830 = vshrl.u32 %v5829, 7
        %v5831 = vsub.s32 0, %v5830
        %v5832 = vrot.slane %v4498, %v5831
        %v5833 = vlaneseq
        %v5834 = vshrl.u32 %v5833, 7
        %v5835 = vsub.s32 0, %v5834
        %v5836 = vrot.slane %v4499, %v5835
        %v5837 = vlaneseq
        %v5838 = vshrl.u32 %v5837, 7
        %v5839 = vsub.s32 0, %v5838
        %v5840 = vrot.slane %v4500, %v5839
        %v5841 = vlaneseq
        %v5842 = vshrl.u32 %v5841, 7
        %v5843 = vsub.s32 0, %v5842
        %v5844 = vrot.slane %v4501, %v5843
        %v5845 = vsel %vm4826, %v5820, %v5816
        %v5846 = vsel %vm4828, %v5824, %v5845
        %v5847 = vsel %vm4830, %v5828, %v5846
        %v5848 = vsel %vm4832, %v5832, %v5847
        %v5849 = vsel %vm4834, %v5836, %v5848
        %v5850 = vsel %vm4836, %v5840, %v5849
        %v5851 = vsel %vm4838, %v5844, %v5850
        %v5855 = vlaneseq
        %v5856 = vshrl.u32 %v5855, 7
        %v5857 = vsub.s32 0, %v5856
        %v5858 = vrot.slane %v4502, %v5857
        %v5859 = vsel %vm4826, %v5824, %v5820
        %v5860 = vsel %vm4828, %v5828, %v5859
        %v5861 = vsel %vm4830, %v5832, %v5860
        %v5862 = vsel %vm4832, %v5836, %v5861
        %v5863 = vsel %vm4834, %v5840, %v5862
        %v5864 = vsel %vm4836, %v5844, %v5863
        %v5865 = vsel %vm4838, %v5858, %v5864
        %5866 = vrot.lane.b32.xlu0 %v5752, 64
        %v5867 = vpop.permute.xlu0 %5866
        %5868 = vrot.lane.b32.xlu0 %v5865, 64
        %v5869 = vpop.permute.xlu0 %5868
        %v5873 = vlaneseq
        %v5874 = vshrl.u32 %v5873, 7
        %v5875 = vsub.s32 0, %v5874
        %v5876 = vrot.slane %v4503, %v5875
        %v5877 = vsel %vm4826, %v5828, %v5824
        %v5878 = vsel %vm4828, %v5832, %v5877
        %v5879 = vsel %vm4830, %v5836, %v5878
        %v5880 = vsel %vm4832, %v5840, %v5879
        %v5881 = vsel %vm4834, %v5844, %v5880
        %v5882 = vsel %vm4836, %v5858, %v5881
        %v5883 = vsel %vm4838, %v5876, %v5882
        %v5887 = vlaneseq
        %v5888 = vshrl.u32 %v5887, 7
        %v5889 = vsub.s32 0, %v5888
        %v5890 = vrot.slane %v4504, %v5889
        %v5891 = vsel %vm4826, %v5832, %v5828
        %v5892 = vsel %vm4828, %v5836, %v5891
        %v5893 = vsel %vm4830, %v5840, %v5892
        %v5894 = vsel %vm4832, %v5844, %v5893
        %v5895 = vsel %vm4834, %v5858, %v5894
        %v5896 = vsel %vm4836, %v5876, %v5895
        %v5897 = vsel %vm4838, %v5890, %v5896
        %5898 = vrot.lane.b32.xlu0 %v5784, 64
        %v5899 = vpop.permute.xlu0 %5898
        %5900 = vrot.lane.b32.xlu0 %v5897, 64
        %v5901 = vpop.permute.xlu0 %5900
        %v5905 = vlaneseq
        %v5906 = vshrl.u32 %v5905, 7
        %v5907 = vsub.s32 0, %v5906
        %v5908 = vrot.slane %v4505, %v5907
        %v5909 = vsel %vm4826, %v5836, %v5832
        %v5910 = vsel %vm4828, %v5840, %v5909
        %v5911 = vsel %vm4830, %v5844, %v5910
        %v5912 = vsel %vm4832, %v5858, %v5911
        %v5913 = vsel %vm4834, %v5876, %v5912
        %v5914 = vsel %vm4836, %v5890, %v5913
        %v5915 = vsel %vm4838, %v5908, %v5914
        %v5916 = vsel %vm5694, %v5588, %v5768
        %v5917 = vsel %vm5694, %v5752, %v5770
        %v5918 = vsel %vm5694, %v5620, %v5800
        %v5919 = vsel %vm5694, %v5784, %v5802
        %v5920 = vsel %vm5694, %v5687, %v5867
        %v5921 = vsel %vm5694, %v5851, %v5869
        %v5922 = vsel %vm5694, %v5766, %v5899
        %v5923 = vsel %vm5694, %v5883, %v5901
        %v5924 = vld [vmem:[%s3] sm:$0xff]
        %v5925 = vld [vmem:[%s3 + $0x8] sm:$0xff]
        %v5926 = vld [vmem:[%s3 + $0x10] sm:$0xff]
        %v5927 = vld [vmem:[%s3 + $0x18] sm:$0xff]
        %v5928 = vld [vmem:[%s3 + $0x20] sm:$0xff]
        %v5929 = vld [vmem:[%s3 + $0x28] sm:$0xff]
        %v5930 = vld [vmem:[%s3 + $0x30] sm:$0xff]
        %v5931 = vld [vmem:[%s3 + $0x38] sm:$0xff]
        %v5932 = vld [vmem:[%s3 + $0x40] sm:$0xff]
        %v5933 = vld [vmem:[%s3 + $0x48] sm:$0xff]
        %v5934 = vld [vmem:[%s3 + $0x50] sm:$0xff]
        %v5935 = vld [vmem:[%s3 + $0x58] sm:$0xff]
        %v5936 = vld [vmem:[%s3 + $0x60] sm:$0xff]
        %v5937 = vld [vmem:[%s3 + $0x68] sm:$0xff]
        %v5938 = vld [vmem:[%s3 + $0x70] sm:$0xff]
        %v5939 = vld [vmem:[%s3 + $0x78] sm:$0xff]
        %v5940 = vld [vmem:[%s3 + $0x80] sm:$0xff]
        %v5941 = vld [vmem:[%s3 + $0x88] sm:$0xff]
        %v5942 = vld [vmem:[%s3 + $0x90] sm:$0xff]
        %v5943 = vld [vmem:[%s3 + $0x98] sm:$0xff]
        %v5944 = vld [vmem:[%s3 + $0xa0] sm:$0xff]
        %v5945 = vld [vmem:[%s3 + $0xa8] sm:$0xff]
        %v5946 = vld [vmem:[%s3 + $0xb0] sm:$0xff]
        %v5947 = vld [vmem:[%s3 + $0xb8] sm:$0xff]
        %v5948 = vld [vmem:[%s3 + $0xc0] sm:$0xff]
        %v5949 = vld [vmem:[%s3 + $0xc8] sm:$0xff]
        %v5950 = vld [vmem:[%s3 + $0xd0] sm:$0xff]
        %v5951 = vld [vmem:[%s3 + $0xd8] sm:$0xff]
        %v5952 = vld [vmem:[%s3 + $0xe0] sm:$0xff]
        %v5953 = vld [vmem:[%s3 + $0xe8] sm:$0xff]
        %v5954 = vld [vmem:[%s3 + $0xf0] sm:$0xff]
        %v5955 = vld [vmem:[%s3 + $0xf8] sm:$0xff]
        %v5956 = vld [vmem:[%s3 + $0x100] sm:$0xff]
        %v5957 = vld [vmem:[%s3 + $0x108] sm:$0xff]
        %v5958 = vld [vmem:[%s3 + $0x110] sm:$0xff]
        %v5959 = vld [vmem:[%s3 + $0x118] sm:$0xff]
        %v5960 = vld [vmem:[%s3 + $0x120] sm:$0xff]
        %v5961 = vld [vmem:[%s3 + $0x128] sm:$0xff]
        %v5962 = vld [vmem:[%s3 + $0x130] sm:$0xff]
        %v5963 = vld [vmem:[%s3 + $0x138] sm:$0xff]
        %v5964 = vld [vmem:[%s3 + $0x140] sm:$0xff]
        %v5965 = vld [vmem:[%s3 + $0x148] sm:$0xff]
        %v5966 = vld [vmem:[%s3 + $0x150] sm:$0xff]
        %v5967 = vld [vmem:[%s3 + $0x158] sm:$0xff]
        %v5968 = vld [vmem:[%s3 + $0x160] sm:$0xff]
        %v5969 = vld [vmem:[%s3 + $0x168] sm:$0xff]
        %v5970 = vld [vmem:[%s3 + $0x170] sm:$0xff]
        %v5971 = vld [vmem:[%s3 + $0x178] sm:$0xff]
        %v5972 = vld [vmem:[%s3 + $0x180] sm:$0xff]
        %v5973 = vld [vmem:[%s3 + $0x188] sm:$0xff]
        %v5974 = vld [vmem:[%s3 + $0x190] sm:$0xff]
        %v5975 = vld [vmem:[%s3 + $0x198] sm:$0xff]
        %v5976 = vld [vmem:[%s3 + $0x1a0] sm:$0xff]
        %v5977 = vld [vmem:[%s3 + $0x1a8] sm:$0xff]
        %v5978 = vld [vmem:[%s3 + $0x1b0] sm:$0xff]
        %v5979 = vld [vmem:[%s3 + $0x1b8] sm:$0xff]
        %v5980 = vld [vmem:[%s3 + $0x1c0] sm:$0xff]
        %v5981 = vld [vmem:[%s3 + $0x1c8] sm:$0xff]
        %v5982 = vld [vmem:[%s3 + $0x1d0] sm:$0xff]
        %v5983 = vld [vmem:[%s3 + $0x1d8] sm:$0xff]
        %v5984 = vld [vmem:[%s3 + $0x1e0] sm:$0xff]
        %v5985 = vld [vmem:[%s3 + $0x1e8] sm:$0xff]
        %v5986 = vld [vmem:[%s3 + $0x1f0] sm:$0xff]
        %v5987 = vld [vmem:[%s3 + $0x1f8] sm:$0xff]
        %v5988 = vld [vmem:[%s3 + $0x200] sm:$0xff]
        %v5989 = vld [vmem:[%s3 + $0x208] sm:$0xff]
        %v5990 = vld [vmem:[%s3 + $0x210] sm:$0xff]
        %v5991 = vld [vmem:[%s3 + $0x218] sm:$0xff]
        %v5992 = vld [vmem:[%s3 + $0x220] sm:$0xff]
        %v5993 = vld [vmem:[%s3 + $0x228] sm:$0xff]
        %v5994 = vld [vmem:[%s3 + $0x230] sm:$0xff]
        %v5995 = vld [vmem:[%s3 + $0x238] sm:$0xff]
        %v5996 = vld [vmem:[%s3 + $0x240] sm:$0xff]
        %v5997 = vld [vmem:[%s3 + $0x248] sm:$0xff]
        %v5998 = vld [vmem:[%s3 + $0x250] sm:$0xff]
        %v5999 = vld [vmem:[%s3 + $0x258] sm:$0xff]
        %v6000 = vld [vmem:[%s3 + $0x260] sm:$0xff]
        %v6001 = vld [vmem:[%s3 + $0x268] sm:$0xff]
        %v6002 = vld [vmem:[%s3 + $0x270] sm:$0xff]
        %v6003 = vld [vmem:[%s3 + $0x278] sm:$0xff]
        %v6004 = vld [vmem:[%s3 + $0x280] sm:$0xff]
        %v6005 = vld [vmem:[%s3 + $0x288] sm:$0xff]
        %v6006 = vld [vmem:[%s3 + $0x290] sm:$0xff]
        %v6007 = vld [vmem:[%s3 + $0x298] sm:$0xff]
        %v6008 = vld [vmem:[%s3 + $0x2a0] sm:$0xff]
        %v6009 = vld [vmem:[%s3 + $0x2a8] sm:$0xff]
        %v6010 = vld [vmem:[%s3 + $0x2b0] sm:$0xff]
        %v6011 = vld [vmem:[%s3 + $0x2b8] sm:$0xff]
        %v6012 = vld [vmem:[%s3 + $0x2c0] sm:$0xff]
        %v6013 = vld [vmem:[%s3 + $0x2c8] sm:$0xff]
        %v6014 = vld [vmem:[%s3 + $0x2d0] sm:$0xff]
        %v6015 = vld [vmem:[%s3 + $0x2d8] sm:$0xff]
        %v6016 = vld [vmem:[%s3 + $0x2e0] sm:$0xff]
        %v6017 = vld [vmem:[%s3 + $0x2e8] sm:$0xff]
        %v6018 = vld [vmem:[%s3 + $0x2f0] sm:$0xff]
        %v6019 = vld [vmem:[%s3 + $0x2f8] sm:$0xff]
        %v6020 = vld [vmem:[%s3 + $0x300] sm:$0xff]
        %v6021 = vld [vmem:[%s3 + $0x308] sm:$0xff]
        %v6022 = vld [vmem:[%s3 + $0x310] sm:$0xff]
        %v6023 = vld [vmem:[%s3 + $0x318] sm:$0xff]
        %v6024 = vld [vmem:[%s3 + $0x320] sm:$0xff]
        %v6025 = vld [vmem:[%s3 + $0x328] sm:$0xff]
        %v6026 = vld [vmem:[%s3 + $0x330] sm:$0xff]
        %v6027 = vld [vmem:[%s3 + $0x338] sm:$0xff]
        %v6028 = vld [vmem:[%s3 + $0x340] sm:$0xff]
        %v6029 = vld [vmem:[%s3 + $0x348] sm:$0xff]
        %v6030 = vld [vmem:[%s3 + $0x350] sm:$0xff]
        %v6031 = vld [vmem:[%s3 + $0x358] sm:$0xff]
        %v6032 = vld [vmem:[%s3 + $0x360] sm:$0xff]
        %v6033 = vld [vmem:[%s3 + $0x368] sm:$0xff]
        %v6034 = vld [vmem:[%s3 + $0x370] sm:$0xff]
        %v6035 = vld [vmem:[%s3 + $0x378] sm:$0xff]
        %v6036 = vld [vmem:[%s3 + $0x380] sm:$0xff]
        %v6037 = vld [vmem:[%s3 + $0x388] sm:$0xff]
        %v6038 = vld [vmem:[%s3 + $0x390] sm:$0xff]
        %v6039 = vld [vmem:[%s3 + $0x398] sm:$0xff]
        %v6040 = vld [vmem:[%s3 + $0x3a0] sm:$0xff]
        %v6041 = vld [vmem:[%s3 + $0x3a8] sm:$0xff]
        %v6042 = vld [vmem:[%s3 + $0x3b0] sm:$0xff]
        %v6043 = vld [vmem:[%s3 + $0x3b8] sm:$0xff]
        %v6044 = vld [vmem:[%s3 + $0x3c0] sm:$0xff]
        %v6045 = vld [vmem:[%s3 + $0x3c8] sm:$0xff]
        %v6046 = vld [vmem:[%s3 + $0x3d0] sm:$0xff]
        %v6047 = vld [vmem:[%s3 + $0x3d8] sm:$0xff]
        %v6048 = vld [vmem:[%s3 + $0x3e0] sm:$0xff]
        %v6049 = vld [vmem:[%s3 + $0x3e8] sm:$0xff]
        %v6050 = vld [vmem:[%s3 + $0x3f0] sm:$0xff]
        %v6051 = vld [vmem:[%s3 + $0x3f8] sm:$0xff]
        %v6052 = vld [vmem:[%s3 + $0x400] sm:$0xff]
        %v6053 = vld [vmem:[%s3 + $0x408] sm:$0xff]
        %v6054 = vld [vmem:[%s3 + $0x410] sm:$0xff]
        %v6055 = vld [vmem:[%s3 + $0x418] sm:$0xff]
        %v6056 = vld [vmem:[%s3 + $0x420] sm:$0xff]
        %v6057 = vld [vmem:[%s3 + $0x428] sm:$0xff]
        %v6058 = vld [vmem:[%s3 + $0x430] sm:$0xff]
        %v6059 = vld [vmem:[%s3 + $0x438] sm:$0xff]
        %v6060 = vld [vmem:[%s3 + $0x440] sm:$0xff]
        %v6061 = vld [vmem:[%s3 + $0x448] sm:$0xff]
        %v6062 = vld [vmem:[%s3 + $0x450] sm:$0xff]
        %v6063 = vld [vmem:[%s3 + $0x458] sm:$0xff]
        %v6064 = vld [vmem:[%s3 + $0x460] sm:$0xff]
        %v6065 = vld [vmem:[%s3 + $0x468] sm:$0xff]
        %v6066 = vld [vmem:[%s3 + $0x470] sm:$0xff]
        %v6067 = vld [vmem:[%s3 + $0x478] sm:$0xff]
        %v6068 = vld [vmem:[%s3 + $0x480] sm:$0xff]
        %v6069 = vld [vmem:[%s3 + $0x488] sm:$0xff]
        %v6070 = vld [vmem:[%s3 + $0x490] sm:$0xff]
        %v6071 = vld [vmem:[%s3 + $0x498] sm:$0xff]
        %v6072 = vld [vmem:[%s3 + $0x4a0] sm:$0xff]
        %v6073 = vld [vmem:[%s3 + $0x4a8] sm:$0xff]
        %v6074 = vld [vmem:[%s3 + $0x4b0] sm:$0xff]
        %v6075 = vld [vmem:[%s3 + $0x4b8] sm:$0xff]
        %v6076 = vld [vmem:[%s3 + $0x4c0] sm:$0xff]
        %v6077 = vld [vmem:[%s3 + $0x4c8] sm:$0xff]
        %v6078 = vld [vmem:[%s3 + $0x4d0] sm:$0xff]
        %v6079 = vld [vmem:[%s3 + $0x4d8] sm:$0xff]
        %v6080 = vld [vmem:[%s3 + $0x4e0] sm:$0xff]
        %v6081 = vld [vmem:[%s3 + $0x4e8] sm:$0xff]
        %v6082 = vld [vmem:[%s3 + $0x4f0] sm:$0xff]
        %v6083 = vld [vmem:[%s3 + $0x4f8] sm:$0xff]
        %v6084 = vld [vmem:[%s3 + $0x500] sm:$0xff]
        %v6085 = vld [vmem:[%s3 + $0x508] sm:$0xff]
        %v6086 = vld [vmem:[%s3 + $0x510] sm:$0xff]
        %v6087 = vld [vmem:[%s3 + $0x518] sm:$0xff]
        %v6088 = vld [vmem:[%s3 + $0x520] sm:$0xff]
        %v6089 = vld [vmem:[%s3 + $0x528] sm:$0xff]
        %v6090 = vld [vmem:[%s3 + $0x530] sm:$0xff]
        %v6091 = vld [vmem:[%s3 + $0x538] sm:$0xff]
        %v6092 = vld [vmem:[%s3 + $0x540] sm:$0xff]
        %v6093 = vld [vmem:[%s3 + $0x548] sm:$0xff]
        %v6094 = vld [vmem:[%s3 + $0x550] sm:$0xff]
        %v6095 = vld [vmem:[%s3 + $0x558] sm:$0xff]
        %v6096 = vld [vmem:[%s3 + $0x560] sm:$0xff]
        %v6097 = vld [vmem:[%s3 + $0x568] sm:$0xff]
        %v6098 = vld [vmem:[%s3 + $0x570] sm:$0xff]
        %v6099 = vld [vmem:[%s3 + $0x578] sm:$0xff]
        %v6100 = vld [vmem:[%s3 + $0x580] sm:$0xff]
        %v6101 = vld [vmem:[%s3 + $0x588] sm:$0xff]
        %v6102 = vld [vmem:[%s3 + $0x590] sm:$0xff]
        %v6103 = vld [vmem:[%s3 + $0x598] sm:$0xff]
        %v6104 = vld [vmem:[%s3 + $0x5a0] sm:$0xff]
        %v6105 = vld [vmem:[%s3 + $0x5a8] sm:$0xff]
        %v6106 = vld [vmem:[%s3 + $0x5b0] sm:$0xff]
        %v6107 = vld [vmem:[%s3 + $0x5b8] sm:$0xff]
        %v6108 = vld [vmem:[%s3 + $0x5c0] sm:$0xff]
        %v6109 = vld [vmem:[%s3 + $0x5c8] sm:$0xff]
        %v6110 = vld [vmem:[%s3 + $0x5d0] sm:$0xff]
        %v6111 = vld [vmem:[%s3 + $0x5d8] sm:$0xff]
        %v6112 = vld [vmem:[%s3 + $0x5e0] sm:$0xff]
        %v6113 = vld [vmem:[%s3 + $0x5e8] sm:$0xff]
        %v6114 = vld [vmem:[%s3 + $0x5f0] sm:$0xff]
        %v6115 = vld [vmem:[%s3 + $0x5f8] sm:$0xff]
        %v6116 = vld [vmem:[%s3 + $0x600] sm:$0xff]
        %v6117 = vld [vmem:[%s3 + $0x608] sm:$0xff]
        %v6118 = vld [vmem:[%s3 + $0x610] sm:$0xff]
        %v6119 = vld [vmem:[%s3 + $0x618] sm:$0xff]
        %v6120 = vld [vmem:[%s3 + $0x620] sm:$0xff]
        %v6121 = vld [vmem:[%s3 + $0x628] sm:$0xff]
        %v6122 = vld [vmem:[%s3 + $0x630] sm:$0xff]
        %v6123 = vld [vmem:[%s3 + $0x638] sm:$0xff]
        %v6124 = vld [vmem:[#allocation7] sm:$0x1]
        %v6126 = vlaneseq
        %v6127 = vshrl.u32 %v6126, 7
        %v6128 = vsub.s32 0, %v6127
        %v6129 = vrot.slane %v6124, %v6128
        %v6131 = vsel %vm5694, %v5315, 0
        %v6133 = vsel %vm5694, %v5322, 0
        %v6135 = vsel %vm5694, %v5329, 0
        %v6137 = vsel %vm5694, %v5336, 0
        %v6139 = vsel %vm5694, %v5503, 0
        %v6141 = vsel %vm5694, %v5638, 0
        %v6143 = vsel %vm5694, %v5798, 0
        %v6145 = vsel %vm5694, %v5915, 0
        %6147 = vmatprep.subr.mxu0 0.0
        %6148 = vmatpush1.msra.mxu0 %v5939
        %6149 = vmatprep.subr.mxu0 0.0
        %6150 = vmatpush1.msra.mxu0 %v5938
        %6151 = vmatprep.subr.mxu0 0.0
        %6152 = vmatpush1.msra.mxu0 %v5937
        %6153 = vmatprep.subr.mxu0 0.0
        %6154 = vmatpush1.msra.mxu0 %v5936
        %6155 = vmatprep.subr.mxu0 0.0
        %6156 = vmatpush1.msra.mxu0 %v5935
        %6157 = vmatprep.subr.mxu0 0.0
        %6158 = vmatpush1.msra.mxu0 %v5934
        %6159 = vmatprep.subr.mxu0 0.0
        %6160 = vmatpush1.msra.mxu0 %v5933
        %6161 = vmatprep.subr.mxu0 0.0
        %6162 = vmatpush1.msra.mxu0 %v5932
        %6163 = vmatprep.subr.mxu0 0.0
        %6164 = vmatpush1.msra.mxu0 %v5931
        %6165 = vmatprep.subr.mxu0 0.0
        %6166 = vmatpush1.msra.mxu0 %v5930
        %6167 = vmatprep.subr.mxu0 0.0
        %6168 = vmatpush1.msra.mxu0 %v5929
        %6169 = vmatprep.subr.mxu0 0.0
        %6170 = vmatpush1.msra.mxu0 %v5928
        %6171 = vmatprep.subr.mxu0 0.0
        %6172 = vmatpush1.msra.mxu0 %v5927
        %6173 = vmatprep.subr.mxu0 0.0
        %6174 = vmatpush1.msra.mxu0 %v5926
        %6175 = vmatprep.subr.mxu0 0.0
        %6176 = vmatpush1.msra.mxu0 %v5925
        %6177 = vmatprep.subr.mxu0 0.0
        %6178 = vmatpush1.msra.mxu0 %v5924
        %6179 = vmatprep.subr.mxu0 0.0
        %6180 = vmatpush2.msra.mxu0 %v5955
        %6181 = vmatprep.subr.mxu0 0.0
        %6182 = vmatpush2.msra.mxu0 %v5954
        %6183 = vmatprep.subr.mxu0 0.0
        %6184 = vmatpush2.msra.mxu0 %v5953
        %6185 = vmatprep.subr.mxu0 0.0
        %6186 = vmatpush2.msra.mxu0 %v5952
        %6187 = vmatprep.subr.mxu0 0.0
        %6188 = vmatpush2.msra.mxu0 %v5951
        %6189 = vmatprep.subr.mxu0 0.0
        %6190 = vmatpush2.msra.mxu0 %v5950
        %6191 = vmatprep.subr.mxu0 0.0
        %6192 = vmatpush2.msra.mxu0 %v5949
        %6193 = vmatprep.subr.mxu0 0.0
        %6194 = vmatpush2.msra.mxu0 %v5948
        %6195 = vmatprep.subr.mxu0 0.0
        %6196 = vmatpush2.msra.mxu0 %v5947
        %6197 = vmatprep.subr.mxu0 0.0
        %6198 = vmatpush2.msra.mxu0 %v5946
        %6199 = vmatprep.subr.mxu0 0.0
        %6200 = vmatpush2.msra.mxu0 %v5945
        %6201 = vmatprep.subr.mxu0 0.0
        %6202 = vmatpush2.msra.mxu0 %v5944
        %6203 = vmatprep.subr.mxu0 0.0
        %6204 = vmatpush2.msra.mxu0 %v5943
        %6205 = vmatprep.subr.mxu0 0.0
        %6206 = vmatpush2.msra.mxu0 %v5942
        %6207 = vmatprep.subr.mxu0 0.0
        %6208 = vmatpush2.msra.mxu0 %v5941
        %6209 = vmatprep.subr.mxu0 0.0
        %6210 = vmatpush2.msra.mxu0 %v5940
        %6211 = vmatprep.mubr.f32.mxu0 %v5703
        %6212 = vmatmul.mubr.f32.gmra.mxu0 %v5695
        %v6213 = vpop.f32.mrf.mxu0
        %v6214 = vadd.f32 %v6129, %v6213
        %v6215 = vpop.f32.mrf.mxu0
        %6216 = vmatprep.mubr.f32.mxu0 %v5704
        %6217 = vmatmul.mubr.f32.gmra.mxu0 %v5696
        %v6218 = vpop.f32.mrf.mxu0
        %v6219 = vadd.f32 %v6129, %v6218
        %v6220 = vpop.f32.mrf.mxu0
        %6221 = vmatprep.mubr.f32.mxu0 %v5705
        %6222 = vmatmul.mubr.f32.gmra.mxu0 %v5697
        %v6223 = vpop.f32.mrf.mxu0
        %v6224 = vadd.f32 %v6129, %v6223
        %v6225 = vpop.f32.mrf.mxu0
        %6226 = vmatprep.mubr.f32.mxu0 %v5706
        %6227 = vmatmul.mubr.f32.gmra.mxu0 %v5698
        %v6228 = vpop.f32.mrf.mxu0
        %v6229 = vadd.f32 %v6129, %v6228
        %v6230 = vpop.f32.mrf.mxu0
        %6231 = vmatprep.mubr.f32.mxu0 %v5707
        %6232 = vmatmul.mubr.f32.gmra.mxu0 %v5699
        %v6233 = vpop.f32.mrf.mxu0
        %v6234 = vadd.f32 %v6129, %v6233
        %v6235 = vpop.f32.mrf.mxu0
        %6236 = vmatprep.mubr.f32.mxu0 %v5708
        %6237 = vmatmul.mubr.f32.gmra.mxu0 %v5700
        %v6238 = vpop.f32.mrf.mxu0
        %v6239 = vadd.f32 %v6129, %v6238
        %v6240 = vpop.f32.mrf.mxu0
        %6241 = vmatprep.mubr.f32.mxu0 %v5709
        %6242 = vmatmul.mubr.f32.gmra.mxu0 %v5701
        %v6243 = vpop.f32.mrf.mxu0
        %v6244 = vadd.f32 %v6129, %v6243
        %v6245 = vpop.f32.mrf.mxu0
        %6246 = vmatprep.mubr.f32.mxu0 %v5710
        %6247 = vmatmul.mubr.f32.gmra.mxu0 %v5702
        %v6248 = vpop.f32.mrf.mxu0
        %v6249 = vadd.f32 %v6129, %v6248
        %v6250 = vpop.f32.mrf.mxu0
        %6251 = vdwg.mxu0
        %6252 = vmatprep.subr.mxu0 0.0
        %6253 = vmatpush1.msra.mxu0 %v5971
        %6254 = vmatprep.subr.mxu0 0.0
        %6255 = vmatpush1.msra.mxu0 %v5970
        %6256 = vmatprep.subr.mxu0 0.0
        %6257 = vmatpush1.msra.mxu0 %v5969
        %6258 = vmatprep.subr.mxu0 0.0
        %6259 = vmatpush1.msra.mxu0 %v5968
        %6260 = vmatprep.subr.mxu0 0.0
        %6261 = vmatpush1.msra.mxu0 %v5967
        %6262 = vmatprep.subr.mxu0 0.0
        %6263 = vmatpush1.msra.mxu0 %v5966
        %6264 = vmatprep.subr.mxu0 0.0
        %6265 = vmatpush1.msra.mxu0 %v5965
        %6266 = vmatprep.subr.mxu0 0.0
        %6267 = vmatpush1.msra.mxu0 %v5964
        %6268 = vmatprep.subr.mxu0 0.0
        %6269 = vmatpush1.msra.mxu0 %v5963
        %6270 = vmatprep.subr.mxu0 0.0
        %6271 = vmatpush1.msra.mxu0 %v5962
        %6272 = vmatprep.subr.mxu0 0.0
        %6273 = vmatpush1.msra.mxu0 %v5961
        %6274 = vmatprep.subr.mxu0 0.0
        %6275 = vmatpush1.msra.mxu0 %v5960
        %6276 = vmatprep.subr.mxu0 0.0
        %6277 = vmatpush1.msra.mxu0 %v5959
        %6278 = vmatprep.subr.mxu0 0.0
        %6279 = vmatpush1.msra.mxu0 %v5958
        %6280 = vmatprep.subr.mxu0 0.0
        %6281 = vmatpush1.msra.mxu0 %v5957
        %6282 = vmatprep.subr.mxu0 0.0
        %6283 = vmatpush1.msra.mxu0 %v5956
        %6284 = vmatprep.subr.mxu0 0.0
        %6285 = vmatpush2.msra.mxu0 %v5987
        %6286 = vmatprep.subr.mxu0 0.0
        %6287 = vmatpush2.msra.mxu0 %v5986
        %6288 = vmatprep.subr.mxu0 0.0
        %6289 = vmatpush2.msra.mxu0 %v5985
        %6290 = vmatprep.subr.mxu0 0.0
        %6291 = vmatpush2.msra.mxu0 %v5984
        %6292 = vmatprep.subr.mxu0 0.0
        %6293 = vmatpush2.msra.mxu0 %v5983
        %6294 = vmatprep.subr.mxu0 0.0
        %6295 = vmatpush2.msra.mxu0 %v5982
        %6296 = vmatprep.subr.mxu0 0.0
        %6297 = vmatpush2.msra.mxu0 %v5981
        %6298 = vmatprep.subr.mxu0 0.0
        %6299 = vmatpush2.msra.mxu0 %v5980
        %6300 = vmatprep.subr.mxu0 0.0
        %6301 = vmatpush2.msra.mxu0 %v5979
        %6302 = vmatprep.subr.mxu0 0.0
        %6303 = vmatpush2.msra.mxu0 %v5978
        %6304 = vmatprep.subr.mxu0 0.0
        %6305 = vmatpush2.msra.mxu0 %v5977
        %6306 = vmatprep.subr.mxu0 0.0
        %6307 = vmatpush2.msra.mxu0 %v5976
        %6308 = vmatprep.subr.mxu0 0.0
        %6309 = vmatpush2.msra.mxu0 %v5975
        %6310 = vmatprep.subr.mxu0 0.0
        %6311 = vmatpush2.msra.mxu0 %v5974
        %6312 = vmatprep.subr.mxu0 0.0
        %6313 = vmatpush2.msra.mxu0 %v5973
        %6314 = vmatprep.subr.mxu0 0.0
        %6315 = vmatpush2.msra.mxu0 %v5972
        %6316 = vmatprep.mubr.f32.mxu0 %v5719
        %6317 = vmatmul.mubr.f32.gmra.mxu0 %v5711
        %v6318 = vpop.f32.mrf.mxu0
        %v6319 = vadd.f32 %v6214, %v6318
        %v6320 = vpop.f32.mrf.mxu0
        %6321 = vmatprep.mubr.f32.mxu0 %v5720
        %6322 = vmatmul.mubr.f32.gmra.mxu0 %v5712
        %v6323 = vpop.f32.mrf.mxu0
        %v6324 = vadd.f32 %v6219, %v6323
        %v6325 = vpop.f32.mrf.mxu0
        %6326 = vmatprep.mubr.f32.mxu0 %v5721
        %6327 = vmatmul.mubr.f32.gmra.mxu0 %v5713
        %v6328 = vpop.f32.mrf.mxu0
        %v6329 = vadd.f32 %v6224, %v6328
        %v6330 = vpop.f32.mrf.mxu0
        %6331 = vmatprep.mubr.f32.mxu0 %v5722
        %6332 = vmatmul.mubr.f32.gmra.mxu0 %v5714
        %v6333 = vpop.f32.mrf.mxu0
        %v6334 = vadd.f32 %v6229, %v6333
        %v6335 = vpop.f32.mrf.mxu0
        %6336 = vmatprep.mubr.f32.mxu0 %v5723
        %6337 = vmatmul.mubr.f32.gmra.mxu0 %v5715
        %v6338 = vpop.f32.mrf.mxu0
        %v6339 = vadd.f32 %v6234, %v6338
        %v6340 = vpop.f32.mrf.mxu0
        %6341 = vmatprep.mubr.f32.mxu0 %v5724
        %6342 = vmatmul.mubr.f32.gmra.mxu0 %v5716
        %v6343 = vpop.f32.mrf.mxu0
        %v6344 = vadd.f32 %v6239, %v6343
        %v6345 = vpop.f32.mrf.mxu0
        %6346 = vmatprep.mubr.f32.mxu0 %v5725
        %6347 = vmatmul.mubr.f32.gmra.mxu0 %v5717
        %v6348 = vpop.f32.mrf.mxu0
        %v6349 = vadd.f32 %v6244, %v6348
        %v6350 = vpop.f32.mrf.mxu0
        %6351 = vmatprep.mubr.f32.mxu0 %v5726
        %6352 = vmatmul.mubr.f32.gmra.mxu0 %v5718
        %v6353 = vpop.f32.mrf.mxu0
        %v6354 = vadd.f32 %v6249, %v6353
        %v6355 = vpop.f32.mrf.mxu0
        %6356 = vdwg.mxu0
        %6357 = vmatprep.subr.mxu0 0.0
        %6358 = vmatpush1.msra.mxu0 %v6003
        %6359 = vmatprep.subr.mxu0 0.0
        %6360 = vmatpush1.msra.mxu0 %v6002
        %6361 = vmatprep.subr.mxu0 0.0
        %6362 = vmatpush1.msra.mxu0 %v6001
        %6363 = vmatprep.subr.mxu0 0.0
        %6364 = vmatpush1.msra.mxu0 %v6000
        %6365 = vmatprep.subr.mxu0 0.0
        %6366 = vmatpush1.msra.mxu0 %v5999
        %6367 = vmatprep.subr.mxu0 0.0
        %6368 = vmatpush1.msra.mxu0 %v5998
        %6369 = vmatprep.subr.mxu0 0.0
        %6370 = vmatpush1.msra.mxu0 %v5997
        %6371 = vmatprep.subr.mxu0 0.0
        %6372 = vmatpush1.msra.mxu0 %v5996
        %6373 = vmatprep.subr.mxu0 0.0
        %6374 = vmatpush1.msra.mxu0 %v5995
        %6375 = vmatprep.subr.mxu0 0.0
        %6376 = vmatpush1.msra.mxu0 %v5994
        %6377 = vmatprep.subr.mxu0 0.0
        %6378 = vmatpush1.msra.mxu0 %v5993
        %6379 = vmatprep.subr.mxu0 0.0
        %6380 = vmatpush1.msra.mxu0 %v5992
        %6381 = vmatprep.subr.mxu0 0.0
        %6382 = vmatpush1.msra.mxu0 %v5991
        %6383 = vmatprep.subr.mxu0 0.0
        %6384 = vmatpush1.msra.mxu0 %v5990
        %6385 = vmatprep.subr.mxu0 0.0
        %6386 = vmatpush1.msra.mxu0 %v5989
        %6387 = vmatprep.subr.mxu0 0.0
        %6388 = vmatpush1.msra.mxu0 %v5988
        %6389 = vmatprep.subr.mxu0 0.0
        %6390 = vmatpush2.msra.mxu0 %v6019
        %6391 = vmatprep.subr.mxu0 0.0
        %6392 = vmatpush2.msra.mxu0 %v6018
        %6393 = vmatprep.subr.mxu0 0.0
        %6394 = vmatpush2.msra.mxu0 %v6017
        %6395 = vmatprep.subr.mxu0 0.0
        %6396 = vmatpush2.msra.mxu0 %v6016
        %6397 = vmatprep.subr.mxu0 0.0
        %6398 = vmatpush2.msra.mxu0 %v6015
        %6399 = vmatprep.subr.mxu0 0.0
        %6400 = vmatpush2.msra.mxu0 %v6014
        %6401 = vmatprep.subr.mxu0 0.0
        %6402 = vmatpush2.msra.mxu0 %v6013
        %6403 = vmatprep.subr.mxu0 0.0
        %6404 = vmatpush2.msra.mxu0 %v6012
        %6405 = vmatprep.subr.mxu0 0.0
        %6406 = vmatpush2.msra.mxu0 %v6011
        %6407 = vmatprep.subr.mxu0 0.0
        %6408 = vmatpush2.msra.mxu0 %v6010
        %6409 = vmatprep.subr.mxu0 0.0
        %6410 = vmatpush2.msra.mxu0 %v6009
        %6411 = vmatprep.subr.mxu0 0.0
        %6412 = vmatpush2.msra.mxu0 %v6008
        %6413 = vmatprep.subr.mxu0 0.0
        %6414 = vmatpush2.msra.mxu0 %v6007
        %6415 = vmatprep.subr.mxu0 0.0
        %6416 = vmatpush2.msra.mxu0 %v6006
        %6417 = vmatprep.subr.mxu0 0.0
        %6418 = vmatpush2.msra.mxu0 %v6005
        %6419 = vmatprep.subr.mxu0 0.0
        %6420 = vmatpush2.msra.mxu0 %v6004
        %6421 = vmatprep.mubr.f32.mxu0 %v5697
        %6422 = vmatmul.mubr.f32.gmra.mxu0 %v5727
        %v6423 = vpop.f32.mrf.mxu0
        %v6424 = vadd.f32 %v6319, %v6423
        %v6425 = vpop.f32.mrf.mxu0
        %6426 = vmatprep.mubr.f32.mxu0 %v5698
        %6427 = vmatmul.mubr.f32.gmra.mxu0 %v5728
        %v6428 = vpop.f32.mrf.mxu0
        %v6429 = vadd.f32 %v6324, %v6428
        %v6430 = vpop.f32.mrf.mxu0
        %6431 = vmatprep.mubr.f32.mxu0 %v5699
        %6432 = vmatmul.mubr.f32.gmra.mxu0 %v5729
        %v6433 = vpop.f32.mrf.mxu0
        %v6434 = vadd.f32 %v6329, %v6433
        %v6435 = vpop.f32.mrf.mxu0
        %6436 = vmatprep.mubr.f32.mxu0 %v5700
        %6437 = vmatmul.mubr.f32.gmra.mxu0 %v5730
        %v6438 = vpop.f32.mrf.mxu0
        %v6439 = vadd.f32 %v6334, %v6438
        %v6440 = vpop.f32.mrf.mxu0
        %6441 = vmatprep.mubr.f32.mxu0 %v5701
        %6442 = vmatmul.mubr.f32.gmra.mxu0 %v5731
        %v6443 = vpop.f32.mrf.mxu0
        %v6444 = vadd.f32 %v6339, %v6443
        %v6445 = vpop.f32.mrf.mxu0
        %6446 = vmatprep.mubr.f32.mxu0 %v5702
        %6447 = vmatmul.mubr.f32.gmra.mxu0 %v5732
        %v6448 = vpop.f32.mrf.mxu0
        %v6449 = vadd.f32 %v6344, %v6448
        %v6450 = vpop.f32.mrf.mxu0
        %6451 = vmatprep.mubr.f32.mxu0 %v5735
        %6452 = vmatmul.mubr.f32.gmra.mxu0 %v5733
        %v6453 = vpop.f32.mrf.mxu0
        %v6454 = vadd.f32 %v6349, %v6453
        %v6455 = vpop.f32.mrf.mxu0
        %6456 = vmatprep.mubr.f32.mxu0 %v5736
        %6457 = vmatmul.mubr.f32.gmra.mxu0 %v5734
        %v6458 = vpop.f32.mrf.mxu0
        %v6459 = vadd.f32 %v6354, %v6458
        %v6460 = vpop.f32.mrf.mxu0
        %6461 = vdwg.mxu0
        %6462 = vmatprep.subr.mxu0 0.0
        %6463 = vmatpush1.msra.mxu0 %v6035
        %6464 = vmatprep.subr.mxu0 0.0
        %6465 = vmatpush1.msra.mxu0 %v6034
        %6466 = vmatprep.subr.mxu0 0.0
        %6467 = vmatpush1.msra.mxu0 %v6033
        %6468 = vmatprep.subr.mxu0 0.0
        %6469 = vmatpush1.msra.mxu0 %v6032
        %6470 = vmatprep.subr.mxu0 0.0
        %6471 = vmatpush1.msra.mxu0 %v6031
        %6472 = vmatprep.subr.mxu0 0.0
        %6473 = vmatpush1.msra.mxu0 %v6030
        %6474 = vmatprep.subr.mxu0 0.0
        %6475 = vmatpush1.msra.mxu0 %v6029
        %6476 = vmatprep.subr.mxu0 0.0
        %6477 = vmatpush1.msra.mxu0 %v6028
        %6478 = vmatprep.subr.mxu0 0.0
        %6479 = vmatpush1.msra.mxu0 %v6027
        %6480 = vmatprep.subr.mxu0 0.0
        %6481 = vmatpush1.msra.mxu0 %v6026
        %6482 = vmatprep.subr.mxu0 0.0
        %6483 = vmatpush1.msra.mxu0 %v6025
        %6484 = vmatprep.subr.mxu0 0.0
        %6485 = vmatpush1.msra.mxu0 %v6024
        %6486 = vmatprep.subr.mxu0 0.0
        %6487 = vmatpush1.msra.mxu0 %v6023
        %6488 = vmatprep.subr.mxu0 0.0
        %6489 = vmatpush1.msra.mxu0 %v6022
        %6490 = vmatprep.subr.mxu0 0.0
        %6491 = vmatpush1.msra.mxu0 %v6021
        %6492 = vmatprep.subr.mxu0 0.0
        %6493 = vmatpush1.msra.mxu0 %v6020
        %6494 = vmatprep.subr.mxu0 0.0
        %6495 = vmatpush2.msra.mxu0 %v6051
        %6496 = vmatprep.subr.mxu0 0.0
        %6497 = vmatpush2.msra.mxu0 %v6050
        %6498 = vmatprep.subr.mxu0 0.0
        %6499 = vmatpush2.msra.mxu0 %v6049
        %6500 = vmatprep.subr.mxu0 0.0
        %6501 = vmatpush2.msra.mxu0 %v6048
        %6502 = vmatprep.subr.mxu0 0.0
        %6503 = vmatpush2.msra.mxu0 %v6047
        %6504 = vmatprep.subr.mxu0 0.0
        %6505 = vmatpush2.msra.mxu0 %v6046
        %6506 = vmatprep.subr.mxu0 0.0
        %6507 = vmatpush2.msra.mxu0 %v6045
        %6508 = vmatprep.subr.mxu0 0.0
        %6509 = vmatpush2.msra.mxu0 %v6044
        %6510 = vmatprep.subr.mxu0 0.0
        %6511 = vmatpush2.msra.mxu0 %v6043
        %6512 = vmatprep.subr.mxu0 0.0
        %6513 = vmatpush2.msra.mxu0 %v6042
        %6514 = vmatprep.subr.mxu0 0.0
        %6515 = vmatpush2.msra.mxu0 %v6041
        %6516 = vmatprep.subr.mxu0 0.0
        %6517 = vmatpush2.msra.mxu0 %v6040
        %6518 = vmatprep.subr.mxu0 0.0
        %6519 = vmatpush2.msra.mxu0 %v6039
        %6520 = vmatprep.subr.mxu0 0.0
        %6521 = vmatpush2.msra.mxu0 %v6038
        %6522 = vmatprep.subr.mxu0 0.0
        %6523 = vmatpush2.msra.mxu0 %v6037
        %6524 = vmatprep.subr.mxu0 0.0
        %6525 = vmatpush2.msra.mxu0 %v6036
        %6526 = vmatprep.mubr.f32.mxu0 %v5713
        %6527 = vmatmul.mubr.f32.gmra.mxu0 %v5705
        %v6528 = vpop.f32.mrf.mxu0
        %v6529 = vadd.f32 %v6424, %v6528
        %v6530 = vpop.f32.mrf.mxu0
        %6531 = vmatprep.mubr.f32.mxu0 %v5714
        %6532 = vmatmul.mubr.f32.gmra.mxu0 %v5706
        %v6533 = vpop.f32.mrf.mxu0
        %v6534 = vadd.f32 %v6429, %v6533
        %v6535 = vpop.f32.mrf.mxu0
        %6536 = vmatprep.mubr.f32.mxu0 %v5715
        %6537 = vmatmul.mubr.f32.gmra.mxu0 %v5707
        %v6538 = vpop.f32.mrf.mxu0
        %v6539 = vadd.f32 %v6434, %v6538
        %v6540 = vpop.f32.mrf.mxu0
        %6541 = vmatprep.mubr.f32.mxu0 %v5716
        %6542 = vmatmul.mubr.f32.gmra.mxu0 %v5708
        %v6543 = vpop.f32.mrf.mxu0
        %v6544 = vadd.f32 %v6439, %v6543
        %v6545 = vpop.f32.mrf.mxu0
        %6546 = vmatprep.mubr.f32.mxu0 %v5717
        %6547 = vmatmul.mubr.f32.gmra.mxu0 %v5709
        %v6548 = vpop.f32.mrf.mxu0
        %v6549 = vadd.f32 %v6444, %v6548
        %v6550 = vpop.f32.mrf.mxu0
        %6551 = vmatprep.mubr.f32.mxu0 %v5718
        %6552 = vmatmul.mubr.f32.gmra.mxu0 %v5710
        %v6553 = vpop.f32.mrf.mxu0
        %v6554 = vadd.f32 %v6449, %v6553
        %v6555 = vpop.f32.mrf.mxu0
        %6556 = vmatprep.mubr.f32.mxu0 %v5739
        %6557 = vmatmul.mubr.f32.gmra.mxu0 %v5737
        %v6558 = vpop.f32.mrf.mxu0
        %v6559 = vadd.f32 %v6454, %v6558
        %v6560 = vpop.f32.mrf.mxu0
        %6561 = vmatprep.mubr.f32.mxu0 %v5740
        %6562 = vmatmul.mubr.f32.gmra.mxu0 %v5738
        %v6563 = vpop.f32.mrf.mxu0
        %v6564 = vadd.f32 %v6459, %v6563
        %v6565 = vpop.f32.mrf.mxu0
        %6566 = vdwg.mxu0
        %6567 = vmatprep.subr.mxu0 0.0
        %6568 = vmatpush1.msra.mxu0 %v6067
        %6569 = vmatprep.subr.mxu0 0.0
        %6570 = vmatpush1.msra.mxu0 %v6066
        %6571 = vmatprep.subr.mxu0 0.0
        %6572 = vmatpush1.msra.mxu0 %v6065
        %6573 = vmatprep.subr.mxu0 0.0
        %6574 = vmatpush1.msra.mxu0 %v6064
        %6575 = vmatprep.subr.mxu0 0.0
        %6576 = vmatpush1.msra.mxu0 %v6063
        %6577 = vmatprep.subr.mxu0 0.0
        %6578 = vmatpush1.msra.mxu0 %v6062
        %6579 = vmatprep.subr.mxu0 0.0
        %6580 = vmatpush1.msra.mxu0 %v6061
        %6581 = vmatprep.subr.mxu0 0.0
        %6582 = vmatpush1.msra.mxu0 %v6060
        %6583 = vmatprep.subr.mxu0 0.0
        %6584 = vmatpush1.msra.mxu0 %v6059
        %6585 = vmatprep.subr.mxu0 0.0
        %6586 = vmatpush1.msra.mxu0 %v6058
        %6587 = vmatprep.subr.mxu0 0.0
        %6588 = vmatpush1.msra.mxu0 %v6057
        %6589 = vmatprep.subr.mxu0 0.0
        %6590 = vmatpush1.msra.mxu0 %v6056
        %6591 = vmatprep.subr.mxu0 0.0
        %6592 = vmatpush1.msra.mxu0 %v6055
        %6593 = vmatprep.subr.mxu0 0.0
        %6594 = vmatpush1.msra.mxu0 %v6054
        %6595 = vmatprep.subr.mxu0 0.0
        %6596 = vmatpush1.msra.mxu0 %v6053
        %6597 = vmatprep.subr.mxu0 0.0
        %6598 = vmatpush1.msra.mxu0 %v6052
        %6599 = vmatprep.subr.mxu0 0.0
        %6600 = vmatpush2.msra.mxu0 %v6083
        %6601 = vmatprep.subr.mxu0 0.0
        %6602 = vmatpush2.msra.mxu0 %v6082
        %6603 = vmatprep.subr.mxu0 0.0
        %6604 = vmatpush2.msra.mxu0 %v6081
        %6605 = vmatprep.subr.mxu0 0.0
        %6606 = vmatpush2.msra.mxu0 %v6080
        %6607 = vmatprep.subr.mxu0 0.0
        %6608 = vmatpush2.msra.mxu0 %v6079
        %6609 = vmatprep.subr.mxu0 0.0
        %6610 = vmatpush2.msra.mxu0 %v6078
        %6611 = vmatprep.subr.mxu0 0.0
        %6612 = vmatpush2.msra.mxu0 %v6077
        %6613 = vmatprep.subr.mxu0 0.0
        %6614 = vmatpush2.msra.mxu0 %v6076
        %6615 = vmatprep.subr.mxu0 0.0
        %6616 = vmatpush2.msra.mxu0 %v6075
        %6617 = vmatprep.subr.mxu0 0.0
        %6618 = vmatpush2.msra.mxu0 %v6074
        %6619 = vmatprep.subr.mxu0 0.0
        %6620 = vmatpush2.msra.mxu0 %v6073
        %6621 = vmatprep.subr.mxu0 0.0
        %6622 = vmatpush2.msra.mxu0 %v6072
        %6623 = vmatprep.subr.mxu0 0.0
        %6624 = vmatpush2.msra.mxu0 %v6071
        %6625 = vmatprep.subr.mxu0 0.0
        %6626 = vmatpush2.msra.mxu0 %v6070
        %6627 = vmatprep.subr.mxu0 0.0
        %6628 = vmatpush2.msra.mxu0 %v6069
        %6629 = vmatprep.subr.mxu0 0.0
        %6630 = vmatpush2.msra.mxu0 %v6068
        %6631 = vmatprep.mubr.f32.mxu0 %v5729
        %6632 = vmatmul.mubr.f32.gmra.mxu0 %v5721
        %v6633 = vpop.f32.mrf.mxu0
        %v6634 = vadd.f32 %v6529, %v6633
        %v6635 = vpop.f32.mrf.mxu0
        %6636 = vmatprep.mubr.f32.mxu0 %v5730
        %6637 = vmatmul.mubr.f32.gmra.mxu0 %v5722
        %v6638 = vpop.f32.mrf.mxu0
        %v6639 = vadd.f32 %v6534, %v6638
        %v6640 = vpop.f32.mrf.mxu0
        %6641 = vmatprep.mubr.f32.mxu0 %v5731
        %6642 = vmatmul.mubr.f32.gmra.mxu0 %v5723
        %v6643 = vpop.f32.mrf.mxu0
        %v6644 = vadd.f32 %v6539, %v6643
        %v6645 = vpop.f32.mrf.mxu0
        %6646 = vmatprep.mubr.f32.mxu0 %v5732
        %6647 = vmatmul.mubr.f32.gmra.mxu0 %v5724
        %v6648 = vpop.f32.mrf.mxu0
        %v6649 = vadd.f32 %v6544, %v6648
        %v6650 = vpop.f32.mrf.mxu0
        %6651 = vmatprep.mubr.f32.mxu0 %v5733
        %6652 = vmatmul.mubr.f32.gmra.mxu0 %v5725
        %v6653 = vpop.f32.mrf.mxu0
        %v6654 = vadd.f32 %v6549, %v6653
        %v6655 = vpop.f32.mrf.mxu0
        %6656 = vmatprep.mubr.f32.mxu0 %v5734
        %6657 = vmatmul.mubr.f32.gmra.mxu0 %v5726
        %v6658 = vpop.f32.mrf.mxu0
        %v6659 = vadd.f32 %v6554, %v6658
        %v6660 = vpop.f32.mrf.mxu0
        %6661 = vmatprep.mubr.f32.mxu0 %v5918
        %6662 = vmatmul.mubr.f32.gmra.mxu0 %v5916
        %v6663 = vpop.f32.mrf.mxu0
        %v6664 = vadd.f32 %v6559, %v6663
        %v6665 = vpop.f32.mrf.mxu0
        %6666 = vmatprep.mubr.f32.mxu0 %v5919
        %6667 = vmatmul.mubr.f32.gmra.mxu0 %v5917
        %v6668 = vpop.f32.mrf.mxu0
        %v6669 = vadd.f32 %v6564, %v6668
        %v6670 = vpop.f32.mrf.mxu0
        %6671 = vdwg.mxu0
        %6672 = vmatprep.subr.mxu0 0.0
        %6673 = vmatpush1.msra.mxu0 %v6099
        %6674 = vmatprep.subr.mxu0 0.0
        %6675 = vmatpush1.msra.mxu0 %v6098
        %6676 = vmatprep.subr.mxu0 0.0
        %6677 = vmatpush1.msra.mxu0 %v6097
        %6678 = vmatprep.subr.mxu0 0.0
        %6679 = vmatpush1.msra.mxu0 %v6096
        %6680 = vmatprep.subr.mxu0 0.0
        %6681 = vmatpush1.msra.mxu0 %v6095
        %6682 = vmatprep.subr.mxu0 0.0
        %6683 = vmatpush1.msra.mxu0 %v6094
        %6684 = vmatprep.subr.mxu0 0.0
        %6685 = vmatpush1.msra.mxu0 %v6093
        %6686 = vmatprep.subr.mxu0 0.0
        %6687 = vmatpush1.msra.mxu0 %v6092
        %6688 = vmatprep.subr.mxu0 0.0
        %6689 = vmatpush1.msra.mxu0 %v6091
        %6690 = vmatprep.subr.mxu0 0.0
        %6691 = vmatpush1.msra.mxu0 %v6090
        %6692 = vmatprep.subr.mxu0 0.0
        %6693 = vmatpush1.msra.mxu0 %v6089
        %6694 = vmatprep.subr.mxu0 0.0
        %6695 = vmatpush1.msra.mxu0 %v6088
        %6696 = vmatprep.subr.mxu0 0.0
        %6697 = vmatpush1.msra.mxu0 %v6087
        %6698 = vmatprep.subr.mxu0 0.0
        %6699 = vmatpush1.msra.mxu0 %v6086
        %6700 = vmatprep.subr.mxu0 0.0
        %6701 = vmatpush1.msra.mxu0 %v6085
        %6702 = vmatprep.subr.mxu0 0.0
        %6703 = vmatpush1.msra.mxu0 %v6084
        %6704 = vmatprep.subr.mxu0 0.0
        %6705 = vmatpush2.msra.mxu0 %v6115
        %6706 = vmatprep.subr.mxu0 0.0
        %6707 = vmatpush2.msra.mxu0 %v6114
        %6708 = vmatprep.subr.mxu0 0.0
        %6709 = vmatpush2.msra.mxu0 %v6113
        %6710 = vmatprep.subr.mxu0 0.0
        %6711 = vmatpush2.msra.mxu0 %v6112
        %6712 = vmatprep.subr.mxu0 0.0
        %6713 = vmatpush2.msra.mxu0 %v6111
        %6714 = vmatprep.subr.mxu0 0.0
        %6715 = vmatpush2.msra.mxu0 %v6110
        %6716 = vmatprep.subr.mxu0 0.0
        %6717 = vmatpush2.msra.mxu0 %v6109
        %6718 = vmatprep.subr.mxu0 0.0
        %6719 = vmatpush2.msra.mxu0 %v6108
        %6720 = vmatprep.subr.mxu0 0.0
        %6721 = vmatpush2.msra.mxu0 %v6107
        %6722 = vmatprep.subr.mxu0 0.0
        %6723 = vmatpush2.msra.mxu0 %v6106
        %6724 = vmatprep.subr.mxu0 0.0
        %6725 = vmatpush2.msra.mxu0 %v6105
        %6726 = vmatprep.subr.mxu0 0.0
        %6727 = vmatpush2.msra.mxu0 %v6104
        %6728 = vmatprep.subr.mxu0 0.0
        %6729 = vmatpush2.msra.mxu0 %v6103
        %6730 = vmatprep.subr.mxu0 0.0
        %6731 = vmatpush2.msra.mxu0 %v6102
        %6732 = vmatprep.subr.mxu0 0.0
        %6733 = vmatpush2.msra.mxu0 %v6101
        %6734 = vmatprep.subr.mxu0 0.0
        %6735 = vmatpush2.msra.mxu0 %v6100
        %6736 = vmatprep.mubr.f32.mxu0 %v5707
        %6737 = vmatmul.mubr.f32.gmra.mxu0 %v5699
        %v6738 = vpop.f32.mrf.mxu0
        %v6739 = vadd.f32 %v6634, %v6738
        %v6740 = vpop.f32.mrf.mxu0
        %6741 = vmatprep.mubr.f32.mxu0 %v5708
        %6742 = vmatmul.mubr.f32.gmra.mxu0 %v5700
        %v6743 = vpop.f32.mrf.mxu0
        %v6744 = vadd.f32 %v6639, %v6743
        %v6745 = vpop.f32.mrf.mxu0
        %6746 = vmatprep.mubr.f32.mxu0 %v5709
        %6747 = vmatmul.mubr.f32.gmra.mxu0 %v5701
        %v6748 = vpop.f32.mrf.mxu0
        %v6749 = vadd.f32 %v6644, %v6748
        %v6750 = vpop.f32.mrf.mxu0
        %6751 = vmatprep.mubr.f32.mxu0 %v5710
        %6752 = vmatmul.mubr.f32.gmra.mxu0 %v5702
        %v6753 = vpop.f32.mrf.mxu0
        %v6754 = vadd.f32 %v6649, %v6753
        %v6755 = vpop.f32.mrf.mxu0
        %6756 = vmatprep.mubr.f32.mxu0 %v5737
        %6757 = vmatmul.mubr.f32.gmra.mxu0 %v5735
        %v6758 = vpop.f32.mrf.mxu0
        %v6759 = vadd.f32 %v6654, %v6758
        %v6760 = vpop.f32.mrf.mxu0
        %6761 = vmatprep.mubr.f32.mxu0 %v5738
        %6762 = vmatmul.mubr.f32.gmra.mxu0 %v5736
        %v6763 = vpop.f32.mrf.mxu0
        %v6764 = vadd.f32 %v6659, %v6763
        %v6765 = vpop.f32.mrf.mxu0
        %6766 = vmatprep.mubr.f32.mxu0 %v5922
        %6767 = vmatmul.mubr.f32.gmra.mxu0 %v5920
        %v6768 = vpop.f32.mrf.mxu0
        %v6769 = vadd.f32 %v6664, %v6768
        %v6770 = vpop.f32.mrf.mxu0
        %6771 = vmatprep.mubr.f32.mxu0 %v5923
        %6772 = vmatmul.mubr.f32.gmra.mxu0 %v5921
        %v6773 = vpop.f32.mrf.mxu0
        %v6774 = vadd.f32 %v6669, %v6773
        %v6775 = vpop.f32.mrf.mxu0
        %6776 = vdwg.mxu0
        %6777 = vmatprep.subr.mxu0 0.0
        %6778 = vmatpush1.msra.mxu0 0.0
        %6779 = vmatprep.subr.mxu0 0.0
        %6780 = vmatpush1.msra.mxu0 0.0
        %6781 = vmatprep.subr.mxu0 0.0
        %6782 = vmatpush1.msra.mxu0 0.0
        %6783 = vmatprep.subr.mxu0 0.0
        %6784 = vmatpush1.msra.mxu0 0.0
        %6785 = vmatprep.subr.mxu0 0.0
        %6786 = vmatpush1.msra.mxu0 0.0
        %6787 = vmatprep.subr.mxu0 0.0
        %6788 = vmatpush1.msra.mxu0 0.0
        %6789 = vmatprep.subr.mxu0 0.0
        %6790 = vmatpush1.msra.mxu0 0.0
        %6791 = vmatprep.subr.mxu0 0.0
        %6792 = vmatpush1.msra.mxu0 0.0
        %6793 = vmatprep.subr.mxu0 0.0
        %6794 = vmatpush1.msra.mxu0 %v6123
        %6795 = vmatprep.subr.mxu0 0.0
        %6796 = vmatpush1.msra.mxu0 %v6122
        %6797 = vmatprep.subr.mxu0 0.0
        %6798 = vmatpush1.msra.mxu0 %v6121
        %6799 = vmatprep.subr.mxu0 0.0
        %6800 = vmatpush1.msra.mxu0 %v6120
        %6801 = vmatprep.subr.mxu0 0.0
        %6802 = vmatpush1.msra.mxu0 %v6119
        %6803 = vmatprep.subr.mxu0 0.0
        %6804 = vmatpush1.msra.mxu0 %v6118
        %6805 = vmatprep.subr.mxu0 0.0
        %6806 = vmatpush1.msra.mxu0 %v6117
        %6807 = vmatprep.subr.mxu0 0.0
        %6808 = vmatpush1.msra.mxu0 %v6116
        %6809 = vmatprep.subr.mxu0 0.0
        %6810 = vmatpush2.msra.mxu0 0.0
        %6811 = vmatprep.subr.mxu0 0.0
        %6812 = vmatpush2.msra.mxu0 0.0
        %6813 = vmatprep.subr.mxu0 0.0
        %6814 = vmatpush2.msra.mxu0 0.0
        %6815 = vmatprep.subr.mxu0 0.0
        %6816 = vmatpush2.msra.mxu0 0.0
        %6817 = vmatprep.subr.mxu0 0.0
        %6818 = vmatpush2.msra.mxu0 0.0
        %6819 = vmatprep.subr.mxu0 0.0
        %6820 = vmatpush2.msra.mxu0 0.0
        %6821 = vmatprep.subr.mxu0 0.0
        %6822 = vmatpush2.msra.mxu0 0.0
        %6823 = vmatprep.subr.mxu0 0.0
        %6824 = vmatpush2.msra.mxu0 0.0
        %6825 = vmatprep.subr.mxu0 0.0
        %6826 = vmatpush2.msra.mxu0 0.0
        %6827 = vmatprep.subr.mxu0 0.0
        %6828 = vmatpush2.msra.mxu0 0.0
        %6829 = vmatprep.subr.mxu0 0.0
        %6830 = vmatpush2.msra.mxu0 0.0
        %6831 = vmatprep.subr.mxu0 0.0
        %6832 = vmatpush2.msra.mxu0 0.0
        %6833 = vmatprep.subr.mxu0 0.0
        %6834 = vmatpush2.msra.mxu0 0.0
        %6835 = vmatprep.subr.mxu0 0.0
        %6836 = vmatpush2.msra.mxu0 0.0
        %6837 = vmatprep.subr.mxu0 0.0
        %6838 = vmatpush2.msra.mxu0 0.0
        %6839 = vmatprep.subr.mxu0 0.0
        %6840 = vmatpush2.msra.mxu0 0.0
        %6841 = vmatprep.mubr.f32.mxu0 0.0
        %6842 = vmatmul.mubr.f32.gmra.mxu0 %v6131
        %v6843 = vpop.f32.mrf.mxu0
        %v6844 = vadd.f32 %v6739, %v6843
        %v6845 = vpop.f32.mrf.mxu0
        %6846 = vmatprep.mubr.f32.mxu0 0.0
        %6847 = vmatmul.mubr.f32.gmra.mxu0 %v6133
        %v6848 = vpop.f32.mrf.mxu0
        %v6849 = vadd.f32 %v6744, %v6848
        %v6850 = vpop.f32.mrf.mxu0
        %6851 = vmatprep.mubr.f32.mxu0 0.0
        %6852 = vmatmul.mubr.f32.gmra.mxu0 %v6135
        %v6853 = vpop.f32.mrf.mxu0
        %v6854 = vadd.f32 %v6749, %v6853
        %v6855 = vpop.f32.mrf.mxu0
        %6856 = vmatprep.mubr.f32.mxu0 0.0
        %6857 = vmatmul.mubr.f32.gmra.mxu0 %v6137
        %v6858 = vpop.f32.mrf.mxu0
        %v6859 = vadd.f32 %v6754, %v6858
        %v6860 = vpop.f32.mrf.mxu0
        %6861 = vmatprep.mubr.f32.mxu0 0.0
        %6862 = vmatmul.mubr.f32.gmra.mxu0 %v6139
        %v6863 = vpop.f32.mrf.mxu0
        %v6864 = vadd.f32 %v6759, %v6863
        %v6865 = vpop.f32.mrf.mxu0
        %6866 = vmatprep.mubr.f32.mxu0 0.0
        %6867 = vmatmul.mubr.f32.gmra.mxu0 %v6141
        %v6868 = vpop.f32.mrf.mxu0
        %v6869 = vadd.f32 %v6764, %v6868
        %v6870 = vpop.f32.mrf.mxu0
        %6871 = vmatprep.mubr.f32.mxu0 0.0
        %6872 = vmatmul.mubr.f32.gmra.mxu0 %v6143
        %v6873 = vpop.f32.mrf.mxu0
        %v6874 = vadd.f32 %v6769, %v6873
        %v6875 = vpop.f32.mrf.mxu0
        %6876 = vmatprep.mubr.f32.mxu0 0.0
        %6877 = vmatmul.mubr.f32.gmra.mxu0 %v6145
        %v6878 = vpop.f32.mrf.mxu0
        %v6879 = vadd.f32 %v6774, %v6878
        %v6880 = vpop.f32.mrf.mxu0
        %6881 = vdwg.mxu0
        %v6882 = vmax.f32 %v6844, 0.0
        %v6883 = vmax.f32 %v6849, 0.0
        %v6884 = vmax.f32 %v6854, 0.0
        %v6885 = vmax.f32 %v6859, 0.0
        %v6886 = vmax.f32 %v6864, 0.0
        %v6887 = vmax.f32 %v6869, 0.0
        %v6888 = vmax.f32 %v6874, 0.0
        %v6889 = vmax.f32 %v6879, 0.0
        %v6898 = vcombine.high %v6882, %v6882
        %v6900 = vunpack.c.l.s4 1983009808
        %v6901 = vunpack.c.0.s8 %v6900
        %v6902 = vlaneseq
        %v6903 = vshrl.u32 %v6902, 7
        %v6904 = vsub.s32 %v6901, %v6903
        %v6905 = vrot.slane %v6882, %v6904
        %v6907 = vunpack.c.l.s4 1983009808
        %v6908 = vunpack.c.0.s8 %v6907
        %v6909 = vlaneseq
        %v6910 = vshrl.u32 %v6909, 7
        %v6911 = vsub.s32 %v6908, %v6910
        %v6912 = vrot.slane %v6898, %v6911
        %v6913 = vcombine.high %v6905, %v6905
        %v6914 = vcombine.high %v6912, %v6912
        %v6915 = vcombine.high %v6883, %v6883
        %v6917 = vunpack.c.l.s4 1983009808
        %v6918 = vunpack.c.0.s8 %v6917
        %v6919 = vlaneseq
        %v6920 = vshrl.u32 %v6919, 7
        %v6921 = vsub.s32 %v6918, %v6920
        %v6922 = vrot.slane %v6883, %v6921
        %v6924 = vunpack.c.l.s4 1983009808
        %v6925 = vunpack.c.0.s8 %v6924
        %v6926 = vlaneseq
        %v6927 = vshrl.u32 %v6926, 7
        %v6928 = vsub.s32 %v6925, %v6927
        %v6929 = vrot.slane %v6915, %v6928
        %v6930 = vcombine.high %v6922, %v6922
        %v6931 = vcombine.high %v6929, %v6929
        %v6932 = vcombine.high %v6884, %v6884
        %v6934 = vunpack.c.l.s4 1983009808
        %v6935 = vunpack.c.0.s8 %v6934
        %v6936 = vlaneseq
        %v6937 = vshrl.u32 %v6936, 7
        %v6938 = vsub.s32 %v6935, %v6937
        %v6939 = vrot.slane %v6884, %v6938
        %v6941 = vunpack.c.l.s4 1983009808
        %v6942 = vunpack.c.0.s8 %v6941
        %v6943 = vlaneseq
        %v6944 = vshrl.u32 %v6943, 7
        %v6945 = vsub.s32 %v6942, %v6944
        %v6946 = vrot.slane %v6932, %v6945
        %v6947 = vcombine.high %v6939, %v6939
        %v6948 = vcombine.high %v6946, %v6946
        %v6949 = vcombine.high %v6885, %v6885
        %v6951 = vunpack.c.l.s4 1983009808
        %v6952 = vunpack.c.0.s8 %v6951
        %v6953 = vlaneseq
        %v6954 = vshrl.u32 %v6953, 7
        %v6955 = vsub.s32 %v6952, %v6954
        %v6956 = vrot.slane %v6885, %v6955
        %v6958 = vunpack.c.l.s4 1983009808
        %v6959 = vunpack.c.0.s8 %v6958
        %v6960 = vlaneseq
        %v6961 = vshrl.u32 %v6960, 7
        %v6962 = vsub.s32 %v6959, %v6961
        %v6963 = vrot.slane %v6949, %v6962
        %v6964 = vcombine.high %v6956, %v6956
        %v6965 = vcombine.high %v6963, %v6963
        %v6966 = vcombine.high %v6886, %v6886
        %v6968 = vunpack.c.l.s4 1983009808
        %v6969 = vunpack.c.0.s8 %v6968
        %v6970 = vlaneseq
        %v6971 = vshrl.u32 %v6970, 7
        %v6972 = vsub.s32 %v6969, %v6971
        %v6973 = vrot.slane %v6886, %v6972
        %v6975 = vunpack.c.l.s4 1983009808
        %v6976 = vunpack.c.0.s8 %v6975
        %v6977 = vlaneseq
        %v6978 = vshrl.u32 %v6977, 7
        %v6979 = vsub.s32 %v6976, %v6978
        %v6980 = vrot.slane %v6966, %v6979
        %v6981 = vcombine.high %v6973, %v6973
        %v6982 = vcombine.high %v6980, %v6980
        %v6983 = vcombine.high %v6887, %v6887
        %v6985 = vunpack.c.l.s4 1983009808
        %v6986 = vunpack.c.0.s8 %v6985
        %v6987 = vlaneseq
        %v6988 = vshrl.u32 %v6987, 7
        %v6989 = vsub.s32 %v6986, %v6988
        %v6990 = vrot.slane %v6887, %v6989
        %v6992 = vunpack.c.l.s4 1983009808
        %v6993 = vunpack.c.0.s8 %v6992
        %v6994 = vlaneseq
        %v6995 = vshrl.u32 %v6994, 7
        %v6996 = vsub.s32 %v6993, %v6995
        %v6997 = vrot.slane %v6983, %v6996
        %v6998 = vcombine.high %v6990, %v6990
        %v6999 = vcombine.high %v6997, %v6997
        %v7000 = vcombine.high %v6888, %v6888
        %v7002 = vunpack.c.l.s4 1983009808
        %v7003 = vunpack.c.0.s8 %v7002
        %v7004 = vlaneseq
        %v7005 = vshrl.u32 %v7004, 7
        %v7006 = vsub.s32 %v7003, %v7005
        %v7007 = vrot.slane %v6888, %v7006
        %v7009 = vunpack.c.l.s4 1983009808
        %v7010 = vunpack.c.0.s8 %v7009
        %v7011 = vlaneseq
        %v7012 = vshrl.u32 %v7011, 7
        %v7013 = vsub.s32 %v7010, %v7012
        %v7014 = vrot.slane %v7000, %v7013
        %v7015 = vcombine.high %v7007, %v7007
        %v7016 = vcombine.high %v7014, %v7014
        %v7017 = vcombine.high %v6889, %v6889
        %v7019 = vunpack.c.l.s4 1983009808
        %v7020 = vunpack.c.0.s8 %v7019
        %v7021 = vlaneseq
        %v7022 = vshrl.u32 %v7021, 7
        %v7023 = vsub.s32 %v7020, %v7022
        %v7024 = vrot.slane %v6889, %v7023
        %v7026 = vunpack.c.l.s4 1983009808
        %v7027 = vunpack.c.0.s8 %v7026
        %v7028 = vlaneseq
        %v7029 = vshrl.u32 %v7028, 7
        %v7030 = vsub.s32 %v7027, %v7029
        %v7031 = vrot.slane %v7017, %v7030
        %v7032 = vcombine.high %v7024, %v7024
        %v7033 = vcombine.high %v7031, %v7031
        %v7066 = vrot.slane %v6905, 7
        %v7067 = vrot.slane %v7066, 2
        %v7068 = vrot.slane %v6913, 7
        %v7069 = vrot.slane %v7068, 2
        %v7070 = vrot.slane %v6912, 7
        %v7071 = vrot.slane %v7070, 2
        %v7072 = vrot.slane %v6914, 7
        %v7073 = vrot.slane %v7072, 2
        %v7074 = vrot.slane %v6922, 7
        %v7075 = vrot.slane %v7074, 2
        %v7076 = vrot.slane %v6930, 7
        %v7077 = vrot.slane %v7076, 2
        %v7078 = vrot.slane %v6929, 7
        %v7079 = vrot.slane %v7078, 2
        %v7080 = vrot.slane %v6931, 7
        %v7081 = vrot.slane %v7080, 2
        %v7082 = vrot.slane %v6939, 7
        %v7083 = vrot.slane %v7082, 2
        %v7084 = vrot.slane %v6947, 7
        %v7085 = vrot.slane %v7084, 2
        %v7086 = vrot.slane %v6946, 7
        %v7087 = vrot.slane %v7086, 2
        %v7088 = vrot.slane %v6948, 7
        %v7089 = vrot.slane %v7088, 2
        %v7090 = vrot.slane %v6956, 7
        %v7091 = vrot.slane %v7090, 2
        %v7092 = vrot.slane %v6964, 7
        %v7093 = vrot.slane %v7092, 2
        %v7094 = vrot.slane %v6963, 7
        %v7095 = vrot.slane %v7094, 2
        %v7096 = vrot.slane %v6965, 7
        %v7097 = vrot.slane %v7096, 2
        %v7098 = vrot.slane %v6973, 7
        %v7099 = vrot.slane %v7098, 2
        %v7100 = vrot.slane %v6981, 7
        %v7101 = vrot.slane %v7100, 2
        %v7102 = vrot.slane %v6980, 7
        %v7103 = vrot.slane %v7102, 2
        %v7104 = vrot.slane %v6982, 7
        %v7105 = vrot.slane %v7104, 2
        %v7106 = vrot.slane %v6990, 7
        %v7107 = vrot.slane %v7106, 2
        %v7108 = vrot.slane %v6998, 7
        %v7109 = vrot.slane %v7108, 2
        %v7110 = vrot.slane %v6997, 7
        %v7111 = vrot.slane %v7110, 2
        %v7112 = vrot.slane %v6999, 7
        %v7113 = vrot.slane %v7112, 2
        %v7114 = vrot.slane %v7007, 7
        %v7115 = vrot.slane %v7114, 2
        %v7116 = vrot.slane %v7015, 7
        %v7117 = vrot.slane %v7116, 2
        %v7118 = vrot.slane %v7014, 7
        %v7119 = vrot.slane %v7118, 2
        %v7120 = vrot.slane %v7016, 7
        %v7121 = vrot.slane %v7120, 2
        %v7122 = vrot.slane %v7024, 7
        %v7123 = vrot.slane %v7122, 2
        %v7124 = vrot.slane %v7032, 7
        %v7125 = vrot.slane %v7124, 2
        %v7126 = vrot.slane %v7031, 7
        %v7127 = vrot.slane %v7126, 2
        %v7128 = vrot.slane %v7033, 7
        %v7129 = vrot.slane %v7128, 2
        %v7162 = vmax.f32 %v6905, %v7067
        %v7163 = vmax.f32 %v6913, %v7069
        %v7164 = vmax.f32 %v6912, %v7071
        %v7165 = vmax.f32 %v6914, %v7073
        %v7166 = vmax.f32 %v6922, %v7075
        %v7167 = vmax.f32 %v6930, %v7077
        %v7168 = vmax.f32 %v6929, %v7079
        %v7169 = vmax.f32 %v6931, %v7081
        %v7170 = vmax.f32 %v6939, %v7083
        %v7171 = vmax.f32 %v6947, %v7085
        %v7172 = vmax.f32 %v6946, %v7087
        %v7173 = vmax.f32 %v6948, %v7089
        %v7174 = vmax.f32 %v6956, %v7091
        %v7175 = vmax.f32 %v6964, %v7093
        %v7176 = vmax.f32 %v6963, %v7095
        %v7177 = vmax.f32 %v6965, %v7097
        %v7178 = vmax.f32 %v6973, %v7099
        %v7179 = vmax.f32 %v6981, %v7101
        %v7180 = vmax.f32 %v6980, %v7103
        %v7181 = vmax.f32 %v6982, %v7105
        %v7182 = vmax.f32 %v6990, %v7107
        %v7183 = vmax.f32 %v6998, %v7109
        %v7184 = vmax.f32 %v6997, %v7111
        %v7185 = vmax.f32 %v6999, %v7113
        %v7186 = vmax.f32 %v7007, %v7115
        %v7187 = vmax.f32 %v7015, %v7117
        %v7188 = vmax.f32 %v7014, %v7119
        %v7189 = vmax.f32 %v7016, %v7121
        %v7190 = vmax.f32 %v7024, %v7123
        %v7191 = vmax.f32 %v7032, %v7125
        %v7192 = vmax.f32 %v7031, %v7127
        %v7193 = vmax.f32 %v7033, %v7129
        %v7194 = vmax.f32 %v7162, %v7166
        %v7195 = vmax.f32 %v7163, %v7167
        %v7196 = vmax.f32 %v7164, %v7168
        %v7197 = vmax.f32 %v7165, %v7169
        %v7198 = vmax.f32 %v7170, %v7174
        %v7199 = vmax.f32 %v7171, %v7175
        %v7200 = vmax.f32 %v7172, %v7176
        %v7201 = vmax.f32 %v7173, %v7177
        %v7202 = vmax.f32 %v7178, %v7182
        %v7203 = vmax.f32 %v7179, %v7183
        %v7204 = vmax.f32 %v7180, %v7184
        %v7205 = vmax.f32 %v7181, %v7185
        %v7206 = vmax.f32 %v7186, %v7190
        %v7207 = vmax.f32 %v7187, %v7191
        %v7208 = vmax.f32 %v7188, %v7192
        %v7209 = vmax.f32 %v7189, %v7193
        %v7214 = vlaneseq
        %v7215 = vshrl.u32 %v7214, 7
        %v7216 = vsub.s32 0, %v7215
        %v7217 = vrot.slane %v7194, %v7216
        %v7218 = vlaneseq
        %v7219 = vshrl.u32 %v7218, 7
        %v7220 = vsub.s32 0, %v7219
        %v7221 = vrot.slane %v7195, %v7220
        %v7222 = vlaneseq
        %v7223 = vshrl.u32 %v7222, 7
        %v7224 = vsub.s32 0, %v7223
        %v7225 = vrot.slane %v7198, %v7224
        %v7226 = vlaneseq
        %v7227 = vshrl.u32 %v7226, 7
        %v7228 = vsub.s32 0, %v7227
        %v7229 = vrot.slane %v7199, %v7228
        %v7230 = vsel %vm4826, %v7221, %v7217
        %v7231 = vsel %vm4828, %v7225, %v7230
        %v7232 = vsel %vm4830, %v7229, %v7231
        %v7236 = vlaneseq
        %v7237 = vshrl.u32 %v7236, 7
        %v7238 = vsub.s32 0, %v7237
        %v7239 = vrot.slane %v7196, %v7238
        %v7240 = vlaneseq
        %v7241 = vshrl.u32 %v7240, 7
        %v7242 = vsub.s32 0, %v7241
        %v7243 = vrot.slane %v7200, %v7242
        %v7244 = vsel %vm4826, %v7239, %v7221
        %v7245 = vsel %vm4828, %v7229, %v7244
        %v7246 = vsel %vm4830, %v7243, %v7245
        %v7250 = vlaneseq
        %v7251 = vshrl.u32 %v7250, 7
        %v7252 = vsub.s32 0, %v7251
        %v7253 = vrot.slane %v7197, %v7252
        %v7254 = vlaneseq
        %v7255 = vshrl.u32 %v7254, 7
        %v7256 = vsub.s32 0, %v7255
        %v7257 = vrot.slane %v7201, %v7256
        %v7258 = vsel %vm4826, %v7253, %v7239
        %v7259 = vsel %vm4828, %v7243, %v7258
        %v7260 = vsel %vm4830, %v7257, %v7259
        %v7264 = vlaneseq
        %v7265 = vshrl.u32 %v7264, 7
        %v7266 = vsub.s32 0, %v7265
        %v7267 = vrot.slane %v7202, %v7266
        %v7268 = vlaneseq
        %v7269 = vshrl.u32 %v7268, 7
        %v7270 = vsub.s32 0, %v7269
        %v7271 = vrot.slane %v7203, %v7270
        %v7272 = vsel %vm4826, %v7229, %v7225
        %v7273 = vsel %vm4828, %v7267, %v7272
        %v7274 = vsel %vm4830, %v7271, %v7273
        %v7277 = vlaneseq
        %v7278 = vshrl.u32 %v7277, 7
        %v7279 = vsub.s32 0, %v7278
        %v7280 = vrot.slane %v7204, %v7279
        %v7281 = vsel %vm4826, %v7243, %v7229
        %v7282 = vsel %vm4828, %v7271, %v7281
        %v7283 = vsel %vm4830, %v7280, %v7282
        %v7286 = vlaneseq
        %v7287 = vshrl.u32 %v7286, 7
        %v7288 = vsub.s32 0, %v7287
        %v7289 = vrot.slane %v7205, %v7288
        %v7290 = vsel %vm4826, %v7257, %v7243
        %v7291 = vsel %vm4828, %v7280, %v7290
        %v7292 = vsel %vm4830, %v7289, %v7291
        %v7296 = vlaneseq
        %v7297 = vshrl.u32 %v7296, 7
        %v7298 = vsub.s32 0, %v7297
        %v7299 = vrot.slane %v7206, %v7298
        %v7300 = vlaneseq
        %v7301 = vshrl.u32 %v7300, 7
        %v7302 = vsub.s32 0, %v7301
        %v7303 = vrot.slane %v7207, %v7302
        %v7304 = vsel %vm4826, %v7271, %v7267
        %v7305 = vsel %vm4828, %v7299, %v7304
        %v7306 = vsel %vm4830, %v7303, %v7305
        %v7309 = vlaneseq
        %v7310 = vshrl.u32 %v7309, 7
        %v7311 = vsub.s32 0, %v7310
        %v7312 = vrot.slane %v7208, %v7311
        %v7313 = vsel %vm4826, %v7280, %v7271
        %v7314 = vsel %vm4828, %v7303, %v7313
        %v7315 = vsel %vm4830, %v7312, %v7314
        %v7318 = vlaneseq
        %v7319 = vshrl.u32 %v7318, 7
        %v7320 = vsub.s32 0, %v7319
        %v7321 = vrot.slane %v7209, %v7320
        %v7322 = vsel %vm4826, %v7289, %v7280
        %v7323 = vsel %vm4828, %v7312, %v7322
        %v7324 = vsel %vm4830, %v7321, %v7323
        %v7326 = vld [vmem:[#allocation8] sm:$0xff]
        %v7327 = vld [vmem:[#allocation8 + $0x8] sm:$0xff]
        %v7328 = vld [vmem:[#allocation8 + $0x10] sm:$0xff]
        %v7329 = vld [vmem:[#allocation8 + $0x18] sm:$0xff]
        %v7330 = vld [vmem:[#allocation8 + $0x20] sm:$0xff]
        %v7331 = vld [vmem:[#allocation8 + $0x28] sm:$0xff]
        %v7332 = vld [vmem:[#allocation8 + $0x30] sm:$0xff]
        %v7333 = vld [vmem:[#allocation8 + $0x38] sm:$0xff]
        %v7334 = vld [vmem:[#allocation8 + $0x40] sm:$0xff]
        %v7335 = vld [vmem:[#allocation8 + $0x48] sm:$0xff]
        %v7336 = vld [vmem:[#allocation8 + $0x50] sm:$0xff]
        %v7337 = vld [vmem:[#allocation8 + $0x58] sm:$0xff]
        %v7338 = vld [vmem:[#allocation8 + $0x60] sm:$0xff]
        %v7339 = vld [vmem:[#allocation8 + $0x68] sm:$0xff]
        %v7340 = vld [vmem:[#allocation8 + $0x70] sm:$0xff]
        %v7341 = vld [vmem:[#allocation8 + $0x78] sm:$0xff]
        %v7342 = vld [vmem:[#allocation8 + $0x80] sm:$0xff]
        %v7343 = vld [vmem:[#allocation8 + $0x88] sm:$0xff]
        %v7344 = vld [vmem:[#allocation8 + $0x90] sm:$0xff]
        %v7345 = vld [vmem:[#allocation8 + $0x98] sm:$0xff]
        %v7346 = vld [vmem:[#allocation8 + $0xa0] sm:$0xff]
        %v7347 = vld [vmem:[#allocation8 + $0xa8] sm:$0xff]
        %v7348 = vld [vmem:[#allocation8 + $0xb0] sm:$0xff]
        %v7349 = vld [vmem:[#allocation8 + $0xb8] sm:$0xff]
        %v7350 = vld [vmem:[#allocation8 + $0xc0] sm:$0xff]
        %v7351 = vld [vmem:[#allocation8 + $0xc8] sm:$0xff]
        %v7352 = vld [vmem:[#allocation8 + $0xd0] sm:$0xff]
        %v7353 = vld [vmem:[#allocation8 + $0xd8] sm:$0xff]
        %v7354 = vld [vmem:[#allocation8 + $0xe0] sm:$0xff]
        %v7355 = vld [vmem:[#allocation8 + $0xe8] sm:$0xff]
        %v7356 = vld [vmem:[#allocation8 + $0xf0] sm:$0xff]
        %v7357 = vld [vmem:[#allocation8 + $0xf8] sm:$0xff]
        %v7358 = vld [vmem:[#allocation8 + $0x100] sm:$0xff]
        %v7359 = vld [vmem:[#allocation8 + $0x108] sm:$0xff]
        %v7360 = vld [vmem:[#allocation8 + $0x110] sm:$0xff]
        %v7361 = vld [vmem:[#allocation8 + $0x118] sm:$0xff]
        %v7362 = vld [vmem:[#allocation8 + $0x120] sm:$0xff]
        %v7363 = vld [vmem:[#allocation8 + $0x128] sm:$0xff]
        %v7364 = vld [vmem:[#allocation8 + $0x130] sm:$0xff]
        %v7365 = vld [vmem:[#allocation8 + $0x138] sm:$0xff]
        %v7366 = vld [vmem:[#allocation8 + $0x140] sm:$0xff]
        %v7367 = vld [vmem:[#allocation8 + $0x148] sm:$0xff]
        %v7368 = vld [vmem:[#allocation8 + $0x150] sm:$0xff]
        %v7369 = vld [vmem:[#allocation8 + $0x158] sm:$0xff]
        %v7370 = vld [vmem:[#allocation8 + $0x160] sm:$0xff]
        %v7371 = vld [vmem:[#allocation8 + $0x168] sm:$0xff]
        %v7372 = vld [vmem:[#allocation8 + $0x170] sm:$0xff]
        %v7373 = vld [vmem:[#allocation8 + $0x178] sm:$0xff]
        %v7374 = vld [vmem:[#allocation8 + $0x180] sm:$0xff]
        %v7375 = vld [vmem:[#allocation8 + $0x188] sm:$0xff]
        %v7376 = vld [vmem:[#allocation8 + $0x190] sm:$0xff]
        %v7377 = vld [vmem:[#allocation8 + $0x198] sm:$0xff]
        %v7378 = vld [vmem:[#allocation8 + $0x1a0] sm:$0xff]
        %v7379 = vld [vmem:[#allocation8 + $0x1a8] sm:$0xff]
        %v7380 = vld [vmem:[#allocation8 + $0x1b0] sm:$0xff]
        %v7381 = vld [vmem:[#allocation8 + $0x1b8] sm:$0xff]
        %v7382 = vld [vmem:[#allocation8 + $0x1c0] sm:$0xff]
        %v7383 = vld [vmem:[#allocation8 + $0x1c8] sm:$0xff]
        %v7384 = vld [vmem:[#allocation8 + $0x1d0] sm:$0xff]
        %v7385 = vld [vmem:[#allocation8 + $0x1d8] sm:$0xff]
        %v7386 = vld [vmem:[#allocation8 + $0x1e0] sm:$0xff]
        %v7387 = vld [vmem:[#allocation8 + $0x1e8] sm:$0xff]
        %v7388 = vld [vmem:[#allocation8 + $0x1f0] sm:$0xff]
        %v7389 = vld [vmem:[#allocation8 + $0x1f8] sm:$0xff]
        %v7390 = vld [vmem:[#allocation8 + $0x200] sm:$0xff]
        %v7391 = vld [vmem:[#allocation8 + $0x208] sm:$0xff]
        %v7392 = vld [vmem:[#allocation8 + $0x210] sm:$0xff]
        %v7393 = vld [vmem:[#allocation8 + $0x218] sm:$0xff]
        %v7394 = vld [vmem:[#allocation8 + $0x220] sm:$0xff]
        %v7395 = vld [vmem:[#allocation8 + $0x228] sm:$0xff]
        %v7396 = vld [vmem:[#allocation8 + $0x230] sm:$0xff]
        %v7397 = vld [vmem:[#allocation8 + $0x238] sm:$0xff]
        %v7398 = vld [vmem:[#allocation8 + $0x240] sm:$0xff]
        %v7399 = vld [vmem:[#allocation8 + $0x248] sm:$0xff]
        %v7400 = vld [vmem:[#allocation8 + $0x250] sm:$0xff]
        %v7401 = vld [vmem:[#allocation8 + $0x258] sm:$0xff]
        %v7402 = vld [vmem:[#allocation8 + $0x260] sm:$0xff]
        %v7403 = vld [vmem:[#allocation8 + $0x268] sm:$0xff]
        %v7404 = vld [vmem:[#allocation8 + $0x270] sm:$0xff]
        %v7405 = vld [vmem:[#allocation8 + $0x278] sm:$0xff]
        %v7406 = vld [vmem:[#allocation8 + $0x280] sm:$0xff]
        %v7407 = vld [vmem:[#allocation8 + $0x288] sm:$0xff]
        %v7408 = vld [vmem:[#allocation8 + $0x290] sm:$0xff]
        %v7409 = vld [vmem:[#allocation8 + $0x298] sm:$0xff]
        %v7410 = vld [vmem:[#allocation8 + $0x2a0] sm:$0xff]
        %v7411 = vld [vmem:[#allocation8 + $0x2a8] sm:$0xff]
        %v7412 = vld [vmem:[#allocation8 + $0x2b0] sm:$0xff]
        %v7413 = vld [vmem:[#allocation8 + $0x2b8] sm:$0xff]
        %v7414 = vld [vmem:[#allocation8 + $0x2c0] sm:$0xff]
        %v7415 = vld [vmem:[#allocation8 + $0x2c8] sm:$0xff]
        %v7416 = vld [vmem:[#allocation8 + $0x2d0] sm:$0xff]
        %v7417 = vld [vmem:[#allocation8 + $0x2d8] sm:$0xff]
        %v7418 = vld [vmem:[#allocation8 + $0x2e0] sm:$0xff]
        %v7419 = vld [vmem:[#allocation8 + $0x2e8] sm:$0xff]
        %v7420 = vld [vmem:[#allocation8 + $0x2f0] sm:$0xff]
        %v7421 = vld [vmem:[#allocation8 + $0x2f8] sm:$0xff]
        %v7422 = vld [vmem:[#allocation8 + $0x300] sm:$0xff]
        %v7423 = vld [vmem:[#allocation8 + $0x308] sm:$0xff]
        %v7424 = vld [vmem:[#allocation8 + $0x310] sm:$0xff]
        %v7425 = vld [vmem:[#allocation8 + $0x318] sm:$0xff]
        %v7426 = vld [vmem:[#allocation8 + $0x320] sm:$0xff]
        %v7427 = vld [vmem:[#allocation8 + $0x328] sm:$0xff]
        %v7428 = vld [vmem:[#allocation8 + $0x330] sm:$0xff]
        %v7429 = vld [vmem:[#allocation8 + $0x338] sm:$0xff]
        %v7430 = vld [vmem:[#allocation8 + $0x340] sm:$0xff]
        %v7431 = vld [vmem:[#allocation8 + $0x348] sm:$0xff]
        %v7432 = vld [vmem:[#allocation8 + $0x350] sm:$0xff]
        %v7433 = vld [vmem:[#allocation8 + $0x358] sm:$0xff]
        %v7434 = vld [vmem:[#allocation8 + $0x360] sm:$0xff]
        %v7435 = vld [vmem:[#allocation8 + $0x368] sm:$0xff]
        %v7436 = vld [vmem:[#allocation8 + $0x370] sm:$0xff]
        %v7437 = vld [vmem:[#allocation8 + $0x378] sm:$0xff]
        %v7438 = vld [vmem:[#allocation8 + $0x380] sm:$0xff]
        %v7439 = vld [vmem:[#allocation8 + $0x388] sm:$0xff]
        %v7440 = vld [vmem:[#allocation8 + $0x390] sm:$0xff]
        %v7441 = vld [vmem:[#allocation8 + $0x398] sm:$0xff]
        %v7442 = vld [vmem:[#allocation8 + $0x3a0] sm:$0xff]
        %v7443 = vld [vmem:[#allocation8 + $0x3a8] sm:$0xff]
        %v7444 = vld [vmem:[#allocation8 + $0x3b0] sm:$0xff]
        %v7445 = vld [vmem:[#allocation8 + $0x3b8] sm:$0xff]
        %v7446 = vld [vmem:[#allocation8 + $0x3c0] sm:$0xff]
        %v7447 = vld [vmem:[#allocation8 + $0x3c8] sm:$0xff]
        %v7448 = vld [vmem:[#allocation8 + $0x3d0] sm:$0xff]
        %v7449 = vld [vmem:[#allocation8 + $0x3d8] sm:$0xff]
        %v7450 = vld [vmem:[#allocation8 + $0x3e0] sm:$0xff]
        %v7451 = vld [vmem:[#allocation8 + $0x3e8] sm:$0xff]
        %v7452 = vld [vmem:[#allocation8 + $0x3f0] sm:$0xff]
        %v7453 = vld [vmem:[#allocation8 + $0x3f8] sm:$0xff]
        %v7454 = vld [vmem:[#allocation8 + $0x400] sm:$0xff]
        %v7455 = vld [vmem:[#allocation8 + $0x408] sm:$0xff]
        %v7456 = vld [vmem:[#allocation8 + $0x410] sm:$0xff]
        %v7457 = vld [vmem:[#allocation8 + $0x418] sm:$0xff]
        %v7458 = vld [vmem:[#allocation8 + $0x420] sm:$0xff]
        %v7459 = vld [vmem:[#allocation8 + $0x428] sm:$0xff]
        %v7460 = vld [vmem:[#allocation8 + $0x430] sm:$0xff]
        %v7461 = vld [vmem:[#allocation8 + $0x438] sm:$0xff]
        %v7462 = vld [vmem:[#allocation8 + $0x440] sm:$0xff]
        %v7463 = vld [vmem:[#allocation8 + $0x448] sm:$0xff]
        %v7464 = vld [vmem:[#allocation8 + $0x450] sm:$0xff]
        %v7465 = vld [vmem:[#allocation8 + $0x458] sm:$0xff]
        %v7466 = vld [vmem:[#allocation8 + $0x460] sm:$0xff]
        %v7467 = vld [vmem:[#allocation8 + $0x468] sm:$0xff]
        %v7468 = vld [vmem:[#allocation8 + $0x470] sm:$0xff]
        %v7469 = vld [vmem:[#allocation8 + $0x478] sm:$0xff]
        %v7470 = vld [vmem:[#allocation8 + $0x480] sm:$0xff]
        %v7471 = vld [vmem:[#allocation8 + $0x488] sm:$0xff]
        %v7472 = vld [vmem:[#allocation8 + $0x490] sm:$0xff]
        %v7473 = vld [vmem:[#allocation8 + $0x498] sm:$0xff]
        %v7474 = vld [vmem:[#allocation8 + $0x4a0] sm:$0xff]
        %v7475 = vld [vmem:[#allocation8 + $0x4a8] sm:$0xff]
        %v7476 = vld [vmem:[#allocation8 + $0x4b0] sm:$0xff]
        %v7477 = vld [vmem:[#allocation8 + $0x4b8] sm:$0xff]
        %v7478 = vld [vmem:[#allocation8 + $0x4c0] sm:$0xff]
        %v7479 = vld [vmem:[#allocation8 + $0x4c8] sm:$0xff]
        %v7480 = vld [vmem:[#allocation8 + $0x4d0] sm:$0xff]
        %v7481 = vld [vmem:[#allocation8 + $0x4d8] sm:$0xff]
        %v7482 = vld [vmem:[#allocation8 + $0x4e0] sm:$0xff]
        %v7483 = vld [vmem:[#allocation8 + $0x4e8] sm:$0xff]
        %v7484 = vld [vmem:[#allocation8 + $0x4f0] sm:$0xff]
        %v7485 = vld [vmem:[#allocation8 + $0x4f8] sm:$0xff]
        %v7486 = vld [vmem:[#allocation8 + $0x500] sm:$0xff]
        %v7487 = vld [vmem:[#allocation8 + $0x508] sm:$0xff]
        %v7488 = vld [vmem:[#allocation8 + $0x510] sm:$0xff]
        %v7489 = vld [vmem:[#allocation8 + $0x518] sm:$0xff]
        %v7490 = vld [vmem:[#allocation8 + $0x520] sm:$0xff]
        %v7491 = vld [vmem:[#allocation8 + $0x528] sm:$0xff]
        %v7492 = vld [vmem:[#allocation8 + $0x530] sm:$0xff]
        %v7493 = vld [vmem:[#allocation8 + $0x538] sm:$0xff]
        %v7494 = vld [vmem:[#allocation8 + $0x540] sm:$0xff]
        %v7495 = vld [vmem:[#allocation8 + $0x548] sm:$0xff]
        %v7496 = vld [vmem:[#allocation8 + $0x550] sm:$0xff]
        %v7497 = vld [vmem:[#allocation8 + $0x558] sm:$0xff]
        %v7498 = vld [vmem:[#allocation8 + $0x560] sm:$0xff]
        %v7499 = vld [vmem:[#allocation8 + $0x568] sm:$0xff]
        %v7500 = vld [vmem:[#allocation8 + $0x570] sm:$0xff]
        %v7501 = vld [vmem:[#allocation8 + $0x578] sm:$0xff]
        %v7502 = vld [vmem:[#allocation8 + $0x580] sm:$0xff]
        %v7503 = vld [vmem:[#allocation8 + $0x588] sm:$0xff]
        %v7504 = vld [vmem:[#allocation8 + $0x590] sm:$0xff]
        %v7505 = vld [vmem:[#allocation8 + $0x598] sm:$0xff]
        %v7506 = vld [vmem:[#allocation8 + $0x5a0] sm:$0xff]
        %v7507 = vld [vmem:[#allocation8 + $0x5a8] sm:$0xff]
        %v7508 = vld [vmem:[#allocation8 + $0x5b0] sm:$0xff]
        %v7509 = vld [vmem:[#allocation8 + $0x5b8] sm:$0xff]
        %v7510 = vld [vmem:[#allocation8 + $0x5c0] sm:$0xff]
        %v7511 = vld [vmem:[#allocation8 + $0x5c8] sm:$0xff]
        %v7512 = vld [vmem:[#allocation8 + $0x5d0] sm:$0xff]
        %v7513 = vld [vmem:[#allocation8 + $0x5d8] sm:$0xff]
        %v7514 = vld [vmem:[#allocation8 + $0x5e0] sm:$0xff]
        %v7515 = vld [vmem:[#allocation8 + $0x5e8] sm:$0xff]
        %v7516 = vld [vmem:[#allocation8 + $0x5f0] sm:$0xff]
        %v7517 = vld [vmem:[#allocation8 + $0x5f8] sm:$0xff]
        %v7518 = vld [vmem:[#allocation8 + $0x600] sm:$0xff]
        %v7519 = vld [vmem:[#allocation8 + $0x608] sm:$0xff]
        %v7520 = vld [vmem:[#allocation8 + $0x610] sm:$0xff]
        %v7521 = vld [vmem:[#allocation8 + $0x618] sm:$0xff]
        %v7522 = vld [vmem:[#allocation8 + $0x620] sm:$0xff]
        %v7523 = vld [vmem:[#allocation8 + $0x628] sm:$0xff]
        %v7524 = vld [vmem:[#allocation8 + $0x630] sm:$0xff]
        %v7525 = vld [vmem:[#allocation8 + $0x638] sm:$0xff]
        %v7526 = vld [vmem:[#allocation8 + $0x640] sm:$0xff]
        %v7527 = vld [vmem:[#allocation8 + $0x648] sm:$0xff]
        %v7528 = vld [vmem:[#allocation8 + $0x650] sm:$0xff]
        %v7529 = vld [vmem:[#allocation8 + $0x658] sm:$0xff]
        %v7530 = vld [vmem:[#allocation8 + $0x660] sm:$0xff]
        %v7531 = vld [vmem:[#allocation8 + $0x668] sm:$0xff]
        %v7532 = vld [vmem:[#allocation8 + $0x670] sm:$0xff]
        %v7533 = vld [vmem:[#allocation8 + $0x678] sm:$0xff]
        %v7534 = vld [vmem:[#allocation8 + $0x680] sm:$0xff]
        %v7535 = vld [vmem:[#allocation8 + $0x688] sm:$0xff]
        %v7536 = vld [vmem:[#allocation8 + $0x690] sm:$0xff]
        %v7537 = vld [vmem:[#allocation8 + $0x698] sm:$0xff]
        %v7538 = vld [vmem:[#allocation8 + $0x6a0] sm:$0xff]
        %v7539 = vld [vmem:[#allocation8 + $0x6a8] sm:$0xff]
        %v7540 = vld [vmem:[#allocation8 + $0x6b0] sm:$0xff]
        %v7541 = vld [vmem:[#allocation8 + $0x6b8] sm:$0xff]
        %v7542 = vld [vmem:[#allocation8 + $0x6c0] sm:$0xff]
        %v7543 = vld [vmem:[#allocation8 + $0x6c8] sm:$0xff]
        %v7544 = vld [vmem:[#allocation8 + $0x6d0] sm:$0xff]
        %v7545 = vld [vmem:[#allocation8 + $0x6d8] sm:$0xff]
        %v7546 = vld [vmem:[#allocation8 + $0x6e0] sm:$0xff]
        %v7547 = vld [vmem:[#allocation8 + $0x6e8] sm:$0xff]
        %v7548 = vld [vmem:[#allocation8 + $0x6f0] sm:$0xff]
        %v7549 = vld [vmem:[#allocation8 + $0x6f8] sm:$0xff]
        %v7550 = vld [vmem:[#allocation8 + $0x700] sm:$0xff]
        %v7551 = vld [vmem:[#allocation8 + $0x708] sm:$0xff]
        %v7552 = vld [vmem:[#allocation8 + $0x710] sm:$0xff]
        %v7553 = vld [vmem:[#allocation8 + $0x718] sm:$0xff]
        %v7554 = vld [vmem:[#allocation8 + $0x720] sm:$0xff]
        %v7555 = vld [vmem:[#allocation8 + $0x728] sm:$0xff]
        %v7556 = vld [vmem:[#allocation8 + $0x730] sm:$0xff]
        %v7557 = vld [vmem:[#allocation8 + $0x738] sm:$0xff]
        %v7558 = vld [vmem:[#allocation8 + $0x740] sm:$0xff]
        %v7559 = vld [vmem:[#allocation8 + $0x748] sm:$0xff]
        %v7560 = vld [vmem:[#allocation8 + $0x750] sm:$0xff]
        %v7561 = vld [vmem:[#allocation8 + $0x758] sm:$0xff]
        %v7562 = vld [vmem:[#allocation8 + $0x760] sm:$0xff]
        %v7563 = vld [vmem:[#allocation8 + $0x768] sm:$0xff]
        %v7564 = vld [vmem:[#allocation8 + $0x770] sm:$0xff]
        %v7565 = vld [vmem:[#allocation8 + $0x778] sm:$0xff]
        %v7566 = vld [vmem:[#allocation8 + $0x780] sm:$0xff]
        %v7567 = vld [vmem:[#allocation8 + $0x788] sm:$0xff]
        %v7568 = vld [vmem:[#allocation8 + $0x790] sm:$0xff]
        %v7569 = vld [vmem:[#allocation8 + $0x798] sm:$0xff]
        %v7570 = vld [vmem:[#allocation8 + $0x7a0] sm:$0xff]
        %v7571 = vld [vmem:[#allocation8 + $0x7a8] sm:$0xff]
        %v7572 = vld [vmem:[#allocation8 + $0x7b0] sm:$0xff]
        %v7573 = vld [vmem:[#allocation8 + $0x7b8] sm:$0xff]
        %v7574 = vld [vmem:[#allocation8 + $0x7c0] sm:$0xff]
        %v7575 = vld [vmem:[#allocation8 + $0x7c8] sm:$0xff]
        %v7576 = vld [vmem:[#allocation8 + $0x7d0] sm:$0xff]
        %v7577 = vld [vmem:[#allocation8 + $0x7d8] sm:$0xff]
        %v7578 = vld [vmem:[#allocation8 + $0x7e0] sm:$0xff]
        %v7579 = vld [vmem:[#allocation8 + $0x7e8] sm:$0xff]
        %v7580 = vld [vmem:[#allocation8 + $0x7f0] sm:$0xff]
        %v7581 = vld [vmem:[#allocation8 + $0x7f8] sm:$0xff]
        %v7582 = vld [vmem:[#allocation8 + $0x800] sm:$0xff]
        %v7583 = vld [vmem:[#allocation8 + $0x808] sm:$0xff]
        %v7584 = vld [vmem:[#allocation8 + $0x810] sm:$0xff]
        %v7585 = vld [vmem:[#allocation8 + $0x818] sm:$0xff]
        %v7586 = vld [vmem:[#allocation8 + $0x820] sm:$0xff]
        %v7587 = vld [vmem:[#allocation8 + $0x828] sm:$0xff]
        %v7588 = vld [vmem:[#allocation8 + $0x830] sm:$0xff]
        %v7589 = vld [vmem:[#allocation8 + $0x838] sm:$0xff]
        %v7590 = vld [vmem:[#allocation8 + $0x840] sm:$0xff]
        %v7591 = vld [vmem:[#allocation8 + $0x848] sm:$0xff]
        %v7592 = vld [vmem:[#allocation8 + $0x850] sm:$0xff]
        %v7593 = vld [vmem:[#allocation8 + $0x858] sm:$0xff]
        %v7594 = vld [vmem:[#allocation8 + $0x860] sm:$0xff]
        %v7595 = vld [vmem:[#allocation8 + $0x868] sm:$0xff]
        %v7596 = vld [vmem:[#allocation8 + $0x870] sm:$0xff]
        %v7597 = vld [vmem:[#allocation8 + $0x878] sm:$0xff]
        %v7598 = vld [vmem:[#allocation8 + $0x880] sm:$0xff]
        %v7599 = vld [vmem:[#allocation8 + $0x888] sm:$0xff]
        %v7600 = vld [vmem:[#allocation8 + $0x890] sm:$0xff]
        %v7601 = vld [vmem:[#allocation8 + $0x898] sm:$0xff]
        %v7602 = vld [vmem:[#allocation8 + $0x8a0] sm:$0xff]
        %v7603 = vld [vmem:[#allocation8 + $0x8a8] sm:$0xff]
        %v7604 = vld [vmem:[#allocation8 + $0x8b0] sm:$0xff]
        %v7605 = vld [vmem:[#allocation8 + $0x8b8] sm:$0xff]
        %v7606 = vld [vmem:[#allocation8 + $0x8c0] sm:$0xff]
        %v7607 = vld [vmem:[#allocation8 + $0x8c8] sm:$0xff]
        %v7608 = vld [vmem:[#allocation8 + $0x8d0] sm:$0xff]
        %v7609 = vld [vmem:[#allocation8 + $0x8d8] sm:$0xff]
        %v7610 = vld [vmem:[#allocation8 + $0x8e0] sm:$0xff]
        %v7611 = vld [vmem:[#allocation8 + $0x8e8] sm:$0xff]
        %v7612 = vld [vmem:[#allocation8 + $0x8f0] sm:$0xff]
        %v7613 = vld [vmem:[#allocation8 + $0x8f8] sm:$0xff]
        %v7614 = vld [vmem:[#allocation10] sm:$0x3]
        %v7616 = vlaneseq
        %v7617 = vshrl.u32 %v7616, 7
        %v7618 = vsub.s32 0, %v7617
        %v7619 = vrot.slane %v7614, %v7618
        %v7620 = vlaneseq
        %v7621 = vshrl.u32 %v7620, 7
        %v7622 = vsub.s32 1, %v7621
        %v7623 = vrot.slane %v7614, %v7622
        %7626 = vmatprep.subr.mxu0 %v7357
        %7627 = vmatpush1.msra.mxu0 %v7356
        %7628 = vmatprep.subr.mxu0 %v7355
        %7629 = vmatpush1.msra.mxu0 %v7354
        %7630 = vmatprep.subr.mxu0 %v7353
        %7631 = vmatpush1.msra.mxu0 %v7352
        %7632 = vmatprep.subr.mxu0 %v7351
        %7633 = vmatpush1.msra.mxu0 %v7350
        %7634 = vmatprep.subr.mxu0 %v7349
        %7635 = vmatpush1.msra.mxu0 %v7348
        %7636 = vmatprep.subr.mxu0 %v7347
        %7637 = vmatpush1.msra.mxu0 %v7346
        %7638 = vmatprep.subr.mxu0 %v7345
        %7639 = vmatpush1.msra.mxu0 %v7344
        %7640 = vmatprep.subr.mxu0 %v7343
        %7641 = vmatpush1.msra.mxu0 %v7342
        %7642 = vmatprep.subr.mxu0 %v7341
        %7643 = vmatpush1.msra.mxu0 %v7340
        %7644 = vmatprep.subr.mxu0 %v7339
        %7645 = vmatpush1.msra.mxu0 %v7338
        %7646 = vmatprep.subr.mxu0 %v7337
        %7647 = vmatpush1.msra.mxu0 %v7336
        %7648 = vmatprep.subr.mxu0 %v7335
        %7649 = vmatpush1.msra.mxu0 %v7334
        %7650 = vmatprep.subr.mxu0 %v7333
        %7651 = vmatpush1.msra.mxu0 %v7332
        %7652 = vmatprep.subr.mxu0 %v7331
        %7653 = vmatpush1.msra.mxu0 %v7330
        %7654 = vmatprep.subr.mxu0 %v7329
        %7655 = vmatpush1.msra.mxu0 %v7328
        %7656 = vmatprep.subr.mxu0 %v7327
        %7657 = vmatpush1.msra.mxu0 %v7326
        %7658 = vmatprep.subr.mxu0 %v7389
        %7659 = vmatpush2.msra.mxu0 %v7388
        %7660 = vmatprep.subr.mxu0 %v7387
        %7661 = vmatpush2.msra.mxu0 %v7386
        %7662 = vmatprep.subr.mxu0 %v7385
        %7663 = vmatpush2.msra.mxu0 %v7384
        %7664 = vmatprep.subr.mxu0 %v7383
        %7665 = vmatpush2.msra.mxu0 %v7382
        %7666 = vmatprep.subr.mxu0 %v7381
        %7667 = vmatpush2.msra.mxu0 %v7380
        %7668 = vmatprep.subr.mxu0 %v7379
        %7669 = vmatpush2.msra.mxu0 %v7378
        %7670 = vmatprep.subr.mxu0 %v7377
        %7671 = vmatpush2.msra.mxu0 %v7376
        %7672 = vmatprep.subr.mxu0 %v7375
        %7673 = vmatpush2.msra.mxu0 %v7374
        %7674 = vmatprep.subr.mxu0 %v7373
        %7675 = vmatpush2.msra.mxu0 %v7372
        %7676 = vmatprep.subr.mxu0 %v7371
        %7677 = vmatpush2.msra.mxu0 %v7370
        %7678 = vmatprep.subr.mxu0 %v7369
        %7679 = vmatpush2.msra.mxu0 %v7368
        %7680 = vmatprep.subr.mxu0 %v7367
        %7681 = vmatpush2.msra.mxu0 %v7366
        %7682 = vmatprep.subr.mxu0 %v7365
        %7683 = vmatpush2.msra.mxu0 %v7364
        %7684 = vmatprep.subr.mxu0 %v7363
        %7685 = vmatpush2.msra.mxu0 %v7362
        %7686 = vmatprep.subr.mxu0 %v7361
        %7687 = vmatpush2.msra.mxu0 %v7360
        %7688 = vmatprep.subr.mxu0 %v7359
        %7689 = vmatpush2.msra.mxu0 %v7358
        %7690 = vmatprep.mubr.f32.mxu0 %v7246
        %7691 = vmatmul.mubr.f32.gmra.mxu0 %v7232
        %v7692 = vpop.f32.mrf.mxu0
        %v7693 = vadd.f32 %v7619, %v7692
        %v7694 = vpop.f32.mrf.mxu0
        %v7695 = vadd.f32 %v7623, %v7694
        %7696 = vdwg.mxu0
        %7697 = vmatprep.subr.mxu0 %v7421
        %7698 = vmatpush1.msra.mxu0 %v7420
        %7699 = vmatprep.subr.mxu0 %v7419
        %7700 = vmatpush1.msra.mxu0 %v7418
        %7701 = vmatprep.subr.mxu0 %v7417
        %7702 = vmatpush1.msra.mxu0 %v7416
        %7703 = vmatprep.subr.mxu0 %v7415
        %7704 = vmatpush1.msra.mxu0 %v7414
        %7705 = vmatprep.subr.mxu0 %v7413
        %7706 = vmatpush1.msra.mxu0 %v7412
        %7707 = vmatprep.subr.mxu0 %v7411
        %7708 = vmatpush1.msra.mxu0 %v7410
        %7709 = vmatprep.subr.mxu0 %v7409
        %7710 = vmatpush1.msra.mxu0 %v7408
        %7711 = vmatprep.subr.mxu0 %v7407
        %7712 = vmatpush1.msra.mxu0 %v7406
        %7713 = vmatprep.subr.mxu0 %v7405
        %7714 = vmatpush1.msra.mxu0 %v7404
        %7715 = vmatprep.subr.mxu0 %v7403
        %7716 = vmatpush1.msra.mxu0 %v7402
        %7717 = vmatprep.subr.mxu0 %v7401
        %7718 = vmatpush1.msra.mxu0 %v7400
        %7719 = vmatprep.subr.mxu0 %v7399
        %7720 = vmatpush1.msra.mxu0 %v7398
        %7721 = vmatprep.subr.mxu0 %v7397
        %7722 = vmatpush1.msra.mxu0 %v7396
        %7723 = vmatprep.subr.mxu0 %v7395
        %7724 = vmatpush1.msra.mxu0 %v7394
        %7725 = vmatprep.subr.mxu0 %v7393
        %7726 = vmatpush1.msra.mxu0 %v7392
        %7727 = vmatprep.subr.mxu0 %v7391
        %7728 = vmatpush1.msra.mxu0 %v7390
        %7729 = vmatprep.subr.mxu0 %v7453
        %7730 = vmatpush2.msra.mxu0 %v7452
        %7731 = vmatprep.subr.mxu0 %v7451
        %7732 = vmatpush2.msra.mxu0 %v7450
        %7733 = vmatprep.subr.mxu0 %v7449
        %7734 = vmatpush2.msra.mxu0 %v7448
        %7735 = vmatprep.subr.mxu0 %v7447
        %7736 = vmatpush2.msra.mxu0 %v7446
        %7737 = vmatprep.subr.mxu0 %v7445
        %7738 = vmatpush2.msra.mxu0 %v7444
        %7739 = vmatprep.subr.mxu0 %v7443
        %7740 = vmatpush2.msra.mxu0 %v7442
        %7741 = vmatprep.subr.mxu0 %v7441
        %7742 = vmatpush2.msra.mxu0 %v7440
        %7743 = vmatprep.subr.mxu0 %v7439
        %7744 = vmatpush2.msra.mxu0 %v7438
        %7745 = vmatprep.subr.mxu0 %v7437
        %7746 = vmatpush2.msra.mxu0 %v7436
        %7747 = vmatprep.subr.mxu0 %v7435
        %7748 = vmatpush2.msra.mxu0 %v7434
        %7749 = vmatprep.subr.mxu0 %v7433
        %7750 = vmatpush2.msra.mxu0 %v7432
        %7751 = vmatprep.subr.mxu0 %v7431
        %7752 = vmatpush2.msra.mxu0 %v7430
        %7753 = vmatprep.subr.mxu0 %v7429
        %7754 = vmatpush2.msra.mxu0 %v7428
        %7755 = vmatprep.subr.mxu0 %v7427
        %7756 = vmatpush2.msra.mxu0 %v7426
        %7757 = vmatprep.subr.mxu0 %v7425
        %7758 = vmatpush2.msra.mxu0 %v7424
        %7759 = vmatprep.subr.mxu0 %v7423
        %7760 = vmatpush2.msra.mxu0 %v7422
        %7761 = vmatprep.mubr.f32.mxu0 %v7274
        %7762 = vmatmul.mubr.f32.gmra.mxu0 %v7260
        %v7763 = vpop.f32.mrf.mxu0
        %v7764 = vadd.f32 %v7693, %v7763
        %v7765 = vpop.f32.mrf.mxu0
        %v7766 = vadd.f32 %v7695, %v7765
        %7767 = vdwg.mxu0
        %7768 = vmatprep.subr.mxu0 %v7485
        %7769 = vmatpush1.msra.mxu0 %v7484
        %7770 = vmatprep.subr.mxu0 %v7483
        %7771 = vmatpush1.msra.mxu0 %v7482
        %7772 = vmatprep.subr.mxu0 %v7481
        %7773 = vmatpush1.msra.mxu0 %v7480
        %7774 = vmatprep.subr.mxu0 %v7479
        %7775 = vmatpush1.msra.mxu0 %v7478
        %7776 = vmatprep.subr.mxu0 %v7477
        %7777 = vmatpush1.msra.mxu0 %v7476
        %7778 = vmatprep.subr.mxu0 %v7475
        %7779 = vmatpush1.msra.mxu0 %v7474
        %7780 = vmatprep.subr.mxu0 %v7473
        %7781 = vmatpush1.msra.mxu0 %v7472
        %7782 = vmatprep.subr.mxu0 %v7471
        %7783 = vmatpush1.msra.mxu0 %v7470
        %7784 = vmatprep.subr.mxu0 %v7469
        %7785 = vmatpush1.msra.mxu0 %v7468
        %7786 = vmatprep.subr.mxu0 %v7467
        %7787 = vmatpush1.msra.mxu0 %v7466
        %7788 = vmatprep.subr.mxu0 %v7465
        %7789 = vmatpush1.msra.mxu0 %v7464
        %7790 = vmatprep.subr.mxu0 %v7463
        %7791 = vmatpush1.msra.mxu0 %v7462
        %7792 = vmatprep.subr.mxu0 %v7461
        %7793 = vmatpush1.msra.mxu0 %v7460
        %7794 = vmatprep.subr.mxu0 %v7459
        %7795 = vmatpush1.msra.mxu0 %v7458
        %7796 = vmatprep.subr.mxu0 %v7457
        %7797 = vmatpush1.msra.mxu0 %v7456
        %7798 = vmatprep.subr.mxu0 %v7455
        %7799 = vmatpush1.msra.mxu0 %v7454
        %7800 = vmatprep.subr.mxu0 %v7517
        %7801 = vmatpush2.msra.mxu0 %v7516
        %7802 = vmatprep.subr.mxu0 %v7515
        %7803 = vmatpush2.msra.mxu0 %v7514
        %7804 = vmatprep.subr.mxu0 %v7513
        %7805 = vmatpush2.msra.mxu0 %v7512
        %7806 = vmatprep.subr.mxu0 %v7511
        %7807 = vmatpush2.msra.mxu0 %v7510
        %7808 = vmatprep.subr.mxu0 %v7509
        %7809 = vmatpush2.msra.mxu0 %v7508
        %7810 = vmatprep.subr.mxu0 %v7507
        %7811 = vmatpush2.msra.mxu0 %v7506
        %7812 = vmatprep.subr.mxu0 %v7505
        %7813 = vmatpush2.msra.mxu0 %v7504
        %7814 = vmatprep.subr.mxu0 %v7503
        %7815 = vmatpush2.msra.mxu0 %v7502
        %7816 = vmatprep.subr.mxu0 %v7501
        %7817 = vmatpush2.msra.mxu0 %v7500
        %7818 = vmatprep.subr.mxu0 %v7499
        %7819 = vmatpush2.msra.mxu0 %v7498
        %7820 = vmatprep.subr.mxu0 %v7497
        %7821 = vmatpush2.msra.mxu0 %v7496
        %7822 = vmatprep.subr.mxu0 %v7495
        %7823 = vmatpush2.msra.mxu0 %v7494
        %7824 = vmatprep.subr.mxu0 %v7493
        %7825 = vmatpush2.msra.mxu0 %v7492
        %7826 = vmatprep.subr.mxu0 %v7491
        %7827 = vmatpush2.msra.mxu0 %v7490
        %7828 = vmatprep.subr.mxu0 %v7489
        %7829 = vmatpush2.msra.mxu0 %v7488
        %7830 = vmatprep.subr.mxu0 %v7487
        %7831 = vmatpush2.msra.mxu0 %v7486
        %7832 = vmatprep.mubr.f32.mxu0 %v7292
        %7833 = vmatmul.mubr.f32.gmra.mxu0 %v7283
        %v7834 = vpop.f32.mrf.mxu0
        %v7835 = vadd.f32 %v7764, %v7834
        %v7836 = vpop.f32.mrf.mxu0
        %v7837 = vadd.f32 %v7766, %v7836
        %7838 = vdwg.mxu0
        %7839 = vmatprep.subr.mxu0 %v7549
        %7840 = vmatpush1.msra.mxu0 %v7548
        %7841 = vmatprep.subr.mxu0 %v7547
        %7842 = vmatpush1.msra.mxu0 %v7546
        %7843 = vmatprep.subr.mxu0 %v7545
        %7844 = vmatpush1.msra.mxu0 %v7544
        %7845 = vmatprep.subr.mxu0 %v7543
        %7846 = vmatpush1.msra.mxu0 %v7542
        %7847 = vmatprep.subr.mxu0 %v7541
        %7848 = vmatpush1.msra.mxu0 %v7540
        %7849 = vmatprep.subr.mxu0 %v7539
        %7850 = vmatpush1.msra.mxu0 %v7538
        %7851 = vmatprep.subr.mxu0 %v7537
        %7852 = vmatpush1.msra.mxu0 %v7536
        %7853 = vmatprep.subr.mxu0 %v7535
        %7854 = vmatpush1.msra.mxu0 %v7534
        %7855 = vmatprep.subr.mxu0 %v7533
        %7856 = vmatpush1.msra.mxu0 %v7532
        %7857 = vmatprep.subr.mxu0 %v7531
        %7858 = vmatpush1.msra.mxu0 %v7530
        %7859 = vmatprep.subr.mxu0 %v7529
        %7860 = vmatpush1.msra.mxu0 %v7528
        %7861 = vmatprep.subr.mxu0 %v7527
        %7862 = vmatpush1.msra.mxu0 %v7526
        %7863 = vmatprep.subr.mxu0 %v7525
        %7864 = vmatpush1.msra.mxu0 %v7524
        %7865 = vmatprep.subr.mxu0 %v7523
        %7866 = vmatpush1.msra.mxu0 %v7522
        %7867 = vmatprep.subr.mxu0 %v7521
        %7868 = vmatpush1.msra.mxu0 %v7520
        %7869 = vmatprep.subr.mxu0 %v7519
        %7870 = vmatpush1.msra.mxu0 %v7518
        %7871 = vmatprep.subr.mxu0 %v7581
        %7872 = vmatpush2.msra.mxu0 %v7580
        %7873 = vmatprep.subr.mxu0 %v7579
        %7874 = vmatpush2.msra.mxu0 %v7578
        %7875 = vmatprep.subr.mxu0 %v7577
        %7876 = vmatpush2.msra.mxu0 %v7576
        %7877 = vmatprep.subr.mxu0 %v7575
        %7878 = vmatpush2.msra.mxu0 %v7574
        %7879 = vmatprep.subr.mxu0 %v7573
        %7880 = vmatpush2.msra.mxu0 %v7572
        %7881 = vmatprep.subr.mxu0 %v7571
        %7882 = vmatpush2.msra.mxu0 %v7570
        %7883 = vmatprep.subr.mxu0 %v7569
        %7884 = vmatpush2.msra.mxu0 %v7568
        %7885 = vmatprep.subr.mxu0 %v7567
        %7886 = vmatpush2.msra.mxu0 %v7566
        %7887 = vmatprep.subr.mxu0 %v7565
        %7888 = vmatpush2.msra.mxu0 %v7564
        %7889 = vmatprep.subr.mxu0 %v7563
        %7890 = vmatpush2.msra.mxu0 %v7562
        %7891 = vmatprep.subr.mxu0 %v7561
        %7892 = vmatpush2.msra.mxu0 %v7560
        %7893 = vmatprep.subr.mxu0 %v7559
        %7894 = vmatpush2.msra.mxu0 %v7558
        %7895 = vmatprep.subr.mxu0 %v7557
        %7896 = vmatpush2.msra.mxu0 %v7556
        %7897 = vmatprep.subr.mxu0 %v7555
        %7898 = vmatpush2.msra.mxu0 %v7554
        %7899 = vmatprep.subr.mxu0 %v7553
        %7900 = vmatpush2.msra.mxu0 %v7552
        %7901 = vmatprep.subr.mxu0 %v7551
        %7902 = vmatpush2.msra.mxu0 %v7550
        %7903 = vmatprep.mubr.f32.mxu0 %v7315
        %7904 = vmatmul.mubr.f32.gmra.mxu0 %v7306
        %v7905 = vpop.f32.mrf.mxu0
        %v7906 = vadd.f32 %v7835, %v7905
        %v7907 = vpop.f32.mrf.mxu0
        %v7908 = vadd.f32 %v7837, %v7907
        %7909 = vdwg.mxu0
        %7910 = vmatprep.subr.mxu0 %v7613
        %7911 = vmatpush1.msra.mxu0 %v7612
        %7912 = vmatprep.subr.mxu0 %v7611
        %7913 = vmatpush1.msra.mxu0 %v7610
        %7914 = vmatprep.subr.mxu0 %v7609
        %7915 = vmatpush1.msra.mxu0 %v7608
        %7916 = vmatprep.subr.mxu0 %v7607
        %7917 = vmatpush1.msra.mxu0 %v7606
        %7918 = vmatprep.subr.mxu0 %v7605
        %7919 = vmatpush1.msra.mxu0 %v7604
        %7920 = vmatprep.subr.mxu0 %v7603
        %7921 = vmatpush1.msra.mxu0 %v7602
        %7922 = vmatprep.subr.mxu0 %v7601
        %7923 = vmatpush1.msra.mxu0 %v7600
        %7924 = vmatprep.subr.mxu0 %v7599
        %7925 = vmatpush1.msra.mxu0 %v7598
        %7926 = vmatprep.subr.mxu0 %v7597
        %7927 = vmatpush1.msra.mxu0 %v7596
        %7928 = vmatprep.subr.mxu0 %v7595
        %7929 = vmatpush1.msra.mxu0 %v7594
        %7930 = vmatprep.subr.mxu0 %v7593
        %7931 = vmatpush1.msra.mxu0 %v7592
        %7932 = vmatprep.subr.mxu0 %v7591
        %7933 = vmatpush1.msra.mxu0 %v7590
        %7934 = vmatprep.subr.mxu0 %v7589
        %7935 = vmatpush1.msra.mxu0 %v7588
        %7936 = vmatprep.subr.mxu0 %v7587
        %7937 = vmatpush1.msra.mxu0 %v7586
        %7938 = vmatprep.subr.mxu0 %v7585
        %7939 = vmatpush1.msra.mxu0 %v7584
        %7940 = vmatprep.subr.mxu0 %v7583
        %7941 = vmatpush1.msra.mxu0 %v7582
        %7942 = vmatprep.subr.mxu0 0.0
        %7943 = vmatpush2.msra.mxu0 0.0
        %7944 = vmatprep.subr.mxu0 0.0
        %7945 = vmatpush2.msra.mxu0 0.0
        %7946 = vmatprep.subr.mxu0 0.0
        %7947 = vmatpush2.msra.mxu0 0.0
        %7948 = vmatprep.subr.mxu0 0.0
        %7949 = vmatpush2.msra.mxu0 0.0
        %7950 = vmatprep.subr.mxu0 0.0
        %7951 = vmatpush2.msra.mxu0 0.0
        %7952 = vmatprep.subr.mxu0 0.0
        %7953 = vmatpush2.msra.mxu0 0.0
        %7954 = vmatprep.subr.mxu0 0.0
        %7955 = vmatpush2.msra.mxu0 0.0
        %7956 = vmatprep.subr.mxu0 0.0
        %7957 = vmatpush2.msra.mxu0 0.0
        %7958 = vmatprep.subr.mxu0 0.0
        %7959 = vmatpush2.msra.mxu0 0.0
        %7960 = vmatprep.subr.mxu0 0.0
        %7961 = vmatpush2.msra.mxu0 0.0
        %7962 = vmatprep.subr.mxu0 0.0
        %7963 = vmatpush2.msra.mxu0 0.0
        %7964 = vmatprep.subr.mxu0 0.0
        %7965 = vmatpush2.msra.mxu0 0.0
        %7966 = vmatprep.subr.mxu0 0.0
        %7967 = vmatpush2.msra.mxu0 0.0
        %7968 = vmatprep.subr.mxu0 0.0
        %7969 = vmatpush2.msra.mxu0 0.0
        %7970 = vmatprep.subr.mxu0 0.0
        %7971 = vmatpush2.msra.mxu0 0.0
        %7972 = vmatprep.subr.mxu0 0.0
        %7973 = vmatpush2.msra.mxu0 0.0
        %7974 = vmatprep.mubr.f32.mxu0 0.0
        %7975 = vmatmul.mubr.f32.gmra.mxu0 %v7324
        %v7976 = vpop.f32.mrf.mxu0
        %v7977 = vadd.f32 %v7906, %v7976
        %v7978 = vpop.f32.mrf.mxu0
        %v7979 = vadd.f32 %v7908, %v7978
        %7980 = vdwg.mxu0
        %v7981 = vmax.f32 %v7977, 0.0
        %v7982 = vmax.f32 %v7979, 0.0
        %v7985 = vcombine.low %v7981, %v7982
        %v7987 = vunpack.c.l.s4 1983009808
        %v7988 = vunpack.c.0.s8 %v7987
        %v7989 = vlaneseq
        %v7990 = vshrl.u32 %v7989, 7
        %v7991 = vsub.s32 %v7988, %v7990
        %v7992 = vrot.slane %v7985, %v7991
        %v7993 = vcombine.high %v7992, %v7992
        %v7996 = vrot.slane %v7992, 7
        %v7997 = vrot.slane %v7996, 2
        %v7998 = vrot.slane %v7993, 7
        %v7999 = vrot.slane %v7998, 2
        %v8002 = vmax.f32 %v7992, %v7997
        %v8003 = vmax.f32 %v7993, %v7999
        %v8004 = vmax.f32 %v8002, %v8003
        %v8005 = vld [vmem:[%s7] sm:$0xff]
        %v8006 = vld [vmem:[%s7 + $0x8] sm:$0xff]
        %v8007 = vld [vmem:[%s7 + $0x10] sm:$0xff]
        %v8008 = vld [vmem:[%s7 + $0x18] sm:$0xff]
        %v8009 = vld [vmem:[%s7 + $0x20] sm:$0xff]
        %v8010 = vld [vmem:[%s7 + $0x28] sm:$0xff]
        %v8011 = vld [vmem:[%s7 + $0x30] sm:$0xff]
        %v8012 = vld [vmem:[%s7 + $0x38] sm:$0xff]
        %v8013 = vld [vmem:[%s7 + $0x40] sm:$0xff]
        %v8014 = vld [vmem:[%s7 + $0x48] sm:$0xff]
        %v8015 = vld [vmem:[%s7 + $0x50] sm:$0xff]
        %v8016 = vld [vmem:[%s7 + $0x58] sm:$0xff]
        %v8017 = vld [vmem:[%s7 + $0x60] sm:$0xff]
        %v8018 = vld [vmem:[%s7 + $0x68] sm:$0xff]
        %v8019 = vld [vmem:[%s7 + $0x70] sm:$0xff]
        %v8020 = vld [vmem:[%s7 + $0x78] sm:$0xff]
        %v8021 = vld [vmem:[%s7 + $0x80] sm:$0xff]
        %v8022 = vld [vmem:[%s7 + $0x88] sm:$0xff]
        %v8023 = vld [vmem:[%s7 + $0x90] sm:$0xff]
        %v8024 = vld [vmem:[%s7 + $0x98] sm:$0xff]
        %v8025 = vld [vmem:[%s7 + $0xa0] sm:$0xff]
        %v8026 = vld [vmem:[%s7 + $0xa8] sm:$0xff]
        %v8027 = vld [vmem:[%s7 + $0xb0] sm:$0xff]
        %v8028 = vld [vmem:[%s7 + $0xb8] sm:$0xff]
        %v8029 = vld [vmem:[%s7 + $0xc0] sm:$0xff]
        %v8030 = vld [vmem:[%s7 + $0xc8] sm:$0xff]
        %v8031 = vld [vmem:[%s7 + $0xd0] sm:$0xff]
        %v8032 = vld [vmem:[%s7 + $0xd8] sm:$0xff]
        %v8033 = vld [vmem:[%s7 + $0xe0] sm:$0xff]
        %v8034 = vld [vmem:[%s7 + $0xe8] sm:$0xff]
        %v8035 = vld [vmem:[%s7 + $0xf0] sm:$0xff]
        %v8036 = vld [vmem:[%s7 + $0xf8] sm:$0xff]
        %v8037 = vld [vmem:[#allocation11] sm:$0x1]
        %v8039 = vlaneseq
        %v8040 = vshrl.u32 %v8039, 7
        %v8041 = vsub.s32 0, %v8040
        %v8042 = vrot.slane %v8004, %v8041
        %v8043 = vlaneseq
        %v8044 = vshrl.u32 %v8043, 7
        %v8045 = vsub.s32 2, %v8044
        %v8046 = vrot.slane %v8004, %v8045
        %8049 = vmatprep.subr.mxu0 0.0
        %8050 = vmatpush1.msra.mxu0 %v8020
        %8051 = vmatprep.subr.mxu0 0.0
        %8052 = vmatpush1.msra.mxu0 %v8019
        %8053 = vmatprep.subr.mxu0 0.0
        %8054 = vmatpush1.msra.mxu0 %v8018
        %8055 = vmatprep.subr.mxu0 0.0
        %8056 = vmatpush1.msra.mxu0 %v8017
        %8057 = vmatprep.subr.mxu0 0.0
        %8058 = vmatpush1.msra.mxu0 %v8016
        %8059 = vmatprep.subr.mxu0 0.0
        %8060 = vmatpush1.msra.mxu0 %v8015
        %8061 = vmatprep.subr.mxu0 0.0
        %8062 = vmatpush1.msra.mxu0 %v8014
        %8063 = vmatprep.subr.mxu0 0.0
        %8064 = vmatpush1.msra.mxu0 %v8013
        %8065 = vmatprep.subr.mxu0 0.0
        %8066 = vmatpush1.msra.mxu0 %v8012
        %8067 = vmatprep.subr.mxu0 0.0
        %8068 = vmatpush1.msra.mxu0 %v8011
        %8069 = vmatprep.subr.mxu0 0.0
        %8070 = vmatpush1.msra.mxu0 %v8010
        %8071 = vmatprep.subr.mxu0 0.0
        %8072 = vmatpush1.msra.mxu0 %v8009
        %8073 = vmatprep.subr.mxu0 0.0
        %8074 = vmatpush1.msra.mxu0 %v8008
        %8075 = vmatprep.subr.mxu0 0.0
        %8076 = vmatpush1.msra.mxu0 %v8007
        %8077 = vmatprep.subr.mxu0 0.0
        %8078 = vmatpush1.msra.mxu0 %v8006
        %8079 = vmatprep.subr.mxu0 0.0
        %8080 = vmatpush1.msra.mxu0 %v8005
        %8081 = vmatprep.subr.mxu0 0.0
        %8082 = vmatpush2.msra.mxu0 %v8036
        %8083 = vmatprep.subr.mxu0 0.0
        %8084 = vmatpush2.msra.mxu0 %v8035
        %8085 = vmatprep.subr.mxu0 0.0
        %8086 = vmatpush2.msra.mxu0 %v8034
        %8087 = vmatprep.subr.mxu0 0.0
        %8088 = vmatpush2.msra.mxu0 %v8033
        %8089 = vmatprep.subr.mxu0 0.0
        %8090 = vmatpush2.msra.mxu0 %v8032
        %8091 = vmatprep.subr.mxu0 0.0
        %8092 = vmatpush2.msra.mxu0 %v8031
        %8093 = vmatprep.subr.mxu0 0.0
        %8094 = vmatpush2.msra.mxu0 %v8030
        %8095 = vmatprep.subr.mxu0 0.0
        %8096 = vmatpush2.msra.mxu0 %v8029
        %8097 = vmatprep.subr.mxu0 0.0
        %8098 = vmatpush2.msra.mxu0 %v8028
        %8099 = vmatprep.subr.mxu0 0.0
        %8100 = vmatpush2.msra.mxu0 %v8027
        %8101 = vmatprep.subr.mxu0 0.0
        %8102 = vmatpush2.msra.mxu0 %v8026
        %8103 = vmatprep.subr.mxu0 0.0
        %8104 = vmatpush2.msra.mxu0 %v8025
        %8105 = vmatprep.subr.mxu0 0.0
        %8106 = vmatpush2.msra.mxu0 %v8024
        %8107 = vmatprep.subr.mxu0 0.0
        %8108 = vmatpush2.msra.mxu0 %v8023
        %8109 = vmatprep.subr.mxu0 0.0
        %8110 = vmatpush2.msra.mxu0 %v8022
        %8111 = vmatprep.subr.mxu0 0.0
        %8112 = vmatpush2.msra.mxu0 %v8021
        %8113 = vmatprep.mubr.f32.mxu0 %v8046
        %8114 = vmatmul.mubr.f32.gmra.mxu0 %v8042
        %v8115 = vpop.f32.mrf.mxu0
        %v8116 = vadd.f32 %v8037, %v8115
        %v8117 = vpop.f32.mrf.mxu0
        %8118 = vdwg.mxu0
        %vm8119 = vcmp.gt.f32.partialorder %v8116, 0.0
        %v8120 = vmin.f32 %v8116, 0.0
        %v8121 = vmul.f32 %v8120, 1.442695
        %v8122 = vpow.pop %v8121
        %v8123 = vsub.f32 %v8122, 1.0
        %v8124 = vsel %vm8119, %v8116, %v8123
        %v8125 = vld [vmem:[%s9] sm:$0xff]
        %v8126 = vld [vmem:[%s9 + $0x8] sm:$0xff]
        %v8127 = vld [vmem:[%s9 + $0x10] sm:$0xff]
        %v8128 = vld [vmem:[%s9 + $0x18] sm:$0xff]
        %v8129 = vld [vmem:[%s9 + $0x20] sm:$0xff]
        %v8130 = vld [vmem:[%s9 + $0x28] sm:$0xff]
        %v8131 = vld [vmem:[%s9 + $0x30] sm:$0xff]
        %v8132 = vld [vmem:[%s9 + $0x38] sm:$0xff]
        %v8133 = vld [vmem:[#allocation2] sm:$0x1]
        %v8135 = vsel %vm5694, %v8124, 0
        %8137 = vmatprep.subr.mxu0 0.0
        %8138 = vmatpush1.msra.mxu0 0.0
        %8139 = vmatprep.subr.mxu0 0.0
        %8140 = vmatpush1.msra.mxu0 0.0
        %8141 = vmatprep.subr.mxu0 0.0
        %8142 = vmatpush1.msra.mxu0 0.0
        %8143 = vmatprep.subr.mxu0 0.0
        %8144 = vmatpush1.msra.mxu0 0.0
        %8145 = vmatprep.subr.mxu0 0.0
        %8146 = vmatpush1.msra.mxu0 0.0
        %8147 = vmatprep.subr.mxu0 0.0
        %8148 = vmatpush1.msra.mxu0 0.0
        %8149 = vmatprep.subr.mxu0 0.0
        %8150 = vmatpush1.msra.mxu0 0.0
        %8151 = vmatprep.subr.mxu0 0.0
        %8152 = vmatpush1.msra.mxu0 0.0
        %8153 = vmatprep.subr.mxu0 0.0
        %8154 = vmatpush1.msra.mxu0 %v8132
        %8155 = vmatprep.subr.mxu0 0.0
        %8156 = vmatpush1.msra.mxu0 %v8131
        %8157 = vmatprep.subr.mxu0 0.0
        %8158 = vmatpush1.msra.mxu0 %v8130
        %8159 = vmatprep.subr.mxu0 0.0
        %8160 = vmatpush1.msra.mxu0 %v8129
        %8161 = vmatprep.subr.mxu0 0.0
        %8162 = vmatpush1.msra.mxu0 %v8128
        %8163 = vmatprep.subr.mxu0 0.0
        %8164 = vmatpush1.msra.mxu0 %v8127
        %8165 = vmatprep.subr.mxu0 0.0
        %8166 = vmatpush1.msra.mxu0 %v8126
        %8167 = vmatprep.subr.mxu0 0.0
        %8168 = vmatpush1.msra.mxu0 %v8125
        %8169 = vmatprep.subr.mxu0 0.0
        %8170 = vmatpush2.msra.mxu0 0.0
        %8171 = vmatprep.subr.mxu0 0.0
        %8172 = vmatpush2.msra.mxu0 0.0
        %8173 = vmatprep.subr.mxu0 0.0
        %8174 = vmatpush2.msra.mxu0 0.0
        %8175 = vmatprep.subr.mxu0 0.0
        %8176 = vmatpush2.msra.mxu0 0.0
        %8177 = vmatprep.subr.mxu0 0.0
        %8178 = vmatpush2.msra.mxu0 0.0
        %8179 = vmatprep.subr.mxu0 0.0
        %8180 = vmatpush2.msra.mxu0 0.0
        %8181 = vmatprep.subr.mxu0 0.0
        %8182 = vmatpush2.msra.mxu0 0.0
        %8183 = vmatprep.subr.mxu0 0.0
        %8184 = vmatpush2.msra.mxu0 0.0
        %8185 = vmatprep.subr.mxu0 0.0
        %8186 = vmatpush2.msra.mxu0 0.0
        %8187 = vmatprep.subr.mxu0 0.0
        %8188 = vmatpush2.msra.mxu0 0.0
        %8189 = vmatprep.subr.mxu0 0.0
        %8190 = vmatpush2.msra.mxu0 0.0
        %8191 = vmatprep.subr.mxu0 0.0
        %8192 = vmatpush2.msra.mxu0 0.0
        %8193 = vmatprep.subr.mxu0 0.0
        %8194 = vmatpush2.msra.mxu0 0.0
        %8195 = vmatprep.subr.mxu0 0.0
        %8196 = vmatpush2.msra.mxu0 0.0
        %8197 = vmatprep.subr.mxu0 0.0
        %8198 = vmatpush2.msra.mxu0 0.0
        %8199 = vmatprep.subr.mxu0 0.0
        %8200 = vmatpush2.msra.mxu0 0.0
        %8201 = vmatprep.mubr.f32.mxu0 0.0
        %8202 = vmatmul.mubr.f32.gmra.mxu0 %v8135
        %v8203 = vpop.f32.mrf.mxu0
        %v8204 = vadd.f32 %v8133, %v8203
        %v8205 = vpop.f32.mrf.mxu0
        %8206 = vdwg.mxu0
        %v8207 = vsub.f32 0.0, %v8204
        %v8208 = vmul.f32 %v8207, 1.442695
        %v8209 = vpow.pop %v8208
        %v8210 = vadd.f32 %v8209, 1.0
        %v8211 = vrcp.pop %v8210
        %v8212 = vmul.f32 1.0, %v8211
        %vm8213 = vcmask 0
        %8214 = vst.msk [vmem:[%s464] sm:$0x1] %vm8213, %v8212
        %p8215 = scmp.lt.s32.totalorder %s28, 1
        %s8216 = scalar_select %p8215, %s28, 1
        %s8217 = scalar_lea.vmem %s11, %s8216
        // Predicated region
        $region89: #{tpu_custom_call.1} parent=63 // pred_check
          %p8218 = pneg %p282
        $region90: #{tpu_custom_call.1} parent=63 // pred_check_branch
          %8220 = sbr.rel (%p8218) target = $region92
        $region91: #{tpu_custom_call.1} parent=63 // pred_region
          _
        $region92: #{tpu_custom_call.1} parent=63 // pred_fallthru
          _
      $region64: #{tpu_custom_call.1} parent=5 // pred_fallthru
        _
      %p8221 = scmp.le.s32.totalorder 2, %s23
      // Predicated region
      $region93: #{tpu_custom_call.1} parent=5 // pred_check
        %p8222 = pneg %p8221
      $region94: #{tpu_custom_call.1} parent=5 // pred_check_branch
        %8224 = sbr.rel (%p8222) target = $region96
      $region95: #{tpu_custom_call.1} parent=5 // pred_region
        %s8225 = ssub.s32 %s23, 2
        // Predicated region
        $region97: #{tpu_custom_call.1} parent=95 // pred_check
          %p8226 = pneg %p288
        $region98: #{tpu_custom_call.1} parent=95 // pred_check_branch
          %8228 = sbr.rel (%p8226) target = $region100
        $region99: #{tpu_custom_call.1} parent=95 // pred_region
          %p8229 = scmp.lt.s32.totalorder %s29, 1
          %s8230 = scalar_select %p8229, %s29, 1
          %s8231 = scalar_lea.vmem %s11, %s8230
        $region100: #{tpu_custom_call.1} parent=95 // pred_fallthru
          _
      $region96: #{tpu_custom_call.1} parent=5 // pred_fallthru
        _
    $region6: #{tpu_custom_call.1} parent=1 // loop_footer
      %s27 = sadd.s32 1, %s23
    $region7: #{tpu_custom_call.1} parent=1 // loop_footer_branch
      %22 = sbr.rel target = $region3
    $region8: #{tpu_custom_call.1} parent=1 // loop_exit
      _
    %8232 = vsyncpa [#allocation4], 1
    %s8233 = scalar_lea.sflag [#allocation4], 1
    %8234 = vsyncpa %s8233, 1
    %8235 = vsyncpa [#allocation6], 1
    %8236 = vsyncpa [#allocation9], 1
    %8237 = vsyncpa [#allocation12], 1

</llo_original>
